<compile_context>
chip_gen: v7x
topology: tpu7x:2x2x1
jax: 0.10.0
libtpu: 0.0.40
codegen_flags: <defaults>
</compile_context>

<pallas_src>
import functools
import math

import jax
import jax.numpy as jnp
from jax.experimental import pallas as pl
from jax.experimental.pallas import tpu as pltpu


def _round_up(a: int, b: int) -> int:
    return ((a + b - 1) // b) * b


def _vmem_capacity() -> int:
    try:
        return int(pltpu.get_tpu_info().vmem_capacity_bytes)
    except Exception:                      # conservative fallback (v7x per-TC size)
        return 64 << 20


def _gconv_gru_kernel(a_ref, c0_ref, h_ref, wc_ref, whh_ref, b_ref, out_ref,
                      t_prev, t_pp, t_new, acc_a, acc_hh,
                      *, k, fout, fhp, tile_j, n_j, s_total, a_resident):
    f32, bf16 = jnp.float32, jnp.bfloat16
    sa = k - 1                       # number of A sweeps for the shared [X|H] basis
    s = pl.program_id(0)             # Chebyshev sweep index (phase A then phase B)
    j = pl.program_id(1)             # A column-tile index (innermost)
    n_rows = t_prev.shape[0]

    def a_block():
        # Resident: the whole pre-tiled A lives in VMEM, select tile j dynamically.
        # Streamed: the pipeline delivers one contiguous [n_p, tile_j] slab.
        return a_ref[j] if a_resident else a_ref[0]

    # ------------------- one-time init (first grid point) -------------------
    @pl.when((s == 0) & (j == 0))
    def _init():
        c0 = c0_ref[...]                                   # [N, fc] bf16, packed [X|H]
        t_prev[...] = c0
        t_pp[...] = jnp.zeros_like(t_pp)
        t_new[...] = jnp.zeros_like(t_new)
        acc_hh[...] = jnp.zeros_like(acc_hh)
        # Chebyshev order-0 fold of the shared basis: Z | R | cand-X blocks at once.
        acc_a[...] = jnp.dot(c0, wc_ref[0], preferred_element_type=f32)

    is_a = s < sa
    row0 = pl.multiple_of(j * tile_j, tile_j)

    # -------- accumulate A[:, tile_j] @ T_prev[tile_j, :] (both phases) ------
    @pl.when(is_a)
    def _sweep_a():
        t_slc = t_prev[pl.ds(row0, tile_j), :]             # [tj, fc] bf16
        t_new[...] += jnp.dot(a_block(), t_slc, preferred_element_type=f32)

    @pl.when(jnp.logical_not(is_a))
    def _sweep_b():
        t_slc = t_prev[pl.ds(row0, tile_j), :fhp]          # [tj, fhp] bf16
        t_new[:, :fhp] += jnp.dot(a_block(), t_slc, preferred_element_type=f32)

    # -------- end of a full column sweep: finalize one Chebyshev order -------
    @pl.when(j == n_j - 1)
    def _finalize():
        @pl.when(is_a)
        def _fin_a():
            order = s + 1
            coef = jnp.where(order == 1, -1.0, -2.0).astype(f32)
            t_cur = coef * t_new[...] - t_pp[...].astype(f32)
            acc_a[...] += jnp.dot(t_cur.astype(bf16), wc_ref[order],
                                  preferred_element_type=f32)
            t_pp[...] = t_prev[...]
            t_prev[...] = t_cur.astype(bf16)
            t_new[...] = jnp.zeros_like(t_new)

        @pl.when(jnp.logical_not(is_a))
        def _fin_b():
            order = s - sa + 1
            coef = jnp.where(order == 1, -1.0, -2.0).astype(f32)
            t_cur = coef * t_new[:, :fhp] - t_pp[:, :fhp].astype(f32)
            acc_hh[...] += jnp.dot(t_cur.astype(bf16), whh_ref[order],
                                   preferred_element_type=f32)
            t_pp[:, :fhp] = t_prev[:, :fhp]
            t_prev[:, :fhp] = t_cur.astype(bf16)
            t_new[:, :fhp] = jnp.zeros_like(t_cur)

    # -------- phase boundary: compute R, start the (H*R) Chebyshev basis -----
    @pl.when((s == sa - 1) & (j == n_j - 1))
    def _start_hr():
        r = jax.nn.sigmoid(acc_a[:, fout:2 * fout] + b_ref[:, fout:2 * fout])
        hr = h_ref[...].astype(jnp.float32) * r            # [N, fout] f32
        if fhp > fout:
            hr = jnp.concatenate(
                [hr, jnp.zeros((n_rows, fhp - fout), jnp.float32)], axis=1)
        acc_hh[...] = jnp.dot(hr.astype(bf16), whh_ref[0],
                              preferred_element_type=f32)
        t_prev[:, :fhp] = hr.astype(bf16)
        t_pp[:, :fhp] = jnp.zeros((n_rows, fhp), bf16)

    # -------- last grid point: fused GRU pointwise epilogue ------------------
    @pl.when((s == s_total - 1) & (j == n_j - 1))
    def _epilogue():
        z = jax.nn.sigmoid(acc_a[:, 0:fout] + b_ref[:, 0:fout])
        h_tilde = jnp.tanh(acc_a[:, 2 * fout:3 * fout]
                           + b_ref[:, 2 * fout:3 * fout] + acc_hh[:, 0:fout])
        out_ref[...] = z * h_ref[...].astype(f32) + (1.0 - z) * h_tilde


@functools.partial(jax.jit, static_argnames=("tile_j",))
def gconv_gru_cell(a_norm, x, h, params, *, tile_j: int = 256):
    """One GConvGRU cell step.

    a_norm : [N, N]  dense normalized adjacency D^-1/2 A D^-1/2 (DGL in-degree, clamped >= 1)
    x      : [N, F_in]   node features
    h      : [N, F_out]  previous hidden state (or None -> zeros)
    params : dict of per-order ChebConv weights [k, fan_in, F_out] named
             wxz, whz, wxr, whr, wxh, whh and biases [F_out] named
             bxz, bhz, bxr, bhr, bxh, bhh.
    Returns H' : [N, F_out] f32.
    """
    if h is None:
        h = jnp.zeros((x.shape[0], params["whz"].shape[1]), jnp.float32)

    n, fin = x.shape
    fout = h.shape[1]
    k = params["wxz"].shape[0]
    f32, bf16 = jnp.float32, jnp.bfloat16
    p = params

    if k == 1:
        # ChebConv with k == 1 ignores the graph; a fused dense GRU in plain XLA is
        # already optimal (also drops the pointless A input / DMAs).
        z = jax.nn.sigmoid(x @ p["wxz"][0] + p["bxz"] + h @ p["whz"][0] + p["bhz"])
        r = jax.nn.sigmoid(x @ p["wxr"][0] + p["bxr"] + h @ p["whr"][0] + p["bhr"])
        h_t = jnp.tanh(x @ p["wxh"][0] + p["bxh"] + (h * r) @ p["whh"][0] + p["bhh"])
        return (z * h + (1.0 - z) * h_t).astype(f32)

    # ---- packed (padding-minimal) geometry ----
    tj = max(128, _round_up(tile_j, 128))   # 256 suits v6e/v7x MXU; pass 128 on v5e
    n_p = _round_up(n, tj)
    n_j = n_p // tj
    fc = _round_up(fin + fout, 128)         # packed [X | H] basis width
    gcols = _round_up(3 * fout, 128)        # packed Z | R | cand-X accumulator width
    fhp = _round_up(fout, 128)              # (H*R) basis width
    s_total = 2 * (k - 1)

    # ---- VMEM budget: decide A residency, set an explicit scoped limit ----
    def _need(a_buf_bytes):
        in_bufs = 2 * (a_buf_bytes          # inputs are double-buffered by the pipeline
                       + n_p * fc * 2 + n_p * fout * 2
                       + k * fc * gcols * 2 + k * fhp * fhp * 2 + gcols * 4)
        out_bufs = 2 * n_p * fout * 4
        scratch = (2 * n_p * fc * 2 + n_p * fc * 4
                   + n_p * gcols * 4 + n_p * fhp * 4)
        return in_bufs + out_bufs + scratch

    vmem_cap = _vmem_capacity()
    budget = min(int(0.75 * vmem_cap), 96 << 20)
    a_resident = _need(n_p * n_p * 2) <= budget
    need = _need(n_p * n_p * 2 if a_resident else n_p * tj * 2)
    vmem_limit = int(min(max(need * 1.25 + (4 << 20), 32 << 20), 0.9 * vmem_cap))
    # TODO(synk): node-row tiling (3-D grid) when the full-node-resident scratch
    #             exceeds the budget (v7x: 64 MiB/TC).

    # ---- pad / pack inputs (zero padding keeps the math exact; sliced off) ----
    a_p = jnp.zeros((n_p, n_p), bf16).at[:n, :n].set(a_norm.astype(bf16))
    # Pre-tile A so every streamed grid step DMAs ONE contiguous slab:
    # a_t[j] == A[:, j*tj:(j+1)*tj].
    a_t = a_p.reshape(n_p, n_j, tj).transpose(1, 0, 2)

    c0 = jnp.zeros((n_p, fc), bf16)
    c0 = c0.at[:n, :fin].set(x.astype(bf16))
    c0 = c0.at[:n, fin:fin + fout].set(h.astype(bf16))
    h_p = jnp.zeros((n_p, fout), bf16).at[:n, :].set(h.astype(bf16))

    # Combined per-order weights: rows = [X | H], cols = packed [Z | R | cand-X].
    wc = jnp.zeros((k, fc, gcols), f32)
    wc = wc.at[:, :fin, 0:fout].set(p["wxz"])
    wc = wc.at[:, fin:fin + fout, 0:fout].set(p["whz"])
    wc = wc.at[:, :fin, fout:2 * fout].set(p["wxr"])
    wc = wc.at[:, fin:fin + fout, fout:2 * fout].set(p["whr"])
    wc = wc.at[:, :fin, 2 * fout:3 * fout].set(p["wxh"])
    wc = wc.astype(bf16)

    whh_p = (jnp.zeros((k, fhp, fhp), f32)
             .at[:, :fout, :fout].set(p["whh"]).astype(bf16))

    b = jnp.zeros((1, gcols), f32)
    b = b.at[0, 0:fout].set(p["bxz"] + p["bhz"])
    b = b.at[0, fout:2 * fout].set(p["bxr"] + p["bhr"])
    b = b.at[0, 2 * fout:3 * fout].set(p["bxh"] + p["bhh"])

    # ---- advisory cost estimate ----
    a_passes = 1 if a_resident else s_total
    cost = pl.CostEstimate(
        flops=int(2 * (k - 1) * n_p * n_p * (fc + fhp)
                  + 2 * n_p * k * (fc * gcols + fhp * fhp) + 12 * n_p * fout),
        transcendentals=int(3 * n_p * fout),
        bytes_accessed=int(a_passes * n_p * n_p * 2 + n_p * (fc + fout) * 2
                           + k * (fc * gcols + fhp * fhp) * 2 + gcols * 4
                           + n_p * fout * 4))

    kernel = functools.partial(
        _gconv_gru_kernel, k=k, fout=fout, fhp=fhp, tile_j=tj, n_j=n_j,
        s_total=s_total, a_resident=a_resident)

    a_spec = (pl.BlockSpec((n_j, n_p, tj), lambda s, j: (0, 0, 0)) if a_resident
              else pl.BlockSpec((1, n_p, tj), lambda s, j: (j, 0, 0)))

    out = pl.pallas_call(
        kernel,
        out_shape=jax.ShapeDtypeStruct((n_p, fout), f32),
        grid_spec=pltpu.PrefetchScalarGridSpec(
            num_scalar_prefetch=0,
            grid=(s_total, n_j),
            in_specs=[
                a_spec,                                                  # A (resident/streamed)
                pl.BlockSpec((n_p, fc), lambda s, j: (0, 0)),            # packed [X|H]
                pl.BlockSpec((n_p, fout), lambda s, j: (0, 0)),          # H
                pl.BlockSpec((k, fc, gcols), lambda s, j: (0, 0, 0)),    # combined W
                pl.BlockSpec((k, fhp, fhp), lambda s, j: (0, 0, 0)),     # W_hh
                pl.BlockSpec((1, gcols), lambda s, j: (0, 0)),           # biases
            ],
            out_specs=pl.BlockSpec((n_p, fout), lambda s, j: (0, 0)),
            scratch_shapes=[
                pltpu.VMEM((n_p, fc), bf16),      # T_{i-1} (bf16 carry)
                pltpu.VMEM((n_p, fc), bf16),      # T_{i-2} (bf16 carry)
                pltpu.VMEM((n_p, fc), f32),       # A @ T accumulator
                pltpu.VMEM((n_p, gcols), f32),    # packed Z | R | cand-X accumulator
                pltpu.VMEM((n_p, fhp), f32),      # cand-H (H*R basis) accumulator
            ],
        ),
        compiler_params=pltpu.CompilerParams(
            dimension_semantics=("arbitrary", "arbitrary"),
            vmem_limit_bytes=vmem_limit),
        cost_estimate=cost,
    )(a_t, c0, h_p, wc, whh_p, b)

    return out[:n]


# ------------------------- pure-JAX reference -------------------------
def _cheb_conv_ref(a_norm, feat, w, b):
    k = w.shape[0]
    t_pp = feat
    out = feat @ w[0]
    if k > 1:
        t_p = -(a_norm @ feat)
        out = out + t_p @ w[1]
        for i in range(2, k):
            t_c = -2.0 * (a_norm @ t_p) - t_pp
            out = out + t_c @ w[i]
            t_pp, t_p = t_p, t_c
    return out + b


def gconv_gru_reference(a_norm, x, h, p):
    z = jax.nn.sigmoid(_cheb_conv_ref(a_norm, x, p["wxz"], p["bxz"])
                       + _cheb_conv_ref(a_norm, h, p["whz"], p["bhz"]))
    r = jax.nn.sigmoid(_cheb_conv_ref(a_norm, x, p["wxr"], p["bxr"])
                       + _cheb_conv_ref(a_norm, h, p["whr"], p["bhr"]))
    h_tilde = jnp.tanh(_cheb_conv_ref(a_norm, x, p["wxh"], p["bxh"])
                       + _cheb_conv_ref(a_norm, h * r, p["whh"], p["bhh"]))
    return z * h + (1.0 - z) * h_tilde


if __name__ == "__main__":
    key = jax.random.PRNGKey(0)
    N, F_IN, F_OUT, K = 300, 16, 32, 3
    keys = jax.random.split(key, 16)

    # Random undirected graph -> symmetric normalized adjacency D^-1/2 A D^-1/2.
    prob = jax.random.uniform(keys[0], (N, N))
    adj = (prob < 0.05).astype(jnp.float32)
    adj = jnp.maximum(adj, adj.T) * (1.0 - jnp.eye(N, dtype=jnp.float32))
    deg = jnp.maximum(jnp.sum(adj, axis=1), 1.0)
    dinv = 1.0 / jnp.sqrt(deg)
    a_norm = dinv[:, None] * adj * dinv[None, :]

    x = jax.random.normal(keys[1], (N, F_IN), jnp.float32)
    h = 0.5 * jax.random.normal(keys[2], (N, F_OUT), jnp.float32)

    def _w(fan_in, fan_out, kk):
        return jax.random.normal(kk, (K, fan_in, fan_out), jnp.float32) / \
            math.sqrt(K * fan_in)

    params = {
        "wxz": _w(F_IN, F_OUT, keys[3]), "whz": _w(F_OUT, F_OUT, keys[4]),
        "wxr": _w(F_IN, F_OUT, keys[5]), "whr": _w(F_OUT, F_OUT, keys[6]),
        "wxh": _w(F_IN, F_OUT, keys[7]), "whh": _w(F_OUT, F_OUT, keys[8]),
        "bxz": 0.1 * jax.random.normal(keys[9], (F_OUT,), jnp.float32),
        "bhz": 0.1 * jax.random.normal(keys[10], (F_OUT,), jnp.float32),
        "bxr": 0.1 * jax.random.normal(keys[11], (F_OUT,), jnp.float32),
        "bhr": 0.1 * jax.random.normal(keys[12], (F_OUT,), jnp.float32),
        "bxh": 0.1 * jax.random.normal(keys[13], (F_OUT,), jnp.float32),
        "bhh": 0.1 * jax.random.normal(keys[14], (F_OUT,), jnp.float32),
    }

    out = gconv_gru_cell(a_norm, x, h, params)
    out = jax.block_until_ready(out)

    ref = gconv_gru_reference(a_norm, x, h, params)
    max_err = float(jnp.max(jnp.abs(out - ref)))
    assert out.shape == (N, F_OUT)
    # bf16 Chebyshev carries / bf16 MXU operands bound the abs error well below this.
    assert math.isfinite(max_err) and max_err < 1.5e-1, f"max_err={max_err}"
    print("KERNEL_OK")
</pallas_src>

<mosaic_0001>
module attributes {stable_mosaic.version = 11 : i64} {
  func.func @_gconv_gru_kernel(%arg0: i32, %arg1: i32, %arg2: memref<2x512x256xbf16, #tpu.memory_space<vmem>>, %arg3: memref<512x128xbf16, #tpu.memory_space<vmem>>, %arg4: memref<512x32xbf16, #tpu.memory_space<vmem>>, %arg5: memref<3x128x128xbf16, #tpu.memory_space<vmem>>, %arg6: memref<3x128x128xbf16, #tpu.memory_space<vmem>>, %arg7: memref<1x128xf32, #tpu.memory_space<vmem>>, %arg8: memref<512x32xf32, #tpu.memory_space<vmem>>, %arg9: memref<512x128xbf16, #tpu.memory_space<vmem>>, %arg10: memref<512x128xbf16, #tpu.memory_space<vmem>>, %arg11: memref<512x128xf32, #tpu.memory_space<vmem>>, %arg12: memref<512x128xf32, #tpu.memory_space<vmem>>, %arg13: memref<512x128xf32, #tpu.memory_space<vmem>>) attributes {dimension_semantics = [#tpu.dimension_semantics<arbitrary>, #tpu.dimension_semantics<arbitrary>], iteration_bounds = array<i64: 4, 2>, scalar_prefetch = 0 : i64, scratch_operands = 5 : i64, tpu.core_type = #tpu.core_type<tc>, window_params = [{pipeline_mode = #tpu.pipeline_mode<synchronous>, transform_indices = @transform_0, window_bounds = array<i64: 2, 512, 256>}, {pipeline_mode = #tpu.pipeline_mode<synchronous>, transform_indices = @transform_1, window_bounds = array<i64: 512, 128>}, {pipeline_mode = #tpu.pipeline_mode<synchronous>, transform_indices = @transform_2, window_bounds = array<i64: 512, 32>}, {pipeline_mode = #tpu.pipeline_mode<synchronous>, transform_indices = @transform_3, window_bounds = array<i64: 3, 128, 128>}, {pipeline_mode = #tpu.pipeline_mode<synchronous>, transform_indices = @transform_4, window_bounds = array<i64: 3, 128, 128>}, {pipeline_mode = #tpu.pipeline_mode<synchronous>, transform_indices = @transform_5, window_bounds = array<i64: 1, 128>}, {pipeline_mode = #tpu.pipeline_mode<synchronous>, transform_indices = @transform_6, window_bounds = array<i64: 512, 32>}]} {
    %c0_i32 = arith.constant 0 : i32
    %0 = arith.cmpi eq, %arg0, %c0_i32 : i32
    %c0_i32_0 = arith.constant 0 : i32
    %1 = arith.cmpi eq, %arg1, %c0_i32_0 : i32
    %2 = arith.andi %0, %1 : i1
    %3 = arith.extui %2 : i1 to i32
    %c0_i32_1 = arith.constant 0 : i32
    %4 = arith.cmpi ne, %3, %c0_i32_1 : i32
    scf.if %4 {
      %c0 = arith.constant 0 : index
      %c0_10 = arith.constant 0 : index
      %26 = vector.load %arg3[%c0, %c0_10] : memref<512x128xbf16, #tpu.memory_space<vmem>>, vector<512x128xbf16>
      %c0_11 = arith.constant 0 : index
      %c0_12 = arith.constant 0 : index
      %27 = vector.load %arg9[%c0_11, %c0_12] : memref<512x128xbf16, #tpu.memory_space<vmem>>, vector<512x128xbf16>
      tpu.vector_store %arg9[%c0_11, %c0_12], %26 {strides = array<i32>} : memref<512x128xbf16, #tpu.memory_space<vmem>>, vector<512x128xbf16>,
      %cst = arith.constant 0.000000e+00 : bf16
      %28 = vector.broadcast %cst : bf16 to vector<512x128xbf16>
      %c0_13 = arith.constant 0 : index
      %c0_14 = arith.constant 0 : index
      %29 = vector.load %arg10[%c0_13, %c0_14] : memref<512x128xbf16, #tpu.memory_space<vmem>>, vector<512x128xbf16>
      tpu.vector_store %arg10[%c0_13, %c0_14], %28 {strides = array<i32>} : memref<512x128xbf16, #tpu.memory_space<vmem>>, vector<512x128xbf16>,
      %cst_15 = arith.constant 0.000000e+00 : f32
      %30 = vector.broadcast %cst_15 : f32 to vector<512x128xf32>
      %c0_16 = arith.constant 0 : index
      %c0_17 = arith.constant 0 : index
      %31 = vector.load %arg11[%c0_16, %c0_17] : memref<512x128xf32, #tpu.memory_space<vmem>>, vector<512x128xf32>
      tpu.vector_store %arg11[%c0_16, %c0_17], %30 {strides = array<i32>} : memref<512x128xf32, #tpu.memory_space<vmem>>, vector<512x128xf32>,
      %cst_18 = arith.constant 0.000000e+00 : f32
      %32 = vector.broadcast %cst_18 : f32 to vector<512x128xf32>
      %c0_19 = arith.constant 0 : index
      %c0_20 = arith.constant 0 : index
      %33 = vector.load %arg13[%c0_19, %c0_20] : memref<512x128xf32, #tpu.memory_space<vmem>>, vector<512x128xf32>
      tpu.vector_store %arg13[%c0_19, %c0_20], %32 {strides = array<i32>} : memref<512x128xf32, #tpu.memory_space<vmem>>, vector<512x128xf32>,
      %c0_21 = arith.constant 0 : index
      %c0_22 = arith.constant 0 : index
      %c0_23 = arith.constant 0 : index
      %34 = vector.load %arg5[%c0_21, %c0_22, %c0_23] : memref<3x128x128xbf16, #tpu.memory_space<vmem>>, vector<1x128x128xbf16>
      %35 = vector.shape_cast %34 : vector<1x128x128xbf16> to vector<128x128xbf16>
      %cst_24 = arith.constant dense<0.000000e+00> : vector<512x128xf32>
      %36 = tpu.matmul %26, %35, %cst_24 {dimension_numbers = #tpu.dot_dimension_numbers<[1], [0], [0], [1], [0, 0, 1, 1], [], []>} : vector<512x128xbf16>, vector<128x128xbf16>, vector<512x128xf32> -> vector<512x128xf32>
      %c0_25 = arith.constant 0 : index
      %c0_26 = arith.constant 0 : index
      %37 = vector.load %arg12[%c0_25, %c0_26] : memref<512x128xf32, #tpu.memory_space<vmem>>, vector<512x128xf32>
      tpu.vector_store %arg12[%c0_25, %c0_26], %36 {strides = array<i32>} : memref<512x128xf32, #tpu.memory_space<vmem>>, vector<512x128xf32>,
    } else {
    }
    %c2_i32 = arith.constant 2 : i32
    %5 = arith.cmpi slt, %arg0, %c2_i32 : i32
    %c256_i32 = arith.constant 256 : i32
    %6 = arith.muli %arg1, %c256_i32 : i32
    %7 = tpu.assume_multiple %6, 256 : i32
    %8 = arith.extui %5 : i1 to i32
    %c0_i32_2 = arith.constant 0 : i32
    %9 = arith.cmpi ne, %8, %c0_i32_2 : i32
    scf.if %9 {
      %26 = arith.index_cast %7 : i32 to index
      %c0 = arith.constant 0 : index
      %27 = vector.load %arg9[%26, %c0] : memref<512x128xbf16, #tpu.memory_space<vmem>>, vector<256x128xbf16>
      %c0_10 = arith.constant 0 : index
      %c0_11 = arith.constant 0 : index
      %28 = vector.load %arg11[%c0_10, %c0_11] : memref<512x128xf32, #tpu.memory_space<vmem>>, vector<512x128xf32>
      %29 = arith.index_cast %arg1 : i32 to index
      %c0_12 = arith.constant 0 : index
      %c0_13 = arith.constant 0 : index
      %30 = vector.load %arg2[%29, %c0_12, %c0_13] : memref<2x512x256xbf16, #tpu.memory_space<vmem>>, vector<1x512x256xbf16>
      %31 = vector.shape_cast %30 : vector<1x512x256xbf16> to vector<512x256xbf16>
      %cst = arith.constant dense<0.000000e+00> : vector<512x128xf32>
      %32 = tpu.matmul %31, %27, %cst {dimension_numbers = #tpu.dot_dimension_numbers<[1], [0], [0], [1], [0, 0, 1, 1], [], []>} : vector<512x256xbf16>, vector<256x128xbf16>, vector<512x128xf32> -> vector<512x128xf32>
      %33 = arith.addf %28, %32 : vector<512x128xf32>
      %c0_14 = arith.constant 0 : index
      %c0_15 = arith.constant 0 : index
      %34 = vector.load %arg11[%c0_14, %c0_15] : memref<512x128xf32, #tpu.memory_space<vmem>>, vector<512x128xf32>
      tpu.vector_store %arg11[%c0_14, %c0_15], %33 {strides = array<i32>} : memref<512x128xf32, #tpu.memory_space<vmem>>, vector<512x128xf32>,
    } else {
    }
    %true = arith.constant true
    %10 = arith.xori %5, %true : i1
    %11 = arith.extui %10 : i1 to i32
    %c0_i32_3 = arith.constant 0 : i32
    %12 = arith.cmpi ne, %11, %c0_i32_3 : i32
    scf.if %12 {
      %26 = arith.index_cast %7 : i32 to index
      %c0 = arith.constant 0 : index
      %27 = vector.load %arg9[%26, %c0] : memref<512x128xbf16, #tpu.memory_space<vmem>>, vector<256x128xbf16>
      %c0_10 = arith.constant 0 : index
      %c0_11 = arith.constant 0 : index
      %28 = vector.load %arg11[%c0_10, %c0_11] : memref<512x128xf32, #tpu.memory_space<vmem>>, vector<512x128xf32>
      %29 = arith.index_cast %arg1 : i32 to index
      %c0_12 = arith.constant 0 : index
      %c0_13 = arith.constant 0 : index
      %30 = vector.load %arg2[%29, %c0_12, %c0_13] : memref<2x512x256xbf16, #tpu.memory_space<vmem>>, vector<1x512x256xbf16>
      %31 = vector.shape_cast %30 : vector<1x512x256xbf16> to vector<512x256xbf16>
      %cst = arith.constant dense<0.000000e+00> : vector<512x128xf32>
      %32 = tpu.matmul %31, %27, %cst {dimension_numbers = #tpu.dot_dimension_numbers<[1], [0], [0], [1], [0, 0, 1, 1], [], []>} : vector<512x256xbf16>, vector<256x128xbf16>, vector<512x128xf32> -> vector<512x128xf32>
      %33 = arith.addf %28, %32 : vector<512x128xf32>
      %c0_14 = arith.constant 0 : index
      %c0_15 = arith.constant 0 : index
      %34 = vector.load %arg11[%c0_14, %c0_15] : memref<512x128xf32, #tpu.memory_space<vmem>>, vector<512x128xf32>
      tpu.vector_store %arg11[%c0_14, %c0_15], %33 {strides = array<i32>} : memref<512x128xf32, #tpu.memory_space<vmem>>, vector<512x128xf32>,
    } else {
    }
    %c1_i32 = arith.constant 1 : i32
    %13 = arith.cmpi eq, %arg1, %c1_i32 : i32
    %14 = arith.extui %13 : i1 to i32
    %c0_i32_4 = arith.constant 0 : i32
    %15 = arith.cmpi ne, %14, %c0_i32_4 : i32
    scf.if %15 {
      %26 = arith.extui %5 : i1 to i32
      %c0_i32_10 = arith.constant 0 : i32
      %27 = arith.cmpi ne, %26, %c0_i32_10 : i32
      scf.if %27 {
        %c1_i32_13 = arith.constant 1 : i32
        %31 = arith.addi %arg0, %c1_i32_13 : i32
        %c1_i32_14 = arith.constant 1 : i32
        %32 = arith.cmpi eq, %31, %c1_i32_14 : i32
        %cst = arith.constant -1.000000e+00 : f32
        %cst_15 = arith.constant -2.000000e+00 : f32
        %33 = arith.select %32, %cst, %cst_15 : f32
        %c0 = arith.constant 0 : index
        %c0_16 = arith.constant 0 : index
        %34 = vector.load %arg11[%c0, %c0_16] : memref<512x128xf32, #tpu.memory_space<vmem>>, vector<512x128xf32>
        %35 = vector.broadcast %33 : f32 to vector<512x128xf32>
        %36 = arith.mulf %35, %34 : vector<512x128xf32>
        %c0_17 = arith.constant 0 : index
        %c0_18 = arith.constant 0 : index
        %37 = vector.load %arg10[%c0_17, %c0_18] : memref<512x128xbf16, #tpu.memory_space<vmem>>, vector<512x128xbf16>
        %38 = arith.extf %37 : vector<512x128xbf16> to vector<512x128xf32>
        %39 = arith.subf %36, %38 : vector<512x128xf32>
        %c0_19 = arith.constant 0 : index
        %c0_20 = arith.constant 0 : index
        %40 = vector.load %arg12[%c0_19, %c0_20] : memref<512x128xf32, #tpu.memory_space<vmem>>, vector<512x128xf32>
        %41 = arith.truncf %39 : vector<512x128xf32> to vector<512x128xbf16>
        %42 = arith.index_cast %31 : i32 to index
        %c0_21 = arith.constant 0 : index
        %c0_22 = arith.constant 0 : index
        %43 = vector.load %arg5[%42, %c0_21, %c0_22] : memref<3x128x128xbf16, #tpu.memory_space<vmem>>, vector<1x128x128xbf16>
        %44 = vector.shape_cast %43 : vector<1x128x128xbf16> to vector<128x128xbf16>
        %cst_23 = arith.constant dense<0.000000e+00> : vector<512x128xf32>
        %45 = tpu.matmul %41, %44, %cst_23 {dimension_numbers = #tpu.dot_dimension_numbers<[1], [0], [0], [1], [0, 0, 1, 1], [], []>} : vector<512x128xbf16>, vector<128x128xbf16>, vector<512x128xf32> -> vector<512x128xf32>
        %46 = arith.addf %40, %45 : vector<512x128xf32>
        %c0_24 = arith.constant 0 : index
        %c0_25 = arith.constant 0 : index
        %47 = vector.load %arg12[%c0_24, %c0_25] : memref<512x128xf32, #tpu.memory_space<vmem>>, vector<512x128xf32>
        tpu.vector_store %arg12[%c0_24, %c0_25], %46 {strides = array<i32>} : memref<512x128xf32, #tpu.memory_space<vmem>>, vector<512x128xf32>,
        %c0_26 = arith.constant 0 : index
        %c0_27 = arith.constant 0 : index
        %48 = vector.load %arg9[%c0_26, %c0_27] : memref<512x128xbf16, #tpu.memory_space<vmem>>, vector<512x128xbf16>
        %c0_28 = arith.constant 0 : index
        %c0_29 = arith.constant 0 : index
        %49 = vector.load %arg10[%c0_28, %c0_29] : memref<512x128xbf16, #tpu.memory_space<vmem>>, vector<512x128xbf16>
        tpu.vector_store %arg10[%c0_28, %c0_29], %48 {strides = array<i32>} : memref<512x128xbf16, #tpu.memory_space<vmem>>, vector<512x128xbf16>,
        %50 = arith.truncf %39 : vector<512x128xf32> to vector<512x128xbf16>
        %c0_30 = arith.constant 0 : index
        %c0_31 = arith.constant 0 : index
        %51 = vector.load %arg9[%c0_30, %c0_31] : memref<512x128xbf16, #tpu.memory_space<vmem>>, vector<512x128xbf16>
        tpu.vector_store %arg9[%c0_30, %c0_31], %50 {strides = array<i32>} : memref<512x128xbf16, #tpu.memory_space<vmem>>, vector<512x128xbf16>,
        %cst_32 = arith.constant 0.000000e+00 : f32
        %52 = vector.broadcast %cst_32 : f32 to vector<512x128xf32>
        %c0_33 = arith.constant 0 : index
        %c0_34 = arith.constant 0 : index
        %53 = vector.load %arg11[%c0_33, %c0_34] : memref<512x128xf32, #tpu.memory_space<vmem>>, vector<512x128xf32>
        tpu.vector_store %arg11[%c0_33, %c0_34], %52 {strides = array<i32>} : memref<512x128xf32, #tpu.memory_space<vmem>>, vector<512x128xf32>,
      } else {
      }
      %true_11 = arith.constant true
      %28 = arith.xori %5, %true_11 : i1
      %29 = arith.extui %28 : i1 to i32
      %c0_i32_12 = arith.constant 0 : i32
      %30 = arith.cmpi ne, %29, %c0_i32_12 : i32
      scf.if %30 {
        %c2_i32_13 = arith.constant 2 : i32
        %31 = arith.subi %arg0, %c2_i32_13 : i32
        %c1_i32_14 = arith.constant 1 : i32
        %32 = arith.addi %31, %c1_i32_14 : i32
        %c1_i32_15 = arith.constant 1 : i32
        %33 = arith.cmpi eq, %32, %c1_i32_15 : i32
        %cst = arith.constant -1.000000e+00 : f32
        %cst_16 = arith.constant -2.000000e+00 : f32
        %34 = arith.select %33, %cst, %cst_16 : f32
        %c0 = arith.constant 0 : index
        %c0_17 = arith.constant 0 : index
        %35 = vector.load %arg11[%c0, %c0_17] : memref<512x128xf32, #tpu.memory_space<vmem>>, vector<512x128xf32>
        %36 = vector.broadcast %34 : f32 to vector<512x128xf32>
        %37 = arith.mulf %36, %35 : vector<512x128xf32>
        %c0_18 = arith.constant 0 : index
        %c0_19 = arith.constant 0 : index
        %38 = vector.load %arg10[%c0_18, %c0_19] : memref<512x128xbf16, #tpu.memory_space<vmem>>, vector<512x128xbf16>
        %39 = arith.extf %38 : vector<512x128xbf16> to vector<512x128xf32>
        %40 = arith.subf %37, %39 : vector<512x128xf32>
        %c0_20 = arith.constant 0 : index
        %c0_21 = arith.constant 0 : index
        %41 = vector.load %arg13[%c0_20, %c0_21] : memref<512x128xf32, #tpu.memory_space<vmem>>, vector<512x128xf32>
        %42 = arith.truncf %40 : vector<512x128xf32> to vector<512x128xbf16>
        %43 = arith.index_cast %32 : i32 to index
        %c0_22 = arith.constant 0 : index
        %c0_23 = arith.constant 0 : index
        %44 = vector.load %arg6[%43, %c0_22, %c0_23] : memref<3x128x128xbf16, #tpu.memory_space<vmem>>, vector<1x128x128xbf16>
        %45 = vector.shape_cast %44 : vector<1x128x128xbf16> to vector<128x128xbf16>
        %cst_24 = arith.constant dense<0.000000e+00> : vector<512x128xf32>
        %46 = tpu.matmul %42, %45, %cst_24 {dimension_numbers = #tpu.dot_dimension_numbers<[1], [0], [0], [1], [0, 0, 1, 1], [], []>} : vector<512x128xbf16>, vector<128x128xbf16>, vector<512x128xf32> -> vector<512x128xf32>
        %47 = arith.addf %41, %46 : vector<512x128xf32>
        %c0_25 = arith.constant 0 : index
        %c0_26 = arith.constant 0 : index
        %48 = vector.load %arg13[%c0_25, %c0_26] : memref<512x128xf32, #tpu.memory_space<vmem>>, vector<512x128xf32>
        tpu.vector_store %arg13[%c0_25, %c0_26], %47 {strides = array<i32>} : memref<512x128xf32, #tpu.memory_space<vmem>>, vector<512x128xf32>,
        %c0_27 = arith.constant 0 : index
        %c0_28 = arith.constant 0 : index
        %49 = vector.load %arg9[%c0_27, %c0_28] : memref<512x128xbf16, #tpu.memory_space<vmem>>, vector<512x128xbf16>
        %c0_29 = arith.constant 0 : index
        %c0_30 = arith.constant 0 : index
        %50 = vector.load %arg10[%c0_29, %c0_30] : memref<512x128xbf16, #tpu.memory_space<vmem>>, vector<512x128xbf16>
        tpu.vector_store %arg10[%c0_29, %c0_30], %49 {strides = array<i32>} : memref<512x128xbf16, #tpu.memory_space<vmem>>, vector<512x128xbf16>,
        %51 = arith.truncf %40 : vector<512x128xf32> to vector<512x128xbf16>
        %c0_31 = arith.constant 0 : index
        %c0_32 = arith.constant 0 : index
        %52 = vector.load %arg9[%c0_31, %c0_32] : memref<512x128xbf16, #tpu.memory_space<vmem>>, vector<512x128xbf16>
        tpu.vector_store %arg9[%c0_31, %c0_32], %51 {strides = array<i32>} : memref<512x128xbf16, #tpu.memory_space<vmem>>, vector<512x128xbf16>,
        %cst_33 = arith.constant 0.000000e+00 : f32
        %53 = vector.broadcast %cst_33 : f32 to vector<512x128xf32>
        %c0_34 = arith.constant 0 : index
        %c0_35 = arith.constant 0 : index
        %54 = vector.load %arg11[%c0_34, %c0_35] : memref<512x128xf32, #tpu.memory_space<vmem>>, vector<512x128xf32>
        tpu.vector_store %arg11[%c0_34, %c0_35], %53 {strides = array<i32>} : memref<512x128xf32, #tpu.memory_space<vmem>>, vector<512x128xf32>,
      } else {
      }
    } else {
    }
    %c1_i32_5 = arith.constant 1 : i32
    %16 = arith.cmpi eq, %arg0, %c1_i32_5 : i32
    %c1_i32_6 = arith.constant 1 : i32
    %17 = arith.cmpi eq, %arg1, %c1_i32_6 : i32
    %18 = arith.andi %16, %17 : i1
    %19 = arith.extui %18 : i1 to i32
    %c0_i32_7 = arith.constant 0 : i32
    %20 = arith.cmpi ne, %19, %c0_i32_7 : i32
    scf.if %20 {
      %c0 = arith.constant 0 : index
      %c32 = arith.constant 32 : index
      %26 = vector.load %arg12[%c0, %c32] : memref<512x128xf32, #tpu.memory_space<vmem>>, vector<512x32xf32>
      %c0_10 = arith.constant 0 : index
      %c32_11 = arith.constant 32 : index
      %27 = vector.load %arg7[%c0_10, %c32_11] : memref<1x128xf32, #tpu.memory_space<vmem>>, vector<1x32xf32>
      %28 = vector.broadcast %27 : vector<1x32xf32> to vector<512x32xf32>
      %29 = arith.addf %26, %28 : vector<512x32xf32>
      %30 = arith.negf %29 : vector<512x32xf32>
      %31 = math.exp %30 : vector<512x32xf32>
      %cst = arith.constant 1.000000e+00 : f32
      %32 = vector.broadcast %cst : f32 to vector<512x32xf32>
      %33 = arith.addf %32, %31 : vector<512x32xf32>
      %34 = arith.divf %32, %33 : vector<512x32xf32>
      %c0_12 = arith.constant 0 : index
      %c0_13 = arith.constant 0 : index
      %35 = vector.load %arg4[%c0_12, %c0_13] : memref<512x32xbf16, #tpu.memory_space<vmem>>, vector<512x32xbf16>
      %36 = arith.extf %35 : vector<512x32xbf16> to vector<512x32xf32>
      %37 = arith.mulf %36, %34 : vector<512x32xf32>
      %cst_14 = arith.constant 0.000000e+00 : f32
      %38 = vector.broadcast %cst_14 : f32 to vector<512x96xf32>
      %39 = tpu.concatenate %37, %38 in 1 : vector<512x32xf32>, vector<512x96xf32> -> vector<512x128xf32>
      %40 = arith.truncf %39 : vector<512x128xf32> to vector<512x128xbf16>
      %c0_15 = arith.constant 0 : index
      %c0_16 = arith.constant 0 : index
      %c0_17 = arith.constant 0 : index
      %41 = vector.load %arg6[%c0_15, %c0_16, %c0_17] : memref<3x128x128xbf16, #tpu.memory_space<vmem>>, vector<1x128x128xbf16>
      %42 = vector.shape_cast %41 : vector<1x128x128xbf16> to vector<128x128xbf16>
      %cst_18 = arith.constant dense<0.000000e+00> : vector<512x128xf32>
      %43 = tpu.matmul %40, %42, %cst_18 {dimension_numbers = #tpu.dot_dimension_numbers<[1], [0], [0], [1], [0, 0, 1, 1], [], []>} : vector<512x128xbf16>, vector<128x128xbf16>, vector<512x128xf32> -> vector<512x128xf32>
      %c0_19 = arith.constant 0 : index
      %c0_20 = arith.constant 0 : index
      %44 = vector.load %arg13[%c0_19, %c0_20] : memref<512x128xf32, #tpu.memory_space<vmem>>, vector<512x128xf32>
      tpu.vector_store %arg13[%c0_19, %c0_20], %43 {strides = array<i32>} : memref<512x128xf32, #tpu.memory_space<vmem>>, vector<512x128xf32>,
      %45 = arith.truncf %39 : vector<512x128xf32> to vector<512x128xbf16>
      %c0_21 = arith.constant 0 : index
      %c0_22 = arith.constant 0 : index
      %46 = vector.load %arg9[%c0_21, %c0_22] : memref<512x128xbf16, #tpu.memory_space<vmem>>, vector<512x128xbf16>
      tpu.vector_store %arg9[%c0_21, %c0_22], %45 {strides = array<i32>} : memref<512x128xbf16, #tpu.memory_space<vmem>>, vector<512x128xbf16>,
      %cst_23 = arith.constant 0.000000e+00 : bf16
      %47 = vector.broadcast %cst_23 : bf16 to vector<512x128xbf16>
      %c0_24 = arith.constant 0 : index
      %c0_25 = arith.constant 0 : index
      %48 = vector.load %arg10[%c0_24, %c0_25] : memref<512x128xbf16, #tpu.memory_space<vmem>>, vector<512x128xbf16>
      tpu.vector_store %arg10[%c0_24, %c0_25], %47 {strides = array<i32>} : memref<512x128xbf16, #tpu.memory_space<vmem>>, vector<512x128xbf16>,
    } else {
    }
    %c3_i32 = arith.constant 3 : i32
    %21 = arith.cmpi eq, %arg0, %c3_i32 : i32
    %c1_i32_8 = arith.constant 1 : i32
    %22 = arith.cmpi eq, %arg1, %c1_i32_8 : i32
    %23 = arith.andi %21, %22 : i1
    %24 = arith.extui %23 : i1 to i32
    %c0_i32_9 = arith.constant 0 : i32
    %25 = arith.cmpi ne, %24, %c0_i32_9 : i32
    scf.if %25 {
      %c0 = arith.constant 0 : index
      %c0_10 = arith.constant 0 : index
      %26 = vector.load %arg12[%c0, %c0_10] : memref<512x128xf32, #tpu.memory_space<vmem>>, vector<512x32xf32>
      %c0_11 = arith.constant 0 : index
      %c0_12 = arith.constant 0 : index
      %27 = vector.load %arg7[%c0_11, %c0_12] : memref<1x128xf32, #tpu.memory_space<vmem>>, vector<1x32xf32>
      %28 = vector.broadcast %27 : vector<1x32xf32> to vector<512x32xf32>
      %29 = arith.addf %26, %28 : vector<512x32xf32>
      %30 = arith.negf %29 : vector<512x32xf32>
      %31 = math.exp %30 : vector<512x32xf32>
      %cst = arith.constant 1.000000e+00 : f32
      %32 = vector.broadcast %cst : f32 to vector<512x32xf32>
      %33 = arith.addf %32, %31 : vector<512x32xf32>
      %34 = arith.divf %32, %33 : vector<512x32xf32>
      %c0_13 = arith.constant 0 : index
      %c64 = arith.constant 64 : index
      %35 = vector.load %arg12[%c0_13, %c64] : memref<512x128xf32, #tpu.memory_space<vmem>>, vector<512x32xf32>
      %c0_14 = arith.constant 0 : index
      %c64_15 = arith.constant 64 : index
      %36 = vector.load %arg7[%c0_14, %c64_15] : memref<1x128xf32, #tpu.memory_space<vmem>>, vector<1x32xf32>
      %37 = vector.broadcast %36 : vector<1x32xf32> to vector<512x32xf32>
      %38 = arith.addf %35, %37 : vector<512x32xf32>
      %c0_16 = arith.constant 0 : index
      %c0_17 = arith.constant 0 : index
      %39 = vector.load %arg13[%c0_16, %c0_17] : memref<512x128xf32, #tpu.memory_space<vmem>>, vector<512x32xf32>
      %40 = arith.addf %38, %39 : vector<512x32xf32>
      %41 = math.tanh %40 : vector<512x32xf32>
      %c0_18 = arith.constant 0 : index
      %c0_19 = arith.constant 0 : index
      %42 = vector.load %arg4[%c0_18, %c0_19] : memref<512x32xbf16, #tpu.memory_space<vmem>>, vector<512x32xbf16>
      %43 = arith.extf %42 : vector<512x32xbf16> to vector<512x32xf32>
      %44 = arith.mulf %34, %43 : vector<512x32xf32>
      %cst_20 = arith.constant 1.000000e+00 : f32
      %45 = vector.broadcast %cst_20 : f32 to vector<512x32xf32>
      %46 = arith.subf %45, %34 : vector<512x32xf32>
      %47 = arith.mulf %46, %41 : vector<512x32xf32>
      %48 = arith.addf %44, %47 : vector<512x32xf32>
      %c0_21 = arith.constant 0 : index
      %c0_22 = arith.constant 0 : index
      %49 = vector.load %arg8[%c0_21, %c0_22] : memref<512x32xf32, #tpu.memory_space<vmem>>, vector<512x32xf32>
      tpu.vector_store %arg8[%c0_21, %c0_22], %48 {strides = array<i32>} : memref<512x32xf32, #tpu.memory_space<vmem>>, vector<512x32xf32>,
    } else {
    }
    return
  }
  func.func @transform_0(%arg0: i32, %arg1: i32) -> (i32, i32, i32) {
    %c0_i32 = arith.constant 0 : i32
    %c0_i32_0 = arith.constant 0 : i32
    %c0_i32_1 = arith.constant 0 : i32
    %c0_i32_2 = arith.constant 0 : i32
    return %c0_i32, %c0_i32_0, %c0_i32_1 : i32, i32, i32
  }
  func.func @transform_1(%arg0: i32, %arg1: i32) -> (i32, i32) {
    %c0_i32 = arith.constant 0 : i32
    %c0_i32_0 = arith.constant 0 : i32
    %c0_i32_1 = arith.constant 0 : i32
    return %c0_i32, %c0_i32_0 : i32, i32
  }
  func.func @transform_2(%arg0: i32, %arg1: i32) -> (i32, i32) {
    %c0_i32 = arith.constant 0 : i32
    %c0_i32_0 = arith.constant 0 : i32
    %c0_i32_1 = arith.constant 0 : i32
    return %c0_i32, %c0_i32_0 : i32, i32
  }
  func.func @transform_3(%arg0: i32, %arg1: i32) -> (i32, i32, i32) {
    %c0_i32 = arith.constant 0 : i32
    %c0_i32_0 = arith.constant 0 : i32
    %c0_i32_1 = arith.constant 0 : i32
    %c0_i32_2 = arith.constant 0 : i32
    return %c0_i32, %c0_i32_0, %c0_i32_1 : i32, i32, i32
  }
  func.func @transform_4(%arg0: i32, %arg1: i32) -> (i32, i32, i32) {
    %c0_i32 = arith.constant 0 : i32
    %c0_i32_0 = arith.constant 0 : i32
    %c0_i32_1 = arith.constant 0 : i32
    %c0_i32_2 = arith.constant 0 : i32
    return %c0_i32, %c0_i32_0, %c0_i32_1 : i32, i32, i32
  }
  func.func @transform_5(%arg0: i32, %arg1: i32) -> (i32, i32) {
    %c0_i32 = arith.constant 0 : i32
    %c0_i32_0 = arith.constant 0 : i32
    %c0_i32_1 = arith.constant 0 : i32
    return %c0_i32, %c0_i32_0 : i32, i32
  }
  func.func @transform_6(%arg0: i32, %arg1: i32) -> (i32, i32) {
    %c0_i32 = arith.constant 0 : i32
    %c0_i32_0 = arith.constant 0 : i32
    %c0_i32_1 = arith.constant 0 : i32
    return %c0_i32, %c0_i32_0 : i32, i32
  }
}

</mosaic_0001>

<llo_original>
// kernel: gconv_gru_cell.1
$region0: #{gconv_gru_cell.1}
  #allocation0 [shape = 'u32[]', space=smem, size = 0x4, offset = 0x4, fixed_abs, tag = 'smem constant byte address 0x4 - core index']
  #allocation1 [shape = 'u32[144,128]{1,0:T(1,128)}', space=vmem, size = 0x12000, scoped, tag = 'internal scratch']
  #allocation2 [shape = 'bf16[512,128]{1,0:T(16,128)(2,1)}', space=vmem, size = 0x20000, scoped, tag = 'scratch operand']
  #allocation3 [shape = 'bf16[512,128]{1,0:T(16,128)(2,1)}', space=vmem, size = 0x20000, scoped, tag = 'scratch operand']
  #allocation4 [shape = 'f32[512,128]{1,0:T(8,128)}', space=vmem, size = 0x40000, scoped, tag = 'scratch operand']
  #allocation5 [shape = 'f32[512,128]{1,0:T(8,128)}', space=vmem, size = 0x40000, scoped, tag = 'scratch operand']
  #allocation6 [shape = 'f32[512,128]{1,0:T(8,128)}', space=vmem, size = 0x40000, scoped, tag = 'scratch operand']
  %s0 = inlined_call_operand.vmem [shape: bf16[2,512,256], index: 0, kind: input, shape index: {}]
  %s1 = inlined_call_operand.vmem [shape: bf16[512,128], index: 1, kind: input, shape index: {}]
  %s2 = inlined_call_operand.vmem [shape: bf16[512,32], index: 2, kind: input, shape index: {}]
  %s3 = inlined_call_operand.vmem [shape: bf16[3,128,128], index: 3, kind: input, shape index: {}]
  %s4 = inlined_call_operand.vmem [shape: bf16[3,128,128], index: 4, kind: input, shape index: {}]
  %s5 = inlined_call_operand.vmem [shape: f32[1,128], index: 5, kind: input, shape index: {}]
  %s6 = inlined_call_operand.vmem [shape: f32[512,32], index: 6, kind: output, shape index: {}]
  %s7 = sld [smem:[#allocation0]]
  $region89: #{gconv_gru_cell.1} parent=0
    _
  %s9 = ssub.s32 1, %s7
  %s10 = scalar_select 0, %s9, %s7
  loop: start=0, step=1, limit=10
  $region2: #{gconv_gru_cell.1} parent=0 // loop_pre_header
    _
  $region3: #{gconv_gru_cell.1} parent=0 // loop_header
    %s12 = sphi 0, %s16
    %p13 = scmp.ge.s32.totalorder %s12, 10
    %s19 = sphi 0, %s31
    %s20 = sphi 0, %s27
    %s21 = sphi 0, %s19
    %s22 = sphi 0, %s20
    %s23 = sphi 0, %s21
    %s24 = sphi 0, %s22
    %s32 = sphi 0, %s32
    %s34 = sphi 0, %s32
    %s35 = sphi 0, %s34
    %s49 = sphi 0, %s35
    %s53 = sphi 0, %s53
    %s55 = sphi 0, %s53
    %s56 = sphi 0, %s55
    %s70 = sphi 0, %s56
    %s74 = sphi 0, %s74
    %s76 = sphi 0, %s74
    %s77 = sphi 0, %s76
    %s91 = sphi 0, %s77
    %s95 = sphi 0, %s95
    %s97 = sphi 0, %s95
    %s98 = sphi 0, %s97
    %s112 = sphi 0, %s98
    %s116 = sphi 0, %s116
    %s118 = sphi 0, %s116
    %s119 = sphi 0, %s118
    %s133 = sphi 0, %s119
    %s137 = sphi 0, %s137
    %s139 = sphi 0, %s137
    %s140 = sphi 0, %s139
    %s154 = sphi 0, %s140
    %s158 = sphi 0, %s158
    %s160 = sphi 0, %s158
    %s161 = sphi 0, %s160
    %s175 = sphi 0, %s161
  $region4: #{gconv_gru_cell.1} parent=0 // loop_header_branch
    %15 = sbr.rel (%p13) target = $region8
  $region5: #{gconv_gru_cell.1} parent=0 // loop_body
    %s17 = ssub.s32 %s12, 1
    %s18 = ssub.s32 %s12, 2
    %s25 = sadd.s32 1, %s20
    %p26 = scmp.ge.s32.totalorder %s25, 2
    %s27 = scalar_select %p26, 0, %s25
    %s28 = sadd.s32 1, %s19
    %s29 = scalar_select %p26, %s28, %s19
    %p30 = scmp.ge.s32.totalorder %s29, 4
    %s31 = scalar_select %p30, 0, %s29
    %s33 = sadd.s32 %s32, 1
    %p36 = scmp.eq.s32.totalorder %s12, 7
    %p37 = scmp.ne.s32.totalorder %s32, %s34
    %p38 = scmp.eq.s32.totalorder %s12, 0
    %p39 = por %p37, %p38
    %p40 = scmp.ne.s32.totalorder %s32, %s34
    %p41 = scmp.eq.s32.totalorder %s17, 7
    %p42 = por %p40, %p41
    %p43 = scmp.ne.s32.totalorder %s34, %s35
    %p44 = scmp.eq.s32.totalorder %s17, 0
    %p45 = por %p43, %p44
    %p46 = scmp.ne.s32.totalorder %s34, %s35
    %p47 = scmp.eq.s32.totalorder %s18, 7
    %p48 = por %p46, %p47
    %p50 = scmp.ne.s32.totalorder %s35, %s49
    %p51 = scmp.eq.s32.totalorder %s18, 0
    %p52 = por %p50, %p51
    %s54 = sadd.s32 %s53, 1
    %p57 = scmp.eq.s32.totalorder %s12, 7
    %p58 = scmp.ne.s32.totalorder %s53, %s55
    %p59 = scmp.eq.s32.totalorder %s12, 0
    %p60 = por %p58, %p59
    %p61 = scmp.ne.s32.totalorder %s53, %s55
    %p62 = scmp.eq.s32.totalorder %s17, 7
    %p63 = por %p61, %p62
    %p64 = scmp.ne.s32.totalorder %s55, %s56
    %p65 = scmp.eq.s32.totalorder %s17, 0
    %p66 = por %p64, %p65
    %p67 = scmp.ne.s32.totalorder %s55, %s56
    %p68 = scmp.eq.s32.totalorder %s18, 7
    %p69 = por %p67, %p68
    %p71 = scmp.ne.s32.totalorder %s56, %s70
    %p72 = scmp.eq.s32.totalorder %s18, 0
    %p73 = por %p71, %p72
    %s75 = sadd.s32 %s74, 1
    %p78 = scmp.eq.s32.totalorder %s12, 7
    %p79 = scmp.ne.s32.totalorder %s74, %s76
    %p80 = scmp.eq.s32.totalorder %s12, 0
    %p81 = por %p79, %p80
    %p82 = scmp.ne.s32.totalorder %s74, %s76
    %p83 = scmp.eq.s32.totalorder %s17, 7
    %p84 = por %p82, %p83
    %p85 = scmp.ne.s32.totalorder %s76, %s77
    %p86 = scmp.eq.s32.totalorder %s17, 0
    %p87 = por %p85, %p86
    %p88 = scmp.ne.s32.totalorder %s76, %s77
    %p89 = scmp.eq.s32.totalorder %s18, 7
    %p90 = por %p88, %p89
    %p92 = scmp.ne.s32.totalorder %s77, %s91
    %p93 = scmp.eq.s32.totalorder %s18, 0
    %p94 = por %p92, %p93
    %s96 = sadd.s32 %s95, 1
    %p99 = scmp.eq.s32.totalorder %s12, 7
    %p100 = scmp.ne.s32.totalorder %s95, %s97
    %p101 = scmp.eq.s32.totalorder %s12, 0
    %p102 = por %p100, %p101
    %p103 = scmp.ne.s32.totalorder %s95, %s97
    %p104 = scmp.eq.s32.totalorder %s17, 7
    %p105 = por %p103, %p104
    %p106 = scmp.ne.s32.totalorder %s97, %s98
    %p107 = scmp.eq.s32.totalorder %s17, 0
    %p108 = por %p106, %p107
    %p109 = scmp.ne.s32.totalorder %s97, %s98
    %p110 = scmp.eq.s32.totalorder %s18, 7
    %p111 = por %p109, %p110
    %p113 = scmp.ne.s32.totalorder %s98, %s112
    %p114 = scmp.eq.s32.totalorder %s18, 0
    %p115 = por %p113, %p114
    %s117 = sadd.s32 %s116, 1
    %p120 = scmp.eq.s32.totalorder %s12, 7
    %p121 = scmp.ne.s32.totalorder %s116, %s118
    %p122 = scmp.eq.s32.totalorder %s12, 0
    %p123 = por %p121, %p122
    %p124 = scmp.ne.s32.totalorder %s116, %s118
    %p125 = scmp.eq.s32.totalorder %s17, 7
    %p126 = por %p124, %p125
    %p127 = scmp.ne.s32.totalorder %s118, %s119
    %p128 = scmp.eq.s32.totalorder %s17, 0
    %p129 = por %p127, %p128
    %p130 = scmp.ne.s32.totalorder %s118, %s119
    %p131 = scmp.eq.s32.totalorder %s18, 7
    %p132 = por %p130, %p131
    %p134 = scmp.ne.s32.totalorder %s119, %s133
    %p135 = scmp.eq.s32.totalorder %s18, 0
    %p136 = por %p134, %p135
    %s138 = sadd.s32 %s137, 1
    %p141 = scmp.eq.s32.totalorder %s12, 7
    %p142 = scmp.ne.s32.totalorder %s137, %s139
    %p143 = scmp.eq.s32.totalorder %s12, 0
    %p144 = por %p142, %p143
    %p145 = scmp.ne.s32.totalorder %s137, %s139
    %p146 = scmp.eq.s32.totalorder %s17, 7
    %p147 = por %p145, %p146
    %p148 = scmp.ne.s32.totalorder %s139, %s140
    %p149 = scmp.eq.s32.totalorder %s17, 0
    %p150 = por %p148, %p149
    %p151 = scmp.ne.s32.totalorder %s139, %s140
    %p152 = scmp.eq.s32.totalorder %s18, 7
    %p153 = por %p151, %p152
    %p155 = scmp.ne.s32.totalorder %s140, %s154
    %p156 = scmp.eq.s32.totalorder %s18, 0
    %p157 = por %p155, %p156
    %s159 = sadd.s32 %s158, 1
    %p162 = scmp.eq.s32.totalorder %s12, 7
    %p163 = scmp.ne.s32.totalorder %s158, %s160
    %p164 = scmp.eq.s32.totalorder %s12, 0
    %p165 = por %p163, %p164
    %p166 = scmp.ne.s32.totalorder %s158, %s160
    %p167 = scmp.eq.s32.totalorder %s17, 7
    %p168 = por %p166, %p167
    %p169 = scmp.ne.s32.totalorder %s160, %s161
    %p170 = scmp.eq.s32.totalorder %s17, 0
    %p171 = por %p169, %p170
    %p172 = scmp.ne.s32.totalorder %s160, %s161
    %p173 = scmp.eq.s32.totalorder %s18, 7
    %p174 = por %p172, %p173
    %p176 = scmp.ne.s32.totalorder %s161, %s175
    %p177 = scmp.eq.s32.totalorder %s18, 0
    %p178 = por %p176, %p177
    %p179 = scmp.le.s32.totalorder 1, %s12
    %p180 = scmp.lt.s32.totalorder %s12, 9
    %p181 = pnand %p179, %p180
    %p182 = pneg %p181
    // Predicated region
    $region9: #{gconv_gru_cell.1} parent=5 // pred_check
      _
    $region10: #{gconv_gru_cell.1} parent=5 // pred_check_branch
      %184 = sbr.rel (%p181) target = $region12
    $region11: #{gconv_gru_cell.1} parent=5 // pred_region
      %s185 = ssub.s32 %s12, 1
      // Predicated region
      $region13: #{gconv_gru_cell.1} parent=11 // pred_check
        %p186 = pneg %p45
      $region14: #{gconv_gru_cell.1} parent=11 // pred_check_branch
        %188 = sbr.rel (%p186) target = $region16
      $region15: #{gconv_gru_cell.1} parent=11 // pred_region
        _
      $region16: #{gconv_gru_cell.1} parent=11 // pred_fallthru
        _
      // Predicated region
      $region17: #{gconv_gru_cell.1} parent=11 // pred_check
        %p189 = pneg %p66
      $region18: #{gconv_gru_cell.1} parent=11 // pred_check_branch
        %191 = sbr.rel (%p189) target = $region20
      $region19: #{gconv_gru_cell.1} parent=11 // pred_region
        _
      $region20: #{gconv_gru_cell.1} parent=11 // pred_fallthru
        _
      // Predicated region
      $region21: #{gconv_gru_cell.1} parent=11 // pred_check
        %p192 = pneg %p87
      $region22: #{gconv_gru_cell.1} parent=11 // pred_check_branch
        %194 = sbr.rel (%p192) target = $region24
      $region23: #{gconv_gru_cell.1} parent=11 // pred_region
        _
      $region24: #{gconv_gru_cell.1} parent=11 // pred_fallthru
        _
      // Predicated region
      $region25: #{gconv_gru_cell.1} parent=11 // pred_check
        %p195 = pneg %p108
      $region26: #{gconv_gru_cell.1} parent=11 // pred_check_branch
        %197 = sbr.rel (%p195) target = $region28
      $region27: #{gconv_gru_cell.1} parent=11 // pred_region
        _
      $region28: #{gconv_gru_cell.1} parent=11 // pred_fallthru
        _
      // Predicated region
      $region29: #{gconv_gru_cell.1} parent=11 // pred_check
        %p198 = pneg %p129
      $region30: #{gconv_gru_cell.1} parent=11 // pred_check_branch
        %200 = sbr.rel (%p198) target = $region32
      $region31: #{gconv_gru_cell.1} parent=11 // pred_region
        _
      $region32: #{gconv_gru_cell.1} parent=11 // pred_fallthru
        _
      // Predicated region
      $region33: #{gconv_gru_cell.1} parent=11 // pred_check
        %p201 = pneg %p150
      $region34: #{gconv_gru_cell.1} parent=11 // pred_check_branch
        %203 = sbr.rel (%p201) target = $region36
      $region35: #{gconv_gru_cell.1} parent=11 // pred_region
        _
      $region36: #{gconv_gru_cell.1} parent=11 // pred_fallthru
        _
    $region12: #{gconv_gru_cell.1} parent=5 // pred_fallthru
      _
    %p204 = scmp.lt.s32.totalorder %s12, 8
    // Predicated region
    $region37: #{gconv_gru_cell.1} parent=5 // pred_check
      %p205 = pneg %p204
    $region38: #{gconv_gru_cell.1} parent=5 // pred_check_branch
      %207 = sbr.rel (%p205) target = $region40
    $region39: #{gconv_gru_cell.1} parent=5 // pred_region
      _
    $region40: #{gconv_gru_cell.1} parent=5 // pred_fallthru
      _
    %p208 = scmp.le.s32.totalorder 1, %s12
    %p209 = scmp.lt.s32.totalorder %s12, 9
    %p210 = pnand %p208, %p209
    %p211 = pneg %p210
    // Predicated region
    $region41: #{gconv_gru_cell.1} parent=5 // pred_check
      _
    $region42: #{gconv_gru_cell.1} parent=5 // pred_check_branch
      %213 = sbr.rel (%p210) target = $region44
    $region43: #{gconv_gru_cell.1} parent=5 // pred_region
      %s214 = ssub.s32 %s12, 1
      %p215 = pneg %p45
      %p216 = pneg %p42
      %p217 = pneg %p66
      %p218 = pneg %p63
      %p219 = pneg %p87
      %p220 = pneg %p84
      %p221 = pneg %p108
      %p222 = pneg %p105
      %p223 = pneg %p129
      %p224 = pneg %p126
      %p225 = pneg %p150
      %p226 = pneg %p147
      %p227 = pneg %p171
      %p228 = pneg %p168
      %p230 = scmp.eq.s32.totalorder %s21, 0
      %p231 = scmp.eq.s32.totalorder %s22, 0
      %p232 = pnand %p230, %p231
      %p233 = pneg %p232
      // Predicated region
      $region45: #{gconv_gru_cell.1} parent=43 // pred_check
        _
      $region46: #{gconv_gru_cell.1} parent=43 // pred_check_branch
        %235 = sbr.rel (%p232) target = $region48
      $region47: #{gconv_gru_cell.1} parent=43 // pred_region
        %v236 = vld [vmem:[%s1] sm:$0xf]
        %v237 = vld [vmem:[%s1 + $0x4] sm:$0xf]
        %v238 = vld [vmem:[%s1 + $0x8] sm:$0xf]
        %v239 = vld [vmem:[%s1 + $0xc] sm:$0xf]
        %v240 = vld [vmem:[%s1 + $0x10] sm:$0xf]
        %v241 = vld [vmem:[%s1 + $0x14] sm:$0xf]
        %v242 = vld [vmem:[%s1 + $0x18] sm:$0xf]
        %v243 = vld [vmem:[%s1 + $0x1c] sm:$0xf]
        %v244 = vld [vmem:[%s1 + $0x20] sm:$0xf]
        %v245 = vld [vmem:[%s1 + $0x24] sm:$0xf]
        %v246 = vld [vmem:[%s1 + $0x28] sm:$0xf]
        %v247 = vld [vmem:[%s1 + $0x2c] sm:$0xf]
        %v248 = vld [vmem:[%s1 + $0x30] sm:$0xf]
        %v249 = vld [vmem:[%s1 + $0x34] sm:$0xf]
        %v250 = vld [vmem:[%s1 + $0x38] sm:$0xf]
        %v251 = vld [vmem:[%s1 + $0x3c] sm:$0xf]
        %v252 = vld [vmem:[%s1 + $0x40] sm:$0xf]
        %v253 = vld [vmem:[%s1 + $0x44] sm:$0xf]
        %v254 = vld [vmem:[%s1 + $0x48] sm:$0xf]
        %v255 = vld [vmem:[%s1 + $0x4c] sm:$0xf]
        %v256 = vld [vmem:[%s1 + $0x50] sm:$0xf]
        %v257 = vld [vmem:[%s1 + $0x54] sm:$0xf]
        %v258 = vld [vmem:[%s1 + $0x58] sm:$0xf]
        %v259 = vld [vmem:[%s1 + $0x5c] sm:$0xf]
        %v260 = vld [vmem:[%s1 + $0x60] sm:$0xf]
        %v261 = vld [vmem:[%s1 + $0x64] sm:$0xf]
        %v262 = vld [vmem:[%s1 + $0x68] sm:$0xf]
        %v263 = vld [vmem:[%s1 + $0x6c] sm:$0xf]
        %v264 = vld [vmem:[%s1 + $0x70] sm:$0xf]
        %v265 = vld [vmem:[%s1 + $0x74] sm:$0xf]
        %v266 = vld [vmem:[%s1 + $0x78] sm:$0xf]
        %v267 = vld [vmem:[%s1 + $0x7c] sm:$0xf]
        %v268 = vld [vmem:[%s1 + $0x80] sm:$0xf]
        %v269 = vld [vmem:[%s1 + $0x84] sm:$0xf]
        %v270 = vld [vmem:[%s1 + $0x88] sm:$0xf]
        %v271 = vld [vmem:[%s1 + $0x8c] sm:$0xf]
        %v272 = vld [vmem:[%s1 + $0x90] sm:$0xf]
        %v273 = vld [vmem:[%s1 + $0x94] sm:$0xf]
        %v274 = vld [vmem:[%s1 + $0x98] sm:$0xf]
        %v275 = vld [vmem:[%s1 + $0x9c] sm:$0xf]
        %v276 = vld [vmem:[%s1 + $0xa0] sm:$0xf]
        %v277 = vld [vmem:[%s1 + $0xa4] sm:$0xf]
        %v278 = vld [vmem:[%s1 + $0xa8] sm:$0xf]
        %v279 = vld [vmem:[%s1 + $0xac] sm:$0xf]
        %v280 = vld [vmem:[%s1 + $0xb0] sm:$0xf]
        %v281 = vld [vmem:[%s1 + $0xb4] sm:$0xf]
        %v282 = vld [vmem:[%s1 + $0xb8] sm:$0xf]
        %v283 = vld [vmem:[%s1 + $0xbc] sm:$0xf]
        %v284 = vld [vmem:[%s1 + $0xc0] sm:$0xf]
        %v285 = vld [vmem:[%s1 + $0xc4] sm:$0xf]
        %v286 = vld [vmem:[%s1 + $0xc8] sm:$0xf]
        %v287 = vld [vmem:[%s1 + $0xcc] sm:$0xf]
        %v288 = vld [vmem:[%s1 + $0xd0] sm:$0xf]
        %v289 = vld [vmem:[%s1 + $0xd4] sm:$0xf]
        %v290 = vld [vmem:[%s1 + $0xd8] sm:$0xf]
        %v291 = vld [vmem:[%s1 + $0xdc] sm:$0xf]
        %v292 = vld [vmem:[%s1 + $0xe0] sm:$0xf]
        %v293 = vld [vmem:[%s1 + $0xe4] sm:$0xf]
        %v294 = vld [vmem:[%s1 + $0xe8] sm:$0xf]
        %v295 = vld [vmem:[%s1 + $0xec] sm:$0xf]
        %v296 = vld [vmem:[%s1 + $0xf0] sm:$0xf]
        %v297 = vld [vmem:[%s1 + $0xf4] sm:$0xf]
        %v298 = vld [vmem:[%s1 + $0xf8] sm:$0xf]
        %v299 = vld [vmem:[%s1 + $0xfc] sm:$0xf]
        %v364 = vunpack.c.l.b16 %v236
        %v365 = vunpack.c.l.b16 %v237
        %v366 = vunpack.c.l.b16 %v238
        %v367 = vunpack.c.l.b16 %v239
        %v368 = vunpack.c.l.b16 %v240
        %v369 = vunpack.c.l.b16 %v241
        %v370 = vunpack.c.l.b16 %v242
        %v371 = vunpack.c.l.b16 %v243
        %v372 = vunpack.c.l.b16 %v244
        %v373 = vunpack.c.l.b16 %v245
        %v374 = vunpack.c.l.b16 %v246
        %v375 = vunpack.c.l.b16 %v247
        %v376 = vunpack.c.l.b16 %v248
        %v377 = vunpack.c.l.b16 %v249
        %v378 = vunpack.c.l.b16 %v250
        %v379 = vunpack.c.l.b16 %v251
        %v380 = vunpack.c.l.b16 %v252
        %v381 = vunpack.c.l.b16 %v253
        %v382 = vunpack.c.l.b16 %v254
        %v383 = vunpack.c.l.b16 %v255
        %v384 = vunpack.c.l.b16 %v256
        %v385 = vunpack.c.l.b16 %v257
        %v386 = vunpack.c.l.b16 %v258
        %v387 = vunpack.c.l.b16 %v259
        %v388 = vunpack.c.l.b16 %v260
        %v389 = vunpack.c.l.b16 %v261
        %v390 = vunpack.c.l.b16 %v262
        %v391 = vunpack.c.l.b16 %v263
        %v392 = vunpack.c.l.b16 %v264
        %v393 = vunpack.c.l.b16 %v265
        %v394 = vunpack.c.l.b16 %v266
        %v395 = vunpack.c.l.b16 %v267
        %v396 = vunpack.c.l.b16 %v268
        %v397 = vunpack.c.l.b16 %v269
        %v398 = vunpack.c.l.b16 %v270
        %v399 = vunpack.c.l.b16 %v271
        %v400 = vunpack.c.l.b16 %v272
        %v401 = vunpack.c.l.b16 %v273
        %v402 = vunpack.c.l.b16 %v274
        %v403 = vunpack.c.l.b16 %v275
        %v404 = vunpack.c.l.b16 %v276
        %v405 = vunpack.c.l.b16 %v277
        %v406 = vunpack.c.l.b16 %v278
        %v407 = vunpack.c.l.b16 %v279
        %v408 = vunpack.c.l.b16 %v280
        %v409 = vunpack.c.l.b16 %v281
        %v410 = vunpack.c.l.b16 %v282
        %v411 = vunpack.c.l.b16 %v283
        %v412 = vunpack.c.l.b16 %v284
        %v413 = vunpack.c.l.b16 %v285
        %v414 = vunpack.c.l.b16 %v286
        %v415 = vunpack.c.l.b16 %v287
        %v416 = vunpack.c.l.b16 %v288
        %v417 = vunpack.c.l.b16 %v289
        %v418 = vunpack.c.l.b16 %v290
        %v419 = vunpack.c.l.b16 %v291
        %v420 = vunpack.c.l.b16 %v292
        %v421 = vunpack.c.l.b16 %v293
        %v422 = vunpack.c.l.b16 %v294
        %v423 = vunpack.c.l.b16 %v295
        %v424 = vunpack.c.l.b16 %v296
        %v425 = vunpack.c.l.b16 %v297
        %v426 = vunpack.c.l.b16 %v298
        %v427 = vunpack.c.l.b16 %v299
        %v428 = vpack.c.b16 %v365, %v364
        %v429 = vpack.c.b16 %v367, %v366
        %v430 = vpack.c.b16 %v369, %v368
        %v431 = vpack.c.b16 %v371, %v370
        %v432 = vpack.c.b16 %v373, %v372
        %v433 = vpack.c.b16 %v375, %v374
        %v434 = vpack.c.b16 %v377, %v376
        %v435 = vpack.c.b16 %v379, %v378
        %v436 = vpack.c.b16 %v381, %v380
        %v437 = vpack.c.b16 %v383, %v382
        %v438 = vpack.c.b16 %v385, %v384
        %v439 = vpack.c.b16 %v387, %v386
        %v440 = vpack.c.b16 %v389, %v388
        %v441 = vpack.c.b16 %v391, %v390
        %v442 = vpack.c.b16 %v393, %v392
        %v443 = vpack.c.b16 %v395, %v394
        %v444 = vpack.c.b16 %v397, %v396
        %v445 = vpack.c.b16 %v399, %v398
        %v446 = vpack.c.b16 %v401, %v400
        %v447 = vpack.c.b16 %v403, %v402
        %v448 = vpack.c.b16 %v405, %v404
        %v449 = vpack.c.b16 %v407, %v406
        %v450 = vpack.c.b16 %v409, %v408
        %v451 = vpack.c.b16 %v411, %v410
        %v452 = vpack.c.b16 %v413, %v412
        %v453 = vpack.c.b16 %v415, %v414
        %v454 = vpack.c.b16 %v417, %v416
        %v455 = vpack.c.b16 %v419, %v418
        %v456 = vpack.c.b16 %v421, %v420
        %v457 = vpack.c.b16 %v423, %v422
        %v458 = vpack.c.b16 %v425, %v424
        %v459 = vpack.c.b16 %v427, %v426
        %492 = vst [vmem:[#allocation2] sm:$0xff] %v428
        %493 = vst [vmem:[#allocation2 + $0x8] sm:$0xff] %v429
        %494 = vst [vmem:[#allocation2 + $0x10] sm:$0xff] %v430
        %495 = vst [vmem:[#allocation2 + $0x18] sm:$0xff] %v431
        %496 = vst [vmem:[#allocation2 + $0x20] sm:$0xff] %v432
        %497 = vst [vmem:[#allocation2 + $0x28] sm:$0xff] %v433
        %498 = vst [vmem:[#allocation2 + $0x30] sm:$0xff] %v434
        %499 = vst [vmem:[#allocation2 + $0x38] sm:$0xff] %v435
        %500 = vst [vmem:[#allocation2 + $0x40] sm:$0xff] %v436
        %501 = vst [vmem:[#allocation2 + $0x48] sm:$0xff] %v437
        %502 = vst [vmem:[#allocation2 + $0x50] sm:$0xff] %v438
        %503 = vst [vmem:[#allocation2 + $0x58] sm:$0xff] %v439
        %504 = vst [vmem:[#allocation2 + $0x60] sm:$0xff] %v440
        %505 = vst [vmem:[#allocation2 + $0x68] sm:$0xff] %v441
        %506 = vst [vmem:[#allocation2 + $0x70] sm:$0xff] %v442
        %507 = vst [vmem:[#allocation2 + $0x78] sm:$0xff] %v443
        %508 = vst [vmem:[#allocation2 + $0x80] sm:$0xff] %v444
        %509 = vst [vmem:[#allocation2 + $0x88] sm:$0xff] %v445
        %510 = vst [vmem:[#allocation2 + $0x90] sm:$0xff] %v446
        %511 = vst [vmem:[#allocation2 + $0x98] sm:$0xff] %v447
        %512 = vst [vmem:[#allocation2 + $0xa0] sm:$0xff] %v448
        %513 = vst [vmem:[#allocation2 + $0xa8] sm:$0xff] %v449
        %514 = vst [vmem:[#allocation2 + $0xb0] sm:$0xff] %v450
        %515 = vst [vmem:[#allocation2 + $0xb8] sm:$0xff] %v451
        %516 = vst [vmem:[#allocation2 + $0xc0] sm:$0xff] %v452
        %517 = vst [vmem:[#allocation2 + $0xc8] sm:$0xff] %v453
        %518 = vst [vmem:[#allocation2 + $0xd0] sm:$0xff] %v454
        %519 = vst [vmem:[#allocation2 + $0xd8] sm:$0xff] %v455
        %520 = vst [vmem:[#allocation2 + $0xe0] sm:$0xff] %v456
        %521 = vst [vmem:[#allocation2 + $0xe8] sm:$0xff] %v457
        %522 = vst [vmem:[#allocation2 + $0xf0] sm:$0xff] %v458
        %523 = vst [vmem:[#allocation2 + $0xf8] sm:$0xff] %v459
        %524 = vst [vmem:[#allocation3] sm:$0xff] 0
        %525 = vst [vmem:[#allocation3 + $0x8] sm:$0xff] 0
        %526 = vst [vmem:[#allocation3 + $0x10] sm:$0xff] 0
        %527 = vst [vmem:[#allocation3 + $0x18] sm:$0xff] 0
        %528 = vst [vmem:[#allocation3 + $0x20] sm:$0xff] 0
        %529 = vst [vmem:[#allocation3 + $0x28] sm:$0xff] 0
        %530 = vst [vmem:[#allocation3 + $0x30] sm:$0xff] 0
        %531 = vst [vmem:[#allocation3 + $0x38] sm:$0xff] 0
        %532 = vst [vmem:[#allocation3 + $0x40] sm:$0xff] 0
        %533 = vst [vmem:[#allocation3 + $0x48] sm:$0xff] 0
        %534 = vst [vmem:[#allocation3 + $0x50] sm:$0xff] 0
        %535 = vst [vmem:[#allocation3 + $0x58] sm:$0xff] 0
        %536 = vst [vmem:[#allocation3 + $0x60] sm:$0xff] 0
        %537 = vst [vmem:[#allocation3 + $0x68] sm:$0xff] 0
        %538 = vst [vmem:[#allocation3 + $0x70] sm:$0xff] 0
        %539 = vst [vmem:[#allocation3 + $0x78] sm:$0xff] 0
        %540 = vst [vmem:[#allocation3 + $0x80] sm:$0xff] 0
        %541 = vst [vmem:[#allocation3 + $0x88] sm:$0xff] 0
        %542 = vst [vmem:[#allocation3 + $0x90] sm:$0xff] 0
        %543 = vst [vmem:[#allocation3 + $0x98] sm:$0xff] 0
        %544 = vst [vmem:[#allocation3 + $0xa0] sm:$0xff] 0
        %545 = vst [vmem:[#allocation3 + $0xa8] sm:$0xff] 0
        %546 = vst [vmem:[#allocation3 + $0xb0] sm:$0xff] 0
        %547 = vst [vmem:[#allocation3 + $0xb8] sm:$0xff] 0
        %548 = vst [vmem:[#allocation3 + $0xc0] sm:$0xff] 0
        %549 = vst [vmem:[#allocation3 + $0xc8] sm:$0xff] 0
        %550 = vst [vmem:[#allocation3 + $0xd0] sm:$0xff] 0
        %551 = vst [vmem:[#allocation3 + $0xd8] sm:$0xff] 0
        %552 = vst [vmem:[#allocation3 + $0xe0] sm:$0xff] 0
        %553 = vst [vmem:[#allocation3 + $0xe8] sm:$0xff] 0
        %554 = vst [vmem:[#allocation3 + $0xf0] sm:$0xff] 0
        %555 = vst [vmem:[#allocation3 + $0xf8] sm:$0xff] 0
        %556 = vst [vmem:[#allocation4] sm:$0xff] 0.0
        %557 = vst [vmem:[#allocation4 + $0x8] sm:$0xff] 0.0
        %558 = vst [vmem:[#allocation4 + $0x10] sm:$0xff] 0.0
        %559 = vst [vmem:[#allocation4 + $0x18] sm:$0xff] 0.0
        %560 = vst [vmem:[#allocation4 + $0x20] sm:$0xff] 0.0
        %561 = vst [vmem:[#allocation4 + $0x28] sm:$0xff] 0.0
        %562 = vst [vmem:[#allocation4 + $0x30] sm:$0xff] 0.0
        %563 = vst [vmem:[#allocation4 + $0x38] sm:$0xff] 0.0
        %564 = vst [vmem:[#allocation4 + $0x40] sm:$0xff] 0.0
        %565 = vst [vmem:[#allocation4 + $0x48] sm:$0xff] 0.0
        %566 = vst [vmem:[#allocation4 + $0x50] sm:$0xff] 0.0
        %567 = vst [vmem:[#allocation4 + $0x58] sm:$0xff] 0.0
        %568 = vst [vmem:[#allocation4 + $0x60] sm:$0xff] 0.0
        %569 = vst [vmem:[#allocation4 + $0x68] sm:$0xff] 0.0
        %570 = vst [vmem:[#allocation4 + $0x70] sm:$0xff] 0.0
        %571 = vst [vmem:[#allocation4 + $0x78] sm:$0xff] 0.0
        %572 = vst [vmem:[#allocation4 + $0x80] sm:$0xff] 0.0
        %573 = vst [vmem:[#allocation4 + $0x88] sm:$0xff] 0.0
        %574 = vst [vmem:[#allocation4 + $0x90] sm:$0xff] 0.0
        %575 = vst [vmem:[#allocation4 + $0x98] sm:$0xff] 0.0
        %576 = vst [vmem:[#allocation4 + $0xa0] sm:$0xff] 0.0
        %577 = vst [vmem:[#allocation4 + $0xa8] sm:$0xff] 0.0
        %578 = vst [vmem:[#allocation4 + $0xb0] sm:$0xff] 0.0
        %579 = vst [vmem:[#allocation4 + $0xb8] sm:$0xff] 0.0
        %580 = vst [vmem:[#allocation4 + $0xc0] sm:$0xff] 0.0
        %581 = vst [vmem:[#allocation4 + $0xc8] sm:$0xff] 0.0
        %582 = vst [vmem:[#allocation4 + $0xd0] sm:$0xff] 0.0
        %583 = vst [vmem:[#allocation4 + $0xd8] sm:$0xff] 0.0
        %584 = vst [vmem:[#allocation4 + $0xe0] sm:$0xff] 0.0
        %585 = vst [vmem:[#allocation4 + $0xe8] sm:$0xff] 0.0
        %586 = vst [vmem:[#allocation4 + $0xf0] sm:$0xff] 0.0
        %587 = vst [vmem:[#allocation4 + $0xf8] sm:$0xff] 0.0
        %588 = vst [vmem:[#allocation4 + $0x100] sm:$0xff] 0.0
        %589 = vst [vmem:[#allocation4 + $0x108] sm:$0xff] 0.0
        %590 = vst [vmem:[#allocation4 + $0x110] sm:$0xff] 0.0
        %591 = vst [vmem:[#allocation4 + $0x118] sm:$0xff] 0.0
        %592 = vst [vmem:[#allocation4 + $0x120] sm:$0xff] 0.0
        %593 = vst [vmem:[#allocation4 + $0x128] sm:$0xff] 0.0
        %594 = vst [vmem:[#allocation4 + $0x130] sm:$0xff] 0.0
        %595 = vst [vmem:[#allocation4 + $0x138] sm:$0xff] 0.0
        %596 = vst [vmem:[#allocation4 + $0x140] sm:$0xff] 0.0
        %597 = vst [vmem:[#allocation4 + $0x148] sm:$0xff] 0.0
        %598 = vst [vmem:[#allocation4 + $0x150] sm:$0xff] 0.0
        %599 = vst [vmem:[#allocation4 + $0x158] sm:$0xff] 0.0
        %600 = vst [vmem:[#allocation4 + $0x160] sm:$0xff] 0.0
        %601 = vst [vmem:[#allocation4 + $0x168] sm:$0xff] 0.0
        %602 = vst [vmem:[#allocation4 + $0x170] sm:$0xff] 0.0
        %603 = vst [vmem:[#allocation4 + $0x178] sm:$0xff] 0.0
        %604 = vst [vmem:[#allocation4 + $0x180] sm:$0xff] 0.0
        %605 = vst [vmem:[#allocation4 + $0x188] sm:$0xff] 0.0
        %606 = vst [vmem:[#allocation4 + $0x190] sm:$0xff] 0.0
        %607 = vst [vmem:[#allocation4 + $0x198] sm:$0xff] 0.0
        %608 = vst [vmem:[#allocation4 + $0x1a0] sm:$0xff] 0.0
        %609 = vst [vmem:[#allocation4 + $0x1a8] sm:$0xff] 0.0
        %610 = vst [vmem:[#allocation4 + $0x1b0] sm:$0xff] 0.0
        %611 = vst [vmem:[#allocation4 + $0x1b8] sm:$0xff] 0.0
        %612 = vst [vmem:[#allocation4 + $0x1c0] sm:$0xff] 0.0
        %613 = vst [vmem:[#allocation4 + $0x1c8] sm:$0xff] 0.0
        %614 = vst [vmem:[#allocation4 + $0x1d0] sm:$0xff] 0.0
        %615 = vst [vmem:[#allocation4 + $0x1d8] sm:$0xff] 0.0
        %616 = vst [vmem:[#allocation4 + $0x1e0] sm:$0xff] 0.0
        %617 = vst [vmem:[#allocation4 + $0x1e8] sm:$0xff] 0.0
        %618 = vst [vmem:[#allocation4 + $0x1f0] sm:$0xff] 0.0
        %619 = vst [vmem:[#allocation4 + $0x1f8] sm:$0xff] 0.0
        %620 = vst [vmem:[#allocation6] sm:$0xff] 0.0
        %621 = vst [vmem:[#allocation6 + $0x8] sm:$0xff] 0.0
        %622 = vst [vmem:[#allocation6 + $0x10] sm:$0xff] 0.0
        %623 = vst [vmem:[#allocation6 + $0x18] sm:$0xff] 0.0
        %624 = vst [vmem:[#allocation6 + $0x20] sm:$0xff] 0.0
        %625 = vst [vmem:[#allocation6 + $0x28] sm:$0xff] 0.0
        %626 = vst [vmem:[#allocation6 + $0x30] sm:$0xff] 0.0
        %627 = vst [vmem:[#allocation6 + $0x38] sm:$0xff] 0.0
        %628 = vst [vmem:[#allocation6 + $0x40] sm:$0xff] 0.0
        %629 = vst [vmem:[#allocation6 + $0x48] sm:$0xff] 0.0
        %630 = vst [vmem:[#allocation6 + $0x50] sm:$0xff] 0.0
        %631 = vst [vmem:[#allocation6 + $0x58] sm:$0xff] 0.0
        %632 = vst [vmem:[#allocation6 + $0x60] sm:$0xff] 0.0
        %633 = vst [vmem:[#allocation6 + $0x68] sm:$0xff] 0.0
        %634 = vst [vmem:[#allocation6 + $0x70] sm:$0xff] 0.0
        %635 = vst [vmem:[#allocation6 + $0x78] sm:$0xff] 0.0
        %636 = vst [vmem:[#allocation6 + $0x80] sm:$0xff] 0.0
        %637 = vst [vmem:[#allocation6 + $0x88] sm:$0xff] 0.0
        %638 = vst [vmem:[#allocation6 + $0x90] sm:$0xff] 0.0
        %639 = vst [vmem:[#allocation6 + $0x98] sm:$0xff] 0.0
        %640 = vst [vmem:[#allocation6 + $0xa0] sm:$0xff] 0.0
        %641 = vst [vmem:[#allocation6 + $0xa8] sm:$0xff] 0.0
        %642 = vst [vmem:[#allocation6 + $0xb0] sm:$0xff] 0.0
        %643 = vst [vmem:[#allocation6 + $0xb8] sm:$0xff] 0.0
        %644 = vst [vmem:[#allocation6 + $0xc0] sm:$0xff] 0.0
        %645 = vst [vmem:[#allocation6 + $0xc8] sm:$0xff] 0.0
        %646 = vst [vmem:[#allocation6 + $0xd0] sm:$0xff] 0.0
        %647 = vst [vmem:[#allocation6 + $0xd8] sm:$0xff] 0.0
        %648 = vst [vmem:[#allocation6 + $0xe0] sm:$0xff] 0.0
        %649 = vst [vmem:[#allocation6 + $0xe8] sm:$0xff] 0.0
        %650 = vst [vmem:[#allocation6 + $0xf0] sm:$0xff] 0.0
        %651 = vst [vmem:[#allocation6 + $0xf8] sm:$0xff] 0.0
        %652 = vst [vmem:[#allocation6 + $0x100] sm:$0xff] 0.0
        %653 = vst [vmem:[#allocation6 + $0x108] sm:$0xff] 0.0
        %654 = vst [vmem:[#allocation6 + $0x110] sm:$0xff] 0.0
        %655 = vst [vmem:[#allocation6 + $0x118] sm:$0xff] 0.0
        %656 = vst [vmem:[#allocation6 + $0x120] sm:$0xff] 0.0
        %657 = vst [vmem:[#allocation6 + $0x128] sm:$0xff] 0.0
        %658 = vst [vmem:[#allocation6 + $0x130] sm:$0xff] 0.0
        %659 = vst [vmem:[#allocation6 + $0x138] sm:$0xff] 0.0
        %660 = vst [vmem:[#allocation6 + $0x140] sm:$0xff] 0.0
        %661 = vst [vmem:[#allocation6 + $0x148] sm:$0xff] 0.0
        %662 = vst [vmem:[#allocation6 + $0x150] sm:$0xff] 0.0
        %663 = vst [vmem:[#allocation6 + $0x158] sm:$0xff] 0.0
        %664 = vst [vmem:[#allocation6 + $0x160] sm:$0xff] 0.0
        %665 = vst [vmem:[#allocation6 + $0x168] sm:$0xff] 0.0
        %666 = vst [vmem:[#allocation6 + $0x170] sm:$0xff] 0.0
        %667 = vst [vmem:[#allocation6 + $0x178] sm:$0xff] 0.0
        %668 = vst [vmem:[#allocation6 + $0x180] sm:$0xff] 0.0
        %669 = vst [vmem:[#allocation6 + $0x188] sm:$0xff] 0.0
        %670 = vst [vmem:[#allocation6 + $0x190] sm:$0xff] 0.0
        %671 = vst [vmem:[#allocation6 + $0x198] sm:$0xff] 0.0
        %672 = vst [vmem:[#allocation6 + $0x1a0] sm:$0xff] 0.0
        %673 = vst [vmem:[#allocation6 + $0x1a8] sm:$0xff] 0.0
        %674 = vst [vmem:[#allocation6 + $0x1b0] sm:$0xff] 0.0
        %675 = vst [vmem:[#allocation6 + $0x1b8] sm:$0xff] 0.0
        %676 = vst [vmem:[#allocation6 + $0x1c0] sm:$0xff] 0.0
        %677 = vst [vmem:[#allocation6 + $0x1c8] sm:$0xff] 0.0
        %678 = vst [vmem:[#allocation6 + $0x1d0] sm:$0xff] 0.0
        %679 = vst [vmem:[#allocation6 + $0x1d8] sm:$0xff] 0.0
        %680 = vst [vmem:[#allocation6 + $0x1e0] sm:$0xff] 0.0
        %681 = vst [vmem:[#allocation6 + $0x1e8] sm:$0xff] 0.0
        %682 = vst [vmem:[#allocation6 + $0x1f0] sm:$0xff] 0.0
        %683 = vst [vmem:[#allocation6 + $0x1f8] sm:$0xff] 0.0
        %v684 = vld [vmem:[%s3] sm:$0xf]
        %v685 = vld [vmem:[%s3 + $0x4] sm:$0xf]
        %v686 = vld [vmem:[%s3 + $0x8] sm:$0xf]
        %v687 = vld [vmem:[%s3 + $0xc] sm:$0xf]
        %v688 = vld [vmem:[%s3 + $0x10] sm:$0xf]
        %v689 = vld [vmem:[%s3 + $0x14] sm:$0xf]
        %v690 = vld [vmem:[%s3 + $0x18] sm:$0xf]
        %v691 = vld [vmem:[%s3 + $0x1c] sm:$0xf]
        %v692 = vld [vmem:[%s3 + $0x20] sm:$0xf]
        %v693 = vld [vmem:[%s3 + $0x24] sm:$0xf]
        %v694 = vld [vmem:[%s3 + $0x28] sm:$0xf]
        %v695 = vld [vmem:[%s3 + $0x2c] sm:$0xf]
        %v696 = vld [vmem:[%s3 + $0x30] sm:$0xf]
        %v697 = vld [vmem:[%s3 + $0x34] sm:$0xf]
        %v698 = vld [vmem:[%s3 + $0x38] sm:$0xf]
        %v699 = vld [vmem:[%s3 + $0x3c] sm:$0xf]
        %v716 = vunpack.c.l.b16 %v684
        %v717 = vunpack.c.l.b16 %v685
        %v718 = vunpack.c.l.b16 %v686
        %v719 = vunpack.c.l.b16 %v687
        %v720 = vunpack.c.l.b16 %v688
        %v721 = vunpack.c.l.b16 %v689
        %v722 = vunpack.c.l.b16 %v690
        %v723 = vunpack.c.l.b16 %v691
        %v724 = vunpack.c.l.b16 %v692
        %v725 = vunpack.c.l.b16 %v693
        %v726 = vunpack.c.l.b16 %v694
        %v727 = vunpack.c.l.b16 %v695
        %v728 = vunpack.c.l.b16 %v696
        %v729 = vunpack.c.l.b16 %v697
        %v730 = vunpack.c.l.b16 %v698
        %v731 = vunpack.c.l.b16 %v699
        %v732 = vpack.c.b16 %v717, %v716
        %v733 = vpack.c.b16 %v719, %v718
        %v734 = vpack.c.b16 %v721, %v720
        %v735 = vpack.c.b16 %v723, %v722
        %v736 = vpack.c.b16 %v725, %v724
        %v737 = vpack.c.b16 %v727, %v726
        %v738 = vpack.c.b16 %v729, %v728
        %v739 = vpack.c.b16 %v731, %v730
        %748 = vmatprep.subr.bf16.mxu0 0
        %749 = vmatpush1.bf16.msra.mxu0 %v732
        %750 = vmatprep.subr.bf16.mxu0 0
        %751 = vmatpush1.bf16.msra.mxu0 %v733
        %752 = vmatprep.subr.bf16.mxu0 0
        %753 = vmatpush1.bf16.msra.mxu0 %v734
        %754 = vmatprep.subr.bf16.mxu0 0
        %755 = vmatpush1.bf16.msra.mxu0 %v735
        %756 = vmatprep.subr.bf16.mxu0 0
        %757 = vmatpush1.bf16.msra.mxu0 %v736
        %758 = vmatprep.subr.bf16.mxu0 0
        %759 = vmatpush1.bf16.msra.mxu0 %v737
        %760 = vmatprep.subr.bf16.mxu0 0
        %761 = vmatpush1.bf16.msra.mxu0 %v738
        %762 = vmatprep.subr.bf16.mxu0 0
        %763 = vmatpush1.bf16.msra.mxu0 %v739
        %764 = vmatprep.subr.bf16.mxu0 0
        %765 = vmatpush1.bf16.msra.mxu0 0
        %766 = vmatprep.subr.bf16.mxu0 0
        %767 = vmatpush1.bf16.msra.mxu0 0
        %768 = vmatprep.subr.bf16.mxu0 0
        %769 = vmatpush1.bf16.msra.mxu0 0
        %770 = vmatprep.subr.bf16.mxu0 0
        %771 = vmatpush1.bf16.msra.mxu0 0
        %772 = vmatprep.subr.bf16.mxu0 0
        %773 = vmatpush1.bf16.msra.mxu0 0
        %774 = vmatprep.subr.bf16.mxu0 0
        %775 = vmatpush1.bf16.msra.mxu0 0
        %776 = vmatprep.subr.bf16.mxu0 0
        %777 = vmatpush1.bf16.msra.mxu0 0
        %778 = vmatprep.subr.bf16.mxu0 0
        %779 = vmatpush1.bf16.msra.mxu0 0
        %780 = vmatprep.mubr.bf16.mxu0 0
        %781 = vmatmul.mubr.bf16.gmra.mrb[0].mxu0 %v428
        %v782 = vpop.f32.mrb[0].mxu0
        %v783 = vadd.f32 0.0, %v782
        %v784 = vpop.f32.mrb[0].mxu0
        %v785 = vpop.f32.mrb[0].mxu0
        %v786 = vadd.f32 0.0, %v785
        %v787 = vpop.f32.mrb[0].mxu0
        %788 = vmatprep.mubr.bf16.mxu0 0
        %789 = vmatmul.mubr.bf16.gmra.mrb[0].mxu0 %v429
        %v790 = vpop.f32.mrb[0].mxu0
        %v791 = vadd.f32 0.0, %v790
        %v792 = vpop.f32.mrb[0].mxu0
        %v793 = vpop.f32.mrb[0].mxu0
        %v794 = vadd.f32 0.0, %v793
        %v795 = vpop.f32.mrb[0].mxu0
        %796 = vmatprep.mubr.bf16.mxu0 0
        %797 = vmatmul.mubr.bf16.gmra.mrb[0].mxu0 %v430
        %v798 = vpop.f32.mrb[0].mxu0
        %v799 = vadd.f32 0.0, %v798
        %v800 = vpop.f32.mrb[0].mxu0
        %v801 = vpop.f32.mrb[0].mxu0
        %v802 = vadd.f32 0.0, %v801
        %v803 = vpop.f32.mrb[0].mxu0
        %804 = vmatprep.mubr.bf16.mxu0 0
        %805 = vmatmul.mubr.bf16.gmra.mrb[0].mxu0 %v431
        %v806 = vpop.f32.mrb[0].mxu0
        %v807 = vadd.f32 0.0, %v806
        %v808 = vpop.f32.mrb[0].mxu0
        %v809 = vpop.f32.mrb[0].mxu0
        %v810 = vadd.f32 0.0, %v809
        %v811 = vpop.f32.mrb[0].mxu0
        %812 = vmatprep.mubr.bf16.mxu0 0
        %813 = vmatmul.mubr.bf16.gmra.mrb[0].mxu0 %v432
        %v814 = vpop.f32.mrb[0].mxu0
        %v815 = vadd.f32 0.0, %v814
        %v816 = vpop.f32.mrb[0].mxu0
        %v817 = vpop.f32.mrb[0].mxu0
        %v818 = vadd.f32 0.0, %v817
        %v819 = vpop.f32.mrb[0].mxu0
        %820 = vmatprep.mubr.bf16.mxu0 0
        %821 = vmatmul.mubr.bf16.gmra.mrb[0].mxu0 %v433
        %v822 = vpop.f32.mrb[0].mxu0
        %v823 = vadd.f32 0.0, %v822
        %v824 = vpop.f32.mrb[0].mxu0
        %v825 = vpop.f32.mrb[0].mxu0
        %v826 = vadd.f32 0.0, %v825
        %v827 = vpop.f32.mrb[0].mxu0
        %828 = vmatprep.mubr.bf16.mxu0 0
        %829 = vmatmul.mubr.bf16.gmra.mrb[0].mxu0 %v434
        %v830 = vpop.f32.mrb[0].mxu0
        %v831 = vadd.f32 0.0, %v830
        %v832 = vpop.f32.mrb[0].mxu0
        %v833 = vpop.f32.mrb[0].mxu0
        %v834 = vadd.f32 0.0, %v833
        %v835 = vpop.f32.mrb[0].mxu0
        %836 = vmatprep.mubr.bf16.mxu0 0
        %837 = vmatmul.mubr.bf16.gmra.mrb[0].mxu0 %v435
        %v838 = vpop.f32.mrb[0].mxu0
        %v839 = vadd.f32 0.0, %v838
        %v840 = vpop.f32.mrb[0].mxu0
        %v841 = vpop.f32.mrb[0].mxu0
        %v842 = vadd.f32 0.0, %v841
        %v843 = vpop.f32.mrb[0].mxu0
        %844 = vmatprep.mubr.bf16.mxu0 0
        %845 = vmatmul.mubr.bf16.gmra.mrb[0].mxu0 %v436
        %v846 = vpop.f32.mrb[0].mxu0
        %v847 = vadd.f32 0.0, %v846
        %v848 = vpop.f32.mrb[0].mxu0
        %v849 = vpop.f32.mrb[0].mxu0
        %v850 = vadd.f32 0.0, %v849
        %v851 = vpop.f32.mrb[0].mxu0
        %852 = vmatprep.mubr.bf16.mxu0 0
        %853 = vmatmul.mubr.bf16.gmra.mrb[0].mxu0 %v437
        %v854 = vpop.f32.mrb[0].mxu0
        %v855 = vadd.f32 0.0, %v854
        %v856 = vpop.f32.mrb[0].mxu0
        %v857 = vpop.f32.mrb[0].mxu0
        %v858 = vadd.f32 0.0, %v857
        %v859 = vpop.f32.mrb[0].mxu0
        %860 = vmatprep.mubr.bf16.mxu0 0
        %861 = vmatmul.mubr.bf16.gmra.mrb[0].mxu0 %v438
        %v862 = vpop.f32.mrb[0].mxu0
        %v863 = vadd.f32 0.0, %v862
        %v864 = vpop.f32.mrb[0].mxu0
        %v865 = vpop.f32.mrb[0].mxu0
        %v866 = vadd.f32 0.0, %v865
        %v867 = vpop.f32.mrb[0].mxu0
        %868 = vmatprep.mubr.bf16.mxu0 0
        %869 = vmatmul.mubr.bf16.gmra.mrb[0].mxu0 %v439
        %v870 = vpop.f32.mrb[0].mxu0
        %v871 = vadd.f32 0.0, %v870
        %v872 = vpop.f32.mrb[0].mxu0
        %v873 = vpop.f32.mrb[0].mxu0
        %v874 = vadd.f32 0.0, %v873
        %v875 = vpop.f32.mrb[0].mxu0
        %876 = vmatprep.mubr.bf16.mxu0 0
        %877 = vmatmul.mubr.bf16.gmra.mrb[0].mxu0 %v440
        %v878 = vpop.f32.mrb[0].mxu0
        %v879 = vadd.f32 0.0, %v878
        %v880 = vpop.f32.mrb[0].mxu0
        %v881 = vpop.f32.mrb[0].mxu0
        %v882 = vadd.f32 0.0, %v881
        %v883 = vpop.f32.mrb[0].mxu0
        %884 = vmatprep.mubr.bf16.mxu0 0
        %885 = vmatmul.mubr.bf16.gmra.mrb[0].mxu0 %v441
        %v886 = vpop.f32.mrb[0].mxu0
        %v887 = vadd.f32 0.0, %v886
        %v888 = vpop.f32.mrb[0].mxu0
        %v889 = vpop.f32.mrb[0].mxu0
        %v890 = vadd.f32 0.0, %v889
        %v891 = vpop.f32.mrb[0].mxu0
        %892 = vmatprep.mubr.bf16.mxu0 0
        %893 = vmatmul.mubr.bf16.gmra.mrb[0].mxu0 %v442
        %v894 = vpop.f32.mrb[0].mxu0
        %v895 = vadd.f32 0.0, %v894
        %v896 = vpop.f32.mrb[0].mxu0
        %v897 = vpop.f32.mrb[0].mxu0
        %v898 = vadd.f32 0.0, %v897
        %v899 = vpop.f32.mrb[0].mxu0
        %900 = vmatprep.mubr.bf16.mxu0 0
        %901 = vmatmul.mubr.bf16.gmra.mrb[0].mxu0 %v443
        %v902 = vpop.f32.mrb[0].mxu0
        %v903 = vadd.f32 0.0, %v902
        %v904 = vpop.f32.mrb[0].mxu0
        %v905 = vpop.f32.mrb[0].mxu0
        %v906 = vadd.f32 0.0, %v905
        %v907 = vpop.f32.mrb[0].mxu0
        %908 = vmatprep.mubr.bf16.mxu0 0
        %909 = vmatmul.mubr.bf16.gmra.mrb[0].mxu0 %v444
        %v910 = vpop.f32.mrb[0].mxu0
        %v911 = vadd.f32 0.0, %v910
        %v912 = vpop.f32.mrb[0].mxu0
        %v913 = vpop.f32.mrb[0].mxu0
        %v914 = vadd.f32 0.0, %v913
        %v915 = vpop.f32.mrb[0].mxu0
        %916 = vmatprep.mubr.bf16.mxu0 0
        %917 = vmatmul.mubr.bf16.gmra.mrb[0].mxu0 %v445
        %v918 = vpop.f32.mrb[0].mxu0
        %v919 = vadd.f32 0.0, %v918
        %v920 = vpop.f32.mrb[0].mxu0
        %v921 = vpop.f32.mrb[0].mxu0
        %v922 = vadd.f32 0.0, %v921
        %v923 = vpop.f32.mrb[0].mxu0
        %924 = vmatprep.mubr.bf16.mxu0 0
        %925 = vmatmul.mubr.bf16.gmra.mrb[0].mxu0 %v446
        %v926 = vpop.f32.mrb[0].mxu0
        %v927 = vadd.f32 0.0, %v926
        %v928 = vpop.f32.mrb[0].mxu0
        %v929 = vpop.f32.mrb[0].mxu0
        %v930 = vadd.f32 0.0, %v929
        %v931 = vpop.f32.mrb[0].mxu0
        %932 = vmatprep.mubr.bf16.mxu0 0
        %933 = vmatmul.mubr.bf16.gmra.mrb[0].mxu0 %v447
        %v934 = vpop.f32.mrb[0].mxu0
        %v935 = vadd.f32 0.0, %v934
        %v936 = vpop.f32.mrb[0].mxu0
        %v937 = vpop.f32.mrb[0].mxu0
        %v938 = vadd.f32 0.0, %v937
        %v939 = vpop.f32.mrb[0].mxu0
        %940 = vmatprep.mubr.bf16.mxu0 0
        %941 = vmatmul.mubr.bf16.gmra.mrb[0].mxu0 %v448
        %v942 = vpop.f32.mrb[0].mxu0
        %v943 = vadd.f32 0.0, %v942
        %v944 = vpop.f32.mrb[0].mxu0
        %v945 = vpop.f32.mrb[0].mxu0
        %v946 = vadd.f32 0.0, %v945
        %v947 = vpop.f32.mrb[0].mxu0
        %948 = vmatprep.mubr.bf16.mxu0 0
        %949 = vmatmul.mubr.bf16.gmra.mrb[0].mxu0 %v449
        %v950 = vpop.f32.mrb[0].mxu0
        %v951 = vadd.f32 0.0, %v950
        %v952 = vpop.f32.mrb[0].mxu0
        %v953 = vpop.f32.mrb[0].mxu0
        %v954 = vadd.f32 0.0, %v953
        %v955 = vpop.f32.mrb[0].mxu0
        %956 = vmatprep.mubr.bf16.mxu0 0
        %957 = vmatmul.mubr.bf16.gmra.mrb[0].mxu0 %v450
        %v958 = vpop.f32.mrb[0].mxu0
        %v959 = vadd.f32 0.0, %v958
        %v960 = vpop.f32.mrb[0].mxu0
        %v961 = vpop.f32.mrb[0].mxu0
        %v962 = vadd.f32 0.0, %v961
        %v963 = vpop.f32.mrb[0].mxu0
        %964 = vmatprep.mubr.bf16.mxu0 0
        %965 = vmatmul.mubr.bf16.gmra.mrb[0].mxu0 %v451
        %v966 = vpop.f32.mrb[0].mxu0
        %v967 = vadd.f32 0.0, %v966
        %v968 = vpop.f32.mrb[0].mxu0
        %v969 = vpop.f32.mrb[0].mxu0
        %v970 = vadd.f32 0.0, %v969
        %v971 = vpop.f32.mrb[0].mxu0
        %972 = vmatprep.mubr.bf16.mxu0 0
        %973 = vmatmul.mubr.bf16.gmra.mrb[0].mxu0 %v452
        %v974 = vpop.f32.mrb[0].mxu0
        %v975 = vadd.f32 0.0, %v974
        %v976 = vpop.f32.mrb[0].mxu0
        %v977 = vpop.f32.mrb[0].mxu0
        %v978 = vadd.f32 0.0, %v977
        %v979 = vpop.f32.mrb[0].mxu0
        %980 = vmatprep.mubr.bf16.mxu0 0
        %981 = vmatmul.mubr.bf16.gmra.mrb[0].mxu0 %v453
        %v982 = vpop.f32.mrb[0].mxu0
        %v983 = vadd.f32 0.0, %v982
        %v984 = vpop.f32.mrb[0].mxu0
        %v985 = vpop.f32.mrb[0].mxu0
        %v986 = vadd.f32 0.0, %v985
        %v987 = vpop.f32.mrb[0].mxu0
        %988 = vmatprep.mubr.bf16.mxu0 0
        %989 = vmatmul.mubr.bf16.gmra.mrb[0].mxu0 %v454
        %v990 = vpop.f32.mrb[0].mxu0
        %v991 = vadd.f32 0.0, %v990
        %v992 = vpop.f32.mrb[0].mxu0
        %v993 = vpop.f32.mrb[0].mxu0
        %v994 = vadd.f32 0.0, %v993
        %v995 = vpop.f32.mrb[0].mxu0
        %996 = vmatprep.mubr.bf16.mxu0 0
        %997 = vmatmul.mubr.bf16.gmra.mrb[0].mxu0 %v455
        %v998 = vpop.f32.mrb[0].mxu0
        %v999 = vadd.f32 0.0, %v998
        %v1000 = vpop.f32.mrb[0].mxu0
        %v1001 = vpop.f32.mrb[0].mxu0
        %v1002 = vadd.f32 0.0, %v1001
        %v1003 = vpop.f32.mrb[0].mxu0
        %1004 = vmatprep.mubr.bf16.mxu0 0
        %1005 = vmatmul.mubr.bf16.gmra.mrb[0].mxu0 %v456
        %v1006 = vpop.f32.mrb[0].mxu0
        %v1007 = vadd.f32 0.0, %v1006
        %v1008 = vpop.f32.mrb[0].mxu0
        %v1009 = vpop.f32.mrb[0].mxu0
        %v1010 = vadd.f32 0.0, %v1009
        %v1011 = vpop.f32.mrb[0].mxu0
        %1012 = vmatprep.mubr.bf16.mxu0 0
        %1013 = vmatmul.mubr.bf16.gmra.mrb[0].mxu0 %v457
        %v1014 = vpop.f32.mrb[0].mxu0
        %v1015 = vadd.f32 0.0, %v1014
        %v1016 = vpop.f32.mrb[0].mxu0
        %v1017 = vpop.f32.mrb[0].mxu0
        %v1018 = vadd.f32 0.0, %v1017
        %v1019 = vpop.f32.mrb[0].mxu0
        %1020 = vmatprep.mubr.bf16.mxu0 0
        %1021 = vmatmul.mubr.bf16.gmra.mrb[0].mxu0 %v458
        %v1022 = vpop.f32.mrb[0].mxu0
        %v1023 = vadd.f32 0.0, %v1022
        %v1024 = vpop.f32.mrb[0].mxu0
        %v1025 = vpop.f32.mrb[0].mxu0
        %v1026 = vadd.f32 0.0, %v1025
        %v1027 = vpop.f32.mrb[0].mxu0
        %1028 = vmatprep.mubr.bf16.mxu0 0
        %1029 = vmatmul.mubr.bf16.gmra.mrb[0].mxu0 %v459
        %v1030 = vpop.f32.mrb[0].mxu0
        %v1031 = vadd.f32 0.0, %v1030
        %v1032 = vpop.f32.mrb[0].mxu0
        %v1033 = vpop.f32.mrb[0].mxu0
        %v1034 = vadd.f32 0.0, %v1033
        %v1035 = vpop.f32.mrb[0].mxu0
        %1036 = vdwg.mxu0
        %1037 = vst [vmem:[#allocation5] sm:$0xff] %v783
        %1038 = vst [vmem:[#allocation5 + $0x8] sm:$0xff] %v786
        %1039 = vst [vmem:[#allocation5 + $0x10] sm:$0xff] %v791
        %1040 = vst [vmem:[#allocation5 + $0x18] sm:$0xff] %v794
        %1041 = vst [vmem:[#allocation5 + $0x20] sm:$0xff] %v799
        %1042 = vst [vmem:[#allocation5 + $0x28] sm:$0xff] %v802
        %1043 = vst [vmem:[#allocation5 + $0x30] sm:$0xff] %v807
        %1044 = vst [vmem:[#allocation5 + $0x38] sm:$0xff] %v810
        %1045 = vst [vmem:[#allocation5 + $0x40] sm:$0xff] %v815
        %1046 = vst [vmem:[#allocation5 + $0x48] sm:$0xff] %v818
        %1047 = vst [vmem:[#allocation5 + $0x50] sm:$0xff] %v823
        %1048 = vst [vmem:[#allocation5 + $0x58] sm:$0xff] %v826
        %1049 = vst [vmem:[#allocation5 + $0x60] sm:$0xff] %v831
        %1050 = vst [vmem:[#allocation5 + $0x68] sm:$0xff] %v834
        %1051 = vst [vmem:[#allocation5 + $0x70] sm:$0xff] %v839
        %1052 = vst [vmem:[#allocation5 + $0x78] sm:$0xff] %v842
        %1053 = vst [vmem:[#allocation5 + $0x80] sm:$0xff] %v847
        %1054 = vst [vmem:[#allocation5 + $0x88] sm:$0xff] %v850
        %1055 = vst [vmem:[#allocation5 + $0x90] sm:$0xff] %v855
        %1056 = vst [vmem:[#allocation5 + $0x98] sm:$0xff] %v858
        %1057 = vst [vmem:[#allocation5 + $0xa0] sm:$0xff] %v863
        %1058 = vst [vmem:[#allocation5 + $0xa8] sm:$0xff] %v866
        %1059 = vst [vmem:[#allocation5 + $0xb0] sm:$0xff] %v871
        %1060 = vst [vmem:[#allocation5 + $0xb8] sm:$0xff] %v874
        %1061 = vst [vmem:[#allocation5 + $0xc0] sm:$0xff] %v879
        %1062 = vst [vmem:[#allocation5 + $0xc8] sm:$0xff] %v882
        %1063 = vst [vmem:[#allocation5 + $0xd0] sm:$0xff] %v887
        %1064 = vst [vmem:[#allocation5 + $0xd8] sm:$0xff] %v890
        %1065 = vst [vmem:[#allocation5 + $0xe0] sm:$0xff] %v895
        %1066 = vst [vmem:[#allocation5 + $0xe8] sm:$0xff] %v898
        %1067 = vst [vmem:[#allocation5 + $0xf0] sm:$0xff] %v903
        %1068 = vst [vmem:[#allocation5 + $0xf8] sm:$0xff] %v906
        %1069 = vst [vmem:[#allocation5 + $0x100] sm:$0xff] %v911
        %1070 = vst [vmem:[#allocation5 + $0x108] sm:$0xff] %v914
        %1071 = vst [vmem:[#allocation5 + $0x110] sm:$0xff] %v919
        %1072 = vst [vmem:[#allocation5 + $0x118] sm:$0xff] %v922
        %1073 = vst [vmem:[#allocation5 + $0x120] sm:$0xff] %v927
        %1074 = vst [vmem:[#allocation5 + $0x128] sm:$0xff] %v930
        %1075 = vst [vmem:[#allocation5 + $0x130] sm:$0xff] %v935
        %1076 = vst [vmem:[#allocation5 + $0x138] sm:$0xff] %v938
        %1077 = vst [vmem:[#allocation5 + $0x140] sm:$0xff] %v943
        %1078 = vst [vmem:[#allocation5 + $0x148] sm:$0xff] %v946
        %1079 = vst [vmem:[#allocation5 + $0x150] sm:$0xff] %v951
        %1080 = vst [vmem:[#allocation5 + $0x158] sm:$0xff] %v954
        %1081 = vst [vmem:[#allocation5 + $0x160] sm:$0xff] %v959
        %1082 = vst [vmem:[#allocation5 + $0x168] sm:$0xff] %v962
        %1083 = vst [vmem:[#allocation5 + $0x170] sm:$0xff] %v967
        %1084 = vst [vmem:[#allocation5 + $0x178] sm:$0xff] %v970
        %1085 = vst [vmem:[#allocation5 + $0x180] sm:$0xff] %v975
        %1086 = vst [vmem:[#allocation5 + $0x188] sm:$0xff] %v978
        %1087 = vst [vmem:[#allocation5 + $0x190] sm:$0xff] %v983
        %1088 = vst [vmem:[#allocation5 + $0x198] sm:$0xff] %v986
        %1089 = vst [vmem:[#allocation5 + $0x1a0] sm:$0xff] %v991
        %1090 = vst [vmem:[#allocation5 + $0x1a8] sm:$0xff] %v994
        %1091 = vst [vmem:[#allocation5 + $0x1b0] sm:$0xff] %v999
        %1092 = vst [vmem:[#allocation5 + $0x1b8] sm:$0xff] %v1002
        %1093 = vst [vmem:[#allocation5 + $0x1c0] sm:$0xff] %v1007
        %1094 = vst [vmem:[#allocation5 + $0x1c8] sm:$0xff] %v1010
        %1095 = vst [vmem:[#allocation5 + $0x1d0] sm:$0xff] %v1015
        %1096 = vst [vmem:[#allocation5 + $0x1d8] sm:$0xff] %v1018
        %1097 = vst [vmem:[#allocation5 + $0x1e0] sm:$0xff] %v1023
        %1098 = vst [vmem:[#allocation5 + $0x1e8] sm:$0xff] %v1026
        %1099 = vst [vmem:[#allocation5 + $0x1f0] sm:$0xff] %v1031
        %1100 = vst [vmem:[#allocation5 + $0x1f8] sm:$0xff] %v1034
      $region48: #{gconv_gru_cell.1} parent=43 // pred_fallthru
        _
      %p1101 = scmp.lt.s32.totalorder %s21, 2
      %s1102 = smul.u32 %s22, 256
      // Predicated region
      $region49: #{gconv_gru_cell.1} parent=43 // pred_check
        %p1103 = pneg %p1101
      $region50: #{gconv_gru_cell.1} parent=43 // pred_check_branch
        %1105 = sbr.rel (%p1103) target = $region52
      $region51: #{gconv_gru_cell.1} parent=43 // pred_region
        %s1106 = sshra.s32 %s1102, 4
        %s1107 = sand.u32 %s1102, 15
        %s1108 = smul.addr %s1106, 8
        %s1109 = scalar_lea.vmem [#allocation2], %s1108
        %v1110 = vld [vmem:[%s1109] sm:$0xff]
        %v1111 = vld [vmem:[%s1109 + $0x8] sm:$0xff]
        %v1112 = vld [vmem:[%s1109 + $0x10] sm:$0xff]
        %v1113 = vld [vmem:[%s1109 + $0x18] sm:$0xff]
        %v1114 = vld [vmem:[%s1109 + $0x20] sm:$0xff]
        %v1115 = vld [vmem:[%s1109 + $0x28] sm:$0xff]
        %v1116 = vld [vmem:[%s1109 + $0x30] sm:$0xff]
        %v1117 = vld [vmem:[%s1109 + $0x38] sm:$0xff]
        %v1118 = vld [vmem:[%s1109 + $0x40] sm:$0xff]
        %v1119 = vld [vmem:[%s1109 + $0x48] sm:$0xff]
        %v1120 = vld [vmem:[%s1109 + $0x50] sm:$0xff]
        %v1121 = vld [vmem:[%s1109 + $0x58] sm:$0xff]
        %v1122 = vld [vmem:[%s1109 + $0x60] sm:$0xff]
        %v1123 = vld [vmem:[%s1109 + $0x68] sm:$0xff]
        %v1124 = vld [vmem:[%s1109 + $0x70] sm:$0xff]
        %v1125 = vld [vmem:[%s1109 + $0x78] sm:$0xff]
        %v1126 = vld [vmem:[#allocation4] sm:$0xff]
        %v1127 = vld [vmem:[#allocation4 + $0x8] sm:$0xff]
        %v1128 = vld [vmem:[#allocation4 + $0x10] sm:$0xff]
        %v1129 = vld [vmem:[#allocation4 + $0x18] sm:$0xff]
        %v1130 = vld [vmem:[#allocation4 + $0x20] sm:$0xff]
        %v1131 = vld [vmem:[#allocation4 + $0x28] sm:$0xff]
        %v1132 = vld [vmem:[#allocation4 + $0x30] sm:$0xff]
        %v1133 = vld [vmem:[#allocation4 + $0x38] sm:$0xff]
        %v1134 = vld [vmem:[#allocation4 + $0x40] sm:$0xff]
        %v1135 = vld [vmem:[#allocation4 + $0x48] sm:$0xff]
        %v1136 = vld [vmem:[#allocation4 + $0x50] sm:$0xff]
        %v1137 = vld [vmem:[#allocation4 + $0x58] sm:$0xff]
        %v1138 = vld [vmem:[#allocation4 + $0x60] sm:$0xff]
        %v1139 = vld [vmem:[#allocation4 + $0x68] sm:$0xff]
        %v1140 = vld [vmem:[#allocation4 + $0x70] sm:$0xff]
        %v1141 = vld [vmem:[#allocation4 + $0x78] sm:$0xff]
        %v1142 = vld [vmem:[#allocation4 + $0x80] sm:$0xff]
        %v1143 = vld [vmem:[#allocation4 + $0x88] sm:$0xff]
        %v1144 = vld [vmem:[#allocation4 + $0x90] sm:$0xff]
        %v1145 = vld [vmem:[#allocation4 + $0x98] sm:$0xff]
        %v1146 = vld [vmem:[#allocation4 + $0xa0] sm:$0xff]
        %v1147 = vld [vmem:[#allocation4 + $0xa8] sm:$0xff]
        %v1148 = vld [vmem:[#allocation4 + $0xb0] sm:$0xff]
        %v1149 = vld [vmem:[#allocation4 + $0xb8] sm:$0xff]
        %v1150 = vld [vmem:[#allocation4 + $0xc0] sm:$0xff]
        %v1151 = vld [vmem:[#allocation4 + $0xc8] sm:$0xff]
        %v1152 = vld [vmem:[#allocation4 + $0xd0] sm:$0xff]
        %v1153 = vld [vmem:[#allocation4 + $0xd8] sm:$0xff]
        %v1154 = vld [vmem:[#allocation4 + $0xe0] sm:$0xff]
        %v1155 = vld [vmem:[#allocation4 + $0xe8] sm:$0xff]
        %v1156 = vld [vmem:[#allocation4 + $0xf0] sm:$0xff]
        %v1157 = vld [vmem:[#allocation4 + $0xf8] sm:$0xff]
        %v1158 = vld [vmem:[#allocation4 + $0x100] sm:$0xff]
        %v1159 = vld [vmem:[#allocation4 + $0x108] sm:$0xff]
        %v1160 = vld [vmem:[#allocation4 + $0x110] sm:$0xff]
        %v1161 = vld [vmem:[#allocation4 + $0x118] sm:$0xff]
        %v1162 = vld [vmem:[#allocation4 + $0x120] sm:$0xff]
        %v1163 = vld [vmem:[#allocation4 + $0x128] sm:$0xff]
        %v1164 = vld [vmem:[#allocation4 + $0x130] sm:$0xff]
        %v1165 = vld [vmem:[#allocation4 + $0x138] sm:$0xff]
        %v1166 = vld [vmem:[#allocation4 + $0x140] sm:$0xff]
        %v1167 = vld [vmem:[#allocation4 + $0x148] sm:$0xff]
        %v1168 = vld [vmem:[#allocation4 + $0x150] sm:$0xff]
        %v1169 = vld [vmem:[#allocation4 + $0x158] sm:$0xff]
        %v1170 = vld [vmem:[#allocation4 + $0x160] sm:$0xff]
        %v1171 = vld [vmem:[#allocation4 + $0x168] sm:$0xff]
        %v1172 = vld [vmem:[#allocation4 + $0x170] sm:$0xff]
        %v1173 = vld [vmem:[#allocation4 + $0x178] sm:$0xff]
        %v1174 = vld [vmem:[#allocation4 + $0x180] sm:$0xff]
        %v1175 = vld [vmem:[#allocation4 + $0x188] sm:$0xff]
        %v1176 = vld [vmem:[#allocation4 + $0x190] sm:$0xff]
        %v1177 = vld [vmem:[#allocation4 + $0x198] sm:$0xff]
        %v1178 = vld [vmem:[#allocation4 + $0x1a0] sm:$0xff]
        %v1179 = vld [vmem:[#allocation4 + $0x1a8] sm:$0xff]
        %v1180 = vld [vmem:[#allocation4 + $0x1b0] sm:$0xff]
        %v1181 = vld [vmem:[#allocation4 + $0x1b8] sm:$0xff]
        %v1182 = vld [vmem:[#allocation4 + $0x1c0] sm:$0xff]
        %v1183 = vld [vmem:[#allocation4 + $0x1c8] sm:$0xff]
        %v1184 = vld [vmem:[#allocation4 + $0x1d0] sm:$0xff]
        %v1185 = vld [vmem:[#allocation4 + $0x1d8] sm:$0xff]
        %v1186 = vld [vmem:[#allocation4 + $0x1e0] sm:$0xff]
        %v1187 = vld [vmem:[#allocation4 + $0x1e8] sm:$0xff]
        %v1188 = vld [vmem:[#allocation4 + $0x1f0] sm:$0xff]
        %v1189 = vld [vmem:[#allocation4 + $0x1f8] sm:$0xff]
        %s1190 = smul.u32 %s22, 128
        %s1191 = smul.addr %s1190, 4
        %s1192 = scalar_lea.vmem %s0, %s1191
        %v1193 = vld [vmem:[%s1192] sm:$0xff]
        %v1194 = vld [vmem:[%s1192 + $0x8] sm:$0xff]
        %v1195 = vld [vmem:[%s1192 + $0x10] sm:$0xff]
        %v1196 = vld [vmem:[%s1192 + $0x18] sm:$0xff]
        %v1197 = vld [vmem:[%s1192 + $0x20] sm:$0xff]
        %v1198 = vld [vmem:[%s1192 + $0x28] sm:$0xff]
        %v1199 = vld [vmem:[%s1192 + $0x30] sm:$0xff]
        %v1200 = vld [vmem:[%s1192 + $0x38] sm:$0xff]
        %v1201 = vld [vmem:[%s1192 + $0x40] sm:$0xff]
        %v1202 = vld [vmem:[%s1192 + $0x48] sm:$0xff]
        %v1203 = vld [vmem:[%s1192 + $0x50] sm:$0xff]
        %v1204 = vld [vmem:[%s1192 + $0x58] sm:$0xff]
        %v1205 = vld [vmem:[%s1192 + $0x60] sm:$0xff]
        %v1206 = vld [vmem:[%s1192 + $0x68] sm:$0xff]
        %v1207 = vld [vmem:[%s1192 + $0x70] sm:$0xff]
        %v1208 = vld [vmem:[%s1192 + $0x78] sm:$0xff]
        %v1209 = vld [vmem:[%s1192 + $0x80] sm:$0xff]
        %v1210 = vld [vmem:[%s1192 + $0x88] sm:$0xff]
        %v1211 = vld [vmem:[%s1192 + $0x90] sm:$0xff]
        %v1212 = vld [vmem:[%s1192 + $0x98] sm:$0xff]
        %v1213 = vld [vmem:[%s1192 + $0xa0] sm:$0xff]
        %v1214 = vld [vmem:[%s1192 + $0xa8] sm:$0xff]
        %v1215 = vld [vmem:[%s1192 + $0xb0] sm:$0xff]
        %v1216 = vld [vmem:[%s1192 + $0xb8] sm:$0xff]
        %v1217 = vld [vmem:[%s1192 + $0xc0] sm:$0xff]
        %v1218 = vld [vmem:[%s1192 + $0xc8] sm:$0xff]
        %v1219 = vld [vmem:[%s1192 + $0xd0] sm:$0xff]
        %v1220 = vld [vmem:[%s1192 + $0xd8] sm:$0xff]
        %v1221 = vld [vmem:[%s1192 + $0xe0] sm:$0xff]
        %v1222 = vld [vmem:[%s1192 + $0xe8] sm:$0xff]
        %v1223 = vld [vmem:[%s1192 + $0xf0] sm:$0xff]
        %v1224 = vld [vmem:[%s1192 + $0xf8] sm:$0xff]
        %v1225 = vld [vmem:[%s1192 + $0x100] sm:$0xff]
        %v1226 = vld [vmem:[%s1192 + $0x108] sm:$0xff]
        %v1227 = vld [vmem:[%s1192 + $0x110] sm:$0xff]
        %v1228 = vld [vmem:[%s1192 + $0x118] sm:$0xff]
        %v1229 = vld [vmem:[%s1192 + $0x120] sm:$0xff]
        %v1230 = vld [vmem:[%s1192 + $0x128] sm:$0xff]
        %v1231 = vld [vmem:[%s1192 + $0x130] sm:$0xff]
        %v1232 = vld [vmem:[%s1192 + $0x138] sm:$0xff]
        %v1233 = vld [vmem:[%s1192 + $0x140] sm:$0xff]
        %v1234 = vld [vmem:[%s1192 + $0x148] sm:$0xff]
        %v1235 = vld [vmem:[%s1192 + $0x150] sm:$0xff]
        %v1236 = vld [vmem:[%s1192 + $0x158] sm:$0xff]
        %v1237 = vld [vmem:[%s1192 + $0x160] sm:$0xff]
        %v1238 = vld [vmem:[%s1192 + $0x168] sm:$0xff]
        %v1239 = vld [vmem:[%s1192 + $0x170] sm:$0xff]
        %v1240 = vld [vmem:[%s1192 + $0x178] sm:$0xff]
        %v1241 = vld [vmem:[%s1192 + $0x180] sm:$0xff]
        %v1242 = vld [vmem:[%s1192 + $0x188] sm:$0xff]
        %v1243 = vld [vmem:[%s1192 + $0x190] sm:$0xff]
        %v1244 = vld [vmem:[%s1192 + $0x198] sm:$0xff]
        %v1245 = vld [vmem:[%s1192 + $0x1a0] sm:$0xff]
        %v1246 = vld [vmem:[%s1192 + $0x1a8] sm:$0xff]
        %v1247 = vld [vmem:[%s1192 + $0x1b0] sm:$0xff]
        %v1248 = vld [vmem:[%s1192 + $0x1b8] sm:$0xff]
        %v1249 = vld [vmem:[%s1192 + $0x1c0] sm:$0xff]
        %v1250 = vld [vmem:[%s1192 + $0x1c8] sm:$0xff]
        %v1251 = vld [vmem:[%s1192 + $0x1d0] sm:$0xff]
        %v1252 = vld [vmem:[%s1192 + $0x1d8] sm:$0xff]
        %v1253 = vld [vmem:[%s1192 + $0x1e0] sm:$0xff]
        %v1254 = vld [vmem:[%s1192 + $0x1e8] sm:$0xff]
        %v1255 = vld [vmem:[%s1192 + $0x1f0] sm:$0xff]
        %v1256 = vld [vmem:[%s1192 + $0x1f8] sm:$0xff]
        %v1321 = vunpack.c.l.b16 %v1193
        %v1322 = vunpack.c.h.b16 %v1193
        %v1323 = vunpack.c.l.b16 %v1194
        %v1324 = vunpack.c.h.b16 %v1194
        %v1325 = vunpack.c.l.b16 %v1195
        %v1326 = vunpack.c.h.b16 %v1195
        %v1327 = vunpack.c.l.b16 %v1196
        %v1328 = vunpack.c.h.b16 %v1196
        %v1329 = vunpack.c.l.b16 %v1197
        %v1330 = vunpack.c.h.b16 %v1197
        %v1331 = vunpack.c.l.b16 %v1198
        %v1332 = vunpack.c.h.b16 %v1198
        %v1333 = vunpack.c.l.b16 %v1199
        %v1334 = vunpack.c.h.b16 %v1199
        %v1335 = vunpack.c.l.b16 %v1200
        %v1336 = vunpack.c.h.b16 %v1200
        %v1337 = vunpack.c.l.b16 %v1201
        %v1338 = vunpack.c.h.b16 %v1201
        %v1339 = vunpack.c.l.b16 %v1202
        %v1340 = vunpack.c.h.b16 %v1202
        %v1341 = vunpack.c.l.b16 %v1203
        %v1342 = vunpack.c.h.b16 %v1203
        %v1343 = vunpack.c.l.b16 %v1204
        %v1344 = vunpack.c.h.b16 %v1204
        %v1345 = vunpack.c.l.b16 %v1205
        %v1346 = vunpack.c.h.b16 %v1205
        %v1347 = vunpack.c.l.b16 %v1206
        %v1348 = vunpack.c.h.b16 %v1206
        %v1349 = vunpack.c.l.b16 %v1207
        %v1350 = vunpack.c.h.b16 %v1207
        %v1351 = vunpack.c.l.b16 %v1208
        %v1352 = vunpack.c.h.b16 %v1208
        %v1353 = vunpack.c.l.b16 %v1209
        %v1354 = vunpack.c.h.b16 %v1209
        %v1355 = vunpack.c.l.b16 %v1210
        %v1356 = vunpack.c.h.b16 %v1210
        %v1357 = vunpack.c.l.b16 %v1211
        %v1358 = vunpack.c.h.b16 %v1211
        %v1359 = vunpack.c.l.b16 %v1212
        %v1360 = vunpack.c.h.b16 %v1212
        %v1361 = vunpack.c.l.b16 %v1213
        %v1362 = vunpack.c.h.b16 %v1213
        %v1363 = vunpack.c.l.b16 %v1214
        %v1364 = vunpack.c.h.b16 %v1214
        %v1365 = vunpack.c.l.b16 %v1215
        %v1366 = vunpack.c.h.b16 %v1215
        %v1367 = vunpack.c.l.b16 %v1216
        %v1368 = vunpack.c.h.b16 %v1216
        %v1369 = vunpack.c.l.b16 %v1217
        %v1370 = vunpack.c.h.b16 %v1217
        %v1371 = vunpack.c.l.b16 %v1218
        %v1372 = vunpack.c.h.b16 %v1218
        %v1373 = vunpack.c.l.b16 %v1219
        %v1374 = vunpack.c.h.b16 %v1219
        %v1375 = vunpack.c.l.b16 %v1220
        %v1376 = vunpack.c.h.b16 %v1220
        %v1377 = vunpack.c.l.b16 %v1221
        %v1378 = vunpack.c.h.b16 %v1221
        %v1379 = vunpack.c.l.b16 %v1222
        %v1380 = vunpack.c.h.b16 %v1222
        %v1381 = vunpack.c.l.b16 %v1223
        %v1382 = vunpack.c.h.b16 %v1223
        %v1383 = vunpack.c.l.b16 %v1224
        %v1384 = vunpack.c.h.b16 %v1224
        %v1385 = vunpack.c.l.b16 %v1225
        %v1386 = vunpack.c.h.b16 %v1225
        %v1387 = vunpack.c.l.b16 %v1226
        %v1388 = vunpack.c.h.b16 %v1226
        %v1389 = vunpack.c.l.b16 %v1227
        %v1390 = vunpack.c.h.b16 %v1227
        %v1391 = vunpack.c.l.b16 %v1228
        %v1392 = vunpack.c.h.b16 %v1228
        %v1393 = vunpack.c.l.b16 %v1229
        %v1394 = vunpack.c.h.b16 %v1229
        %v1395 = vunpack.c.l.b16 %v1230
        %v1396 = vunpack.c.h.b16 %v1230
        %v1397 = vunpack.c.l.b16 %v1231
        %v1398 = vunpack.c.h.b16 %v1231
        %v1399 = vunpack.c.l.b16 %v1232
        %v1400 = vunpack.c.h.b16 %v1232
        %v1401 = vunpack.c.l.b16 %v1233
        %v1402 = vunpack.c.h.b16 %v1233
        %v1403 = vunpack.c.l.b16 %v1234
        %v1404 = vunpack.c.h.b16 %v1234
        %v1405 = vunpack.c.l.b16 %v1235
        %v1406 = vunpack.c.h.b16 %v1235
        %v1407 = vunpack.c.l.b16 %v1236
        %v1408 = vunpack.c.h.b16 %v1236
        %v1409 = vunpack.c.l.b16 %v1237
        %v1410 = vunpack.c.h.b16 %v1237
        %v1411 = vunpack.c.l.b16 %v1238
        %v1412 = vunpack.c.h.b16 %v1238
        %v1413 = vunpack.c.l.b16 %v1239
        %v1414 = vunpack.c.h.b16 %v1239
        %v1415 = vunpack.c.l.b16 %v1240
        %v1416 = vunpack.c.h.b16 %v1240
        %v1417 = vunpack.c.l.b16 %v1241
        %v1418 = vunpack.c.h.b16 %v1241
        %v1419 = vunpack.c.l.b16 %v1242
        %v1420 = vunpack.c.h.b16 %v1242
        %v1421 = vunpack.c.l.b16 %v1243
        %v1422 = vunpack.c.h.b16 %v1243
        %v1423 = vunpack.c.l.b16 %v1244
        %v1424 = vunpack.c.h.b16 %v1244
        %v1425 = vunpack.c.l.b16 %v1245
        %v1426 = vunpack.c.h.b16 %v1245
        %v1427 = vunpack.c.l.b16 %v1246
        %v1428 = vunpack.c.h.b16 %v1246
        %v1429 = vunpack.c.l.b16 %v1247
        %v1430 = vunpack.c.h.b16 %v1247
        %v1431 = vunpack.c.l.b16 %v1248
        %v1432 = vunpack.c.h.b16 %v1248
        %v1433 = vunpack.c.l.b16 %v1249
        %v1434 = vunpack.c.h.b16 %v1249
        %v1435 = vunpack.c.l.b16 %v1250
        %v1436 = vunpack.c.h.b16 %v1250
        %v1437 = vunpack.c.l.b16 %v1251
        %v1438 = vunpack.c.h.b16 %v1251
        %v1439 = vunpack.c.l.b16 %v1252
        %v1440 = vunpack.c.h.b16 %v1252
        %v1441 = vunpack.c.l.b16 %v1253
        %v1442 = vunpack.c.h.b16 %v1253
        %v1443 = vunpack.c.l.b16 %v1254
        %v1444 = vunpack.c.h.b16 %v1254
        %v1445 = vunpack.c.l.b16 %v1255
        %v1446 = vunpack.c.h.b16 %v1255
        %v1447 = vunpack.c.l.b16 %v1256
        %v1448 = vunpack.c.h.b16 %v1256
        %v1449 = vpack.c.b16 %v1323, %v1321
        %v1450 = vpack.c.b16 %v1324, %v1322
        %v1451 = vpack.c.b16 %v1327, %v1325
        %v1452 = vpack.c.b16 %v1328, %v1326
        %v1453 = vpack.c.b16 %v1331, %v1329
        %v1454 = vpack.c.b16 %v1332, %v1330
        %v1455 = vpack.c.b16 %v1335, %v1333
        %v1456 = vpack.c.b16 %v1336, %v1334
        %v1457 = vpack.c.b16 %v1339, %v1337
        %v1458 = vpack.c.b16 %v1340, %v1338
        %v1459 = vpack.c.b16 %v1343, %v1341
        %v1460 = vpack.c.b16 %v1344, %v1342
        %v1461 = vpack.c.b16 %v1347, %v1345
        %v1462 = vpack.c.b16 %v1348, %v1346
        %v1463 = vpack.c.b16 %v1351, %v1349
        %v1464 = vpack.c.b16 %v1352, %v1350
        %v1465 = vpack.c.b16 %v1355, %v1353
        %v1466 = vpack.c.b16 %v1356, %v1354
        %v1467 = vpack.c.b16 %v1359, %v1357
        %v1468 = vpack.c.b16 %v1360, %v1358
        %v1469 = vpack.c.b16 %v1363, %v1361
        %v1470 = vpack.c.b16 %v1364, %v1362
        %v1471 = vpack.c.b16 %v1367, %v1365
        %v1472 = vpack.c.b16 %v1368, %v1366
        %v1473 = vpack.c.b16 %v1371, %v1369
        %v1474 = vpack.c.b16 %v1372, %v1370
        %v1475 = vpack.c.b16 %v1375, %v1373
        %v1476 = vpack.c.b16 %v1376, %v1374
        %v1477 = vpack.c.b16 %v1379, %v1377
        %v1478 = vpack.c.b16 %v1380, %v1378
        %v1479 = vpack.c.b16 %v1383, %v1381
        %v1480 = vpack.c.b16 %v1384, %v1382
        %v1481 = vpack.c.b16 %v1387, %v1385
        %v1482 = vpack.c.b16 %v1388, %v1386
        %v1483 = vpack.c.b16 %v1391, %v1389
        %v1484 = vpack.c.b16 %v1392, %v1390
        %v1485 = vpack.c.b16 %v1395, %v1393
        %v1486 = vpack.c.b16 %v1396, %v1394
        %v1487 = vpack.c.b16 %v1399, %v1397
        %v1488 = vpack.c.b16 %v1400, %v1398
        %v1489 = vpack.c.b16 %v1403, %v1401
        %v1490 = vpack.c.b16 %v1404, %v1402
        %v1491 = vpack.c.b16 %v1407, %v1405
        %v1492 = vpack.c.b16 %v1408, %v1406
        %v1493 = vpack.c.b16 %v1411, %v1409
        %v1494 = vpack.c.b16 %v1412, %v1410
        %v1495 = vpack.c.b16 %v1415, %v1413
        %v1496 = vpack.c.b16 %v1416, %v1414
        %v1497 = vpack.c.b16 %v1419, %v1417
        %v1498 = vpack.c.b16 %v1420, %v1418
        %v1499 = vpack.c.b16 %v1423, %v1421
        %v1500 = vpack.c.b16 %v1424, %v1422
        %v1501 = vpack.c.b16 %v1427, %v1425
        %v1502 = vpack.c.b16 %v1428, %v1426
        %v1503 = vpack.c.b16 %v1431, %v1429
        %v1504 = vpack.c.b16 %v1432, %v1430
        %v1505 = vpack.c.b16 %v1435, %v1433
        %v1506 = vpack.c.b16 %v1436, %v1434
        %v1507 = vpack.c.b16 %v1439, %v1437
        %v1508 = vpack.c.b16 %v1440, %v1438
        %v1509 = vpack.c.b16 %v1443, %v1441
        %v1510 = vpack.c.b16 %v1444, %v1442
        %v1511 = vpack.c.b16 %v1447, %v1445
        %v1512 = vpack.c.b16 %v1448, %v1446
        %1577 = vmatprep.subr.bf16.mxu0 0
        %1578 = vmatpush1.bf16.msra.mxu0 %v1110
        %1579 = vmatprep.subr.bf16.mxu0 0
        %1580 = vmatpush1.bf16.msra.mxu0 %v1111
        %1581 = vmatprep.subr.bf16.mxu0 0
        %1582 = vmatpush1.bf16.msra.mxu0 %v1112
        %1583 = vmatprep.subr.bf16.mxu0 0
        %1584 = vmatpush1.bf16.msra.mxu0 %v1113
        %1585 = vmatprep.subr.bf16.mxu0 0
        %1586 = vmatpush1.bf16.msra.mxu0 %v1114
        %1587 = vmatprep.subr.bf16.mxu0 0
        %1588 = vmatpush1.bf16.msra.mxu0 %v1115
        %1589 = vmatprep.subr.bf16.mxu0 0
        %1590 = vmatpush1.bf16.msra.mxu0 %v1116
        %1591 = vmatprep.subr.bf16.mxu0 0
        %1592 = vmatpush1.bf16.msra.mxu0 %v1117
        %1593 = vmatprep.subr.bf16.mxu0 0
        %1594 = vmatpush1.bf16.msra.mxu0 %v1118
        %1595 = vmatprep.subr.bf16.mxu0 0
        %1596 = vmatpush1.bf16.msra.mxu0 %v1119
        %1597 = vmatprep.subr.bf16.mxu0 0
        %1598 = vmatpush1.bf16.msra.mxu0 %v1120
        %1599 = vmatprep.subr.bf16.mxu0 0
        %1600 = vmatpush1.bf16.msra.mxu0 %v1121
        %1601 = vmatprep.subr.bf16.mxu0 0
        %1602 = vmatpush1.bf16.msra.mxu0 %v1122
        %1603 = vmatprep.subr.bf16.mxu0 0
        %1604 = vmatpush1.bf16.msra.mxu0 %v1123
        %1605 = vmatprep.subr.bf16.mxu0 0
        %1606 = vmatpush1.bf16.msra.mxu0 %v1124
        %1607 = vmatprep.subr.bf16.mxu0 0
        %1608 = vmatpush1.bf16.msra.mxu0 %v1125
        %1609 = vmatprep.mubr.bf16.mxu0 %v1450
        %1610 = vmatmul.mubr.bf16.gmra.mrb[0].mxu0 %v1449
        %v1611 = vpop.f32.mrb[0].mxu0
        %v1612 = vadd.f32 0.0, %v1611
        %v1613 = vpop.f32.mrb[0].mxu0
        %v1614 = vpop.f32.mrb[0].mxu0
        %v1615 = vadd.f32 0.0, %v1614
        %v1616 = vpop.f32.mrb[0].mxu0
        %1617 = vmatprep.mubr.bf16.mxu0 %v1452
        %1618 = vmatmul.mubr.bf16.gmra.mrb[0].mxu0 %v1451
        %v1619 = vpop.f32.mrb[0].mxu0
        %v1620 = vadd.f32 0.0, %v1619
        %v1621 = vpop.f32.mrb[0].mxu0
        %v1622 = vpop.f32.mrb[0].mxu0
        %v1623 = vadd.f32 0.0, %v1622
        %v1624 = vpop.f32.mrb[0].mxu0
        %1625 = vmatprep.mubr.bf16.mxu0 %v1454
        %1626 = vmatmul.mubr.bf16.gmra.mrb[0].mxu0 %v1453
        %v1627 = vpop.f32.mrb[0].mxu0
        %v1628 = vadd.f32 0.0, %v1627
        %v1629 = vpop.f32.mrb[0].mxu0
        %v1630 = vpop.f32.mrb[0].mxu0
        %v1631 = vadd.f32 0.0, %v1630
        %v1632 = vpop.f32.mrb[0].mxu0
        %1633 = vmatprep.mubr.bf16.mxu0 %v1456
        %1634 = vmatmul.mubr.bf16.gmra.mrb[0].mxu0 %v1455
        %v1635 = vpop.f32.mrb[0].mxu0
        %v1636 = vadd.f32 0.0, %v1635
        %v1637 = vpop.f32.mrb[0].mxu0
        %v1638 = vpop.f32.mrb[0].mxu0
        %v1639 = vadd.f32 0.0, %v1638
        %v1640 = vpop.f32.mrb[0].mxu0
        %1641 = vmatprep.mubr.bf16.mxu0 %v1458
        %1642 = vmatmul.mubr.bf16.gmra.mrb[0].mxu0 %v1457
        %v1643 = vpop.f32.mrb[0].mxu0
        %v1644 = vadd.f32 0.0, %v1643
        %v1645 = vpop.f32.mrb[0].mxu0
        %v1646 = vpop.f32.mrb[0].mxu0
        %v1647 = vadd.f32 0.0, %v1646
        %v1648 = vpop.f32.mrb[0].mxu0
        %1649 = vmatprep.mubr.bf16.mxu0 %v1460
        %1650 = vmatmul.mubr.bf16.gmra.mrb[0].mxu0 %v1459
        %v1651 = vpop.f32.mrb[0].mxu0
        %v1652 = vadd.f32 0.0, %v1651
        %v1653 = vpop.f32.mrb[0].mxu0
        %v1654 = vpop.f32.mrb[0].mxu0
        %v1655 = vadd.f32 0.0, %v1654
        %v1656 = vpop.f32.mrb[0].mxu0
        %1657 = vmatprep.mubr.bf16.mxu0 %v1462
        %1658 = vmatmul.mubr.bf16.gmra.mrb[0].mxu0 %v1461
        %v1659 = vpop.f32.mrb[0].mxu0
        %v1660 = vadd.f32 0.0, %v1659
        %v1661 = vpop.f32.mrb[0].mxu0
        %v1662 = vpop.f32.mrb[0].mxu0
        %v1663 = vadd.f32 0.0, %v1662
        %v1664 = vpop.f32.mrb[0].mxu0
        %1665 = vmatprep.mubr.bf16.mxu0 %v1464
        %1666 = vmatmul.mubr.bf16.gmra.mrb[0].mxu0 %v1463
        %v1667 = vpop.f32.mrb[0].mxu0
        %v1668 = vadd.f32 0.0, %v1667
        %v1669 = vpop.f32.mrb[0].mxu0
        %v1670 = vpop.f32.mrb[0].mxu0
        %v1671 = vadd.f32 0.0, %v1670
        %v1672 = vpop.f32.mrb[0].mxu0
        %1673 = vmatprep.mubr.bf16.mxu0 %v1466
        %1674 = vmatmul.mubr.bf16.gmra.mrb[0].mxu0 %v1465
        %v1675 = vpop.f32.mrb[0].mxu0
        %v1676 = vadd.f32 0.0, %v1675
        %v1677 = vpop.f32.mrb[0].mxu0
        %v1678 = vpop.f32.mrb[0].mxu0
        %v1679 = vadd.f32 0.0, %v1678
        %v1680 = vpop.f32.mrb[0].mxu0
        %1681 = vmatprep.mubr.bf16.mxu0 %v1468
        %1682 = vmatmul.mubr.bf16.gmra.mrb[0].mxu0 %v1467
        %v1683 = vpop.f32.mrb[0].mxu0
        %v1684 = vadd.f32 0.0, %v1683
        %v1685 = vpop.f32.mrb[0].mxu0
        %v1686 = vpop.f32.mrb[0].mxu0
        %v1687 = vadd.f32 0.0, %v1686
        %v1688 = vpop.f32.mrb[0].mxu0
        %1689 = vmatprep.mubr.bf16.mxu0 %v1470
        %1690 = vmatmul.mubr.bf16.gmra.mrb[0].mxu0 %v1469
        %v1691 = vpop.f32.mrb[0].mxu0
        %v1692 = vadd.f32 0.0, %v1691
        %v1693 = vpop.f32.mrb[0].mxu0
        %v1694 = vpop.f32.mrb[0].mxu0
        %v1695 = vadd.f32 0.0, %v1694
        %v1696 = vpop.f32.mrb[0].mxu0
        %1697 = vmatprep.mubr.bf16.mxu0 %v1472
        %1698 = vmatmul.mubr.bf16.gmra.mrb[0].mxu0 %v1471
        %v1699 = vpop.f32.mrb[0].mxu0
        %v1700 = vadd.f32 0.0, %v1699
        %v1701 = vpop.f32.mrb[0].mxu0
        %v1702 = vpop.f32.mrb[0].mxu0
        %v1703 = vadd.f32 0.0, %v1702
        %v1704 = vpop.f32.mrb[0].mxu0
        %1705 = vmatprep.mubr.bf16.mxu0 %v1474
        %1706 = vmatmul.mubr.bf16.gmra.mrb[0].mxu0 %v1473
        %v1707 = vpop.f32.mrb[0].mxu0
        %v1708 = vadd.f32 0.0, %v1707
        %v1709 = vpop.f32.mrb[0].mxu0
        %v1710 = vpop.f32.mrb[0].mxu0
        %v1711 = vadd.f32 0.0, %v1710
        %v1712 = vpop.f32.mrb[0].mxu0
        %1713 = vmatprep.mubr.bf16.mxu0 %v1476
        %1714 = vmatmul.mubr.bf16.gmra.mrb[0].mxu0 %v1475
        %v1715 = vpop.f32.mrb[0].mxu0
        %v1716 = vadd.f32 0.0, %v1715
        %v1717 = vpop.f32.mrb[0].mxu0
        %v1718 = vpop.f32.mrb[0].mxu0
        %v1719 = vadd.f32 0.0, %v1718
        %v1720 = vpop.f32.mrb[0].mxu0
        %1721 = vmatprep.mubr.bf16.mxu0 %v1478
        %1722 = vmatmul.mubr.bf16.gmra.mrb[0].mxu0 %v1477
        %v1723 = vpop.f32.mrb[0].mxu0
        %v1724 = vadd.f32 0.0, %v1723
        %v1725 = vpop.f32.mrb[0].mxu0
        %v1726 = vpop.f32.mrb[0].mxu0
        %v1727 = vadd.f32 0.0, %v1726
        %v1728 = vpop.f32.mrb[0].mxu0
        %1729 = vmatprep.mubr.bf16.mxu0 %v1480
        %1730 = vmatmul.mubr.bf16.gmra.mrb[0].mxu0 %v1479
        %v1731 = vpop.f32.mrb[0].mxu0
        %v1732 = vadd.f32 0.0, %v1731
        %v1733 = vpop.f32.mrb[0].mxu0
        %v1734 = vpop.f32.mrb[0].mxu0
        %v1735 = vadd.f32 0.0, %v1734
        %v1736 = vpop.f32.mrb[0].mxu0
        %1737 = vmatprep.mubr.bf16.mxu0 %v1482
        %1738 = vmatmul.mubr.bf16.gmra.mrb[0].mxu0 %v1481
        %v1739 = vpop.f32.mrb[0].mxu0
        %v1740 = vadd.f32 0.0, %v1739
        %v1741 = vpop.f32.mrb[0].mxu0
        %v1742 = vpop.f32.mrb[0].mxu0
        %v1743 = vadd.f32 0.0, %v1742
        %v1744 = vpop.f32.mrb[0].mxu0
        %1745 = vmatprep.mubr.bf16.mxu0 %v1484
        %1746 = vmatmul.mubr.bf16.gmra.mrb[0].mxu0 %v1483
        %v1747 = vpop.f32.mrb[0].mxu0
        %v1748 = vadd.f32 0.0, %v1747
        %v1749 = vpop.f32.mrb[0].mxu0
        %v1750 = vpop.f32.mrb[0].mxu0
        %v1751 = vadd.f32 0.0, %v1750
        %v1752 = vpop.f32.mrb[0].mxu0
        %1753 = vmatprep.mubr.bf16.mxu0 %v1486
        %1754 = vmatmul.mubr.bf16.gmra.mrb[0].mxu0 %v1485
        %v1755 = vpop.f32.mrb[0].mxu0
        %v1756 = vadd.f32 0.0, %v1755
        %v1757 = vpop.f32.mrb[0].mxu0
        %v1758 = vpop.f32.mrb[0].mxu0
        %v1759 = vadd.f32 0.0, %v1758
        %v1760 = vpop.f32.mrb[0].mxu0
        %1761 = vmatprep.mubr.bf16.mxu0 %v1488
        %1762 = vmatmul.mubr.bf16.gmra.mrb[0].mxu0 %v1487
        %v1763 = vpop.f32.mrb[0].mxu0
        %v1764 = vadd.f32 0.0, %v1763
        %v1765 = vpop.f32.mrb[0].mxu0
        %v1766 = vpop.f32.mrb[0].mxu0
        %v1767 = vadd.f32 0.0, %v1766
        %v1768 = vpop.f32.mrb[0].mxu0
        %1769 = vmatprep.mubr.bf16.mxu0 %v1490
        %1770 = vmatmul.mubr.bf16.gmra.mrb[0].mxu0 %v1489
        %v1771 = vpop.f32.mrb[0].mxu0
        %v1772 = vadd.f32 0.0, %v1771
        %v1773 = vpop.f32.mrb[0].mxu0
        %v1774 = vpop.f32.mrb[0].mxu0
        %v1775 = vadd.f32 0.0, %v1774
        %v1776 = vpop.f32.mrb[0].mxu0
        %1777 = vmatprep.mubr.bf16.mxu0 %v1492
        %1778 = vmatmul.mubr.bf16.gmra.mrb[0].mxu0 %v1491
        %v1779 = vpop.f32.mrb[0].mxu0
        %v1780 = vadd.f32 0.0, %v1779
        %v1781 = vpop.f32.mrb[0].mxu0
        %v1782 = vpop.f32.mrb[0].mxu0
        %v1783 = vadd.f32 0.0, %v1782
        %v1784 = vpop.f32.mrb[0].mxu0
        %1785 = vmatprep.mubr.bf16.mxu0 %v1494
        %1786 = vmatmul.mubr.bf16.gmra.mrb[0].mxu0 %v1493
        %v1787 = vpop.f32.mrb[0].mxu0
        %v1788 = vadd.f32 0.0, %v1787
        %v1789 = vpop.f32.mrb[0].mxu0
        %v1790 = vpop.f32.mrb[0].mxu0
        %v1791 = vadd.f32 0.0, %v1790
        %v1792 = vpop.f32.mrb[0].mxu0
        %1793 = vmatprep.mubr.bf16.mxu0 %v1496
        %1794 = vmatmul.mubr.bf16.gmra.mrb[0].mxu0 %v1495
        %v1795 = vpop.f32.mrb[0].mxu0
        %v1796 = vadd.f32 0.0, %v1795
        %v1797 = vpop.f32.mrb[0].mxu0
        %v1798 = vpop.f32.mrb[0].mxu0
        %v1799 = vadd.f32 0.0, %v1798
        %v1800 = vpop.f32.mrb[0].mxu0
        %1801 = vmatprep.mubr.bf16.mxu0 %v1498
        %1802 = vmatmul.mubr.bf16.gmra.mrb[0].mxu0 %v1497
        %v1803 = vpop.f32.mrb[0].mxu0
        %v1804 = vadd.f32 0.0, %v1803
        %v1805 = vpop.f32.mrb[0].mxu0
        %v1806 = vpop.f32.mrb[0].mxu0
        %v1807 = vadd.f32 0.0, %v1806
        %v1808 = vpop.f32.mrb[0].mxu0
        %1809 = vmatprep.mubr.bf16.mxu0 %v1500
        %1810 = vmatmul.mubr.bf16.gmra.mrb[0].mxu0 %v1499
        %v1811 = vpop.f32.mrb[0].mxu0
        %v1812 = vadd.f32 0.0, %v1811
        %v1813 = vpop.f32.mrb[0].mxu0
        %v1814 = vpop.f32.mrb[0].mxu0
        %v1815 = vadd.f32 0.0, %v1814
        %v1816 = vpop.f32.mrb[0].mxu0
        %1817 = vmatprep.mubr.bf16.mxu0 %v1502
        %1818 = vmatmul.mubr.bf16.gmra.mrb[0].mxu0 %v1501
        %v1819 = vpop.f32.mrb[0].mxu0
        %v1820 = vadd.f32 0.0, %v1819
        %v1821 = vpop.f32.mrb[0].mxu0
        %v1822 = vpop.f32.mrb[0].mxu0
        %v1823 = vadd.f32 0.0, %v1822
        %v1824 = vpop.f32.mrb[0].mxu0
        %1825 = vmatprep.mubr.bf16.mxu0 %v1504
        %1826 = vmatmul.mubr.bf16.gmra.mrb[0].mxu0 %v1503
        %v1827 = vpop.f32.mrb[0].mxu0
        %v1828 = vadd.f32 0.0, %v1827
        %v1829 = vpop.f32.mrb[0].mxu0
        %v1830 = vpop.f32.mrb[0].mxu0
        %v1831 = vadd.f32 0.0, %v1830
        %v1832 = vpop.f32.mrb[0].mxu0
        %1833 = vmatprep.mubr.bf16.mxu0 %v1506
        %1834 = vmatmul.mubr.bf16.gmra.mrb[0].mxu0 %v1505
        %v1835 = vpop.f32.mrb[0].mxu0
        %v1836 = vadd.f32 0.0, %v1835
        %v1837 = vpop.f32.mrb[0].mxu0
        %v1838 = vpop.f32.mrb[0].mxu0
        %v1839 = vadd.f32 0.0, %v1838
        %v1840 = vpop.f32.mrb[0].mxu0
        %1841 = vmatprep.mubr.bf16.mxu0 %v1508
        %1842 = vmatmul.mubr.bf16.gmra.mrb[0].mxu0 %v1507
        %v1843 = vpop.f32.mrb[0].mxu0
        %v1844 = vadd.f32 0.0, %v1843
        %v1845 = vpop.f32.mrb[0].mxu0
        %v1846 = vpop.f32.mrb[0].mxu0
        %v1847 = vadd.f32 0.0, %v1846
        %v1848 = vpop.f32.mrb[0].mxu0
        %1849 = vmatprep.mubr.bf16.mxu0 %v1510
        %1850 = vmatmul.mubr.bf16.gmra.mrb[0].mxu0 %v1509
        %v1851 = vpop.f32.mrb[0].mxu0
        %v1852 = vadd.f32 0.0, %v1851
        %v1853 = vpop.f32.mrb[0].mxu0
        %v1854 = vpop.f32.mrb[0].mxu0
        %v1855 = vadd.f32 0.0, %v1854
        %v1856 = vpop.f32.mrb[0].mxu0
        %1857 = vmatprep.mubr.bf16.mxu0 %v1512
        %1858 = vmatmul.mubr.bf16.gmra.mrb[0].mxu0 %v1511
        %v1859 = vpop.f32.mrb[0].mxu0
        %v1860 = vadd.f32 0.0, %v1859
        %v1861 = vpop.f32.mrb[0].mxu0
        %v1862 = vpop.f32.mrb[0].mxu0
        %v1863 = vadd.f32 0.0, %v1862
        %v1864 = vpop.f32.mrb[0].mxu0
        %1865 = vdwg.mxu0
        %v1866 = vadd.f32 %v1126, %v1612
        %v1867 = vadd.f32 %v1127, %v1615
        %v1868 = vadd.f32 %v1128, %v1620
        %v1869 = vadd.f32 %v1129, %v1623
        %v1870 = vadd.f32 %v1130, %v1628
        %v1871 = vadd.f32 %v1131, %v1631
        %v1872 = vadd.f32 %v1132, %v1636
        %v1873 = vadd.f32 %v1133, %v1639
        %v1874 = vadd.f32 %v1134, %v1644
        %v1875 = vadd.f32 %v1135, %v1647
        %v1876 = vadd.f32 %v1136, %v1652
        %v1877 = vadd.f32 %v1137, %v1655
        %v1878 = vadd.f32 %v1138, %v1660
        %v1879 = vadd.f32 %v1139, %v1663
        %v1880 = vadd.f32 %v1140, %v1668
        %v1881 = vadd.f32 %v1141, %v1671
        %v1882 = vadd.f32 %v1142, %v1676
        %v1883 = vadd.f32 %v1143, %v1679
        %v1884 = vadd.f32 %v1144, %v1684
        %v1885 = vadd.f32 %v1145, %v1687
        %v1886 = vadd.f32 %v1146, %v1692
        %v1887 = vadd.f32 %v1147, %v1695
        %v1888 = vadd.f32 %v1148, %v1700
        %v1889 = vadd.f32 %v1149, %v1703
        %v1890 = vadd.f32 %v1150, %v1708
        %v1891 = vadd.f32 %v1151, %v1711
        %v1892 = vadd.f32 %v1152, %v1716
        %v1893 = vadd.f32 %v1153, %v1719
        %v1894 = vadd.f32 %v1154, %v1724
        %v1895 = vadd.f32 %v1155, %v1727
        %v1896 = vadd.f32 %v1156, %v1732
        %v1897 = vadd.f32 %v1157, %v1735
        %v1898 = vadd.f32 %v1158, %v1740
        %v1899 = vadd.f32 %v1159, %v1743
        %v1900 = vadd.f32 %v1160, %v1748
        %v1901 = vadd.f32 %v1161, %v1751
        %v1902 = vadd.f32 %v1162, %v1756
        %v1903 = vadd.f32 %v1163, %v1759
        %v1904 = vadd.f32 %v1164, %v1764
        %v1905 = vadd.f32 %v1165, %v1767
        %v1906 = vadd.f32 %v1166, %v1772
        %v1907 = vadd.f32 %v1167, %v1775
        %v1908 = vadd.f32 %v1168, %v1780
        %v1909 = vadd.f32 %v1169, %v1783
        %v1910 = vadd.f32 %v1170, %v1788
        %v1911 = vadd.f32 %v1171, %v1791
        %v1912 = vadd.f32 %v1172, %v1796
        %v1913 = vadd.f32 %v1173, %v1799
        %v1914 = vadd.f32 %v1174, %v1804
        %v1915 = vadd.f32 %v1175, %v1807
        %v1916 = vadd.f32 %v1176, %v1812
        %v1917 = vadd.f32 %v1177, %v1815
        %v1918 = vadd.f32 %v1178, %v1820
        %v1919 = vadd.f32 %v1179, %v1823
        %v1920 = vadd.f32 %v1180, %v1828
        %v1921 = vadd.f32 %v1181, %v1831
        %v1922 = vadd.f32 %v1182, %v1836
        %v1923 = vadd.f32 %v1183, %v1839
        %v1924 = vadd.f32 %v1184, %v1844
        %v1925 = vadd.f32 %v1185, %v1847
        %v1926 = vadd.f32 %v1186, %v1852
        %v1927 = vadd.f32 %v1187, %v1855
        %v1928 = vadd.f32 %v1188, %v1860
        %v1929 = vadd.f32 %v1189, %v1863
        %1930 = vst [vmem:[#allocation4] sm:$0xff] %v1866
        %1931 = vst [vmem:[#allocation4 + $0x8] sm:$0xff] %v1867
        %1932 = vst [vmem:[#allocation4 + $0x10] sm:$0xff] %v1868
        %1933 = vst [vmem:[#allocation4 + $0x18] sm:$0xff] %v1869
        %1934 = vst [vmem:[#allocation4 + $0x20] sm:$0xff] %v1870
        %1935 = vst [vmem:[#allocation4 + $0x28] sm:$0xff] %v1871
        %1936 = vst [vmem:[#allocation4 + $0x30] sm:$0xff] %v1872
        %1937 = vst [vmem:[#allocation4 + $0x38] sm:$0xff] %v1873
        %1938 = vst [vmem:[#allocation4 + $0x40] sm:$0xff] %v1874
        %1939 = vst [vmem:[#allocation4 + $0x48] sm:$0xff] %v1875
        %1940 = vst [vmem:[#allocation4 + $0x50] sm:$0xff] %v1876
        %1941 = vst [vmem:[#allocation4 + $0x58] sm:$0xff] %v1877
        %1942 = vst [vmem:[#allocation4 + $0x60] sm:$0xff] %v1878
        %1943 = vst [vmem:[#allocation4 + $0x68] sm:$0xff] %v1879
        %1944 = vst [vmem:[#allocation4 + $0x70] sm:$0xff] %v1880
        %1945 = vst [vmem:[#allocation4 + $0x78] sm:$0xff] %v1881
        %1946 = vst [vmem:[#allocation4 + $0x80] sm:$0xff] %v1882
        %1947 = vst [vmem:[#allocation4 + $0x88] sm:$0xff] %v1883
        %1948 = vst [vmem:[#allocation4 + $0x90] sm:$0xff] %v1884
        %1949 = vst [vmem:[#allocation4 + $0x98] sm:$0xff] %v1885
        %1950 = vst [vmem:[#allocation4 + $0xa0] sm:$0xff] %v1886
        %1951 = vst [vmem:[#allocation4 + $0xa8] sm:$0xff] %v1887
        %1952 = vst [vmem:[#allocation4 + $0xb0] sm:$0xff] %v1888
        %1953 = vst [vmem:[#allocation4 + $0xb8] sm:$0xff] %v1889
        %1954 = vst [vmem:[#allocation4 + $0xc0] sm:$0xff] %v1890
        %1955 = vst [vmem:[#allocation4 + $0xc8] sm:$0xff] %v1891
        %1956 = vst [vmem:[#allocation4 + $0xd0] sm:$0xff] %v1892
        %1957 = vst [vmem:[#allocation4 + $0xd8] sm:$0xff] %v1893
        %1958 = vst [vmem:[#allocation4 + $0xe0] sm:$0xff] %v1894
        %1959 = vst [vmem:[#allocation4 + $0xe8] sm:$0xff] %v1895
        %1960 = vst [vmem:[#allocation4 + $0xf0] sm:$0xff] %v1896
        %1961 = vst [vmem:[#allocation4 + $0xf8] sm:$0xff] %v1897
        %1962 = vst [vmem:[#allocation4 + $0x100] sm:$0xff] %v1898
        %1963 = vst [vmem:[#allocation4 + $0x108] sm:$0xff] %v1899
        %1964 = vst [vmem:[#allocation4 + $0x110] sm:$0xff] %v1900
        %1965 = vst [vmem:[#allocation4 + $0x118] sm:$0xff] %v1901
        %1966 = vst [vmem:[#allocation4 + $0x120] sm:$0xff] %v1902
        %1967 = vst [vmem:[#allocation4 + $0x128] sm:$0xff] %v1903
        %1968 = vst [vmem:[#allocation4 + $0x130] sm:$0xff] %v1904
        %1969 = vst [vmem:[#allocation4 + $0x138] sm:$0xff] %v1905
        %1970 = vst [vmem:[#allocation4 + $0x140] sm:$0xff] %v1906
        %1971 = vst [vmem:[#allocation4 + $0x148] sm:$0xff] %v1907
        %1972 = vst [vmem:[#allocation4 + $0x150] sm:$0xff] %v1908
        %1973 = vst [vmem:[#allocation4 + $0x158] sm:$0xff] %v1909
        %1974 = vst [vmem:[#allocation4 + $0x160] sm:$0xff] %v1910
        %1975 = vst [vmem:[#allocation4 + $0x168] sm:$0xff] %v1911
        %1976 = vst [vmem:[#allocation4 + $0x170] sm:$0xff] %v1912
        %1977 = vst [vmem:[#allocation4 + $0x178] sm:$0xff] %v1913
        %1978 = vst [vmem:[#allocation4 + $0x180] sm:$0xff] %v1914
        %1979 = vst [vmem:[#allocation4 + $0x188] sm:$0xff] %v1915
        %1980 = vst [vmem:[#allocation4 + $0x190] sm:$0xff] %v1916
        %1981 = vst [vmem:[#allocation4 + $0x198] sm:$0xff] %v1917
        %1982 = vst [vmem:[#allocation4 + $0x1a0] sm:$0xff] %v1918
        %1983 = vst [vmem:[#allocation4 + $0x1a8] sm:$0xff] %v1919
        %1984 = vst [vmem:[#allocation4 + $0x1b0] sm:$0xff] %v1920
        %1985 = vst [vmem:[#allocation4 + $0x1b8] sm:$0xff] %v1921
        %1986 = vst [vmem:[#allocation4 + $0x1c0] sm:$0xff] %v1922
        %1987 = vst [vmem:[#allocation4 + $0x1c8] sm:$0xff] %v1923
        %1988 = vst [vmem:[#allocation4 + $0x1d0] sm:$0xff] %v1924
        %1989 = vst [vmem:[#allocation4 + $0x1d8] sm:$0xff] %v1925
        %1990 = vst [vmem:[#allocation4 + $0x1e0] sm:$0xff] %v1926
        %1991 = vst [vmem:[#allocation4 + $0x1e8] sm:$0xff] %v1927
        %1992 = vst [vmem:[#allocation4 + $0x1f0] sm:$0xff] %v1928
        %1993 = vst [vmem:[#allocation4 + $0x1f8] sm:$0xff] %v1929
      $region52: #{gconv_gru_cell.1} parent=43 // pred_fallthru
        _
      %p1994 = scmp.ge.s32.totalorder %s21, 2
      // Predicated region
      $region53: #{gconv_gru_cell.1} parent=43 // pred_check
        %p1995 = pneg %p1994
      $region54: #{gconv_gru_cell.1} parent=43 // pred_check_branch
        %1997 = sbr.rel (%p1995) target = $region56
      $region55: #{gconv_gru_cell.1} parent=43 // pred_region
        %s1998 = sshra.s32 %s1102, 4
        %s1999 = sand.u32 %s1102, 15
        %s2000 = smul.addr %s1998, 8
        %s2001 = scalar_lea.vmem [#allocation2], %s2000
        %v2002 = vld [vmem:[%s2001] sm:$0xff]
        %v2003 = vld [vmem:[%s2001 + $0x8] sm:$0xff]
        %v2004 = vld [vmem:[%s2001 + $0x10] sm:$0xff]
        %v2005 = vld [vmem:[%s2001 + $0x18] sm:$0xff]
        %v2006 = vld [vmem:[%s2001 + $0x20] sm:$0xff]
        %v2007 = vld [vmem:[%s2001 + $0x28] sm:$0xff]
        %v2008 = vld [vmem:[%s2001 + $0x30] sm:$0xff]
        %v2009 = vld [vmem:[%s2001 + $0x38] sm:$0xff]
        %v2010 = vld [vmem:[%s2001 + $0x40] sm:$0xff]
        %v2011 = vld [vmem:[%s2001 + $0x48] sm:$0xff]
        %v2012 = vld [vmem:[%s2001 + $0x50] sm:$0xff]
        %v2013 = vld [vmem:[%s2001 + $0x58] sm:$0xff]
        %v2014 = vld [vmem:[%s2001 + $0x60] sm:$0xff]
        %v2015 = vld [vmem:[%s2001 + $0x68] sm:$0xff]
        %v2016 = vld [vmem:[%s2001 + $0x70] sm:$0xff]
        %v2017 = vld [vmem:[%s2001 + $0x78] sm:$0xff]
        %v2018 = vld [vmem:[#allocation4] sm:$0xff]
        %v2019 = vld [vmem:[#allocation4 + $0x8] sm:$0xff]
        %v2020 = vld [vmem:[#allocation4 + $0x10] sm:$0xff]
        %v2021 = vld [vmem:[#allocation4 + $0x18] sm:$0xff]
        %v2022 = vld [vmem:[#allocation4 + $0x20] sm:$0xff]
        %v2023 = vld [vmem:[#allocation4 + $0x28] sm:$0xff]
        %v2024 = vld [vmem:[#allocation4 + $0x30] sm:$0xff]
        %v2025 = vld [vmem:[#allocation4 + $0x38] sm:$0xff]
        %v2026 = vld [vmem:[#allocation4 + $0x40] sm:$0xff]
        %v2027 = vld [vmem:[#allocation4 + $0x48] sm:$0xff]
        %v2028 = vld [vmem:[#allocation4 + $0x50] sm:$0xff]
        %v2029 = vld [vmem:[#allocation4 + $0x58] sm:$0xff]
        %v2030 = vld [vmem:[#allocation4 + $0x60] sm:$0xff]
        %v2031 = vld [vmem:[#allocation4 + $0x68] sm:$0xff]
        %v2032 = vld [vmem:[#allocation4 + $0x70] sm:$0xff]
        %v2033 = vld [vmem:[#allocation4 + $0x78] sm:$0xff]
        %v2034 = vld [vmem:[#allocation4 + $0x80] sm:$0xff]
        %v2035 = vld [vmem:[#allocation4 + $0x88] sm:$0xff]
        %v2036 = vld [vmem:[#allocation4 + $0x90] sm:$0xff]
        %v2037 = vld [vmem:[#allocation4 + $0x98] sm:$0xff]
        %v2038 = vld [vmem:[#allocation4 + $0xa0] sm:$0xff]
        %v2039 = vld [vmem:[#allocation4 + $0xa8] sm:$0xff]
        %v2040 = vld [vmem:[#allocation4 + $0xb0] sm:$0xff]
        %v2041 = vld [vmem:[#allocation4 + $0xb8] sm:$0xff]
        %v2042 = vld [vmem:[#allocation4 + $0xc0] sm:$0xff]
        %v2043 = vld [vmem:[#allocation4 + $0xc8] sm:$0xff]
        %v2044 = vld [vmem:[#allocation4 + $0xd0] sm:$0xff]
        %v2045 = vld [vmem:[#allocation4 + $0xd8] sm:$0xff]
        %v2046 = vld [vmem:[#allocation4 + $0xe0] sm:$0xff]
        %v2047 = vld [vmem:[#allocation4 + $0xe8] sm:$0xff]
        %v2048 = vld [vmem:[#allocation4 + $0xf0] sm:$0xff]
        %v2049 = vld [vmem:[#allocation4 + $0xf8] sm:$0xff]
        %v2050 = vld [vmem:[#allocation4 + $0x100] sm:$0xff]
        %v2051 = vld [vmem:[#allocation4 + $0x108] sm:$0xff]
        %v2052 = vld [vmem:[#allocation4 + $0x110] sm:$0xff]
        %v2053 = vld [vmem:[#allocation4 + $0x118] sm:$0xff]
        %v2054 = vld [vmem:[#allocation4 + $0x120] sm:$0xff]
        %v2055 = vld [vmem:[#allocation4 + $0x128] sm:$0xff]
        %v2056 = vld [vmem:[#allocation4 + $0x130] sm:$0xff]
        %v2057 = vld [vmem:[#allocation4 + $0x138] sm:$0xff]
        %v2058 = vld [vmem:[#allocation4 + $0x140] sm:$0xff]
        %v2059 = vld [vmem:[#allocation4 + $0x148] sm:$0xff]
        %v2060 = vld [vmem:[#allocation4 + $0x150] sm:$0xff]
        %v2061 = vld [vmem:[#allocation4 + $0x158] sm:$0xff]
        %v2062 = vld [vmem:[#allocation4 + $0x160] sm:$0xff]
        %v2063 = vld [vmem:[#allocation4 + $0x168] sm:$0xff]
        %v2064 = vld [vmem:[#allocation4 + $0x170] sm:$0xff]
        %v2065 = vld [vmem:[#allocation4 + $0x178] sm:$0xff]
        %v2066 = vld [vmem:[#allocation4 + $0x180] sm:$0xff]
        %v2067 = vld [vmem:[#allocation4 + $0x188] sm:$0xff]
        %v2068 = vld [vmem:[#allocation4 + $0x190] sm:$0xff]
        %v2069 = vld [vmem:[#allocation4 + $0x198] sm:$0xff]
        %v2070 = vld [vmem:[#allocation4 + $0x1a0] sm:$0xff]
        %v2071 = vld [vmem:[#allocation4 + $0x1a8] sm:$0xff]
        %v2072 = vld [vmem:[#allocation4 + $0x1b0] sm:$0xff]
        %v2073 = vld [vmem:[#allocation4 + $0x1b8] sm:$0xff]
        %v2074 = vld [vmem:[#allocation4 + $0x1c0] sm:$0xff]
        %v2075 = vld [vmem:[#allocation4 + $0x1c8] sm:$0xff]
        %v2076 = vld [vmem:[#allocation4 + $0x1d0] sm:$0xff]
        %v2077 = vld [vmem:[#allocation4 + $0x1d8] sm:$0xff]
        %v2078 = vld [vmem:[#allocation4 + $0x1e0] sm:$0xff]
        %v2079 = vld [vmem:[#allocation4 + $0x1e8] sm:$0xff]
        %v2080 = vld [vmem:[#allocation4 + $0x1f0] sm:$0xff]
        %v2081 = vld [vmem:[#allocation4 + $0x1f8] sm:$0xff]
        %s2082 = smul.u32 %s22, 128
        %s2083 = smul.addr %s2082, 4
        %s2084 = scalar_lea.vmem %s0, %s2083
        %v2085 = vld [vmem:[%s2084] sm:$0xff]
        %v2086 = vld [vmem:[%s2084 + $0x8] sm:$0xff]
        %v2087 = vld [vmem:[%s2084 + $0x10] sm:$0xff]
        %v2088 = vld [vmem:[%s2084 + $0x18] sm:$0xff]
        %v2089 = vld [vmem:[%s2084 + $0x20] sm:$0xff]
        %v2090 = vld [vmem:[%s2084 + $0x28] sm:$0xff]
        %v2091 = vld [vmem:[%s2084 + $0x30] sm:$0xff]
        %v2092 = vld [vmem:[%s2084 + $0x38] sm:$0xff]
        %v2093 = vld [vmem:[%s2084 + $0x40] sm:$0xff]
        %v2094 = vld [vmem:[%s2084 + $0x48] sm:$0xff]
        %v2095 = vld [vmem:[%s2084 + $0x50] sm:$0xff]
        %v2096 = vld [vmem:[%s2084 + $0x58] sm:$0xff]
        %v2097 = vld [vmem:[%s2084 + $0x60] sm:$0xff]
        %v2098 = vld [vmem:[%s2084 + $0x68] sm:$0xff]
        %v2099 = vld [vmem:[%s2084 + $0x70] sm:$0xff]
        %v2100 = vld [vmem:[%s2084 + $0x78] sm:$0xff]
        %v2101 = vld [vmem:[%s2084 + $0x80] sm:$0xff]
        %v2102 = vld [vmem:[%s2084 + $0x88] sm:$0xff]
        %v2103 = vld [vmem:[%s2084 + $0x90] sm:$0xff]
        %v2104 = vld [vmem:[%s2084 + $0x98] sm:$0xff]
        %v2105 = vld [vmem:[%s2084 + $0xa0] sm:$0xff]
        %v2106 = vld [vmem:[%s2084 + $0xa8] sm:$0xff]
        %v2107 = vld [vmem:[%s2084 + $0xb0] sm:$0xff]
        %v2108 = vld [vmem:[%s2084 + $0xb8] sm:$0xff]
        %v2109 = vld [vmem:[%s2084 + $0xc0] sm:$0xff]
        %v2110 = vld [vmem:[%s2084 + $0xc8] sm:$0xff]
        %v2111 = vld [vmem:[%s2084 + $0xd0] sm:$0xff]
        %v2112 = vld [vmem:[%s2084 + $0xd8] sm:$0xff]
        %v2113 = vld [vmem:[%s2084 + $0xe0] sm:$0xff]
        %v2114 = vld [vmem:[%s2084 + $0xe8] sm:$0xff]
        %v2115 = vld [vmem:[%s2084 + $0xf0] sm:$0xff]
        %v2116 = vld [vmem:[%s2084 + $0xf8] sm:$0xff]
        %v2117 = vld [vmem:[%s2084 + $0x100] sm:$0xff]
        %v2118 = vld [vmem:[%s2084 + $0x108] sm:$0xff]
        %v2119 = vld [vmem:[%s2084 + $0x110] sm:$0xff]
        %v2120 = vld [vmem:[%s2084 + $0x118] sm:$0xff]
        %v2121 = vld [vmem:[%s2084 + $0x120] sm:$0xff]
        %v2122 = vld [vmem:[%s2084 + $0x128] sm:$0xff]
        %v2123 = vld [vmem:[%s2084 + $0x130] sm:$0xff]
        %v2124 = vld [vmem:[%s2084 + $0x138] sm:$0xff]
        %v2125 = vld [vmem:[%s2084 + $0x140] sm:$0xff]
        %v2126 = vld [vmem:[%s2084 + $0x148] sm:$0xff]
        %v2127 = vld [vmem:[%s2084 + $0x150] sm:$0xff]
        %v2128 = vld [vmem:[%s2084 + $0x158] sm:$0xff]
        %v2129 = vld [vmem:[%s2084 + $0x160] sm:$0xff]
        %v2130 = vld [vmem:[%s2084 + $0x168] sm:$0xff]
        %v2131 = vld [vmem:[%s2084 + $0x170] sm:$0xff]
        %v2132 = vld [vmem:[%s2084 + $0x178] sm:$0xff]
        %v2133 = vld [vmem:[%s2084 + $0x180] sm:$0xff]
        %v2134 = vld [vmem:[%s2084 + $0x188] sm:$0xff]
        %v2135 = vld [vmem:[%s2084 + $0x190] sm:$0xff]
        %v2136 = vld [vmem:[%s2084 + $0x198] sm:$0xff]
        %v2137 = vld [vmem:[%s2084 + $0x1a0] sm:$0xff]
        %v2138 = vld [vmem:[%s2084 + $0x1a8] sm:$0xff]
        %v2139 = vld [vmem:[%s2084 + $0x1b0] sm:$0xff]
        %v2140 = vld [vmem:[%s2084 + $0x1b8] sm:$0xff]
        %v2141 = vld [vmem:[%s2084 + $0x1c0] sm:$0xff]
        %v2142 = vld [vmem:[%s2084 + $0x1c8] sm:$0xff]
        %v2143 = vld [vmem:[%s2084 + $0x1d0] sm:$0xff]
        %v2144 = vld [vmem:[%s2084 + $0x1d8] sm:$0xff]
        %v2145 = vld [vmem:[%s2084 + $0x1e0] sm:$0xff]
        %v2146 = vld [vmem:[%s2084 + $0x1e8] sm:$0xff]
        %v2147 = vld [vmem:[%s2084 + $0x1f0] sm:$0xff]
        %v2148 = vld [vmem:[%s2084 + $0x1f8] sm:$0xff]
        %v2213 = vunpack.c.l.b16 %v2085
        %v2214 = vunpack.c.h.b16 %v2085
        %v2215 = vunpack.c.l.b16 %v2086
        %v2216 = vunpack.c.h.b16 %v2086
        %v2217 = vunpack.c.l.b16 %v2087
        %v2218 = vunpack.c.h.b16 %v2087
        %v2219 = vunpack.c.l.b16 %v2088
        %v2220 = vunpack.c.h.b16 %v2088
        %v2221 = vunpack.c.l.b16 %v2089
        %v2222 = vunpack.c.h.b16 %v2089
        %v2223 = vunpack.c.l.b16 %v2090
        %v2224 = vunpack.c.h.b16 %v2090
        %v2225 = vunpack.c.l.b16 %v2091
        %v2226 = vunpack.c.h.b16 %v2091
        %v2227 = vunpack.c.l.b16 %v2092
        %v2228 = vunpack.c.h.b16 %v2092
        %v2229 = vunpack.c.l.b16 %v2093
        %v2230 = vunpack.c.h.b16 %v2093
        %v2231 = vunpack.c.l.b16 %v2094
        %v2232 = vunpack.c.h.b16 %v2094
        %v2233 = vunpack.c.l.b16 %v2095
        %v2234 = vunpack.c.h.b16 %v2095
        %v2235 = vunpack.c.l.b16 %v2096
        %v2236 = vunpack.c.h.b16 %v2096
        %v2237 = vunpack.c.l.b16 %v2097
        %v2238 = vunpack.c.h.b16 %v2097
        %v2239 = vunpack.c.l.b16 %v2098
        %v2240 = vunpack.c.h.b16 %v2098
        %v2241 = vunpack.c.l.b16 %v2099
        %v2242 = vunpack.c.h.b16 %v2099
        %v2243 = vunpack.c.l.b16 %v2100
        %v2244 = vunpack.c.h.b16 %v2100
        %v2245 = vunpack.c.l.b16 %v2101
        %v2246 = vunpack.c.h.b16 %v2101
        %v2247 = vunpack.c.l.b16 %v2102
        %v2248 = vunpack.c.h.b16 %v2102
        %v2249 = vunpack.c.l.b16 %v2103
        %v2250 = vunpack.c.h.b16 %v2103
        %v2251 = vunpack.c.l.b16 %v2104
        %v2252 = vunpack.c.h.b16 %v2104
        %v2253 = vunpack.c.l.b16 %v2105
        %v2254 = vunpack.c.h.b16 %v2105
        %v2255 = vunpack.c.l.b16 %v2106
        %v2256 = vunpack.c.h.b16 %v2106
        %v2257 = vunpack.c.l.b16 %v2107
        %v2258 = vunpack.c.h.b16 %v2107
        %v2259 = vunpack.c.l.b16 %v2108
        %v2260 = vunpack.c.h.b16 %v2108
        %v2261 = vunpack.c.l.b16 %v2109
        %v2262 = vunpack.c.h.b16 %v2109
        %v2263 = vunpack.c.l.b16 %v2110
        %v2264 = vunpack.c.h.b16 %v2110
        %v2265 = vunpack.c.l.b16 %v2111
        %v2266 = vunpack.c.h.b16 %v2111
        %v2267 = vunpack.c.l.b16 %v2112
        %v2268 = vunpack.c.h.b16 %v2112
        %v2269 = vunpack.c.l.b16 %v2113
        %v2270 = vunpack.c.h.b16 %v2113
        %v2271 = vunpack.c.l.b16 %v2114
        %v2272 = vunpack.c.h.b16 %v2114
        %v2273 = vunpack.c.l.b16 %v2115
        %v2274 = vunpack.c.h.b16 %v2115
        %v2275 = vunpack.c.l.b16 %v2116
        %v2276 = vunpack.c.h.b16 %v2116
        %v2277 = vunpack.c.l.b16 %v2117
        %v2278 = vunpack.c.h.b16 %v2117
        %v2279 = vunpack.c.l.b16 %v2118
        %v2280 = vunpack.c.h.b16 %v2118
        %v2281 = vunpack.c.l.b16 %v2119
        %v2282 = vunpack.c.h.b16 %v2119
        %v2283 = vunpack.c.l.b16 %v2120
        %v2284 = vunpack.c.h.b16 %v2120
        %v2285 = vunpack.c.l.b16 %v2121
        %v2286 = vunpack.c.h.b16 %v2121
        %v2287 = vunpack.c.l.b16 %v2122
        %v2288 = vunpack.c.h.b16 %v2122
        %v2289 = vunpack.c.l.b16 %v2123
        %v2290 = vunpack.c.h.b16 %v2123
        %v2291 = vunpack.c.l.b16 %v2124
        %v2292 = vunpack.c.h.b16 %v2124
        %v2293 = vunpack.c.l.b16 %v2125
        %v2294 = vunpack.c.h.b16 %v2125
        %v2295 = vunpack.c.l.b16 %v2126
        %v2296 = vunpack.c.h.b16 %v2126
        %v2297 = vunpack.c.l.b16 %v2127
        %v2298 = vunpack.c.h.b16 %v2127
        %v2299 = vunpack.c.l.b16 %v2128
        %v2300 = vunpack.c.h.b16 %v2128
        %v2301 = vunpack.c.l.b16 %v2129
        %v2302 = vunpack.c.h.b16 %v2129
        %v2303 = vunpack.c.l.b16 %v2130
        %v2304 = vunpack.c.h.b16 %v2130
        %v2305 = vunpack.c.l.b16 %v2131
        %v2306 = vunpack.c.h.b16 %v2131
        %v2307 = vunpack.c.l.b16 %v2132
        %v2308 = vunpack.c.h.b16 %v2132
        %v2309 = vunpack.c.l.b16 %v2133
        %v2310 = vunpack.c.h.b16 %v2133
        %v2311 = vunpack.c.l.b16 %v2134
        %v2312 = vunpack.c.h.b16 %v2134
        %v2313 = vunpack.c.l.b16 %v2135
        %v2314 = vunpack.c.h.b16 %v2135
        %v2315 = vunpack.c.l.b16 %v2136
        %v2316 = vunpack.c.h.b16 %v2136
        %v2317 = vunpack.c.l.b16 %v2137
        %v2318 = vunpack.c.h.b16 %v2137
        %v2319 = vunpack.c.l.b16 %v2138
        %v2320 = vunpack.c.h.b16 %v2138
        %v2321 = vunpack.c.l.b16 %v2139
        %v2322 = vunpack.c.h.b16 %v2139
        %v2323 = vunpack.c.l.b16 %v2140
        %v2324 = vunpack.c.h.b16 %v2140
        %v2325 = vunpack.c.l.b16 %v2141
        %v2326 = vunpack.c.h.b16 %v2141
        %v2327 = vunpack.c.l.b16 %v2142
        %v2328 = vunpack.c.h.b16 %v2142
        %v2329 = vunpack.c.l.b16 %v2143
        %v2330 = vunpack.c.h.b16 %v2143
        %v2331 = vunpack.c.l.b16 %v2144
        %v2332 = vunpack.c.h.b16 %v2144
        %v2333 = vunpack.c.l.b16 %v2145
        %v2334 = vunpack.c.h.b16 %v2145
        %v2335 = vunpack.c.l.b16 %v2146
        %v2336 = vunpack.c.h.b16 %v2146
        %v2337 = vunpack.c.l.b16 %v2147
        %v2338 = vunpack.c.h.b16 %v2147
        %v2339 = vunpack.c.l.b16 %v2148
        %v2340 = vunpack.c.h.b16 %v2148
        %v2341 = vpack.c.b16 %v2215, %v2213
        %v2342 = vpack.c.b16 %v2216, %v2214
        %v2343 = vpack.c.b16 %v2219, %v2217
        %v2344 = vpack.c.b16 %v2220, %v2218
        %v2345 = vpack.c.b16 %v2223, %v2221
        %v2346 = vpack.c.b16 %v2224, %v2222
        %v2347 = vpack.c.b16 %v2227, %v2225
        %v2348 = vpack.c.b16 %v2228, %v2226
        %v2349 = vpack.c.b16 %v2231, %v2229
        %v2350 = vpack.c.b16 %v2232, %v2230
        %v2351 = vpack.c.b16 %v2235, %v2233
        %v2352 = vpack.c.b16 %v2236, %v2234
        %v2353 = vpack.c.b16 %v2239, %v2237
        %v2354 = vpack.c.b16 %v2240, %v2238
        %v2355 = vpack.c.b16 %v2243, %v2241
        %v2356 = vpack.c.b16 %v2244, %v2242
        %v2357 = vpack.c.b16 %v2247, %v2245
        %v2358 = vpack.c.b16 %v2248, %v2246
        %v2359 = vpack.c.b16 %v2251, %v2249
        %v2360 = vpack.c.b16 %v2252, %v2250
        %v2361 = vpack.c.b16 %v2255, %v2253
        %v2362 = vpack.c.b16 %v2256, %v2254
        %v2363 = vpack.c.b16 %v2259, %v2257
        %v2364 = vpack.c.b16 %v2260, %v2258
        %v2365 = vpack.c.b16 %v2263, %v2261
        %v2366 = vpack.c.b16 %v2264, %v2262
        %v2367 = vpack.c.b16 %v2267, %v2265
        %v2368 = vpack.c.b16 %v2268, %v2266
        %v2369 = vpack.c.b16 %v2271, %v2269
        %v2370 = vpack.c.b16 %v2272, %v2270
        %v2371 = vpack.c.b16 %v2275, %v2273
        %v2372 = vpack.c.b16 %v2276, %v2274
        %v2373 = vpack.c.b16 %v2279, %v2277
        %v2374 = vpack.c.b16 %v2280, %v2278
        %v2375 = vpack.c.b16 %v2283, %v2281
        %v2376 = vpack.c.b16 %v2284, %v2282
        %v2377 = vpack.c.b16 %v2287, %v2285
        %v2378 = vpack.c.b16 %v2288, %v2286
        %v2379 = vpack.c.b16 %v2291, %v2289
        %v2380 = vpack.c.b16 %v2292, %v2290
        %v2381 = vpack.c.b16 %v2295, %v2293
        %v2382 = vpack.c.b16 %v2296, %v2294
        %v2383 = vpack.c.b16 %v2299, %v2297
        %v2384 = vpack.c.b16 %v2300, %v2298
        %v2385 = vpack.c.b16 %v2303, %v2301
        %v2386 = vpack.c.b16 %v2304, %v2302
        %v2387 = vpack.c.b16 %v2307, %v2305
        %v2388 = vpack.c.b16 %v2308, %v2306
        %v2389 = vpack.c.b16 %v2311, %v2309
        %v2390 = vpack.c.b16 %v2312, %v2310
        %v2391 = vpack.c.b16 %v2315, %v2313
        %v2392 = vpack.c.b16 %v2316, %v2314
        %v2393 = vpack.c.b16 %v2319, %v2317
        %v2394 = vpack.c.b16 %v2320, %v2318
        %v2395 = vpack.c.b16 %v2323, %v2321
        %v2396 = vpack.c.b16 %v2324, %v2322
        %v2397 = vpack.c.b16 %v2327, %v2325
        %v2398 = vpack.c.b16 %v2328, %v2326
        %v2399 = vpack.c.b16 %v2331, %v2329
        %v2400 = vpack.c.b16 %v2332, %v2330
        %v2401 = vpack.c.b16 %v2335, %v2333
        %v2402 = vpack.c.b16 %v2336, %v2334
        %v2403 = vpack.c.b16 %v2339, %v2337
        %v2404 = vpack.c.b16 %v2340, %v2338
        %2469 = vmatprep.subr.bf16.mxu0 0
        %2470 = vmatpush1.bf16.msra.mxu0 %v2002
        %2471 = vmatprep.subr.bf16.mxu0 0
        %2472 = vmatpush1.bf16.msra.mxu0 %v2003
        %2473 = vmatprep.subr.bf16.mxu0 0
        %2474 = vmatpush1.bf16.msra.mxu0 %v2004
        %2475 = vmatprep.subr.bf16.mxu0 0
        %2476 = vmatpush1.bf16.msra.mxu0 %v2005
        %2477 = vmatprep.subr.bf16.mxu0 0
        %2478 = vmatpush1.bf16.msra.mxu0 %v2006
        %2479 = vmatprep.subr.bf16.mxu0 0
        %2480 = vmatpush1.bf16.msra.mxu0 %v2007
        %2481 = vmatprep.subr.bf16.mxu0 0
        %2482 = vmatpush1.bf16.msra.mxu0 %v2008
        %2483 = vmatprep.subr.bf16.mxu0 0
        %2484 = vmatpush1.bf16.msra.mxu0 %v2009
        %2485 = vmatprep.subr.bf16.mxu0 0
        %2486 = vmatpush1.bf16.msra.mxu0 %v2010
        %2487 = vmatprep.subr.bf16.mxu0 0
        %2488 = vmatpush1.bf16.msra.mxu0 %v2011
        %2489 = vmatprep.subr.bf16.mxu0 0
        %2490 = vmatpush1.bf16.msra.mxu0 %v2012
        %2491 = vmatprep.subr.bf16.mxu0 0
        %2492 = vmatpush1.bf16.msra.mxu0 %v2013
        %2493 = vmatprep.subr.bf16.mxu0 0
        %2494 = vmatpush1.bf16.msra.mxu0 %v2014
        %2495 = vmatprep.subr.bf16.mxu0 0
        %2496 = vmatpush1.bf16.msra.mxu0 %v2015
        %2497 = vmatprep.subr.bf16.mxu0 0
        %2498 = vmatpush1.bf16.msra.mxu0 %v2016
        %2499 = vmatprep.subr.bf16.mxu0 0
        %2500 = vmatpush1.bf16.msra.mxu0 %v2017
        %2501 = vmatprep.mubr.bf16.mxu0 %v2342
        %2502 = vmatmul.mubr.bf16.gmra.mrb[0].mxu0 %v2341
        %v2503 = vpop.f32.mrb[0].mxu0
        %v2504 = vadd.f32 0.0, %v2503
        %v2505 = vpop.f32.mrb[0].mxu0
        %v2506 = vpop.f32.mrb[0].mxu0
        %v2507 = vadd.f32 0.0, %v2506
        %v2508 = vpop.f32.mrb[0].mxu0
        %2509 = vmatprep.mubr.bf16.mxu0 %v2344
        %2510 = vmatmul.mubr.bf16.gmra.mrb[0].mxu0 %v2343
        %v2511 = vpop.f32.mrb[0].mxu0
        %v2512 = vadd.f32 0.0, %v2511
        %v2513 = vpop.f32.mrb[0].mxu0
        %v2514 = vpop.f32.mrb[0].mxu0
        %v2515 = vadd.f32 0.0, %v2514
        %v2516 = vpop.f32.mrb[0].mxu0
        %2517 = vmatprep.mubr.bf16.mxu0 %v2346
        %2518 = vmatmul.mubr.bf16.gmra.mrb[0].mxu0 %v2345
        %v2519 = vpop.f32.mrb[0].mxu0
        %v2520 = vadd.f32 0.0, %v2519
        %v2521 = vpop.f32.mrb[0].mxu0
        %v2522 = vpop.f32.mrb[0].mxu0
        %v2523 = vadd.f32 0.0, %v2522
        %v2524 = vpop.f32.mrb[0].mxu0
        %2525 = vmatprep.mubr.bf16.mxu0 %v2348
        %2526 = vmatmul.mubr.bf16.gmra.mrb[0].mxu0 %v2347
        %v2527 = vpop.f32.mrb[0].mxu0
        %v2528 = vadd.f32 0.0, %v2527
        %v2529 = vpop.f32.mrb[0].mxu0
        %v2530 = vpop.f32.mrb[0].mxu0
        %v2531 = vadd.f32 0.0, %v2530
        %v2532 = vpop.f32.mrb[0].mxu0
        %2533 = vmatprep.mubr.bf16.mxu0 %v2350
        %2534 = vmatmul.mubr.bf16.gmra.mrb[0].mxu0 %v2349
        %v2535 = vpop.f32.mrb[0].mxu0
        %v2536 = vadd.f32 0.0, %v2535
        %v2537 = vpop.f32.mrb[0].mxu0
        %v2538 = vpop.f32.mrb[0].mxu0
        %v2539 = vadd.f32 0.0, %v2538
        %v2540 = vpop.f32.mrb[0].mxu0
        %2541 = vmatprep.mubr.bf16.mxu0 %v2352
        %2542 = vmatmul.mubr.bf16.gmra.mrb[0].mxu0 %v2351
        %v2543 = vpop.f32.mrb[0].mxu0
        %v2544 = vadd.f32 0.0, %v2543
        %v2545 = vpop.f32.mrb[0].mxu0
        %v2546 = vpop.f32.mrb[0].mxu0
        %v2547 = vadd.f32 0.0, %v2546
        %v2548 = vpop.f32.mrb[0].mxu0
        %2549 = vmatprep.mubr.bf16.mxu0 %v2354
        %2550 = vmatmul.mubr.bf16.gmra.mrb[0].mxu0 %v2353
        %v2551 = vpop.f32.mrb[0].mxu0
        %v2552 = vadd.f32 0.0, %v2551
        %v2553 = vpop.f32.mrb[0].mxu0
        %v2554 = vpop.f32.mrb[0].mxu0
        %v2555 = vadd.f32 0.0, %v2554
        %v2556 = vpop.f32.mrb[0].mxu0
        %2557 = vmatprep.mubr.bf16.mxu0 %v2356
        %2558 = vmatmul.mubr.bf16.gmra.mrb[0].mxu0 %v2355
        %v2559 = vpop.f32.mrb[0].mxu0
        %v2560 = vadd.f32 0.0, %v2559
        %v2561 = vpop.f32.mrb[0].mxu0
        %v2562 = vpop.f32.mrb[0].mxu0
        %v2563 = vadd.f32 0.0, %v2562
        %v2564 = vpop.f32.mrb[0].mxu0
        %2565 = vmatprep.mubr.bf16.mxu0 %v2358
        %2566 = vmatmul.mubr.bf16.gmra.mrb[0].mxu0 %v2357
        %v2567 = vpop.f32.mrb[0].mxu0
        %v2568 = vadd.f32 0.0, %v2567
        %v2569 = vpop.f32.mrb[0].mxu0
        %v2570 = vpop.f32.mrb[0].mxu0
        %v2571 = vadd.f32 0.0, %v2570
        %v2572 = vpop.f32.mrb[0].mxu0
        %2573 = vmatprep.mubr.bf16.mxu0 %v2360
        %2574 = vmatmul.mubr.bf16.gmra.mrb[0].mxu0 %v2359
        %v2575 = vpop.f32.mrb[0].mxu0
        %v2576 = vadd.f32 0.0, %v2575
        %v2577 = vpop.f32.mrb[0].mxu0
        %v2578 = vpop.f32.mrb[0].mxu0
        %v2579 = vadd.f32 0.0, %v2578
        %v2580 = vpop.f32.mrb[0].mxu0
        %2581 = vmatprep.mubr.bf16.mxu0 %v2362
        %2582 = vmatmul.mubr.bf16.gmra.mrb[0].mxu0 %v2361
        %v2583 = vpop.f32.mrb[0].mxu0
        %v2584 = vadd.f32 0.0, %v2583
        %v2585 = vpop.f32.mrb[0].mxu0
        %v2586 = vpop.f32.mrb[0].mxu0
        %v2587 = vadd.f32 0.0, %v2586
        %v2588 = vpop.f32.mrb[0].mxu0
        %2589 = vmatprep.mubr.bf16.mxu0 %v2364
        %2590 = vmatmul.mubr.bf16.gmra.mrb[0].mxu0 %v2363
        %v2591 = vpop.f32.mrb[0].mxu0
        %v2592 = vadd.f32 0.0, %v2591
        %v2593 = vpop.f32.mrb[0].mxu0
        %v2594 = vpop.f32.mrb[0].mxu0
        %v2595 = vadd.f32 0.0, %v2594
        %v2596 = vpop.f32.mrb[0].mxu0
        %2597 = vmatprep.mubr.bf16.mxu0 %v2366
        %2598 = vmatmul.mubr.bf16.gmra.mrb[0].mxu0 %v2365
        %v2599 = vpop.f32.mrb[0].mxu0
        %v2600 = vadd.f32 0.0, %v2599
        %v2601 = vpop.f32.mrb[0].mxu0
        %v2602 = vpop.f32.mrb[0].mxu0
        %v2603 = vadd.f32 0.0, %v2602
        %v2604 = vpop.f32.mrb[0].mxu0
        %2605 = vmatprep.mubr.bf16.mxu0 %v2368
        %2606 = vmatmul.mubr.bf16.gmra.mrb[0].mxu0 %v2367
        %v2607 = vpop.f32.mrb[0].mxu0
        %v2608 = vadd.f32 0.0, %v2607
        %v2609 = vpop.f32.mrb[0].mxu0
        %v2610 = vpop.f32.mrb[0].mxu0
        %v2611 = vadd.f32 0.0, %v2610
        %v2612 = vpop.f32.mrb[0].mxu0
        %2613 = vmatprep.mubr.bf16.mxu0 %v2370
        %2614 = vmatmul.mubr.bf16.gmra.mrb[0].mxu0 %v2369
        %v2615 = vpop.f32.mrb[0].mxu0
        %v2616 = vadd.f32 0.0, %v2615
        %v2617 = vpop.f32.mrb[0].mxu0
        %v2618 = vpop.f32.mrb[0].mxu0
        %v2619 = vadd.f32 0.0, %v2618
        %v2620 = vpop.f32.mrb[0].mxu0
        %2621 = vmatprep.mubr.bf16.mxu0 %v2372
        %2622 = vmatmul.mubr.bf16.gmra.mrb[0].mxu0 %v2371
        %v2623 = vpop.f32.mrb[0].mxu0
        %v2624 = vadd.f32 0.0, %v2623
        %v2625 = vpop.f32.mrb[0].mxu0
        %v2626 = vpop.f32.mrb[0].mxu0
        %v2627 = vadd.f32 0.0, %v2626
        %v2628 = vpop.f32.mrb[0].mxu0
        %2629 = vmatprep.mubr.bf16.mxu0 %v2374
        %2630 = vmatmul.mubr.bf16.gmra.mrb[0].mxu0 %v2373
        %v2631 = vpop.f32.mrb[0].mxu0
        %v2632 = vadd.f32 0.0, %v2631
        %v2633 = vpop.f32.mrb[0].mxu0
        %v2634 = vpop.f32.mrb[0].mxu0
        %v2635 = vadd.f32 0.0, %v2634
        %v2636 = vpop.f32.mrb[0].mxu0
        %2637 = vmatprep.mubr.bf16.mxu0 %v2376
        %2638 = vmatmul.mubr.bf16.gmra.mrb[0].mxu0 %v2375
        %v2639 = vpop.f32.mrb[0].mxu0
        %v2640 = vadd.f32 0.0, %v2639
        %v2641 = vpop.f32.mrb[0].mxu0
        %v2642 = vpop.f32.mrb[0].mxu0
        %v2643 = vadd.f32 0.0, %v2642
        %v2644 = vpop.f32.mrb[0].mxu0
        %2645 = vmatprep.mubr.bf16.mxu0 %v2378
        %2646 = vmatmul.mubr.bf16.gmra.mrb[0].mxu0 %v2377
        %v2647 = vpop.f32.mrb[0].mxu0
        %v2648 = vadd.f32 0.0, %v2647
        %v2649 = vpop.f32.mrb[0].mxu0
        %v2650 = vpop.f32.mrb[0].mxu0
        %v2651 = vadd.f32 0.0, %v2650
        %v2652 = vpop.f32.mrb[0].mxu0
        %2653 = vmatprep.mubr.bf16.mxu0 %v2380
        %2654 = vmatmul.mubr.bf16.gmra.mrb[0].mxu0 %v2379
        %v2655 = vpop.f32.mrb[0].mxu0
        %v2656 = vadd.f32 0.0, %v2655
        %v2657 = vpop.f32.mrb[0].mxu0
        %v2658 = vpop.f32.mrb[0].mxu0
        %v2659 = vadd.f32 0.0, %v2658
        %v2660 = vpop.f32.mrb[0].mxu0
        %2661 = vmatprep.mubr.bf16.mxu0 %v2382
        %2662 = vmatmul.mubr.bf16.gmra.mrb[0].mxu0 %v2381
        %v2663 = vpop.f32.mrb[0].mxu0
        %v2664 = vadd.f32 0.0, %v2663
        %v2665 = vpop.f32.mrb[0].mxu0
        %v2666 = vpop.f32.mrb[0].mxu0
        %v2667 = vadd.f32 0.0, %v2666
        %v2668 = vpop.f32.mrb[0].mxu0
        %2669 = vmatprep.mubr.bf16.mxu0 %v2384
        %2670 = vmatmul.mubr.bf16.gmra.mrb[0].mxu0 %v2383
        %v2671 = vpop.f32.mrb[0].mxu0
        %v2672 = vadd.f32 0.0, %v2671
        %v2673 = vpop.f32.mrb[0].mxu0
        %v2674 = vpop.f32.mrb[0].mxu0
        %v2675 = vadd.f32 0.0, %v2674
        %v2676 = vpop.f32.mrb[0].mxu0
        %2677 = vmatprep.mubr.bf16.mxu0 %v2386
        %2678 = vmatmul.mubr.bf16.gmra.mrb[0].mxu0 %v2385
        %v2679 = vpop.f32.mrb[0].mxu0
        %v2680 = vadd.f32 0.0, %v2679
        %v2681 = vpop.f32.mrb[0].mxu0
        %v2682 = vpop.f32.mrb[0].mxu0
        %v2683 = vadd.f32 0.0, %v2682
        %v2684 = vpop.f32.mrb[0].mxu0
        %2685 = vmatprep.mubr.bf16.mxu0 %v2388
        %2686 = vmatmul.mubr.bf16.gmra.mrb[0].mxu0 %v2387
        %v2687 = vpop.f32.mrb[0].mxu0
        %v2688 = vadd.f32 0.0, %v2687
        %v2689 = vpop.f32.mrb[0].mxu0
        %v2690 = vpop.f32.mrb[0].mxu0
        %v2691 = vadd.f32 0.0, %v2690
        %v2692 = vpop.f32.mrb[0].mxu0
        %2693 = vmatprep.mubr.bf16.mxu0 %v2390
        %2694 = vmatmul.mubr.bf16.gmra.mrb[0].mxu0 %v2389
        %v2695 = vpop.f32.mrb[0].mxu0
        %v2696 = vadd.f32 0.0, %v2695
        %v2697 = vpop.f32.mrb[0].mxu0
        %v2698 = vpop.f32.mrb[0].mxu0
        %v2699 = vadd.f32 0.0, %v2698
        %v2700 = vpop.f32.mrb[0].mxu0
        %2701 = vmatprep.mubr.bf16.mxu0 %v2392
        %2702 = vmatmul.mubr.bf16.gmra.mrb[0].mxu0 %v2391
        %v2703 = vpop.f32.mrb[0].mxu0
        %v2704 = vadd.f32 0.0, %v2703
        %v2705 = vpop.f32.mrb[0].mxu0
        %v2706 = vpop.f32.mrb[0].mxu0
        %v2707 = vadd.f32 0.0, %v2706
        %v2708 = vpop.f32.mrb[0].mxu0
        %2709 = vmatprep.mubr.bf16.mxu0 %v2394
        %2710 = vmatmul.mubr.bf16.gmra.mrb[0].mxu0 %v2393
        %v2711 = vpop.f32.mrb[0].mxu0
        %v2712 = vadd.f32 0.0, %v2711
        %v2713 = vpop.f32.mrb[0].mxu0
        %v2714 = vpop.f32.mrb[0].mxu0
        %v2715 = vadd.f32 0.0, %v2714
        %v2716 = vpop.f32.mrb[0].mxu0
        %2717 = vmatprep.mubr.bf16.mxu0 %v2396
        %2718 = vmatmul.mubr.bf16.gmra.mrb[0].mxu0 %v2395
        %v2719 = vpop.f32.mrb[0].mxu0
        %v2720 = vadd.f32 0.0, %v2719
        %v2721 = vpop.f32.mrb[0].mxu0
        %v2722 = vpop.f32.mrb[0].mxu0
        %v2723 = vadd.f32 0.0, %v2722
        %v2724 = vpop.f32.mrb[0].mxu0
        %2725 = vmatprep.mubr.bf16.mxu0 %v2398
        %2726 = vmatmul.mubr.bf16.gmra.mrb[0].mxu0 %v2397
        %v2727 = vpop.f32.mrb[0].mxu0
        %v2728 = vadd.f32 0.0, %v2727
        %v2729 = vpop.f32.mrb[0].mxu0
        %v2730 = vpop.f32.mrb[0].mxu0
        %v2731 = vadd.f32 0.0, %v2730
        %v2732 = vpop.f32.mrb[0].mxu0
        %2733 = vmatprep.mubr.bf16.mxu0 %v2400
        %2734 = vmatmul.mubr.bf16.gmra.mrb[0].mxu0 %v2399
        %v2735 = vpop.f32.mrb[0].mxu0
        %v2736 = vadd.f32 0.0, %v2735
        %v2737 = vpop.f32.mrb[0].mxu0
        %v2738 = vpop.f32.mrb[0].mxu0
        %v2739 = vadd.f32 0.0, %v2738
        %v2740 = vpop.f32.mrb[0].mxu0
        %2741 = vmatprep.mubr.bf16.mxu0 %v2402
        %2742 = vmatmul.mubr.bf16.gmra.mrb[0].mxu0 %v2401
        %v2743 = vpop.f32.mrb[0].mxu0
        %v2744 = vadd.f32 0.0, %v2743
        %v2745 = vpop.f32.mrb[0].mxu0
        %v2746 = vpop.f32.mrb[0].mxu0
        %v2747 = vadd.f32 0.0, %v2746
        %v2748 = vpop.f32.mrb[0].mxu0
        %2749 = vmatprep.mubr.bf16.mxu0 %v2404
        %2750 = vmatmul.mubr.bf16.gmra.mrb[0].mxu0 %v2403
        %v2751 = vpop.f32.mrb[0].mxu0
        %v2752 = vadd.f32 0.0, %v2751
        %v2753 = vpop.f32.mrb[0].mxu0
        %v2754 = vpop.f32.mrb[0].mxu0
        %v2755 = vadd.f32 0.0, %v2754
        %v2756 = vpop.f32.mrb[0].mxu0
        %2757 = vdwg.mxu0
        %v2758 = vadd.f32 %v2018, %v2504
        %v2759 = vadd.f32 %v2019, %v2507
        %v2760 = vadd.f32 %v2020, %v2512
        %v2761 = vadd.f32 %v2021, %v2515
        %v2762 = vadd.f32 %v2022, %v2520
        %v2763 = vadd.f32 %v2023, %v2523
        %v2764 = vadd.f32 %v2024, %v2528
        %v2765 = vadd.f32 %v2025, %v2531
        %v2766 = vadd.f32 %v2026, %v2536
        %v2767 = vadd.f32 %v2027, %v2539
        %v2768 = vadd.f32 %v2028, %v2544
        %v2769 = vadd.f32 %v2029, %v2547
        %v2770 = vadd.f32 %v2030, %v2552
        %v2771 = vadd.f32 %v2031, %v2555
        %v2772 = vadd.f32 %v2032, %v2560
        %v2773 = vadd.f32 %v2033, %v2563
        %v2774 = vadd.f32 %v2034, %v2568
        %v2775 = vadd.f32 %v2035, %v2571
        %v2776 = vadd.f32 %v2036, %v2576
        %v2777 = vadd.f32 %v2037, %v2579
        %v2778 = vadd.f32 %v2038, %v2584
        %v2779 = vadd.f32 %v2039, %v2587
        %v2780 = vadd.f32 %v2040, %v2592
        %v2781 = vadd.f32 %v2041, %v2595
        %v2782 = vadd.f32 %v2042, %v2600
        %v2783 = vadd.f32 %v2043, %v2603
        %v2784 = vadd.f32 %v2044, %v2608
        %v2785 = vadd.f32 %v2045, %v2611
        %v2786 = vadd.f32 %v2046, %v2616
        %v2787 = vadd.f32 %v2047, %v2619
        %v2788 = vadd.f32 %v2048, %v2624
        %v2789 = vadd.f32 %v2049, %v2627
        %v2790 = vadd.f32 %v2050, %v2632
        %v2791 = vadd.f32 %v2051, %v2635
        %v2792 = vadd.f32 %v2052, %v2640
        %v2793 = vadd.f32 %v2053, %v2643
        %v2794 = vadd.f32 %v2054, %v2648
        %v2795 = vadd.f32 %v2055, %v2651
        %v2796 = vadd.f32 %v2056, %v2656
        %v2797 = vadd.f32 %v2057, %v2659
        %v2798 = vadd.f32 %v2058, %v2664
        %v2799 = vadd.f32 %v2059, %v2667
        %v2800 = vadd.f32 %v2060, %v2672
        %v2801 = vadd.f32 %v2061, %v2675
        %v2802 = vadd.f32 %v2062, %v2680
        %v2803 = vadd.f32 %v2063, %v2683
        %v2804 = vadd.f32 %v2064, %v2688
        %v2805 = vadd.f32 %v2065, %v2691
        %v2806 = vadd.f32 %v2066, %v2696
        %v2807 = vadd.f32 %v2067, %v2699
        %v2808 = vadd.f32 %v2068, %v2704
        %v2809 = vadd.f32 %v2069, %v2707
        %v2810 = vadd.f32 %v2070, %v2712
        %v2811 = vadd.f32 %v2071, %v2715
        %v2812 = vadd.f32 %v2072, %v2720
        %v2813 = vadd.f32 %v2073, %v2723
        %v2814 = vadd.f32 %v2074, %v2728
        %v2815 = vadd.f32 %v2075, %v2731
        %v2816 = vadd.f32 %v2076, %v2736
        %v2817 = vadd.f32 %v2077, %v2739
        %v2818 = vadd.f32 %v2078, %v2744
        %v2819 = vadd.f32 %v2079, %v2747
        %v2820 = vadd.f32 %v2080, %v2752
        %v2821 = vadd.f32 %v2081, %v2755
        %2822 = vst [vmem:[#allocation4] sm:$0xff] %v2758
        %2823 = vst [vmem:[#allocation4 + $0x8] sm:$0xff] %v2759
        %2824 = vst [vmem:[#allocation4 + $0x10] sm:$0xff] %v2760
        %2825 = vst [vmem:[#allocation4 + $0x18] sm:$0xff] %v2761
        %2826 = vst [vmem:[#allocation4 + $0x20] sm:$0xff] %v2762
        %2827 = vst [vmem:[#allocation4 + $0x28] sm:$0xff] %v2763
        %2828 = vst [vmem:[#allocation4 + $0x30] sm:$0xff] %v2764
        %2829 = vst [vmem:[#allocation4 + $0x38] sm:$0xff] %v2765
        %2830 = vst [vmem:[#allocation4 + $0x40] sm:$0xff] %v2766
        %2831 = vst [vmem:[#allocation4 + $0x48] sm:$0xff] %v2767
        %2832 = vst [vmem:[#allocation4 + $0x50] sm:$0xff] %v2768
        %2833 = vst [vmem:[#allocation4 + $0x58] sm:$0xff] %v2769
        %2834 = vst [vmem:[#allocation4 + $0x60] sm:$0xff] %v2770
        %2835 = vst [vmem:[#allocation4 + $0x68] sm:$0xff] %v2771
        %2836 = vst [vmem:[#allocation4 + $0x70] sm:$0xff] %v2772
        %2837 = vst [vmem:[#allocation4 + $0x78] sm:$0xff] %v2773
        %2838 = vst [vmem:[#allocation4 + $0x80] sm:$0xff] %v2774
        %2839 = vst [vmem:[#allocation4 + $0x88] sm:$0xff] %v2775
        %2840 = vst [vmem:[#allocation4 + $0x90] sm:$0xff] %v2776
        %2841 = vst [vmem:[#allocation4 + $0x98] sm:$0xff] %v2777
        %2842 = vst [vmem:[#allocation4 + $0xa0] sm:$0xff] %v2778
        %2843 = vst [vmem:[#allocation4 + $0xa8] sm:$0xff] %v2779
        %2844 = vst [vmem:[#allocation4 + $0xb0] sm:$0xff] %v2780
        %2845 = vst [vmem:[#allocation4 + $0xb8] sm:$0xff] %v2781
        %2846 = vst [vmem:[#allocation4 + $0xc0] sm:$0xff] %v2782
        %2847 = vst [vmem:[#allocation4 + $0xc8] sm:$0xff] %v2783
        %2848 = vst [vmem:[#allocation4 + $0xd0] sm:$0xff] %v2784
        %2849 = vst [vmem:[#allocation4 + $0xd8] sm:$0xff] %v2785
        %2850 = vst [vmem:[#allocation4 + $0xe0] sm:$0xff] %v2786
        %2851 = vst [vmem:[#allocation4 + $0xe8] sm:$0xff] %v2787
        %2852 = vst [vmem:[#allocation4 + $0xf0] sm:$0xff] %v2788
        %2853 = vst [vmem:[#allocation4 + $0xf8] sm:$0xff] %v2789
        %2854 = vst [vmem:[#allocation4 + $0x100] sm:$0xff] %v2790
        %2855 = vst [vmem:[#allocation4 + $0x108] sm:$0xff] %v2791
        %2856 = vst [vmem:[#allocation4 + $0x110] sm:$0xff] %v2792
        %2857 = vst [vmem:[#allocation4 + $0x118] sm:$0xff] %v2793
        %2858 = vst [vmem:[#allocation4 + $0x120] sm:$0xff] %v2794
        %2859 = vst [vmem:[#allocation4 + $0x128] sm:$0xff] %v2795
        %2860 = vst [vmem:[#allocation4 + $0x130] sm:$0xff] %v2796
        %2861 = vst [vmem:[#allocation4 + $0x138] sm:$0xff] %v2797
        %2862 = vst [vmem:[#allocation4 + $0x140] sm:$0xff] %v2798
        %2863 = vst [vmem:[#allocation4 + $0x148] sm:$0xff] %v2799
        %2864 = vst [vmem:[#allocation4 + $0x150] sm:$0xff] %v2800
        %2865 = vst [vmem:[#allocation4 + $0x158] sm:$0xff] %v2801
        %2866 = vst [vmem:[#allocation4 + $0x160] sm:$0xff] %v2802
        %2867 = vst [vmem:[#allocation4 + $0x168] sm:$0xff] %v2803
        %2868 = vst [vmem:[#allocation4 + $0x170] sm:$0xff] %v2804
        %2869 = vst [vmem:[#allocation4 + $0x178] sm:$0xff] %v2805
        %2870 = vst [vmem:[#allocation4 + $0x180] sm:$0xff] %v2806
        %2871 = vst [vmem:[#allocation4 + $0x188] sm:$0xff] %v2807
        %2872 = vst [vmem:[#allocation4 + $0x190] sm:$0xff] %v2808
        %2873 = vst [vmem:[#allocation4 + $0x198] sm:$0xff] %v2809
        %2874 = vst [vmem:[#allocation4 + $0x1a0] sm:$0xff] %v2810
        %2875 = vst [vmem:[#allocation4 + $0x1a8] sm:$0xff] %v2811
        %2876 = vst [vmem:[#allocation4 + $0x1b0] sm:$0xff] %v2812
        %2877 = vst [vmem:[#allocation4 + $0x1b8] sm:$0xff] %v2813
        %2878 = vst [vmem:[#allocation4 + $0x1c0] sm:$0xff] %v2814
        %2879 = vst [vmem:[#allocation4 + $0x1c8] sm:$0xff] %v2815
        %2880 = vst [vmem:[#allocation4 + $0x1d0] sm:$0xff] %v2816
        %2881 = vst [vmem:[#allocation4 + $0x1d8] sm:$0xff] %v2817
        %2882 = vst [vmem:[#allocation4 + $0x1e0] sm:$0xff] %v2818
        %2883 = vst [vmem:[#allocation4 + $0x1e8] sm:$0xff] %v2819
        %2884 = vst [vmem:[#allocation4 + $0x1f0] sm:$0xff] %v2820
        %2885 = vst [vmem:[#allocation4 + $0x1f8] sm:$0xff] %v2821
      $region56: #{gconv_gru_cell.1} parent=43 // pred_fallthru
        _
      %p2886 = scmp.eq.s32.totalorder %s22, 1
      // Predicated region
      $region57: #{gconv_gru_cell.1} parent=43 // pred_check
        %p2887 = pneg %p2886
      $region58: #{gconv_gru_cell.1} parent=43 // pred_check_branch
        %2889 = sbr.rel (%p2887) target = $region60
      $region59: #{gconv_gru_cell.1} parent=43 // pred_region
        // Predicated region
        $region61: #{gconv_gru_cell.1} parent=59 // pred_check
          %p2890 = pneg %p1101
        $region62: #{gconv_gru_cell.1} parent=59 // pred_check_branch
          %2892 = sbr.rel (%p2890) target = $region64
        $region63: #{gconv_gru_cell.1} parent=59 // pred_region
          %s2893 = sadd.s32 %s21, 1
          %p2894 = scmp.eq.s32.totalorder %s2893, 1
          %s2895 = scalar_select %p2894, -1.0, -2.0
          %v2896 = vld [vmem:[#allocation4] sm:$0xff]
          %v2897 = vld [vmem:[#allocation4 + $0x8] sm:$0xff]
          %v2898 = vld [vmem:[#allocation4 + $0x10] sm:$0xff]
          %v2899 = vld [vmem:[#allocation4 + $0x18] sm:$0xff]
          %v2900 = vld [vmem:[#allocation4 + $0x20] sm:$0xff]
          %v2901 = vld [vmem:[#allocation4 + $0x28] sm:$0xff]
          %v2902 = vld [vmem:[#allocation4 + $0x30] sm:$0xff]
          %v2903 = vld [vmem:[#allocation4 + $0x38] sm:$0xff]
          %v2904 = vld [vmem:[#allocation4 + $0x40] sm:$0xff]
          %v2905 = vld [vmem:[#allocation4 + $0x48] sm:$0xff]
          %v2906 = vld [vmem:[#allocation4 + $0x50] sm:$0xff]
          %v2907 = vld [vmem:[#allocation4 + $0x58] sm:$0xff]
          %v2908 = vld [vmem:[#allocation4 + $0x60] sm:$0xff]
          %v2909 = vld [vmem:[#allocation4 + $0x68] sm:$0xff]
          %v2910 = vld [vmem:[#allocation4 + $0x70] sm:$0xff]
          %v2911 = vld [vmem:[#allocation4 + $0x78] sm:$0xff]
          %v2912 = vld [vmem:[#allocation4 + $0x80] sm:$0xff]
          %v2913 = vld [vmem:[#allocation4 + $0x88] sm:$0xff]
          %v2914 = vld [vmem:[#allocation4 + $0x90] sm:$0xff]
          %v2915 = vld [vmem:[#allocation4 + $0x98] sm:$0xff]
          %v2916 = vld [vmem:[#allocation4 + $0xa0] sm:$0xff]
          %v2917 = vld [vmem:[#allocation4 + $0xa8] sm:$0xff]
          %v2918 = vld [vmem:[#allocation4 + $0xb0] sm:$0xff]
          %v2919 = vld [vmem:[#allocation4 + $0xb8] sm:$0xff]
          %v2920 = vld [vmem:[#allocation4 + $0xc0] sm:$0xff]
          %v2921 = vld [vmem:[#allocation4 + $0xc8] sm:$0xff]
          %v2922 = vld [vmem:[#allocation4 + $0xd0] sm:$0xff]
          %v2923 = vld [vmem:[#allocation4 + $0xd8] sm:$0xff]
          %v2924 = vld [vmem:[#allocation4 + $0xe0] sm:$0xff]
          %v2925 = vld [vmem:[#allocation4 + $0xe8] sm:$0xff]
          %v2926 = vld [vmem:[#allocation4 + $0xf0] sm:$0xff]
          %v2927 = vld [vmem:[#allocation4 + $0xf8] sm:$0xff]
          %v2928 = vld [vmem:[#allocation4 + $0x100] sm:$0xff]
          %v2929 = vld [vmem:[#allocation4 + $0x108] sm:$0xff]
          %v2930 = vld [vmem:[#allocation4 + $0x110] sm:$0xff]
          %v2931 = vld [vmem:[#allocation4 + $0x118] sm:$0xff]
          %v2932 = vld [vmem:[#allocation4 + $0x120] sm:$0xff]
          %v2933 = vld [vmem:[#allocation4 + $0x128] sm:$0xff]
          %v2934 = vld [vmem:[#allocation4 + $0x130] sm:$0xff]
          %v2935 = vld [vmem:[#allocation4 + $0x138] sm:$0xff]
          %v2936 = vld [vmem:[#allocation4 + $0x140] sm:$0xff]
          %v2937 = vld [vmem:[#allocation4 + $0x148] sm:$0xff]
          %v2938 = vld [vmem:[#allocation4 + $0x150] sm:$0xff]
          %v2939 = vld [vmem:[#allocation4 + $0x158] sm:$0xff]
          %v2940 = vld [vmem:[#allocation4 + $0x160] sm:$0xff]
          %v2941 = vld [vmem:[#allocation4 + $0x168] sm:$0xff]
          %v2942 = vld [vmem:[#allocation4 + $0x170] sm:$0xff]
          %v2943 = vld [vmem:[#allocation4 + $0x178] sm:$0xff]
          %v2944 = vld [vmem:[#allocation4 + $0x180] sm:$0xff]
          %v2945 = vld [vmem:[#allocation4 + $0x188] sm:$0xff]
          %v2946 = vld [vmem:[#allocation4 + $0x190] sm:$0xff]
          %v2947 = vld [vmem:[#allocation4 + $0x198] sm:$0xff]
          %v2948 = vld [vmem:[#allocation4 + $0x1a0] sm:$0xff]
          %v2949 = vld [vmem:[#allocation4 + $0x1a8] sm:$0xff]
          %v2950 = vld [vmem:[#allocation4 + $0x1b0] sm:$0xff]
          %v2951 = vld [vmem:[#allocation4 + $0x1b8] sm:$0xff]
          %v2952 = vld [vmem:[#allocation4 + $0x1c0] sm:$0xff]
          %v2953 = vld [vmem:[#allocation4 + $0x1c8] sm:$0xff]
          %v2954 = vld [vmem:[#allocation4 + $0x1d0] sm:$0xff]
          %v2955 = vld [vmem:[#allocation4 + $0x1d8] sm:$0xff]
          %v2956 = vld [vmem:[#allocation4 + $0x1e0] sm:$0xff]
          %v2957 = vld [vmem:[#allocation4 + $0x1e8] sm:$0xff]
          %v2958 = vld [vmem:[#allocation4 + $0x1f0] sm:$0xff]
          %v2959 = vld [vmem:[#allocation4 + $0x1f8] sm:$0xff]
          %v2960 = vstv %s2895
          %v2961 = vmul.f32 %v2960, %v2896
          %v2962 = vmul.f32 %v2960, %v2897
          %v2963 = vmul.f32 %v2960, %v2898
          %v2964 = vmul.f32 %v2960, %v2899
          %v2965 = vmul.f32 %v2960, %v2900
          %v2966 = vmul.f32 %v2960, %v2901
          %v2967 = vmul.f32 %v2960, %v2902
          %v2968 = vmul.f32 %v2960, %v2903
          %v2969 = vmul.f32 %v2960, %v2904
          %v2970 = vmul.f32 %v2960, %v2905
          %v2971 = vmul.f32 %v2960, %v2906
          %v2972 = vmul.f32 %v2960, %v2907
          %v2973 = vmul.f32 %v2960, %v2908
          %v2974 = vmul.f32 %v2960, %v2909
          %v2975 = vmul.f32 %v2960, %v2910
          %v2976 = vmul.f32 %v2960, %v2911
          %v2977 = vmul.f32 %v2960, %v2912
          %v2978 = vmul.f32 %v2960, %v2913
          %v2979 = vmul.f32 %v2960, %v2914
          %v2980 = vmul.f32 %v2960, %v2915
          %v2981 = vmul.f32 %v2960, %v2916
          %v2982 = vmul.f32 %v2960, %v2917
          %v2983 = vmul.f32 %v2960, %v2918
          %v2984 = vmul.f32 %v2960, %v2919
          %v2985 = vmul.f32 %v2960, %v2920
          %v2986 = vmul.f32 %v2960, %v2921
          %v2987 = vmul.f32 %v2960, %v2922
          %v2988 = vmul.f32 %v2960, %v2923
          %v2989 = vmul.f32 %v2960, %v2924
          %v2990 = vmul.f32 %v2960, %v2925
          %v2991 = vmul.f32 %v2960, %v2926
          %v2992 = vmul.f32 %v2960, %v2927
          %v2993 = vmul.f32 %v2960, %v2928
          %v2994 = vmul.f32 %v2960, %v2929
          %v2995 = vmul.f32 %v2960, %v2930
          %v2996 = vmul.f32 %v2960, %v2931
          %v2997 = vmul.f32 %v2960, %v2932
          %v2998 = vmul.f32 %v2960, %v2933
          %v2999 = vmul.f32 %v2960, %v2934
          %v3000 = vmul.f32 %v2960, %v2935
          %v3001 = vmul.f32 %v2960, %v2936
          %v3002 = vmul.f32 %v2960, %v2937
          %v3003 = vmul.f32 %v2960, %v2938
          %v3004 = vmul.f32 %v2960, %v2939
          %v3005 = vmul.f32 %v2960, %v2940
          %v3006 = vmul.f32 %v2960, %v2941
          %v3007 = vmul.f32 %v2960, %v2942
          %v3008 = vmul.f32 %v2960, %v2943
          %v3009 = vmul.f32 %v2960, %v2944
          %v3010 = vmul.f32 %v2960, %v2945
          %v3011 = vmul.f32 %v2960, %v2946
          %v3012 = vmul.f32 %v2960, %v2947
          %v3013 = vmul.f32 %v2960, %v2948
          %v3014 = vmul.f32 %v2960, %v2949
          %v3015 = vmul.f32 %v2960, %v2950
          %v3016 = vmul.f32 %v2960, %v2951
          %v3017 = vmul.f32 %v2960, %v2952
          %v3018 = vmul.f32 %v2960, %v2953
          %v3019 = vmul.f32 %v2960, %v2954
          %v3020 = vmul.f32 %v2960, %v2955
          %v3021 = vmul.f32 %v2960, %v2956
          %v3022 = vmul.f32 %v2960, %v2957
          %v3023 = vmul.f32 %v2960, %v2958
          %v3024 = vmul.f32 %v2960, %v2959
          %v3025 = vld [vmem:[#allocation3] sm:$0xff]
          %v3026 = vld [vmem:[#allocation3 + $0x8] sm:$0xff]
          %v3027 = vld [vmem:[#allocation3 + $0x10] sm:$0xff]
          %v3028 = vld [vmem:[#allocation3 + $0x18] sm:$0xff]
          %v3029 = vld [vmem:[#allocation3 + $0x20] sm:$0xff]
          %v3030 = vld [vmem:[#allocation3 + $0x28] sm:$0xff]
          %v3031 = vld [vmem:[#allocation3 + $0x30] sm:$0xff]
          %v3032 = vld [vmem:[#allocation3 + $0x38] sm:$0xff]
          %v3033 = vld [vmem:[#allocation3 + $0x40] sm:$0xff]
          %v3034 = vld [vmem:[#allocation3 + $0x48] sm:$0xff]
          %v3035 = vld [vmem:[#allocation3 + $0x50] sm:$0xff]
          %v3036 = vld [vmem:[#allocation3 + $0x58] sm:$0xff]
          %v3037 = vld [vmem:[#allocation3 + $0x60] sm:$0xff]
          %v3038 = vld [vmem:[#allocation3 + $0x68] sm:$0xff]
          %v3039 = vld [vmem:[#allocation3 + $0x70] sm:$0xff]
          %v3040 = vld [vmem:[#allocation3 + $0x78] sm:$0xff]
          %v3041 = vld [vmem:[#allocation3 + $0x80] sm:$0xff]
          %v3042 = vld [vmem:[#allocation3 + $0x88] sm:$0xff]
          %v3043 = vld [vmem:[#allocation3 + $0x90] sm:$0xff]
          %v3044 = vld [vmem:[#allocation3 + $0x98] sm:$0xff]
          %v3045 = vld [vmem:[#allocation3 + $0xa0] sm:$0xff]
          %v3046 = vld [vmem:[#allocation3 + $0xa8] sm:$0xff]
          %v3047 = vld [vmem:[#allocation3 + $0xb0] sm:$0xff]
          %v3048 = vld [vmem:[#allocation3 + $0xb8] sm:$0xff]
          %v3049 = vld [vmem:[#allocation3 + $0xc0] sm:$0xff]
          %v3050 = vld [vmem:[#allocation3 + $0xc8] sm:$0xff]
          %v3051 = vld [vmem:[#allocation3 + $0xd0] sm:$0xff]
          %v3052 = vld [vmem:[#allocation3 + $0xd8] sm:$0xff]
          %v3053 = vld [vmem:[#allocation3 + $0xe0] sm:$0xff]
          %v3054 = vld [vmem:[#allocation3 + $0xe8] sm:$0xff]
          %v3055 = vld [vmem:[#allocation3 + $0xf0] sm:$0xff]
          %v3056 = vld [vmem:[#allocation3 + $0xf8] sm:$0xff]
          %v3057 = vunpack.c.l.bf16 %v3025
          %v3058 = vunpack.c.h.bf16 %v3025
          %v3059 = vunpack.c.l.bf16 %v3026
          %v3060 = vunpack.c.h.bf16 %v3026
          %v3061 = vunpack.c.l.bf16 %v3027
          %v3062 = vunpack.c.h.bf16 %v3027
          %v3063 = vunpack.c.l.bf16 %v3028
          %v3064 = vunpack.c.h.bf16 %v3028
          %v3065 = vunpack.c.l.bf16 %v3029
          %v3066 = vunpack.c.h.bf16 %v3029
          %v3067 = vunpack.c.l.bf16 %v3030
          %v3068 = vunpack.c.h.bf16 %v3030
          %v3069 = vunpack.c.l.bf16 %v3031
          %v3070 = vunpack.c.h.bf16 %v3031
          %v3071 = vunpack.c.l.bf16 %v3032
          %v3072 = vunpack.c.h.bf16 %v3032
          %v3073 = vunpack.c.l.bf16 %v3033
          %v3074 = vunpack.c.h.bf16 %v3033
          %v3075 = vunpack.c.l.bf16 %v3034
          %v3076 = vunpack.c.h.bf16 %v3034
          %v3077 = vunpack.c.l.bf16 %v3035
          %v3078 = vunpack.c.h.bf16 %v3035
          %v3079 = vunpack.c.l.bf16 %v3036
          %v3080 = vunpack.c.h.bf16 %v3036
          %v3081 = vunpack.c.l.bf16 %v3037
          %v3082 = vunpack.c.h.bf16 %v3037
          %v3083 = vunpack.c.l.bf16 %v3038
          %v3084 = vunpack.c.h.bf16 %v3038
          %v3085 = vunpack.c.l.bf16 %v3039
          %v3086 = vunpack.c.h.bf16 %v3039
          %v3087 = vunpack.c.l.bf16 %v3040
          %v3088 = vunpack.c.h.bf16 %v3040
          %v3089 = vunpack.c.l.bf16 %v3041
          %v3090 = vunpack.c.h.bf16 %v3041
          %v3091 = vunpack.c.l.bf16 %v3042
          %v3092 = vunpack.c.h.bf16 %v3042
          %v3093 = vunpack.c.l.bf16 %v3043
          %v3094 = vunpack.c.h.bf16 %v3043
          %v3095 = vunpack.c.l.bf16 %v3044
          %v3096 = vunpack.c.h.bf16 %v3044
          %v3097 = vunpack.c.l.bf16 %v3045
          %v3098 = vunpack.c.h.bf16 %v3045
          %v3099 = vunpack.c.l.bf16 %v3046
          %v3100 = vunpack.c.h.bf16 %v3046
          %v3101 = vunpack.c.l.bf16 %v3047
          %v3102 = vunpack.c.h.bf16 %v3047
          %v3103 = vunpack.c.l.bf16 %v3048
          %v3104 = vunpack.c.h.bf16 %v3048
          %v3105 = vunpack.c.l.bf16 %v3049
          %v3106 = vunpack.c.h.bf16 %v3049
          %v3107 = vunpack.c.l.bf16 %v3050
          %v3108 = vunpack.c.h.bf16 %v3050
          %v3109 = vunpack.c.l.bf16 %v3051
          %v3110 = vunpack.c.h.bf16 %v3051
          %v3111 = vunpack.c.l.bf16 %v3052
          %v3112 = vunpack.c.h.bf16 %v3052
          %v3113 = vunpack.c.l.bf16 %v3053
          %v3114 = vunpack.c.h.bf16 %v3053
          %v3115 = vunpack.c.l.bf16 %v3054
          %v3116 = vunpack.c.h.bf16 %v3054
          %v3117 = vunpack.c.l.bf16 %v3055
          %v3118 = vunpack.c.h.bf16 %v3055
          %v3119 = vunpack.c.l.bf16 %v3056
          %v3120 = vunpack.c.h.bf16 %v3056
          %v3121 = vsub.f32 %v2961, %v3057
          %v3122 = vsub.f32 %v2962, %v3058
          %v3123 = vsub.f32 %v2963, %v3059
          %v3124 = vsub.f32 %v2964, %v3060
          %v3125 = vsub.f32 %v2965, %v3061
          %v3126 = vsub.f32 %v2966, %v3062
          %v3127 = vsub.f32 %v2967, %v3063
          %v3128 = vsub.f32 %v2968, %v3064
          %v3129 = vsub.f32 %v2969, %v3065
          %v3130 = vsub.f32 %v2970, %v3066
          %v3131 = vsub.f32 %v2971, %v3067
          %v3132 = vsub.f32 %v2972, %v3068
          %v3133 = vsub.f32 %v2973, %v3069
          %v3134 = vsub.f32 %v2974, %v3070
          %v3135 = vsub.f32 %v2975, %v3071
          %v3136 = vsub.f32 %v2976, %v3072
          %v3137 = vsub.f32 %v2977, %v3073
          %v3138 = vsub.f32 %v2978, %v3074
          %v3139 = vsub.f32 %v2979, %v3075
          %v3140 = vsub.f32 %v2980, %v3076
          %v3141 = vsub.f32 %v2981, %v3077
          %v3142 = vsub.f32 %v2982, %v3078
          %v3143 = vsub.f32 %v2983, %v3079
          %v3144 = vsub.f32 %v2984, %v3080
          %v3145 = vsub.f32 %v2985, %v3081
          %v3146 = vsub.f32 %v2986, %v3082
          %v3147 = vsub.f32 %v2987, %v3083
          %v3148 = vsub.f32 %v2988, %v3084
          %v3149 = vsub.f32 %v2989, %v3085
          %v3150 = vsub.f32 %v2990, %v3086
          %v3151 = vsub.f32 %v2991, %v3087
          %v3152 = vsub.f32 %v2992, %v3088
          %v3153 = vsub.f32 %v2993, %v3089
          %v3154 = vsub.f32 %v2994, %v3090
          %v3155 = vsub.f32 %v2995, %v3091
          %v3156 = vsub.f32 %v2996, %v3092
          %v3157 = vsub.f32 %v2997, %v3093
          %v3158 = vsub.f32 %v2998, %v3094
          %v3159 = vsub.f32 %v2999, %v3095
          %v3160 = vsub.f32 %v3000, %v3096
          %v3161 = vsub.f32 %v3001, %v3097
          %v3162 = vsub.f32 %v3002, %v3098
          %v3163 = vsub.f32 %v3003, %v3099
          %v3164 = vsub.f32 %v3004, %v3100
          %v3165 = vsub.f32 %v3005, %v3101
          %v3166 = vsub.f32 %v3006, %v3102
          %v3167 = vsub.f32 %v3007, %v3103
          %v3168 = vsub.f32 %v3008, %v3104
          %v3169 = vsub.f32 %v3009, %v3105
          %v3170 = vsub.f32 %v3010, %v3106
          %v3171 = vsub.f32 %v3011, %v3107
          %v3172 = vsub.f32 %v3012, %v3108
          %v3173 = vsub.f32 %v3013, %v3109
          %v3174 = vsub.f32 %v3014, %v3110
          %v3175 = vsub.f32 %v3015, %v3111
          %v3176 = vsub.f32 %v3016, %v3112
          %v3177 = vsub.f32 %v3017, %v3113
          %v3178 = vsub.f32 %v3018, %v3114
          %v3179 = vsub.f32 %v3019, %v3115
          %v3180 = vsub.f32 %v3020, %v3116
          %v3181 = vsub.f32 %v3021, %v3117
          %v3182 = vsub.f32 %v3022, %v3118
          %v3183 = vsub.f32 %v3023, %v3119
          %v3184 = vsub.f32 %v3024, %v3120
          %v3185 = vld [vmem:[#allocation5] sm:$0xff]
          %v3186 = vld [vmem:[#allocation5 + $0x8] sm:$0xff]
          %v3187 = vld [vmem:[#allocation5 + $0x10] sm:$0xff]
          %v3188 = vld [vmem:[#allocation5 + $0x18] sm:$0xff]
          %v3189 = vld [vmem:[#allocation5 + $0x20] sm:$0xff]
          %v3190 = vld [vmem:[#allocation5 + $0x28] sm:$0xff]
          %v3191 = vld [vmem:[#allocation5 + $0x30] sm:$0xff]
          %v3192 = vld [vmem:[#allocation5 + $0x38] sm:$0xff]
          %v3193 = vld [vmem:[#allocation5 + $0x40] sm:$0xff]
          %v3194 = vld [vmem:[#allocation5 + $0x48] sm:$0xff]
          %v3195 = vld [vmem:[#allocation5 + $0x50] sm:$0xff]
          %v3196 = vld [vmem:[#allocation5 + $0x58] sm:$0xff]
          %v3197 = vld [vmem:[#allocation5 + $0x60] sm:$0xff]
          %v3198 = vld [vmem:[#allocation5 + $0x68] sm:$0xff]
          %v3199 = vld [vmem:[#allocation5 + $0x70] sm:$0xff]
          %v3200 = vld [vmem:[#allocation5 + $0x78] sm:$0xff]
          %v3201 = vld [vmem:[#allocation5 + $0x80] sm:$0xff]
          %v3202 = vld [vmem:[#allocation5 + $0x88] sm:$0xff]
          %v3203 = vld [vmem:[#allocation5 + $0x90] sm:$0xff]
          %v3204 = vld [vmem:[#allocation5 + $0x98] sm:$0xff]
          %v3205 = vld [vmem:[#allocation5 + $0xa0] sm:$0xff]
          %v3206 = vld [vmem:[#allocation5 + $0xa8] sm:$0xff]
          %v3207 = vld [vmem:[#allocation5 + $0xb0] sm:$0xff]
          %v3208 = vld [vmem:[#allocation5 + $0xb8] sm:$0xff]
          %v3209 = vld [vmem:[#allocation5 + $0xc0] sm:$0xff]
          %v3210 = vld [vmem:[#allocation5 + $0xc8] sm:$0xff]
          %v3211 = vld [vmem:[#allocation5 + $0xd0] sm:$0xff]
          %v3212 = vld [vmem:[#allocation5 + $0xd8] sm:$0xff]
          %v3213 = vld [vmem:[#allocation5 + $0xe0] sm:$0xff]
          %v3214 = vld [vmem:[#allocation5 + $0xe8] sm:$0xff]
          %v3215 = vld [vmem:[#allocation5 + $0xf0] sm:$0xff]
          %v3216 = vld [vmem:[#allocation5 + $0xf8] sm:$0xff]
          %v3217 = vld [vmem:[#allocation5 + $0x100] sm:$0xff]
          %v3218 = vld [vmem:[#allocation5 + $0x108] sm:$0xff]
          %v3219 = vld [vmem:[#allocation5 + $0x110] sm:$0xff]
          %v3220 = vld [vmem:[#allocation5 + $0x118] sm:$0xff]
          %v3221 = vld [vmem:[#allocation5 + $0x120] sm:$0xff]
          %v3222 = vld [vmem:[#allocation5 + $0x128] sm:$0xff]
          %v3223 = vld [vmem:[#allocation5 + $0x130] sm:$0xff]
          %v3224 = vld [vmem:[#allocation5 + $0x138] sm:$0xff]
          %v3225 = vld [vmem:[#allocation5 + $0x140] sm:$0xff]
          %v3226 = vld [vmem:[#allocation5 + $0x148] sm:$0xff]
          %v3227 = vld [vmem:[#allocation5 + $0x150] sm:$0xff]
          %v3228 = vld [vmem:[#allocation5 + $0x158] sm:$0xff]
          %v3229 = vld [vmem:[#allocation5 + $0x160] sm:$0xff]
          %v3230 = vld [vmem:[#allocation5 + $0x168] sm:$0xff]
          %v3231 = vld [vmem:[#allocation5 + $0x170] sm:$0xff]
          %v3232 = vld [vmem:[#allocation5 + $0x178] sm:$0xff]
          %v3233 = vld [vmem:[#allocation5 + $0x180] sm:$0xff]
          %v3234 = vld [vmem:[#allocation5 + $0x188] sm:$0xff]
          %v3235 = vld [vmem:[#allocation5 + $0x190] sm:$0xff]
          %v3236 = vld [vmem:[#allocation5 + $0x198] sm:$0xff]
          %v3237 = vld [vmem:[#allocation5 + $0x1a0] sm:$0xff]
          %v3238 = vld [vmem:[#allocation5 + $0x1a8] sm:$0xff]
          %v3239 = vld [vmem:[#allocation5 + $0x1b0] sm:$0xff]
          %v3240 = vld [vmem:[#allocation5 + $0x1b8] sm:$0xff]
          %v3241 = vld [vmem:[#allocation5 + $0x1c0] sm:$0xff]
          %v3242 = vld [vmem:[#allocation5 + $0x1c8] sm:$0xff]
          %v3243 = vld [vmem:[#allocation5 + $0x1d0] sm:$0xff]
          %v3244 = vld [vmem:[#allocation5 + $0x1d8] sm:$0xff]
          %v3245 = vld [vmem:[#allocation5 + $0x1e0] sm:$0xff]
          %v3246 = vld [vmem:[#allocation5 + $0x1e8] sm:$0xff]
          %v3247 = vld [vmem:[#allocation5 + $0x1f0] sm:$0xff]
          %v3248 = vld [vmem:[#allocation5 + $0x1f8] sm:$0xff]
          %v3249 = vpack.c.bf16 %v3122, %v3121
          %v3250 = vpack.c.bf16 %v3124, %v3123
          %v3251 = vpack.c.bf16 %v3126, %v3125
          %v3252 = vpack.c.bf16 %v3128, %v3127
          %v3253 = vpack.c.bf16 %v3130, %v3129
          %v3254 = vpack.c.bf16 %v3132, %v3131
          %v3255 = vpack.c.bf16 %v3134, %v3133
          %v3256 = vpack.c.bf16 %v3136, %v3135
          %v3257 = vpack.c.bf16 %v3138, %v3137
          %v3258 = vpack.c.bf16 %v3140, %v3139
          %v3259 = vpack.c.bf16 %v3142, %v3141
          %v3260 = vpack.c.bf16 %v3144, %v3143
          %v3261 = vpack.c.bf16 %v3146, %v3145
          %v3262 = vpack.c.bf16 %v3148, %v3147
          %v3263 = vpack.c.bf16 %v3150, %v3149
          %v3264 = vpack.c.bf16 %v3152, %v3151
          %v3265 = vpack.c.bf16 %v3154, %v3153
          %v3266 = vpack.c.bf16 %v3156, %v3155
          %v3267 = vpack.c.bf16 %v3158, %v3157
          %v3268 = vpack.c.bf16 %v3160, %v3159
          %v3269 = vpack.c.bf16 %v3162, %v3161
          %v3270 = vpack.c.bf16 %v3164, %v3163
          %v3271 = vpack.c.bf16 %v3166, %v3165
          %v3272 = vpack.c.bf16 %v3168, %v3167
          %v3273 = vpack.c.bf16 %v3170, %v3169
          %v3274 = vpack.c.bf16 %v3172, %v3171
          %v3275 = vpack.c.bf16 %v3174, %v3173
          %v3276 = vpack.c.bf16 %v3176, %v3175
          %v3277 = vpack.c.bf16 %v3178, %v3177
          %v3278 = vpack.c.bf16 %v3180, %v3179
          %v3279 = vpack.c.bf16 %v3182, %v3181
          %v3280 = vpack.c.bf16 %v3184, %v3183
          %s3281 = smul.u32 %s2893, 16
          %s3282 = smul.addr %s3281, 4
          %s3283 = scalar_lea.vmem %s3, %s3282
          %v3284 = vld [vmem:[%s3283] sm:$0xf]
          %v3285 = vld [vmem:[%s3283 + $0x4] sm:$0xf]
          %v3286 = vld [vmem:[%s3283 + $0x8] sm:$0xf]
          %v3287 = vld [vmem:[%s3283 + $0xc] sm:$0xf]
          %v3288 = vld [vmem:[%s3283 + $0x10] sm:$0xf]
          %v3289 = vld [vmem:[%s3283 + $0x14] sm:$0xf]
          %v3290 = vld [vmem:[%s3283 + $0x18] sm:$0xf]
          %v3291 = vld [vmem:[%s3283 + $0x1c] sm:$0xf]
          %v3292 = vld [vmem:[%s3283 + $0x20] sm:$0xf]
          %v3293 = vld [vmem:[%s3283 + $0x24] sm:$0xf]
          %v3294 = vld [vmem:[%s3283 + $0x28] sm:$0xf]
          %v3295 = vld [vmem:[%s3283 + $0x2c] sm:$0xf]
          %v3296 = vld [vmem:[%s3283 + $0x30] sm:$0xf]
          %v3297 = vld [vmem:[%s3283 + $0x34] sm:$0xf]
          %v3298 = vld [vmem:[%s3283 + $0x38] sm:$0xf]
          %v3299 = vld [vmem:[%s3283 + $0x3c] sm:$0xf]
          %v3316 = vunpack.c.l.b16 %v3284
          %v3317 = vunpack.c.l.b16 %v3285
          %v3318 = vunpack.c.l.b16 %v3286
          %v3319 = vunpack.c.l.b16 %v3287
          %v3320 = vunpack.c.l.b16 %v3288
          %v3321 = vunpack.c.l.b16 %v3289
          %v3322 = vunpack.c.l.b16 %v3290
          %v3323 = vunpack.c.l.b16 %v3291
          %v3324 = vunpack.c.l.b16 %v3292
          %v3325 = vunpack.c.l.b16 %v3293
          %v3326 = vunpack.c.l.b16 %v3294
          %v3327 = vunpack.c.l.b16 %v3295
          %v3328 = vunpack.c.l.b16 %v3296
          %v3329 = vunpack.c.l.b16 %v3297
          %v3330 = vunpack.c.l.b16 %v3298
          %v3331 = vunpack.c.l.b16 %v3299
          %v3332 = vpack.c.b16 %v3317, %v3316
          %v3333 = vpack.c.b16 %v3319, %v3318
          %v3334 = vpack.c.b16 %v3321, %v3320
          %v3335 = vpack.c.b16 %v3323, %v3322
          %v3336 = vpack.c.b16 %v3325, %v3324
          %v3337 = vpack.c.b16 %v3327, %v3326
          %v3338 = vpack.c.b16 %v3329, %v3328
          %v3339 = vpack.c.b16 %v3331, %v3330
          %3348 = vmatprep.subr.bf16.mxu0 0
          %3349 = vmatpush1.bf16.msra.mxu0 %v3332
          %3350 = vmatprep.subr.bf16.mxu0 0
          %3351 = vmatpush1.bf16.msra.mxu0 %v3333
          %3352 = vmatprep.subr.bf16.mxu0 0
          %3353 = vmatpush1.bf16.msra.mxu0 %v3334
          %3354 = vmatprep.subr.bf16.mxu0 0
          %3355 = vmatpush1.bf16.msra.mxu0 %v3335
          %3356 = vmatprep.subr.bf16.mxu0 0
          %3357 = vmatpush1.bf16.msra.mxu0 %v3336
          %3358 = vmatprep.subr.bf16.mxu0 0
          %3359 = vmatpush1.bf16.msra.mxu0 %v3337
          %3360 = vmatprep.subr.bf16.mxu0 0
          %3361 = vmatpush1.bf16.msra.mxu0 %v3338
          %3362 = vmatprep.subr.bf16.mxu0 0
          %3363 = vmatpush1.bf16.msra.mxu0 %v3339
          %3364 = vmatprep.subr.bf16.mxu0 0
          %3365 = vmatpush1.bf16.msra.mxu0 0
          %3366 = vmatprep.subr.bf16.mxu0 0
          %3367 = vmatpush1.bf16.msra.mxu0 0
          %3368 = vmatprep.subr.bf16.mxu0 0
          %3369 = vmatpush1.bf16.msra.mxu0 0
          %3370 = vmatprep.subr.bf16.mxu0 0
          %3371 = vmatpush1.bf16.msra.mxu0 0
          %3372 = vmatprep.subr.bf16.mxu0 0
          %3373 = vmatpush1.bf16.msra.mxu0 0
          %3374 = vmatprep.subr.bf16.mxu0 0
          %3375 = vmatpush1.bf16.msra.mxu0 0
          %3376 = vmatprep.subr.bf16.mxu0 0
          %3377 = vmatpush1.bf16.msra.mxu0 0
          %3378 = vmatprep.subr.bf16.mxu0 0
          %3379 = vmatpush1.bf16.msra.mxu0 0
          %3380 = vmatprep.mubr.bf16.mxu0 0
          %3381 = vmatmul.mubr.bf16.gmra.mrb[0].mxu0 %v3249
          %v3382 = vpop.f32.mrb[0].mxu0
          %v3383 = vadd.f32 0.0, %v3382
          %v3384 = vpop.f32.mrb[0].mxu0
          %v3385 = vpop.f32.mrb[0].mxu0
          %v3386 = vadd.f32 0.0, %v3385
          %v3387 = vpop.f32.mrb[0].mxu0
          %3388 = vmatprep.mubr.bf16.mxu0 0
          %3389 = vmatmul.mubr.bf16.gmra.mrb[0].mxu0 %v3250
          %v3390 = vpop.f32.mrb[0].mxu0
          %v3391 = vadd.f32 0.0, %v3390
          %v3392 = vpop.f32.mrb[0].mxu0
          %v3393 = vpop.f32.mrb[0].mxu0
          %v3394 = vadd.f32 0.0, %v3393
          %v3395 = vpop.f32.mrb[0].mxu0
          %3396 = vmatprep.mubr.bf16.mxu0 0
          %3397 = vmatmul.mubr.bf16.gmra.mrb[0].mxu0 %v3251
          %v3398 = vpop.f32.mrb[0].mxu0
          %v3399 = vadd.f32 0.0, %v3398
          %v3400 = vpop.f32.mrb[0].mxu0
          %v3401 = vpop.f32.mrb[0].mxu0
          %v3402 = vadd.f32 0.0, %v3401
          %v3403 = vpop.f32.mrb[0].mxu0
          %3404 = vmatprep.mubr.bf16.mxu0 0
          %3405 = vmatmul.mubr.bf16.gmra.mrb[0].mxu0 %v3252
          %v3406 = vpop.f32.mrb[0].mxu0
          %v3407 = vadd.f32 0.0, %v3406
          %v3408 = vpop.f32.mrb[0].mxu0
          %v3409 = vpop.f32.mrb[0].mxu0
          %v3410 = vadd.f32 0.0, %v3409
          %v3411 = vpop.f32.mrb[0].mxu0
          %3412 = vmatprep.mubr.bf16.mxu0 0
          %3413 = vmatmul.mubr.bf16.gmra.mrb[0].mxu0 %v3253
          %v3414 = vpop.f32.mrb[0].mxu0
          %v3415 = vadd.f32 0.0, %v3414
          %v3416 = vpop.f32.mrb[0].mxu0
          %v3417 = vpop.f32.mrb[0].mxu0
          %v3418 = vadd.f32 0.0, %v3417
          %v3419 = vpop.f32.mrb[0].mxu0
          %3420 = vmatprep.mubr.bf16.mxu0 0
          %3421 = vmatmul.mubr.bf16.gmra.mrb[0].mxu0 %v3254
          %v3422 = vpop.f32.mrb[0].mxu0
          %v3423 = vadd.f32 0.0, %v3422
          %v3424 = vpop.f32.mrb[0].mxu0
          %v3425 = vpop.f32.mrb[0].mxu0
          %v3426 = vadd.f32 0.0, %v3425
          %v3427 = vpop.f32.mrb[0].mxu0
          %3428 = vmatprep.mubr.bf16.mxu0 0
          %3429 = vmatmul.mubr.bf16.gmra.mrb[0].mxu0 %v3255
          %v3430 = vpop.f32.mrb[0].mxu0
          %v3431 = vadd.f32 0.0, %v3430
          %v3432 = vpop.f32.mrb[0].mxu0
          %v3433 = vpop.f32.mrb[0].mxu0
          %v3434 = vadd.f32 0.0, %v3433
          %v3435 = vpop.f32.mrb[0].mxu0
          %3436 = vmatprep.mubr.bf16.mxu0 0
          %3437 = vmatmul.mubr.bf16.gmra.mrb[0].mxu0 %v3256
          %v3438 = vpop.f32.mrb[0].mxu0
          %v3439 = vadd.f32 0.0, %v3438
          %v3440 = vpop.f32.mrb[0].mxu0
          %v3441 = vpop.f32.mrb[0].mxu0
          %v3442 = vadd.f32 0.0, %v3441
          %v3443 = vpop.f32.mrb[0].mxu0
          %3444 = vmatprep.mubr.bf16.mxu0 0
          %3445 = vmatmul.mubr.bf16.gmra.mrb[0].mxu0 %v3257
          %v3446 = vpop.f32.mrb[0].mxu0
          %v3447 = vadd.f32 0.0, %v3446
          %v3448 = vpop.f32.mrb[0].mxu0
          %v3449 = vpop.f32.mrb[0].mxu0
          %v3450 = vadd.f32 0.0, %v3449
          %v3451 = vpop.f32.mrb[0].mxu0
          %3452 = vmatprep.mubr.bf16.mxu0 0
          %3453 = vmatmul.mubr.bf16.gmra.mrb[0].mxu0 %v3258
          %v3454 = vpop.f32.mrb[0].mxu0
          %v3455 = vadd.f32 0.0, %v3454
          %v3456 = vpop.f32.mrb[0].mxu0
          %v3457 = vpop.f32.mrb[0].mxu0
          %v3458 = vadd.f32 0.0, %v3457
          %v3459 = vpop.f32.mrb[0].mxu0
          %3460 = vmatprep.mubr.bf16.mxu0 0
          %3461 = vmatmul.mubr.bf16.gmra.mrb[0].mxu0 %v3259
          %v3462 = vpop.f32.mrb[0].mxu0
          %v3463 = vadd.f32 0.0, %v3462
          %v3464 = vpop.f32.mrb[0].mxu0
          %v3465 = vpop.f32.mrb[0].mxu0
          %v3466 = vadd.f32 0.0, %v3465
          %v3467 = vpop.f32.mrb[0].mxu0
          %3468 = vmatprep.mubr.bf16.mxu0 0
          %3469 = vmatmul.mubr.bf16.gmra.mrb[0].mxu0 %v3260
          %v3470 = vpop.f32.mrb[0].mxu0
          %v3471 = vadd.f32 0.0, %v3470
          %v3472 = vpop.f32.mrb[0].mxu0
          %v3473 = vpop.f32.mrb[0].mxu0
          %v3474 = vadd.f32 0.0, %v3473
          %v3475 = vpop.f32.mrb[0].mxu0
          %3476 = vmatprep.mubr.bf16.mxu0 0
          %3477 = vmatmul.mubr.bf16.gmra.mrb[0].mxu0 %v3261
          %v3478 = vpop.f32.mrb[0].mxu0
          %v3479 = vadd.f32 0.0, %v3478
          %v3480 = vpop.f32.mrb[0].mxu0
          %v3481 = vpop.f32.mrb[0].mxu0
          %v3482 = vadd.f32 0.0, %v3481
          %v3483 = vpop.f32.mrb[0].mxu0
          %3484 = vmatprep.mubr.bf16.mxu0 0
          %3485 = vmatmul.mubr.bf16.gmra.mrb[0].mxu0 %v3262
          %v3486 = vpop.f32.mrb[0].mxu0
          %v3487 = vadd.f32 0.0, %v3486
          %v3488 = vpop.f32.mrb[0].mxu0
          %v3489 = vpop.f32.mrb[0].mxu0
          %v3490 = vadd.f32 0.0, %v3489
          %v3491 = vpop.f32.mrb[0].mxu0
          %3492 = vmatprep.mubr.bf16.mxu0 0
          %3493 = vmatmul.mubr.bf16.gmra.mrb[0].mxu0 %v3263
          %v3494 = vpop.f32.mrb[0].mxu0
          %v3495 = vadd.f32 0.0, %v3494
          %v3496 = vpop.f32.mrb[0].mxu0
          %v3497 = vpop.f32.mrb[0].mxu0
          %v3498 = vadd.f32 0.0, %v3497
          %v3499 = vpop.f32.mrb[0].mxu0
          %3500 = vmatprep.mubr.bf16.mxu0 0
          %3501 = vmatmul.mubr.bf16.gmra.mrb[0].mxu0 %v3264
          %v3502 = vpop.f32.mrb[0].mxu0
          %v3503 = vadd.f32 0.0, %v3502
          %v3504 = vpop.f32.mrb[0].mxu0
          %v3505 = vpop.f32.mrb[0].mxu0
          %v3506 = vadd.f32 0.0, %v3505
          %v3507 = vpop.f32.mrb[0].mxu0
          %3508 = vmatprep.mubr.bf16.mxu0 0
          %3509 = vmatmul.mubr.bf16.gmra.mrb[0].mxu0 %v3265
          %v3510 = vpop.f32.mrb[0].mxu0
          %v3511 = vadd.f32 0.0, %v3510
          %v3512 = vpop.f32.mrb[0].mxu0
          %v3513 = vpop.f32.mrb[0].mxu0
          %v3514 = vadd.f32 0.0, %v3513
          %v3515 = vpop.f32.mrb[0].mxu0
          %3516 = vmatprep.mubr.bf16.mxu0 0
          %3517 = vmatmul.mubr.bf16.gmra.mrb[0].mxu0 %v3266
          %v3518 = vpop.f32.mrb[0].mxu0
          %v3519 = vadd.f32 0.0, %v3518
          %v3520 = vpop.f32.mrb[0].mxu0
          %v3521 = vpop.f32.mrb[0].mxu0
          %v3522 = vadd.f32 0.0, %v3521
          %v3523 = vpop.f32.mrb[0].mxu0
          %3524 = vmatprep.mubr.bf16.mxu0 0
          %3525 = vmatmul.mubr.bf16.gmra.mrb[0].mxu0 %v3267
          %v3526 = vpop.f32.mrb[0].mxu0
          %v3527 = vadd.f32 0.0, %v3526
          %v3528 = vpop.f32.mrb[0].mxu0
          %v3529 = vpop.f32.mrb[0].mxu0
          %v3530 = vadd.f32 0.0, %v3529
          %v3531 = vpop.f32.mrb[0].mxu0
          %3532 = vmatprep.mubr.bf16.mxu0 0
          %3533 = vmatmul.mubr.bf16.gmra.mrb[0].mxu0 %v3268
          %v3534 = vpop.f32.mrb[0].mxu0
          %v3535 = vadd.f32 0.0, %v3534
          %v3536 = vpop.f32.mrb[0].mxu0
          %v3537 = vpop.f32.mrb[0].mxu0
          %v3538 = vadd.f32 0.0, %v3537
          %v3539 = vpop.f32.mrb[0].mxu0
          %3540 = vmatprep.mubr.bf16.mxu0 0
          %3541 = vmatmul.mubr.bf16.gmra.mrb[0].mxu0 %v3269
          %v3542 = vpop.f32.mrb[0].mxu0
          %v3543 = vadd.f32 0.0, %v3542
          %v3544 = vpop.f32.mrb[0].mxu0
          %v3545 = vpop.f32.mrb[0].mxu0
          %v3546 = vadd.f32 0.0, %v3545
          %v3547 = vpop.f32.mrb[0].mxu0
          %3548 = vmatprep.mubr.bf16.mxu0 0
          %3549 = vmatmul.mubr.bf16.gmra.mrb[0].mxu0 %v3270
          %v3550 = vpop.f32.mrb[0].mxu0
          %v3551 = vadd.f32 0.0, %v3550
          %v3552 = vpop.f32.mrb[0].mxu0
          %v3553 = vpop.f32.mrb[0].mxu0
          %v3554 = vadd.f32 0.0, %v3553
          %v3555 = vpop.f32.mrb[0].mxu0
          %3556 = vmatprep.mubr.bf16.mxu0 0
          %3557 = vmatmul.mubr.bf16.gmra.mrb[0].mxu0 %v3271
          %v3558 = vpop.f32.mrb[0].mxu0
          %v3559 = vadd.f32 0.0, %v3558
          %v3560 = vpop.f32.mrb[0].mxu0
          %v3561 = vpop.f32.mrb[0].mxu0
          %v3562 = vadd.f32 0.0, %v3561
          %v3563 = vpop.f32.mrb[0].mxu0
          %3564 = vmatprep.mubr.bf16.mxu0 0
          %3565 = vmatmul.mubr.bf16.gmra.mrb[0].mxu0 %v3272
          %v3566 = vpop.f32.mrb[0].mxu0
          %v3567 = vadd.f32 0.0, %v3566
          %v3568 = vpop.f32.mrb[0].mxu0
          %v3569 = vpop.f32.mrb[0].mxu0
          %v3570 = vadd.f32 0.0, %v3569
          %v3571 = vpop.f32.mrb[0].mxu0
          %3572 = vmatprep.mubr.bf16.mxu0 0
          %3573 = vmatmul.mubr.bf16.gmra.mrb[0].mxu0 %v3273
          %v3574 = vpop.f32.mrb[0].mxu0
          %v3575 = vadd.f32 0.0, %v3574
          %v3576 = vpop.f32.mrb[0].mxu0
          %v3577 = vpop.f32.mrb[0].mxu0
          %v3578 = vadd.f32 0.0, %v3577
          %v3579 = vpop.f32.mrb[0].mxu0
          %3580 = vmatprep.mubr.bf16.mxu0 0
          %3581 = vmatmul.mubr.bf16.gmra.mrb[0].mxu0 %v3274
          %v3582 = vpop.f32.mrb[0].mxu0
          %v3583 = vadd.f32 0.0, %v3582
          %v3584 = vpop.f32.mrb[0].mxu0
          %v3585 = vpop.f32.mrb[0].mxu0
          %v3586 = vadd.f32 0.0, %v3585
          %v3587 = vpop.f32.mrb[0].mxu0
          %3588 = vmatprep.mubr.bf16.mxu0 0
          %3589 = vmatmul.mubr.bf16.gmra.mrb[0].mxu0 %v3275
          %v3590 = vpop.f32.mrb[0].mxu0
          %v3591 = vadd.f32 0.0, %v3590
          %v3592 = vpop.f32.mrb[0].mxu0
          %v3593 = vpop.f32.mrb[0].mxu0
          %v3594 = vadd.f32 0.0, %v3593
          %v3595 = vpop.f32.mrb[0].mxu0
          %3596 = vmatprep.mubr.bf16.mxu0 0
          %3597 = vmatmul.mubr.bf16.gmra.mrb[0].mxu0 %v3276
          %v3598 = vpop.f32.mrb[0].mxu0
          %v3599 = vadd.f32 0.0, %v3598
          %v3600 = vpop.f32.mrb[0].mxu0
          %v3601 = vpop.f32.mrb[0].mxu0
          %v3602 = vadd.f32 0.0, %v3601
          %v3603 = vpop.f32.mrb[0].mxu0
          %3604 = vmatprep.mubr.bf16.mxu0 0
          %3605 = vmatmul.mubr.bf16.gmra.mrb[0].mxu0 %v3277
          %v3606 = vpop.f32.mrb[0].mxu0
          %v3607 = vadd.f32 0.0, %v3606
          %v3608 = vpop.f32.mrb[0].mxu0
          %v3609 = vpop.f32.mrb[0].mxu0
          %v3610 = vadd.f32 0.0, %v3609
          %v3611 = vpop.f32.mrb[0].mxu0
          %3612 = vmatprep.mubr.bf16.mxu0 0
          %3613 = vmatmul.mubr.bf16.gmra.mrb[0].mxu0 %v3278
          %v3614 = vpop.f32.mrb[0].mxu0
          %v3615 = vadd.f32 0.0, %v3614
          %v3616 = vpop.f32.mrb[0].mxu0
          %v3617 = vpop.f32.mrb[0].mxu0
          %v3618 = vadd.f32 0.0, %v3617
          %v3619 = vpop.f32.mrb[0].mxu0
          %3620 = vmatprep.mubr.bf16.mxu0 0
          %3621 = vmatmul.mubr.bf16.gmra.mrb[0].mxu0 %v3279
          %v3622 = vpop.f32.mrb[0].mxu0
          %v3623 = vadd.f32 0.0, %v3622
          %v3624 = vpop.f32.mrb[0].mxu0
          %v3625 = vpop.f32.mrb[0].mxu0
          %v3626 = vadd.f32 0.0, %v3625
          %v3627 = vpop.f32.mrb[0].mxu0
          %3628 = vmatprep.mubr.bf16.mxu0 0
          %3629 = vmatmul.mubr.bf16.gmra.mrb[0].mxu0 %v3280
          %v3630 = vpop.f32.mrb[0].mxu0
          %v3631 = vadd.f32 0.0, %v3630
          %v3632 = vpop.f32.mrb[0].mxu0
          %v3633 = vpop.f32.mrb[0].mxu0
          %v3634 = vadd.f32 0.0, %v3633
          %v3635 = vpop.f32.mrb[0].mxu0
          %3636 = vdwg.mxu0
          %v3637 = vadd.f32 %v3185, %v3383
          %v3638 = vadd.f32 %v3186, %v3386
          %v3639 = vadd.f32 %v3187, %v3391
          %v3640 = vadd.f32 %v3188, %v3394
          %v3641 = vadd.f32 %v3189, %v3399
          %v3642 = vadd.f32 %v3190, %v3402
          %v3643 = vadd.f32 %v3191, %v3407
          %v3644 = vadd.f32 %v3192, %v3410
          %v3645 = vadd.f32 %v3193, %v3415
          %v3646 = vadd.f32 %v3194, %v3418
          %v3647 = vadd.f32 %v3195, %v3423
          %v3648 = vadd.f32 %v3196, %v3426
          %v3649 = vadd.f32 %v3197, %v3431
          %v3650 = vadd.f32 %v3198, %v3434
          %v3651 = vadd.f32 %v3199, %v3439
          %v3652 = vadd.f32 %v3200, %v3442
          %v3653 = vadd.f32 %v3201, %v3447
          %v3654 = vadd.f32 %v3202, %v3450
          %v3655 = vadd.f32 %v3203, %v3455
          %v3656 = vadd.f32 %v3204, %v3458
          %v3657 = vadd.f32 %v3205, %v3463
          %v3658 = vadd.f32 %v3206, %v3466
          %v3659 = vadd.f32 %v3207, %v3471
          %v3660 = vadd.f32 %v3208, %v3474
          %v3661 = vadd.f32 %v3209, %v3479
          %v3662 = vadd.f32 %v3210, %v3482
          %v3663 = vadd.f32 %v3211, %v3487
          %v3664 = vadd.f32 %v3212, %v3490
          %v3665 = vadd.f32 %v3213, %v3495
          %v3666 = vadd.f32 %v3214, %v3498
          %v3667 = vadd.f32 %v3215, %v3503
          %v3668 = vadd.f32 %v3216, %v3506
          %v3669 = vadd.f32 %v3217, %v3511
          %v3670 = vadd.f32 %v3218, %v3514
          %v3671 = vadd.f32 %v3219, %v3519
          %v3672 = vadd.f32 %v3220, %v3522
          %v3673 = vadd.f32 %v3221, %v3527
          %v3674 = vadd.f32 %v3222, %v3530
          %v3675 = vadd.f32 %v3223, %v3535
          %v3676 = vadd.f32 %v3224, %v3538
          %v3677 = vadd.f32 %v3225, %v3543
          %v3678 = vadd.f32 %v3226, %v3546
          %v3679 = vadd.f32 %v3227, %v3551
          %v3680 = vadd.f32 %v3228, %v3554
          %v3681 = vadd.f32 %v3229, %v3559
          %v3682 = vadd.f32 %v3230, %v3562
          %v3683 = vadd.f32 %v3231, %v3567
          %v3684 = vadd.f32 %v3232, %v3570
          %v3685 = vadd.f32 %v3233, %v3575
          %v3686 = vadd.f32 %v3234, %v3578
          %v3687 = vadd.f32 %v3235, %v3583
          %v3688 = vadd.f32 %v3236, %v3586
          %v3689 = vadd.f32 %v3237, %v3591
          %v3690 = vadd.f32 %v3238, %v3594
          %v3691 = vadd.f32 %v3239, %v3599
          %v3692 = vadd.f32 %v3240, %v3602
          %v3693 = vadd.f32 %v3241, %v3607
          %v3694 = vadd.f32 %v3242, %v3610
          %v3695 = vadd.f32 %v3243, %v3615
          %v3696 = vadd.f32 %v3244, %v3618
          %v3697 = vadd.f32 %v3245, %v3623
          %v3698 = vadd.f32 %v3246, %v3626
          %v3699 = vadd.f32 %v3247, %v3631
          %v3700 = vadd.f32 %v3248, %v3634
          %3701 = vst [vmem:[#allocation5] sm:$0xff] %v3637
          %3702 = vst [vmem:[#allocation5 + $0x8] sm:$0xff] %v3638
          %3703 = vst [vmem:[#allocation5 + $0x10] sm:$0xff] %v3639
          %3704 = vst [vmem:[#allocation5 + $0x18] sm:$0xff] %v3640
          %3705 = vst [vmem:[#allocation5 + $0x20] sm:$0xff] %v3641
          %3706 = vst [vmem:[#allocation5 + $0x28] sm:$0xff] %v3642
          %3707 = vst [vmem:[#allocation5 + $0x30] sm:$0xff] %v3643
          %3708 = vst [vmem:[#allocation5 + $0x38] sm:$0xff] %v3644
          %3709 = vst [vmem:[#allocation5 + $0x40] sm:$0xff] %v3645
          %3710 = vst [vmem:[#allocation5 + $0x48] sm:$0xff] %v3646
          %3711 = vst [vmem:[#allocation5 + $0x50] sm:$0xff] %v3647
          %3712 = vst [vmem:[#allocation5 + $0x58] sm:$0xff] %v3648
          %3713 = vst [vmem:[#allocation5 + $0x60] sm:$0xff] %v3649
          %3714 = vst [vmem:[#allocation5 + $0x68] sm:$0xff] %v3650
          %3715 = vst [vmem:[#allocation5 + $0x70] sm:$0xff] %v3651
          %3716 = vst [vmem:[#allocation5 + $0x78] sm:$0xff] %v3652
          %3717 = vst [vmem:[#allocation5 + $0x80] sm:$0xff] %v3653
          %3718 = vst [vmem:[#allocation5 + $0x88] sm:$0xff] %v3654
          %3719 = vst [vmem:[#allocation5 + $0x90] sm:$0xff] %v3655
          %3720 = vst [vmem:[#allocation5 + $0x98] sm:$0xff] %v3656
          %3721 = vst [vmem:[#allocation5 + $0xa0] sm:$0xff] %v3657
          %3722 = vst [vmem:[#allocation5 + $0xa8] sm:$0xff] %v3658
          %3723 = vst [vmem:[#allocation5 + $0xb0] sm:$0xff] %v3659
          %3724 = vst [vmem:[#allocation5 + $0xb8] sm:$0xff] %v3660
          %3725 = vst [vmem:[#allocation5 + $0xc0] sm:$0xff] %v3661
          %3726 = vst [vmem:[#allocation5 + $0xc8] sm:$0xff] %v3662
          %3727 = vst [vmem:[#allocation5 + $0xd0] sm:$0xff] %v3663
          %3728 = vst [vmem:[#allocation5 + $0xd8] sm:$0xff] %v3664
          %3729 = vst [vmem:[#allocation5 + $0xe0] sm:$0xff] %v3665
          %3730 = vst [vmem:[#allocation5 + $0xe8] sm:$0xff] %v3666
          %3731 = vst [vmem:[#allocation5 + $0xf0] sm:$0xff] %v3667
          %3732 = vst [vmem:[#allocation5 + $0xf8] sm:$0xff] %v3668
          %3733 = vst [vmem:[#allocation5 + $0x100] sm:$0xff] %v3669
          %3734 = vst [vmem:[#allocation5 + $0x108] sm:$0xff] %v3670
          %3735 = vst [vmem:[#allocation5 + $0x110] sm:$0xff] %v3671
          %3736 = vst [vmem:[#allocation5 + $0x118] sm:$0xff] %v3672
          %3737 = vst [vmem:[#allocation5 + $0x120] sm:$0xff] %v3673
          %3738 = vst [vmem:[#allocation5 + $0x128] sm:$0xff] %v3674
          %3739 = vst [vmem:[#allocation5 + $0x130] sm:$0xff] %v3675
          %3740 = vst [vmem:[#allocation5 + $0x138] sm:$0xff] %v3676
          %3741 = vst [vmem:[#allocation5 + $0x140] sm:$0xff] %v3677
          %3742 = vst [vmem:[#allocation5 + $0x148] sm:$0xff] %v3678
          %3743 = vst [vmem:[#allocation5 + $0x150] sm:$0xff] %v3679
          %3744 = vst [vmem:[#allocation5 + $0x158] sm:$0xff] %v3680
          %3745 = vst [vmem:[#allocation5 + $0x160] sm:$0xff] %v3681
          %3746 = vst [vmem:[#allocation5 + $0x168] sm:$0xff] %v3682
          %3747 = vst [vmem:[#allocation5 + $0x170] sm:$0xff] %v3683
          %3748 = vst [vmem:[#allocation5 + $0x178] sm:$0xff] %v3684
          %3749 = vst [vmem:[#allocation5 + $0x180] sm:$0xff] %v3685
          %3750 = vst [vmem:[#allocation5 + $0x188] sm:$0xff] %v3686
          %3751 = vst [vmem:[#allocation5 + $0x190] sm:$0xff] %v3687
          %3752 = vst [vmem:[#allocation5 + $0x198] sm:$0xff] %v3688
          %3753 = vst [vmem:[#allocation5 + $0x1a0] sm:$0xff] %v3689
          %3754 = vst [vmem:[#allocation5 + $0x1a8] sm:$0xff] %v3690
          %3755 = vst [vmem:[#allocation5 + $0x1b0] sm:$0xff] %v3691
          %3756 = vst [vmem:[#allocation5 + $0x1b8] sm:$0xff] %v3692
          %3757 = vst [vmem:[#allocation5 + $0x1c0] sm:$0xff] %v3693
          %3758 = vst [vmem:[#allocation5 + $0x1c8] sm:$0xff] %v3694
          %3759 = vst [vmem:[#allocation5 + $0x1d0] sm:$0xff] %v3695
          %3760 = vst [vmem:[#allocation5 + $0x1d8] sm:$0xff] %v3696
          %3761 = vst [vmem:[#allocation5 + $0x1e0] sm:$0xff] %v3697
          %3762 = vst [vmem:[#allocation5 + $0x1e8] sm:$0xff] %v3698
          %3763 = vst [vmem:[#allocation5 + $0x1f0] sm:$0xff] %v3699
          %3764 = vst [vmem:[#allocation5 + $0x1f8] sm:$0xff] %v3700
          %v3765 = vld [vmem:[#allocation2] sm:$0xff]
          %v3766 = vld [vmem:[#allocation2 + $0x8] sm:$0xff]
          %v3767 = vld [vmem:[#allocation2 + $0x10] sm:$0xff]
          %v3768 = vld [vmem:[#allocation2 + $0x18] sm:$0xff]
          %v3769 = vld [vmem:[#allocation2 + $0x20] sm:$0xff]
          %v3770 = vld [vmem:[#allocation2 + $0x28] sm:$0xff]
          %v3771 = vld [vmem:[#allocation2 + $0x30] sm:$0xff]
          %v3772 = vld [vmem:[#allocation2 + $0x38] sm:$0xff]
          %v3773 = vld [vmem:[#allocation2 + $0x40] sm:$0xff]
          %v3774 = vld [vmem:[#allocation2 + $0x48] sm:$0xff]
          %v3775 = vld [vmem:[#allocation2 + $0x50] sm:$0xff]
          %v3776 = vld [vmem:[#allocation2 + $0x58] sm:$0xff]
          %v3777 = vld [vmem:[#allocation2 + $0x60] sm:$0xff]
          %v3778 = vld [vmem:[#allocation2 + $0x68] sm:$0xff]
          %v3779 = vld [vmem:[#allocation2 + $0x70] sm:$0xff]
          %v3780 = vld [vmem:[#allocation2 + $0x78] sm:$0xff]
          %v3781 = vld [vmem:[#allocation2 + $0x80] sm:$0xff]
          %v3782 = vld [vmem:[#allocation2 + $0x88] sm:$0xff]
          %v3783 = vld [vmem:[#allocation2 + $0x90] sm:$0xff]
          %v3784 = vld [vmem:[#allocation2 + $0x98] sm:$0xff]
          %v3785 = vld [vmem:[#allocation2 + $0xa0] sm:$0xff]
          %v3786 = vld [vmem:[#allocation2 + $0xa8] sm:$0xff]
          %v3787 = vld [vmem:[#allocation2 + $0xb0] sm:$0xff]
          %v3788 = vld [vmem:[#allocation2 + $0xb8] sm:$0xff]
          %v3789 = vld [vmem:[#allocation2 + $0xc0] sm:$0xff]
          %v3790 = vld [vmem:[#allocation2 + $0xc8] sm:$0xff]
          %v3791 = vld [vmem:[#allocation2 + $0xd0] sm:$0xff]
          %v3792 = vld [vmem:[#allocation2 + $0xd8] sm:$0xff]
          %v3793 = vld [vmem:[#allocation2 + $0xe0] sm:$0xff]
          %v3794 = vld [vmem:[#allocation2 + $0xe8] sm:$0xff]
          %v3795 = vld [vmem:[#allocation2 + $0xf0] sm:$0xff]
          %v3796 = vld [vmem:[#allocation2 + $0xf8] sm:$0xff]
          %3797 = vst [vmem:[#allocation3] sm:$0xff] %v3765
          %3798 = vst [vmem:[#allocation3 + $0x8] sm:$0xff] %v3766
          %3799 = vst [vmem:[#allocation3 + $0x10] sm:$0xff] %v3767
          %3800 = vst [vmem:[#allocation3 + $0x18] sm:$0xff] %v3768
          %3801 = vst [vmem:[#allocation3 + $0x20] sm:$0xff] %v3769
          %3802 = vst [vmem:[#allocation3 + $0x28] sm:$0xff] %v3770
          %3803 = vst [vmem:[#allocation3 + $0x30] sm:$0xff] %v3771
          %3804 = vst [vmem:[#allocation3 + $0x38] sm:$0xff] %v3772
          %3805 = vst [vmem:[#allocation3 + $0x40] sm:$0xff] %v3773
          %3806 = vst [vmem:[#allocation3 + $0x48] sm:$0xff] %v3774
          %3807 = vst [vmem:[#allocation3 + $0x50] sm:$0xff] %v3775
          %3808 = vst [vmem:[#allocation3 + $0x58] sm:$0xff] %v3776
          %3809 = vst [vmem:[#allocation3 + $0x60] sm:$0xff] %v3777
          %3810 = vst [vmem:[#allocation3 + $0x68] sm:$0xff] %v3778
          %3811 = vst [vmem:[#allocation3 + $0x70] sm:$0xff] %v3779
          %3812 = vst [vmem:[#allocation3 + $0x78] sm:$0xff] %v3780
          %3813 = vst [vmem:[#allocation3 + $0x80] sm:$0xff] %v3781
          %3814 = vst [vmem:[#allocation3 + $0x88] sm:$0xff] %v3782
          %3815 = vst [vmem:[#allocation3 + $0x90] sm:$0xff] %v3783
          %3816 = vst [vmem:[#allocation3 + $0x98] sm:$0xff] %v3784
          %3817 = vst [vmem:[#allocation3 + $0xa0] sm:$0xff] %v3785
          %3818 = vst [vmem:[#allocation3 + $0xa8] sm:$0xff] %v3786
          %3819 = vst [vmem:[#allocation3 + $0xb0] sm:$0xff] %v3787
          %3820 = vst [vmem:[#allocation3 + $0xb8] sm:$0xff] %v3788
          %3821 = vst [vmem:[#allocation3 + $0xc0] sm:$0xff] %v3789
          %3822 = vst [vmem:[#allocation3 + $0xc8] sm:$0xff] %v3790
          %3823 = vst [vmem:[#allocation3 + $0xd0] sm:$0xff] %v3791
          %3824 = vst [vmem:[#allocation3 + $0xd8] sm:$0xff] %v3792
          %3825 = vst [vmem:[#allocation3 + $0xe0] sm:$0xff] %v3793
          %3826 = vst [vmem:[#allocation3 + $0xe8] sm:$0xff] %v3794
          %3827 = vst [vmem:[#allocation3 + $0xf0] sm:$0xff] %v3795
          %3828 = vst [vmem:[#allocation3 + $0xf8] sm:$0xff] %v3796
          %3829 = vst [vmem:[#allocation2] sm:$0xff] %v3249
          %3830 = vst [vmem:[#allocation2 + $0x8] sm:$0xff] %v3250
          %3831 = vst [vmem:[#allocation2 + $0x10] sm:$0xff] %v3251
          %3832 = vst [vmem:[#allocation2 + $0x18] sm:$0xff] %v3252
          %3833 = vst [vmem:[#allocation2 + $0x20] sm:$0xff] %v3253
          %3834 = vst [vmem:[#allocation2 + $0x28] sm:$0xff] %v3254
          %3835 = vst [vmem:[#allocation2 + $0x30] sm:$0xff] %v3255
          %3836 = vst [vmem:[#allocation2 + $0x38] sm:$0xff] %v3256
          %3837 = vst [vmem:[#allocation2 + $0x40] sm:$0xff] %v3257
          %3838 = vst [vmem:[#allocation2 + $0x48] sm:$0xff] %v3258
          %3839 = vst [vmem:[#allocation2 + $0x50] sm:$0xff] %v3259
          %3840 = vst [vmem:[#allocation2 + $0x58] sm:$0xff] %v3260
          %3841 = vst [vmem:[#allocation2 + $0x60] sm:$0xff] %v3261
          %3842 = vst [vmem:[#allocation2 + $0x68] sm:$0xff] %v3262
          %3843 = vst [vmem:[#allocation2 + $0x70] sm:$0xff] %v3263
          %3844 = vst [vmem:[#allocation2 + $0x78] sm:$0xff] %v3264
          %3845 = vst [vmem:[#allocation2 + $0x80] sm:$0xff] %v3265
          %3846 = vst [vmem:[#allocation2 + $0x88] sm:$0xff] %v3266
          %3847 = vst [vmem:[#allocation2 + $0x90] sm:$0xff] %v3267
          %3848 = vst [vmem:[#allocation2 + $0x98] sm:$0xff] %v3268
          %3849 = vst [vmem:[#allocation2 + $0xa0] sm:$0xff] %v3269
          %3850 = vst [vmem:[#allocation2 + $0xa8] sm:$0xff] %v3270
          %3851 = vst [vmem:[#allocation2 + $0xb0] sm:$0xff] %v3271
          %3852 = vst [vmem:[#allocation2 + $0xb8] sm:$0xff] %v3272
          %3853 = vst [vmem:[#allocation2 + $0xc0] sm:$0xff] %v3273
          %3854 = vst [vmem:[#allocation2 + $0xc8] sm:$0xff] %v3274
          %3855 = vst [vmem:[#allocation2 + $0xd0] sm:$0xff] %v3275
          %3856 = vst [vmem:[#allocation2 + $0xd8] sm:$0xff] %v3276
          %3857 = vst [vmem:[#allocation2 + $0xe0] sm:$0xff] %v3277
          %3858 = vst [vmem:[#allocation2 + $0xe8] sm:$0xff] %v3278
          %3859 = vst [vmem:[#allocation2 + $0xf0] sm:$0xff] %v3279
          %3860 = vst [vmem:[#allocation2 + $0xf8] sm:$0xff] %v3280
          %3861 = vst [vmem:[#allocation4] sm:$0xff] 0.0
          %3862 = vst [vmem:[#allocation4 + $0x8] sm:$0xff] 0.0
          %3863 = vst [vmem:[#allocation4 + $0x10] sm:$0xff] 0.0
          %3864 = vst [vmem:[#allocation4 + $0x18] sm:$0xff] 0.0
          %3865 = vst [vmem:[#allocation4 + $0x20] sm:$0xff] 0.0
          %3866 = vst [vmem:[#allocation4 + $0x28] sm:$0xff] 0.0
          %3867 = vst [vmem:[#allocation4 + $0x30] sm:$0xff] 0.0
          %3868 = vst [vmem:[#allocation4 + $0x38] sm:$0xff] 0.0
          %3869 = vst [vmem:[#allocation4 + $0x40] sm:$0xff] 0.0
          %3870 = vst [vmem:[#allocation4 + $0x48] sm:$0xff] 0.0
          %3871 = vst [vmem:[#allocation4 + $0x50] sm:$0xff] 0.0
          %3872 = vst [vmem:[#allocation4 + $0x58] sm:$0xff] 0.0
          %3873 = vst [vmem:[#allocation4 + $0x60] sm:$0xff] 0.0
          %3874 = vst [vmem:[#allocation4 + $0x68] sm:$0xff] 0.0
          %3875 = vst [vmem:[#allocation4 + $0x70] sm:$0xff] 0.0
          %3876 = vst [vmem:[#allocation4 + $0x78] sm:$0xff] 0.0
          %3877 = vst [vmem:[#allocation4 + $0x80] sm:$0xff] 0.0
          %3878 = vst [vmem:[#allocation4 + $0x88] sm:$0xff] 0.0
          %3879 = vst [vmem:[#allocation4 + $0x90] sm:$0xff] 0.0
          %3880 = vst [vmem:[#allocation4 + $0x98] sm:$0xff] 0.0
          %3881 = vst [vmem:[#allocation4 + $0xa0] sm:$0xff] 0.0
          %3882 = vst [vmem:[#allocation4 + $0xa8] sm:$0xff] 0.0
          %3883 = vst [vmem:[#allocation4 + $0xb0] sm:$0xff] 0.0
          %3884 = vst [vmem:[#allocation4 + $0xb8] sm:$0xff] 0.0
          %3885 = vst [vmem:[#allocation4 + $0xc0] sm:$0xff] 0.0
          %3886 = vst [vmem:[#allocation4 + $0xc8] sm:$0xff] 0.0
          %3887 = vst [vmem:[#allocation4 + $0xd0] sm:$0xff] 0.0
          %3888 = vst [vmem:[#allocation4 + $0xd8] sm:$0xff] 0.0
          %3889 = vst [vmem:[#allocation4 + $0xe0] sm:$0xff] 0.0
          %3890 = vst [vmem:[#allocation4 + $0xe8] sm:$0xff] 0.0
          %3891 = vst [vmem:[#allocation4 + $0xf0] sm:$0xff] 0.0
          %3892 = vst [vmem:[#allocation4 + $0xf8] sm:$0xff] 0.0
          %3893 = vst [vmem:[#allocation4 + $0x100] sm:$0xff] 0.0
          %3894 = vst [vmem:[#allocation4 + $0x108] sm:$0xff] 0.0
          %3895 = vst [vmem:[#allocation4 + $0x110] sm:$0xff] 0.0
          %3896 = vst [vmem:[#allocation4 + $0x118] sm:$0xff] 0.0
          %3897 = vst [vmem:[#allocation4 + $0x120] sm:$0xff] 0.0
          %3898 = vst [vmem:[#allocation4 + $0x128] sm:$0xff] 0.0
          %3899 = vst [vmem:[#allocation4 + $0x130] sm:$0xff] 0.0
          %3900 = vst [vmem:[#allocation4 + $0x138] sm:$0xff] 0.0
          %3901 = vst [vmem:[#allocation4 + $0x140] sm:$0xff] 0.0
          %3902 = vst [vmem:[#allocation4 + $0x148] sm:$0xff] 0.0
          %3903 = vst [vmem:[#allocation4 + $0x150] sm:$0xff] 0.0
          %3904 = vst [vmem:[#allocation4 + $0x158] sm:$0xff] 0.0
          %3905 = vst [vmem:[#allocation4 + $0x160] sm:$0xff] 0.0
          %3906 = vst [vmem:[#allocation4 + $0x168] sm:$0xff] 0.0
          %3907 = vst [vmem:[#allocation4 + $0x170] sm:$0xff] 0.0
          %3908 = vst [vmem:[#allocation4 + $0x178] sm:$0xff] 0.0
          %3909 = vst [vmem:[#allocation4 + $0x180] sm:$0xff] 0.0
          %3910 = vst [vmem:[#allocation4 + $0x188] sm:$0xff] 0.0
          %3911 = vst [vmem:[#allocation4 + $0x190] sm:$0xff] 0.0
          %3912 = vst [vmem:[#allocation4 + $0x198] sm:$0xff] 0.0
          %3913 = vst [vmem:[#allocation4 + $0x1a0] sm:$0xff] 0.0
          %3914 = vst [vmem:[#allocation4 + $0x1a8] sm:$0xff] 0.0
          %3915 = vst [vmem:[#allocation4 + $0x1b0] sm:$0xff] 0.0
          %3916 = vst [vmem:[#allocation4 + $0x1b8] sm:$0xff] 0.0
          %3917 = vst [vmem:[#allocation4 + $0x1c0] sm:$0xff] 0.0
          %3918 = vst [vmem:[#allocation4 + $0x1c8] sm:$0xff] 0.0
          %3919 = vst [vmem:[#allocation4 + $0x1d0] sm:$0xff] 0.0
          %3920 = vst [vmem:[#allocation4 + $0x1d8] sm:$0xff] 0.0
          %3921 = vst [vmem:[#allocation4 + $0x1e0] sm:$0xff] 0.0
          %3922 = vst [vmem:[#allocation4 + $0x1e8] sm:$0xff] 0.0
          %3923 = vst [vmem:[#allocation4 + $0x1f0] sm:$0xff] 0.0
          %3924 = vst [vmem:[#allocation4 + $0x1f8] sm:$0xff] 0.0
        $region64: #{gconv_gru_cell.1} parent=59 // pred_fallthru
          _
        // Predicated region
        $region65: #{gconv_gru_cell.1} parent=59 // pred_check
          %p3925 = pneg %p1994
        $region66: #{gconv_gru_cell.1} parent=59 // pred_check_branch
          %3927 = sbr.rel (%p3925) target = $region68
        $region67: #{gconv_gru_cell.1} parent=59 // pred_region
          %s3928 = sadd.s32 %s21, 4294967295
          %p3929 = scmp.eq.s32.totalorder %s3928, 1
          %s3930 = scalar_select %p3929, -1.0, -2.0
          %v3931 = vld [vmem:[#allocation4] sm:$0xff]
          %v3932 = vld [vmem:[#allocation4 + $0x8] sm:$0xff]
          %v3933 = vld [vmem:[#allocation4 + $0x10] sm:$0xff]
          %v3934 = vld [vmem:[#allocation4 + $0x18] sm:$0xff]
          %v3935 = vld [vmem:[#allocation4 + $0x20] sm:$0xff]
          %v3936 = vld [vmem:[#allocation4 + $0x28] sm:$0xff]
          %v3937 = vld [vmem:[#allocation4 + $0x30] sm:$0xff]
          %v3938 = vld [vmem:[#allocation4 + $0x38] sm:$0xff]
          %v3939 = vld [vmem:[#allocation4 + $0x40] sm:$0xff]
          %v3940 = vld [vmem:[#allocation4 + $0x48] sm:$0xff]
          %v3941 = vld [vmem:[#allocation4 + $0x50] sm:$0xff]
          %v3942 = vld [vmem:[#allocation4 + $0x58] sm:$0xff]
          %v3943 = vld [vmem:[#allocation4 + $0x60] sm:$0xff]
          %v3944 = vld [vmem:[#allocation4 + $0x68] sm:$0xff]
          %v3945 = vld [vmem:[#allocation4 + $0x70] sm:$0xff]
          %v3946 = vld [vmem:[#allocation4 + $0x78] sm:$0xff]
          %v3947 = vld [vmem:[#allocation4 + $0x80] sm:$0xff]
          %v3948 = vld [vmem:[#allocation4 + $0x88] sm:$0xff]
          %v3949 = vld [vmem:[#allocation4 + $0x90] sm:$0xff]
          %v3950 = vld [vmem:[#allocation4 + $0x98] sm:$0xff]
          %v3951 = vld [vmem:[#allocation4 + $0xa0] sm:$0xff]
          %v3952 = vld [vmem:[#allocation4 + $0xa8] sm:$0xff]
          %v3953 = vld [vmem:[#allocation4 + $0xb0] sm:$0xff]
          %v3954 = vld [vmem:[#allocation4 + $0xb8] sm:$0xff]
          %v3955 = vld [vmem:[#allocation4 + $0xc0] sm:$0xff]
          %v3956 = vld [vmem:[#allocation4 + $0xc8] sm:$0xff]
          %v3957 = vld [vmem:[#allocation4 + $0xd0] sm:$0xff]
          %v3958 = vld [vmem:[#allocation4 + $0xd8] sm:$0xff]
          %v3959 = vld [vmem:[#allocation4 + $0xe0] sm:$0xff]
          %v3960 = vld [vmem:[#allocation4 + $0xe8] sm:$0xff]
          %v3961 = vld [vmem:[#allocation4 + $0xf0] sm:$0xff]
          %v3962 = vld [vmem:[#allocation4 + $0xf8] sm:$0xff]
          %v3963 = vld [vmem:[#allocation4 + $0x100] sm:$0xff]
          %v3964 = vld [vmem:[#allocation4 + $0x108] sm:$0xff]
          %v3965 = vld [vmem:[#allocation4 + $0x110] sm:$0xff]
          %v3966 = vld [vmem:[#allocation4 + $0x118] sm:$0xff]
          %v3967 = vld [vmem:[#allocation4 + $0x120] sm:$0xff]
          %v3968 = vld [vmem:[#allocation4 + $0x128] sm:$0xff]
          %v3969 = vld [vmem:[#allocation4 + $0x130] sm:$0xff]
          %v3970 = vld [vmem:[#allocation4 + $0x138] sm:$0xff]
          %v3971 = vld [vmem:[#allocation4 + $0x140] sm:$0xff]
          %v3972 = vld [vmem:[#allocation4 + $0x148] sm:$0xff]
          %v3973 = vld [vmem:[#allocation4 + $0x150] sm:$0xff]
          %v3974 = vld [vmem:[#allocation4 + $0x158] sm:$0xff]
          %v3975 = vld [vmem:[#allocation4 + $0x160] sm:$0xff]
          %v3976 = vld [vmem:[#allocation4 + $0x168] sm:$0xff]
          %v3977 = vld [vmem:[#allocation4 + $0x170] sm:$0xff]
          %v3978 = vld [vmem:[#allocation4 + $0x178] sm:$0xff]
          %v3979 = vld [vmem:[#allocation4 + $0x180] sm:$0xff]
          %v3980 = vld [vmem:[#allocation4 + $0x188] sm:$0xff]
          %v3981 = vld [vmem:[#allocation4 + $0x190] sm:$0xff]
          %v3982 = vld [vmem:[#allocation4 + $0x198] sm:$0xff]
          %v3983 = vld [vmem:[#allocation4 + $0x1a0] sm:$0xff]
          %v3984 = vld [vmem:[#allocation4 + $0x1a8] sm:$0xff]
          %v3985 = vld [vmem:[#allocation4 + $0x1b0] sm:$0xff]
          %v3986 = vld [vmem:[#allocation4 + $0x1b8] sm:$0xff]
          %v3987 = vld [vmem:[#allocation4 + $0x1c0] sm:$0xff]
          %v3988 = vld [vmem:[#allocation4 + $0x1c8] sm:$0xff]
          %v3989 = vld [vmem:[#allocation4 + $0x1d0] sm:$0xff]
          %v3990 = vld [vmem:[#allocation4 + $0x1d8] sm:$0xff]
          %v3991 = vld [vmem:[#allocation4 + $0x1e0] sm:$0xff]
          %v3992 = vld [vmem:[#allocation4 + $0x1e8] sm:$0xff]
          %v3993 = vld [vmem:[#allocation4 + $0x1f0] sm:$0xff]
          %v3994 = vld [vmem:[#allocation4 + $0x1f8] sm:$0xff]
          %v3995 = vstv %s3930
          %v3996 = vmul.f32 %v3995, %v3931
          %v3997 = vmul.f32 %v3995, %v3932
          %v3998 = vmul.f32 %v3995, %v3933
          %v3999 = vmul.f32 %v3995, %v3934
          %v4000 = vmul.f32 %v3995, %v3935
          %v4001 = vmul.f32 %v3995, %v3936
          %v4002 = vmul.f32 %v3995, %v3937
          %v4003 = vmul.f32 %v3995, %v3938
          %v4004 = vmul.f32 %v3995, %v3939
          %v4005 = vmul.f32 %v3995, %v3940
          %v4006 = vmul.f32 %v3995, %v3941
          %v4007 = vmul.f32 %v3995, %v3942
          %v4008 = vmul.f32 %v3995, %v3943
          %v4009 = vmul.f32 %v3995, %v3944
          %v4010 = vmul.f32 %v3995, %v3945
          %v4011 = vmul.f32 %v3995, %v3946
          %v4012 = vmul.f32 %v3995, %v3947
          %v4013 = vmul.f32 %v3995, %v3948
          %v4014 = vmul.f32 %v3995, %v3949
          %v4015 = vmul.f32 %v3995, %v3950
          %v4016 = vmul.f32 %v3995, %v3951
          %v4017 = vmul.f32 %v3995, %v3952
          %v4018 = vmul.f32 %v3995, %v3953
          %v4019 = vmul.f32 %v3995, %v3954
          %v4020 = vmul.f32 %v3995, %v3955
          %v4021 = vmul.f32 %v3995, %v3956
          %v4022 = vmul.f32 %v3995, %v3957
          %v4023 = vmul.f32 %v3995, %v3958
          %v4024 = vmul.f32 %v3995, %v3959
          %v4025 = vmul.f32 %v3995, %v3960
          %v4026 = vmul.f32 %v3995, %v3961
          %v4027 = vmul.f32 %v3995, %v3962
          %v4028 = vmul.f32 %v3995, %v3963
          %v4029 = vmul.f32 %v3995, %v3964
          %v4030 = vmul.f32 %v3995, %v3965
          %v4031 = vmul.f32 %v3995, %v3966
          %v4032 = vmul.f32 %v3995, %v3967
          %v4033 = vmul.f32 %v3995, %v3968
          %v4034 = vmul.f32 %v3995, %v3969
          %v4035 = vmul.f32 %v3995, %v3970
          %v4036 = vmul.f32 %v3995, %v3971
          %v4037 = vmul.f32 %v3995, %v3972
          %v4038 = vmul.f32 %v3995, %v3973
          %v4039 = vmul.f32 %v3995, %v3974
          %v4040 = vmul.f32 %v3995, %v3975
          %v4041 = vmul.f32 %v3995, %v3976
          %v4042 = vmul.f32 %v3995, %v3977
          %v4043 = vmul.f32 %v3995, %v3978
          %v4044 = vmul.f32 %v3995, %v3979
          %v4045 = vmul.f32 %v3995, %v3980
          %v4046 = vmul.f32 %v3995, %v3981
          %v4047 = vmul.f32 %v3995, %v3982
          %v4048 = vmul.f32 %v3995, %v3983
          %v4049 = vmul.f32 %v3995, %v3984
          %v4050 = vmul.f32 %v3995, %v3985
          %v4051 = vmul.f32 %v3995, %v3986
          %v4052 = vmul.f32 %v3995, %v3987
          %v4053 = vmul.f32 %v3995, %v3988
          %v4054 = vmul.f32 %v3995, %v3989
          %v4055 = vmul.f32 %v3995, %v3990
          %v4056 = vmul.f32 %v3995, %v3991
          %v4057 = vmul.f32 %v3995, %v3992
          %v4058 = vmul.f32 %v3995, %v3993
          %v4059 = vmul.f32 %v3995, %v3994
          %v4060 = vld [vmem:[#allocation3] sm:$0xff]
          %v4061 = vld [vmem:[#allocation3 + $0x8] sm:$0xff]
          %v4062 = vld [vmem:[#allocation3 + $0x10] sm:$0xff]
          %v4063 = vld [vmem:[#allocation3 + $0x18] sm:$0xff]
          %v4064 = vld [vmem:[#allocation3 + $0x20] sm:$0xff]
          %v4065 = vld [vmem:[#allocation3 + $0x28] sm:$0xff]
          %v4066 = vld [vmem:[#allocation3 + $0x30] sm:$0xff]
          %v4067 = vld [vmem:[#allocation3 + $0x38] sm:$0xff]
          %v4068 = vld [vmem:[#allocation3 + $0x40] sm:$0xff]
          %v4069 = vld [vmem:[#allocation3 + $0x48] sm:$0xff]
          %v4070 = vld [vmem:[#allocation3 + $0x50] sm:$0xff]
          %v4071 = vld [vmem:[#allocation3 + $0x58] sm:$0xff]
          %v4072 = vld [vmem:[#allocation3 + $0x60] sm:$0xff]
          %v4073 = vld [vmem:[#allocation3 + $0x68] sm:$0xff]
          %v4074 = vld [vmem:[#allocation3 + $0x70] sm:$0xff]
          %v4075 = vld [vmem:[#allocation3 + $0x78] sm:$0xff]
          %v4076 = vld [vmem:[#allocation3 + $0x80] sm:$0xff]
          %v4077 = vld [vmem:[#allocation3 + $0x88] sm:$0xff]
          %v4078 = vld [vmem:[#allocation3 + $0x90] sm:$0xff]
          %v4079 = vld [vmem:[#allocation3 + $0x98] sm:$0xff]
          %v4080 = vld [vmem:[#allocation3 + $0xa0] sm:$0xff]
          %v4081 = vld [vmem:[#allocation3 + $0xa8] sm:$0xff]
          %v4082 = vld [vmem:[#allocation3 + $0xb0] sm:$0xff]
          %v4083 = vld [vmem:[#allocation3 + $0xb8] sm:$0xff]
          %v4084 = vld [vmem:[#allocation3 + $0xc0] sm:$0xff]
          %v4085 = vld [vmem:[#allocation3 + $0xc8] sm:$0xff]
          %v4086 = vld [vmem:[#allocation3 + $0xd0] sm:$0xff]
          %v4087 = vld [vmem:[#allocation3 + $0xd8] sm:$0xff]
          %v4088 = vld [vmem:[#allocation3 + $0xe0] sm:$0xff]
          %v4089 = vld [vmem:[#allocation3 + $0xe8] sm:$0xff]
          %v4090 = vld [vmem:[#allocation3 + $0xf0] sm:$0xff]
          %v4091 = vld [vmem:[#allocation3 + $0xf8] sm:$0xff]
          %v4092 = vunpack.c.l.bf16 %v4060
          %v4093 = vunpack.c.h.bf16 %v4060
          %v4094 = vunpack.c.l.bf16 %v4061
          %v4095 = vunpack.c.h.bf16 %v4061
          %v4096 = vunpack.c.l.bf16 %v4062
          %v4097 = vunpack.c.h.bf16 %v4062
          %v4098 = vunpack.c.l.bf16 %v4063
          %v4099 = vunpack.c.h.bf16 %v4063
          %v4100 = vunpack.c.l.bf16 %v4064
          %v4101 = vunpack.c.h.bf16 %v4064
          %v4102 = vunpack.c.l.bf16 %v4065
          %v4103 = vunpack.c.h.bf16 %v4065
          %v4104 = vunpack.c.l.bf16 %v4066
          %v4105 = vunpack.c.h.bf16 %v4066
          %v4106 = vunpack.c.l.bf16 %v4067
          %v4107 = vunpack.c.h.bf16 %v4067
          %v4108 = vunpack.c.l.bf16 %v4068
          %v4109 = vunpack.c.h.bf16 %v4068
          %v4110 = vunpack.c.l.bf16 %v4069
          %v4111 = vunpack.c.h.bf16 %v4069
          %v4112 = vunpack.c.l.bf16 %v4070
          %v4113 = vunpack.c.h.bf16 %v4070
          %v4114 = vunpack.c.l.bf16 %v4071
          %v4115 = vunpack.c.h.bf16 %v4071
          %v4116 = vunpack.c.l.bf16 %v4072
          %v4117 = vunpack.c.h.bf16 %v4072
          %v4118 = vunpack.c.l.bf16 %v4073
          %v4119 = vunpack.c.h.bf16 %v4073
          %v4120 = vunpack.c.l.bf16 %v4074
          %v4121 = vunpack.c.h.bf16 %v4074
          %v4122 = vunpack.c.l.bf16 %v4075
          %v4123 = vunpack.c.h.bf16 %v4075
          %v4124 = vunpack.c.l.bf16 %v4076
          %v4125 = vunpack.c.h.bf16 %v4076
          %v4126 = vunpack.c.l.bf16 %v4077
          %v4127 = vunpack.c.h.bf16 %v4077
          %v4128 = vunpack.c.l.bf16 %v4078
          %v4129 = vunpack.c.h.bf16 %v4078
          %v4130 = vunpack.c.l.bf16 %v4079
          %v4131 = vunpack.c.h.bf16 %v4079
          %v4132 = vunpack.c.l.bf16 %v4080
          %v4133 = vunpack.c.h.bf16 %v4080
          %v4134 = vunpack.c.l.bf16 %v4081
          %v4135 = vunpack.c.h.bf16 %v4081
          %v4136 = vunpack.c.l.bf16 %v4082
          %v4137 = vunpack.c.h.bf16 %v4082
          %v4138 = vunpack.c.l.bf16 %v4083
          %v4139 = vunpack.c.h.bf16 %v4083
          %v4140 = vunpack.c.l.bf16 %v4084
          %v4141 = vunpack.c.h.bf16 %v4084
          %v4142 = vunpack.c.l.bf16 %v4085
          %v4143 = vunpack.c.h.bf16 %v4085
          %v4144 = vunpack.c.l.bf16 %v4086
          %v4145 = vunpack.c.h.bf16 %v4086
          %v4146 = vunpack.c.l.bf16 %v4087
          %v4147 = vunpack.c.h.bf16 %v4087
          %v4148 = vunpack.c.l.bf16 %v4088
          %v4149 = vunpack.c.h.bf16 %v4088
          %v4150 = vunpack.c.l.bf16 %v4089
          %v4151 = vunpack.c.h.bf16 %v4089
          %v4152 = vunpack.c.l.bf16 %v4090
          %v4153 = vunpack.c.h.bf16 %v4090
          %v4154 = vunpack.c.l.bf16 %v4091
          %v4155 = vunpack.c.h.bf16 %v4091
          %v4156 = vsub.f32 %v3996, %v4092
          %v4157 = vsub.f32 %v3997, %v4093
          %v4158 = vsub.f32 %v3998, %v4094
          %v4159 = vsub.f32 %v3999, %v4095
          %v4160 = vsub.f32 %v4000, %v4096
          %v4161 = vsub.f32 %v4001, %v4097
          %v4162 = vsub.f32 %v4002, %v4098
          %v4163 = vsub.f32 %v4003, %v4099
          %v4164 = vsub.f32 %v4004, %v4100
          %v4165 = vsub.f32 %v4005, %v4101
          %v4166 = vsub.f32 %v4006, %v4102
          %v4167 = vsub.f32 %v4007, %v4103
          %v4168 = vsub.f32 %v4008, %v4104
          %v4169 = vsub.f32 %v4009, %v4105
          %v4170 = vsub.f32 %v4010, %v4106
          %v4171 = vsub.f32 %v4011, %v4107
          %v4172 = vsub.f32 %v4012, %v4108
          %v4173 = vsub.f32 %v4013, %v4109
          %v4174 = vsub.f32 %v4014, %v4110
          %v4175 = vsub.f32 %v4015, %v4111
          %v4176 = vsub.f32 %v4016, %v4112
          %v4177 = vsub.f32 %v4017, %v4113
          %v4178 = vsub.f32 %v4018, %v4114
          %v4179 = vsub.f32 %v4019, %v4115
          %v4180 = vsub.f32 %v4020, %v4116
          %v4181 = vsub.f32 %v4021, %v4117
          %v4182 = vsub.f32 %v4022, %v4118
          %v4183 = vsub.f32 %v4023, %v4119
          %v4184 = vsub.f32 %v4024, %v4120
          %v4185 = vsub.f32 %v4025, %v4121
          %v4186 = vsub.f32 %v4026, %v4122
          %v4187 = vsub.f32 %v4027, %v4123
          %v4188 = vsub.f32 %v4028, %v4124
          %v4189 = vsub.f32 %v4029, %v4125
          %v4190 = vsub.f32 %v4030, %v4126
          %v4191 = vsub.f32 %v4031, %v4127
          %v4192 = vsub.f32 %v4032, %v4128
          %v4193 = vsub.f32 %v4033, %v4129
          %v4194 = vsub.f32 %v4034, %v4130
          %v4195 = vsub.f32 %v4035, %v4131
          %v4196 = vsub.f32 %v4036, %v4132
          %v4197 = vsub.f32 %v4037, %v4133
          %v4198 = vsub.f32 %v4038, %v4134
          %v4199 = vsub.f32 %v4039, %v4135
          %v4200 = vsub.f32 %v4040, %v4136
          %v4201 = vsub.f32 %v4041, %v4137
          %v4202 = vsub.f32 %v4042, %v4138
          %v4203 = vsub.f32 %v4043, %v4139
          %v4204 = vsub.f32 %v4044, %v4140
          %v4205 = vsub.f32 %v4045, %v4141
          %v4206 = vsub.f32 %v4046, %v4142
          %v4207 = vsub.f32 %v4047, %v4143
          %v4208 = vsub.f32 %v4048, %v4144
          %v4209 = vsub.f32 %v4049, %v4145
          %v4210 = vsub.f32 %v4050, %v4146
          %v4211 = vsub.f32 %v4051, %v4147
          %v4212 = vsub.f32 %v4052, %v4148
          %v4213 = vsub.f32 %v4053, %v4149
          %v4214 = vsub.f32 %v4054, %v4150
          %v4215 = vsub.f32 %v4055, %v4151
          %v4216 = vsub.f32 %v4056, %v4152
          %v4217 = vsub.f32 %v4057, %v4153
          %v4218 = vsub.f32 %v4058, %v4154
          %v4219 = vsub.f32 %v4059, %v4155
          %v4220 = vld [vmem:[#allocation6] sm:$0xff]
          %v4221 = vld [vmem:[#allocation6 + $0x8] sm:$0xff]
          %v4222 = vld [vmem:[#allocation6 + $0x10] sm:$0xff]
          %v4223 = vld [vmem:[#allocation6 + $0x18] sm:$0xff]
          %v4224 = vld [vmem:[#allocation6 + $0x20] sm:$0xff]
          %v4225 = vld [vmem:[#allocation6 + $0x28] sm:$0xff]
          %v4226 = vld [vmem:[#allocation6 + $0x30] sm:$0xff]
          %v4227 = vld [vmem:[#allocation6 + $0x38] sm:$0xff]
          %v4228 = vld [vmem:[#allocation6 + $0x40] sm:$0xff]
          %v4229 = vld [vmem:[#allocation6 + $0x48] sm:$0xff]
          %v4230 = vld [vmem:[#allocation6 + $0x50] sm:$0xff]
          %v4231 = vld [vmem:[#allocation6 + $0x58] sm:$0xff]
          %v4232 = vld [vmem:[#allocation6 + $0x60] sm:$0xff]
          %v4233 = vld [vmem:[#allocation6 + $0x68] sm:$0xff]
          %v4234 = vld [vmem:[#allocation6 + $0x70] sm:$0xff]
          %v4235 = vld [vmem:[#allocation6 + $0x78] sm:$0xff]
          %v4236 = vld [vmem:[#allocation6 + $0x80] sm:$0xff]
          %v4237 = vld [vmem:[#allocation6 + $0x88] sm:$0xff]
          %v4238 = vld [vmem:[#allocation6 + $0x90] sm:$0xff]
          %v4239 = vld [vmem:[#allocation6 + $0x98] sm:$0xff]
          %v4240 = vld [vmem:[#allocation6 + $0xa0] sm:$0xff]
          %v4241 = vld [vmem:[#allocation6 + $0xa8] sm:$0xff]
          %v4242 = vld [vmem:[#allocation6 + $0xb0] sm:$0xff]
          %v4243 = vld [vmem:[#allocation6 + $0xb8] sm:$0xff]
          %v4244 = vld [vmem:[#allocation6 + $0xc0] sm:$0xff]
          %v4245 = vld [vmem:[#allocation6 + $0xc8] sm:$0xff]
          %v4246 = vld [vmem:[#allocation6 + $0xd0] sm:$0xff]
          %v4247 = vld [vmem:[#allocation6 + $0xd8] sm:$0xff]
          %v4248 = vld [vmem:[#allocation6 + $0xe0] sm:$0xff]
          %v4249 = vld [vmem:[#allocation6 + $0xe8] sm:$0xff]
          %v4250 = vld [vmem:[#allocation6 + $0xf0] sm:$0xff]
          %v4251 = vld [vmem:[#allocation6 + $0xf8] sm:$0xff]
          %v4252 = vld [vmem:[#allocation6 + $0x100] sm:$0xff]
          %v4253 = vld [vmem:[#allocation6 + $0x108] sm:$0xff]
          %v4254 = vld [vmem:[#allocation6 + $0x110] sm:$0xff]
          %v4255 = vld [vmem:[#allocation6 + $0x118] sm:$0xff]
          %v4256 = vld [vmem:[#allocation6 + $0x120] sm:$0xff]
          %v4257 = vld [vmem:[#allocation6 + $0x128] sm:$0xff]
          %v4258 = vld [vmem:[#allocation6 + $0x130] sm:$0xff]
          %v4259 = vld [vmem:[#allocation6 + $0x138] sm:$0xff]
          %v4260 = vld [vmem:[#allocation6 + $0x140] sm:$0xff]
          %v4261 = vld [vmem:[#allocation6 + $0x148] sm:$0xff]
          %v4262 = vld [vmem:[#allocation6 + $0x150] sm:$0xff]
          %v4263 = vld [vmem:[#allocation6 + $0x158] sm:$0xff]
          %v4264 = vld [vmem:[#allocation6 + $0x160] sm:$0xff]
          %v4265 = vld [vmem:[#allocation6 + $0x168] sm:$0xff]
          %v4266 = vld [vmem:[#allocation6 + $0x170] sm:$0xff]
          %v4267 = vld [vmem:[#allocation6 + $0x178] sm:$0xff]
          %v4268 = vld [vmem:[#allocation6 + $0x180] sm:$0xff]
          %v4269 = vld [vmem:[#allocation6 + $0x188] sm:$0xff]
          %v4270 = vld [vmem:[#allocation6 + $0x190] sm:$0xff]
          %v4271 = vld [vmem:[#allocation6 + $0x198] sm:$0xff]
          %v4272 = vld [vmem:[#allocation6 + $0x1a0] sm:$0xff]
          %v4273 = vld [vmem:[#allocation6 + $0x1a8] sm:$0xff]
          %v4274 = vld [vmem:[#allocation6 + $0x1b0] sm:$0xff]
          %v4275 = vld [vmem:[#allocation6 + $0x1b8] sm:$0xff]
          %v4276 = vld [vmem:[#allocation6 + $0x1c0] sm:$0xff]
          %v4277 = vld [vmem:[#allocation6 + $0x1c8] sm:$0xff]
          %v4278 = vld [vmem:[#allocation6 + $0x1d0] sm:$0xff]
          %v4279 = vld [vmem:[#allocation6 + $0x1d8] sm:$0xff]
          %v4280 = vld [vmem:[#allocation6 + $0x1e0] sm:$0xff]
          %v4281 = vld [vmem:[#allocation6 + $0x1e8] sm:$0xff]
          %v4282 = vld [vmem:[#allocation6 + $0x1f0] sm:$0xff]
          %v4283 = vld [vmem:[#allocation6 + $0x1f8] sm:$0xff]
          %v4284 = vpack.c.bf16 %v4157, %v4156
          %v4285 = vpack.c.bf16 %v4159, %v4158
          %v4286 = vpack.c.bf16 %v4161, %v4160
          %v4287 = vpack.c.bf16 %v4163, %v4162
          %v4288 = vpack.c.bf16 %v4165, %v4164
          %v4289 = vpack.c.bf16 %v4167, %v4166
          %v4290 = vpack.c.bf16 %v4169, %v4168
          %v4291 = vpack.c.bf16 %v4171, %v4170
          %v4292 = vpack.c.bf16 %v4173, %v4172
          %v4293 = vpack.c.bf16 %v4175, %v4174
          %v4294 = vpack.c.bf16 %v4177, %v4176
          %v4295 = vpack.c.bf16 %v4179, %v4178
          %v4296 = vpack.c.bf16 %v4181, %v4180
          %v4297 = vpack.c.bf16 %v4183, %v4182
          %v4298 = vpack.c.bf16 %v4185, %v4184
          %v4299 = vpack.c.bf16 %v4187, %v4186
          %v4300 = vpack.c.bf16 %v4189, %v4188
          %v4301 = vpack.c.bf16 %v4191, %v4190
          %v4302 = vpack.c.bf16 %v4193, %v4192
          %v4303 = vpack.c.bf16 %v4195, %v4194
          %v4304 = vpack.c.bf16 %v4197, %v4196
          %v4305 = vpack.c.bf16 %v4199, %v4198
          %v4306 = vpack.c.bf16 %v4201, %v4200
          %v4307 = vpack.c.bf16 %v4203, %v4202
          %v4308 = vpack.c.bf16 %v4205, %v4204
          %v4309 = vpack.c.bf16 %v4207, %v4206
          %v4310 = vpack.c.bf16 %v4209, %v4208
          %v4311 = vpack.c.bf16 %v4211, %v4210
          %v4312 = vpack.c.bf16 %v4213, %v4212
          %v4313 = vpack.c.bf16 %v4215, %v4214
          %v4314 = vpack.c.bf16 %v4217, %v4216
          %v4315 = vpack.c.bf16 %v4219, %v4218
          %s4316 = smul.u32 %s3928, 16
          %s4317 = smul.addr %s4316, 4
          %s4318 = scalar_lea.vmem %s4, %s4317
          %v4319 = vld [vmem:[%s4318] sm:$0xf]
          %v4320 = vld [vmem:[%s4318 + $0x4] sm:$0xf]
          %v4321 = vld [vmem:[%s4318 + $0x8] sm:$0xf]
          %v4322 = vld [vmem:[%s4318 + $0xc] sm:$0xf]
          %v4323 = vld [vmem:[%s4318 + $0x10] sm:$0xf]
          %v4324 = vld [vmem:[%s4318 + $0x14] sm:$0xf]
          %v4325 = vld [vmem:[%s4318 + $0x18] sm:$0xf]
          %v4326 = vld [vmem:[%s4318 + $0x1c] sm:$0xf]
          %v4327 = vld [vmem:[%s4318 + $0x20] sm:$0xf]
          %v4328 = vld [vmem:[%s4318 + $0x24] sm:$0xf]
          %v4329 = vld [vmem:[%s4318 + $0x28] sm:$0xf]
          %v4330 = vld [vmem:[%s4318 + $0x2c] sm:$0xf]
          %v4331 = vld [vmem:[%s4318 + $0x30] sm:$0xf]
          %v4332 = vld [vmem:[%s4318 + $0x34] sm:$0xf]
          %v4333 = vld [vmem:[%s4318 + $0x38] sm:$0xf]
          %v4334 = vld [vmem:[%s4318 + $0x3c] sm:$0xf]
          %v4351 = vunpack.c.l.b16 %v4319
          %v4352 = vunpack.c.l.b16 %v4320
          %v4353 = vunpack.c.l.b16 %v4321
          %v4354 = vunpack.c.l.b16 %v4322
          %v4355 = vunpack.c.l.b16 %v4323
          %v4356 = vunpack.c.l.b16 %v4324
          %v4357 = vunpack.c.l.b16 %v4325
          %v4358 = vunpack.c.l.b16 %v4326
          %v4359 = vunpack.c.l.b16 %v4327
          %v4360 = vunpack.c.l.b16 %v4328
          %v4361 = vunpack.c.l.b16 %v4329
          %v4362 = vunpack.c.l.b16 %v4330
          %v4363 = vunpack.c.l.b16 %v4331
          %v4364 = vunpack.c.l.b16 %v4332
          %v4365 = vunpack.c.l.b16 %v4333
          %v4366 = vunpack.c.l.b16 %v4334
          %v4367 = vpack.c.b16 %v4352, %v4351
          %v4368 = vpack.c.b16 %v4354, %v4353
          %v4369 = vpack.c.b16 %v4356, %v4355
          %v4370 = vpack.c.b16 %v4358, %v4357
          %v4371 = vpack.c.b16 %v4360, %v4359
          %v4372 = vpack.c.b16 %v4362, %v4361
          %v4373 = vpack.c.b16 %v4364, %v4363
          %v4374 = vpack.c.b16 %v4366, %v4365
          %4383 = vmatprep.subr.bf16.mxu0 0
          %4384 = vmatpush1.bf16.msra.mxu0 %v4367
          %4385 = vmatprep.subr.bf16.mxu0 0
          %4386 = vmatpush1.bf16.msra.mxu0 %v4368
          %4387 = vmatprep.subr.bf16.mxu0 0
          %4388 = vmatpush1.bf16.msra.mxu0 %v4369
          %4389 = vmatprep.subr.bf16.mxu0 0
          %4390 = vmatpush1.bf16.msra.mxu0 %v4370
          %4391 = vmatprep.subr.bf16.mxu0 0
          %4392 = vmatpush1.bf16.msra.mxu0 %v4371
          %4393 = vmatprep.subr.bf16.mxu0 0
          %4394 = vmatpush1.bf16.msra.mxu0 %v4372
          %4395 = vmatprep.subr.bf16.mxu0 0
          %4396 = vmatpush1.bf16.msra.mxu0 %v4373
          %4397 = vmatprep.subr.bf16.mxu0 0
          %4398 = vmatpush1.bf16.msra.mxu0 %v4374
          %4399 = vmatprep.subr.bf16.mxu0 0
          %4400 = vmatpush1.bf16.msra.mxu0 0
          %4401 = vmatprep.subr.bf16.mxu0 0
          %4402 = vmatpush1.bf16.msra.mxu0 0
          %4403 = vmatprep.subr.bf16.mxu0 0
          %4404 = vmatpush1.bf16.msra.mxu0 0
          %4405 = vmatprep.subr.bf16.mxu0 0
          %4406 = vmatpush1.bf16.msra.mxu0 0
          %4407 = vmatprep.subr.bf16.mxu0 0
          %4408 = vmatpush1.bf16.msra.mxu0 0
          %4409 = vmatprep.subr.bf16.mxu0 0
          %4410 = vmatpush1.bf16.msra.mxu0 0
          %4411 = vmatprep.subr.bf16.mxu0 0
          %4412 = vmatpush1.bf16.msra.mxu0 0
          %4413 = vmatprep.subr.bf16.mxu0 0
          %4414 = vmatpush1.bf16.msra.mxu0 0
          %4415 = vmatprep.mubr.bf16.mxu0 0
          %4416 = vmatmul.mubr.bf16.gmra.mrb[0].mxu0 %v4284
          %v4417 = vpop.f32.mrb[0].mxu0
          %v4418 = vadd.f32 0.0, %v4417
          %v4419 = vpop.f32.mrb[0].mxu0
          %v4420 = vpop.f32.mrb[0].mxu0
          %v4421 = vadd.f32 0.0, %v4420
          %v4422 = vpop.f32.mrb[0].mxu0
          %4423 = vmatprep.mubr.bf16.mxu0 0
          %4424 = vmatmul.mubr.bf16.gmra.mrb[0].mxu0 %v4285
          %v4425 = vpop.f32.mrb[0].mxu0
          %v4426 = vadd.f32 0.0, %v4425
          %v4427 = vpop.f32.mrb[0].mxu0
          %v4428 = vpop.f32.mrb[0].mxu0
          %v4429 = vadd.f32 0.0, %v4428
          %v4430 = vpop.f32.mrb[0].mxu0
          %4431 = vmatprep.mubr.bf16.mxu0 0
          %4432 = vmatmul.mubr.bf16.gmra.mrb[0].mxu0 %v4286
          %v4433 = vpop.f32.mrb[0].mxu0
          %v4434 = vadd.f32 0.0, %v4433
          %v4435 = vpop.f32.mrb[0].mxu0
          %v4436 = vpop.f32.mrb[0].mxu0
          %v4437 = vadd.f32 0.0, %v4436
          %v4438 = vpop.f32.mrb[0].mxu0
          %4439 = vmatprep.mubr.bf16.mxu0 0
          %4440 = vmatmul.mubr.bf16.gmra.mrb[0].mxu0 %v4287
          %v4441 = vpop.f32.mrb[0].mxu0
          %v4442 = vadd.f32 0.0, %v4441
          %v4443 = vpop.f32.mrb[0].mxu0
          %v4444 = vpop.f32.mrb[0].mxu0
          %v4445 = vadd.f32 0.0, %v4444
          %v4446 = vpop.f32.mrb[0].mxu0
          %4447 = vmatprep.mubr.bf16.mxu0 0
          %4448 = vmatmul.mubr.bf16.gmra.mrb[0].mxu0 %v4288
          %v4449 = vpop.f32.mrb[0].mxu0
          %v4450 = vadd.f32 0.0, %v4449
          %v4451 = vpop.f32.mrb[0].mxu0
          %v4452 = vpop.f32.mrb[0].mxu0
          %v4453 = vadd.f32 0.0, %v4452
          %v4454 = vpop.f32.mrb[0].mxu0
          %4455 = vmatprep.mubr.bf16.mxu0 0
          %4456 = vmatmul.mubr.bf16.gmra.mrb[0].mxu0 %v4289
          %v4457 = vpop.f32.mrb[0].mxu0
          %v4458 = vadd.f32 0.0, %v4457
          %v4459 = vpop.f32.mrb[0].mxu0
          %v4460 = vpop.f32.mrb[0].mxu0
          %v4461 = vadd.f32 0.0, %v4460
          %v4462 = vpop.f32.mrb[0].mxu0
          %4463 = vmatprep.mubr.bf16.mxu0 0
          %4464 = vmatmul.mubr.bf16.gmra.mrb[0].mxu0 %v4290
          %v4465 = vpop.f32.mrb[0].mxu0
          %v4466 = vadd.f32 0.0, %v4465
          %v4467 = vpop.f32.mrb[0].mxu0
          %v4468 = vpop.f32.mrb[0].mxu0
          %v4469 = vadd.f32 0.0, %v4468
          %v4470 = vpop.f32.mrb[0].mxu0
          %4471 = vmatprep.mubr.bf16.mxu0 0
          %4472 = vmatmul.mubr.bf16.gmra.mrb[0].mxu0 %v4291
          %v4473 = vpop.f32.mrb[0].mxu0
          %v4474 = vadd.f32 0.0, %v4473
          %v4475 = vpop.f32.mrb[0].mxu0
          %v4476 = vpop.f32.mrb[0].mxu0
          %v4477 = vadd.f32 0.0, %v4476
          %v4478 = vpop.f32.mrb[0].mxu0
          %4479 = vmatprep.mubr.bf16.mxu0 0
          %4480 = vmatmul.mubr.bf16.gmra.mrb[0].mxu0 %v4292
          %v4481 = vpop.f32.mrb[0].mxu0
          %v4482 = vadd.f32 0.0, %v4481
          %v4483 = vpop.f32.mrb[0].mxu0
          %v4484 = vpop.f32.mrb[0].mxu0
          %v4485 = vadd.f32 0.0, %v4484
          %v4486 = vpop.f32.mrb[0].mxu0
          %4487 = vmatprep.mubr.bf16.mxu0 0
          %4488 = vmatmul.mubr.bf16.gmra.mrb[0].mxu0 %v4293
          %v4489 = vpop.f32.mrb[0].mxu0
          %v4490 = vadd.f32 0.0, %v4489
          %v4491 = vpop.f32.mrb[0].mxu0
          %v4492 = vpop.f32.mrb[0].mxu0
          %v4493 = vadd.f32 0.0, %v4492
          %v4494 = vpop.f32.mrb[0].mxu0
          %4495 = vmatprep.mubr.bf16.mxu0 0
          %4496 = vmatmul.mubr.bf16.gmra.mrb[0].mxu0 %v4294
          %v4497 = vpop.f32.mrb[0].mxu0
          %v4498 = vadd.f32 0.0, %v4497
          %v4499 = vpop.f32.mrb[0].mxu0
          %v4500 = vpop.f32.mrb[0].mxu0
          %v4501 = vadd.f32 0.0, %v4500
          %v4502 = vpop.f32.mrb[0].mxu0
          %4503 = vmatprep.mubr.bf16.mxu0 0
          %4504 = vmatmul.mubr.bf16.gmra.mrb[0].mxu0 %v4295
          %v4505 = vpop.f32.mrb[0].mxu0
          %v4506 = vadd.f32 0.0, %v4505
          %v4507 = vpop.f32.mrb[0].mxu0
          %v4508 = vpop.f32.mrb[0].mxu0
          %v4509 = vadd.f32 0.0, %v4508
          %v4510 = vpop.f32.mrb[0].mxu0
          %4511 = vmatprep.mubr.bf16.mxu0 0
          %4512 = vmatmul.mubr.bf16.gmra.mrb[0].mxu0 %v4296
          %v4513 = vpop.f32.mrb[0].mxu0
          %v4514 = vadd.f32 0.0, %v4513
          %v4515 = vpop.f32.mrb[0].mxu0
          %v4516 = vpop.f32.mrb[0].mxu0
          %v4517 = vadd.f32 0.0, %v4516
          %v4518 = vpop.f32.mrb[0].mxu0
          %4519 = vmatprep.mubr.bf16.mxu0 0
          %4520 = vmatmul.mubr.bf16.gmra.mrb[0].mxu0 %v4297
          %v4521 = vpop.f32.mrb[0].mxu0
          %v4522 = vadd.f32 0.0, %v4521
          %v4523 = vpop.f32.mrb[0].mxu0
          %v4524 = vpop.f32.mrb[0].mxu0
          %v4525 = vadd.f32 0.0, %v4524
          %v4526 = vpop.f32.mrb[0].mxu0
          %4527 = vmatprep.mubr.bf16.mxu0 0
          %4528 = vmatmul.mubr.bf16.gmra.mrb[0].mxu0 %v4298
          %v4529 = vpop.f32.mrb[0].mxu0
          %v4530 = vadd.f32 0.0, %v4529
          %v4531 = vpop.f32.mrb[0].mxu0
          %v4532 = vpop.f32.mrb[0].mxu0
          %v4533 = vadd.f32 0.0, %v4532
          %v4534 = vpop.f32.mrb[0].mxu0
          %4535 = vmatprep.mubr.bf16.mxu0 0
          %4536 = vmatmul.mubr.bf16.gmra.mrb[0].mxu0 %v4299
          %v4537 = vpop.f32.mrb[0].mxu0
          %v4538 = vadd.f32 0.0, %v4537
          %v4539 = vpop.f32.mrb[0].mxu0
          %v4540 = vpop.f32.mrb[0].mxu0
          %v4541 = vadd.f32 0.0, %v4540
          %v4542 = vpop.f32.mrb[0].mxu0
          %4543 = vmatprep.mubr.bf16.mxu0 0
          %4544 = vmatmul.mubr.bf16.gmra.mrb[0].mxu0 %v4300
          %v4545 = vpop.f32.mrb[0].mxu0
          %v4546 = vadd.f32 0.0, %v4545
          %v4547 = vpop.f32.mrb[0].mxu0
          %v4548 = vpop.f32.mrb[0].mxu0
          %v4549 = vadd.f32 0.0, %v4548
          %v4550 = vpop.f32.mrb[0].mxu0
          %4551 = vmatprep.mubr.bf16.mxu0 0
          %4552 = vmatmul.mubr.bf16.gmra.mrb[0].mxu0 %v4301
          %v4553 = vpop.f32.mrb[0].mxu0
          %v4554 = vadd.f32 0.0, %v4553
          %v4555 = vpop.f32.mrb[0].mxu0
          %v4556 = vpop.f32.mrb[0].mxu0
          %v4557 = vadd.f32 0.0, %v4556
          %v4558 = vpop.f32.mrb[0].mxu0
          %4559 = vmatprep.mubr.bf16.mxu0 0
          %4560 = vmatmul.mubr.bf16.gmra.mrb[0].mxu0 %v4302
          %v4561 = vpop.f32.mrb[0].mxu0
          %v4562 = vadd.f32 0.0, %v4561
          %v4563 = vpop.f32.mrb[0].mxu0
          %v4564 = vpop.f32.mrb[0].mxu0
          %v4565 = vadd.f32 0.0, %v4564
          %v4566 = vpop.f32.mrb[0].mxu0
          %4567 = vmatprep.mubr.bf16.mxu0 0
          %4568 = vmatmul.mubr.bf16.gmra.mrb[0].mxu0 %v4303
          %v4569 = vpop.f32.mrb[0].mxu0
          %v4570 = vadd.f32 0.0, %v4569
          %v4571 = vpop.f32.mrb[0].mxu0
          %v4572 = vpop.f32.mrb[0].mxu0
          %v4573 = vadd.f32 0.0, %v4572
          %v4574 = vpop.f32.mrb[0].mxu0
          %4575 = vmatprep.mubr.bf16.mxu0 0
          %4576 = vmatmul.mubr.bf16.gmra.mrb[0].mxu0 %v4304
          %v4577 = vpop.f32.mrb[0].mxu0
          %v4578 = vadd.f32 0.0, %v4577
          %v4579 = vpop.f32.mrb[0].mxu0
          %v4580 = vpop.f32.mrb[0].mxu0
          %v4581 = vadd.f32 0.0, %v4580
          %v4582 = vpop.f32.mrb[0].mxu0
          %4583 = vmatprep.mubr.bf16.mxu0 0
          %4584 = vmatmul.mubr.bf16.gmra.mrb[0].mxu0 %v4305
          %v4585 = vpop.f32.mrb[0].mxu0
          %v4586 = vadd.f32 0.0, %v4585
          %v4587 = vpop.f32.mrb[0].mxu0
          %v4588 = vpop.f32.mrb[0].mxu0
          %v4589 = vadd.f32 0.0, %v4588
          %v4590 = vpop.f32.mrb[0].mxu0
          %4591 = vmatprep.mubr.bf16.mxu0 0
          %4592 = vmatmul.mubr.bf16.gmra.mrb[0].mxu0 %v4306
          %v4593 = vpop.f32.mrb[0].mxu0
          %v4594 = vadd.f32 0.0, %v4593
          %v4595 = vpop.f32.mrb[0].mxu0
          %v4596 = vpop.f32.mrb[0].mxu0
          %v4597 = vadd.f32 0.0, %v4596
          %v4598 = vpop.f32.mrb[0].mxu0
          %4599 = vmatprep.mubr.bf16.mxu0 0
          %4600 = vmatmul.mubr.bf16.gmra.mrb[0].mxu0 %v4307
          %v4601 = vpop.f32.mrb[0].mxu0
          %v4602 = vadd.f32 0.0, %v4601
          %v4603 = vpop.f32.mrb[0].mxu0
          %v4604 = vpop.f32.mrb[0].mxu0
          %v4605 = vadd.f32 0.0, %v4604
          %v4606 = vpop.f32.mrb[0].mxu0
          %4607 = vmatprep.mubr.bf16.mxu0 0
          %4608 = vmatmul.mubr.bf16.gmra.mrb[0].mxu0 %v4308
          %v4609 = vpop.f32.mrb[0].mxu0
          %v4610 = vadd.f32 0.0, %v4609
          %v4611 = vpop.f32.mrb[0].mxu0
          %v4612 = vpop.f32.mrb[0].mxu0
          %v4613 = vadd.f32 0.0, %v4612
          %v4614 = vpop.f32.mrb[0].mxu0
          %4615 = vmatprep.mubr.bf16.mxu0 0
          %4616 = vmatmul.mubr.bf16.gmra.mrb[0].mxu0 %v4309
          %v4617 = vpop.f32.mrb[0].mxu0
          %v4618 = vadd.f32 0.0, %v4617
          %v4619 = vpop.f32.mrb[0].mxu0
          %v4620 = vpop.f32.mrb[0].mxu0
          %v4621 = vadd.f32 0.0, %v4620
          %v4622 = vpop.f32.mrb[0].mxu0
          %4623 = vmatprep.mubr.bf16.mxu0 0
          %4624 = vmatmul.mubr.bf16.gmra.mrb[0].mxu0 %v4310
          %v4625 = vpop.f32.mrb[0].mxu0
          %v4626 = vadd.f32 0.0, %v4625
          %v4627 = vpop.f32.mrb[0].mxu0
          %v4628 = vpop.f32.mrb[0].mxu0
          %v4629 = vadd.f32 0.0, %v4628
          %v4630 = vpop.f32.mrb[0].mxu0
          %4631 = vmatprep.mubr.bf16.mxu0 0
          %4632 = vmatmul.mubr.bf16.gmra.mrb[0].mxu0 %v4311
          %v4633 = vpop.f32.mrb[0].mxu0
          %v4634 = vadd.f32 0.0, %v4633
          %v4635 = vpop.f32.mrb[0].mxu0
          %v4636 = vpop.f32.mrb[0].mxu0
          %v4637 = vadd.f32 0.0, %v4636
          %v4638 = vpop.f32.mrb[0].mxu0
          %4639 = vmatprep.mubr.bf16.mxu0 0
          %4640 = vmatmul.mubr.bf16.gmra.mrb[0].mxu0 %v4312
          %v4641 = vpop.f32.mrb[0].mxu0
          %v4642 = vadd.f32 0.0, %v4641
          %v4643 = vpop.f32.mrb[0].mxu0
          %v4644 = vpop.f32.mrb[0].mxu0
          %v4645 = vadd.f32 0.0, %v4644
          %v4646 = vpop.f32.mrb[0].mxu0
          %4647 = vmatprep.mubr.bf16.mxu0 0
          %4648 = vmatmul.mubr.bf16.gmra.mrb[0].mxu0 %v4313
          %v4649 = vpop.f32.mrb[0].mxu0
          %v4650 = vadd.f32 0.0, %v4649
          %v4651 = vpop.f32.mrb[0].mxu0
          %v4652 = vpop.f32.mrb[0].mxu0
          %v4653 = vadd.f32 0.0, %v4652
          %v4654 = vpop.f32.mrb[0].mxu0
          %4655 = vmatprep.mubr.bf16.mxu0 0
          %4656 = vmatmul.mubr.bf16.gmra.mrb[0].mxu0 %v4314
          %v4657 = vpop.f32.mrb[0].mxu0
          %v4658 = vadd.f32 0.0, %v4657
          %v4659 = vpop.f32.mrb[0].mxu0
          %v4660 = vpop.f32.mrb[0].mxu0
          %v4661 = vadd.f32 0.0, %v4660
          %v4662 = vpop.f32.mrb[0].mxu0
          %4663 = vmatprep.mubr.bf16.mxu0 0
          %4664 = vmatmul.mubr.bf16.gmra.mrb[0].mxu0 %v4315
          %v4665 = vpop.f32.mrb[0].mxu0
          %v4666 = vadd.f32 0.0, %v4665
          %v4667 = vpop.f32.mrb[0].mxu0
          %v4668 = vpop.f32.mrb[0].mxu0
          %v4669 = vadd.f32 0.0, %v4668
          %v4670 = vpop.f32.mrb[0].mxu0
          %4671 = vdwg.mxu0
          %v4672 = vadd.f32 %v4220, %v4418
          %v4673 = vadd.f32 %v4221, %v4421
          %v4674 = vadd.f32 %v4222, %v4426
          %v4675 = vadd.f32 %v4223, %v4429
          %v4676 = vadd.f32 %v4224, %v4434
          %v4677 = vadd.f32 %v4225, %v4437
          %v4678 = vadd.f32 %v4226, %v4442
          %v4679 = vadd.f32 %v4227, %v4445
          %v4680 = vadd.f32 %v4228, %v4450
          %v4681 = vadd.f32 %v4229, %v4453
          %v4682 = vadd.f32 %v4230, %v4458
          %v4683 = vadd.f32 %v4231, %v4461
          %v4684 = vadd.f32 %v4232, %v4466
          %v4685 = vadd.f32 %v4233, %v4469
          %v4686 = vadd.f32 %v4234, %v4474
          %v4687 = vadd.f32 %v4235, %v4477
          %v4688 = vadd.f32 %v4236, %v4482
          %v4689 = vadd.f32 %v4237, %v4485
          %v4690 = vadd.f32 %v4238, %v4490
          %v4691 = vadd.f32 %v4239, %v4493
          %v4692 = vadd.f32 %v4240, %v4498
          %v4693 = vadd.f32 %v4241, %v4501
          %v4694 = vadd.f32 %v4242, %v4506
          %v4695 = vadd.f32 %v4243, %v4509
          %v4696 = vadd.f32 %v4244, %v4514
          %v4697 = vadd.f32 %v4245, %v4517
          %v4698 = vadd.f32 %v4246, %v4522
          %v4699 = vadd.f32 %v4247, %v4525
          %v4700 = vadd.f32 %v4248, %v4530
          %v4701 = vadd.f32 %v4249, %v4533
          %v4702 = vadd.f32 %v4250, %v4538
          %v4703 = vadd.f32 %v4251, %v4541
          %v4704 = vadd.f32 %v4252, %v4546
          %v4705 = vadd.f32 %v4253, %v4549
          %v4706 = vadd.f32 %v4254, %v4554
          %v4707 = vadd.f32 %v4255, %v4557
          %v4708 = vadd.f32 %v4256, %v4562
          %v4709 = vadd.f32 %v4257, %v4565
          %v4710 = vadd.f32 %v4258, %v4570
          %v4711 = vadd.f32 %v4259, %v4573
          %v4712 = vadd.f32 %v4260, %v4578
          %v4713 = vadd.f32 %v4261, %v4581
          %v4714 = vadd.f32 %v4262, %v4586
          %v4715 = vadd.f32 %v4263, %v4589
          %v4716 = vadd.f32 %v4264, %v4594
          %v4717 = vadd.f32 %v4265, %v4597
          %v4718 = vadd.f32 %v4266, %v4602
          %v4719 = vadd.f32 %v4267, %v4605
          %v4720 = vadd.f32 %v4268, %v4610
          %v4721 = vadd.f32 %v4269, %v4613
          %v4722 = vadd.f32 %v4270, %v4618
          %v4723 = vadd.f32 %v4271, %v4621
          %v4724 = vadd.f32 %v4272, %v4626
          %v4725 = vadd.f32 %v4273, %v4629
          %v4726 = vadd.f32 %v4274, %v4634
          %v4727 = vadd.f32 %v4275, %v4637
          %v4728 = vadd.f32 %v4276, %v4642
          %v4729 = vadd.f32 %v4277, %v4645
          %v4730 = vadd.f32 %v4278, %v4650
          %v4731 = vadd.f32 %v4279, %v4653
          %v4732 = vadd.f32 %v4280, %v4658
          %v4733 = vadd.f32 %v4281, %v4661
          %v4734 = vadd.f32 %v4282, %v4666
          %v4735 = vadd.f32 %v4283, %v4669
          %4736 = vst [vmem:[#allocation6] sm:$0xff] %v4672
          %4737 = vst [vmem:[#allocation6 + $0x8] sm:$0xff] %v4673
          %4738 = vst [vmem:[#allocation6 + $0x10] sm:$0xff] %v4674
          %4739 = vst [vmem:[#allocation6 + $0x18] sm:$0xff] %v4675
          %4740 = vst [vmem:[#allocation6 + $0x20] sm:$0xff] %v4676
          %4741 = vst [vmem:[#allocation6 + $0x28] sm:$0xff] %v4677
          %4742 = vst [vmem:[#allocation6 + $0x30] sm:$0xff] %v4678
          %4743 = vst [vmem:[#allocation6 + $0x38] sm:$0xff] %v4679
          %4744 = vst [vmem:[#allocation6 + $0x40] sm:$0xff] %v4680
          %4745 = vst [vmem:[#allocation6 + $0x48] sm:$0xff] %v4681
          %4746 = vst [vmem:[#allocation6 + $0x50] sm:$0xff] %v4682
          %4747 = vst [vmem:[#allocation6 + $0x58] sm:$0xff] %v4683
          %4748 = vst [vmem:[#allocation6 + $0x60] sm:$0xff] %v4684
          %4749 = vst [vmem:[#allocation6 + $0x68] sm:$0xff] %v4685
          %4750 = vst [vmem:[#allocation6 + $0x70] sm:$0xff] %v4686
          %4751 = vst [vmem:[#allocation6 + $0x78] sm:$0xff] %v4687
          %4752 = vst [vmem:[#allocation6 + $0x80] sm:$0xff] %v4688
          %4753 = vst [vmem:[#allocation6 + $0x88] sm:$0xff] %v4689
          %4754 = vst [vmem:[#allocation6 + $0x90] sm:$0xff] %v4690
          %4755 = vst [vmem:[#allocation6 + $0x98] sm:$0xff] %v4691
          %4756 = vst [vmem:[#allocation6 + $0xa0] sm:$0xff] %v4692
          %4757 = vst [vmem:[#allocation6 + $0xa8] sm:$0xff] %v4693
          %4758 = vst [vmem:[#allocation6 + $0xb0] sm:$0xff] %v4694
          %4759 = vst [vmem:[#allocation6 + $0xb8] sm:$0xff] %v4695
          %4760 = vst [vmem:[#allocation6 + $0xc0] sm:$0xff] %v4696
          %4761 = vst [vmem:[#allocation6 + $0xc8] sm:$0xff] %v4697
          %4762 = vst [vmem:[#allocation6 + $0xd0] sm:$0xff] %v4698
          %4763 = vst [vmem:[#allocation6 + $0xd8] sm:$0xff] %v4699
          %4764 = vst [vmem:[#allocation6 + $0xe0] sm:$0xff] %v4700
          %4765 = vst [vmem:[#allocation6 + $0xe8] sm:$0xff] %v4701
          %4766 = vst [vmem:[#allocation6 + $0xf0] sm:$0xff] %v4702
          %4767 = vst [vmem:[#allocation6 + $0xf8] sm:$0xff] %v4703
          %4768 = vst [vmem:[#allocation6 + $0x100] sm:$0xff] %v4704
          %4769 = vst [vmem:[#allocation6 + $0x108] sm:$0xff] %v4705
          %4770 = vst [vmem:[#allocation6 + $0x110] sm:$0xff] %v4706
          %4771 = vst [vmem:[#allocation6 + $0x118] sm:$0xff] %v4707
          %4772 = vst [vmem:[#allocation6 + $0x120] sm:$0xff] %v4708
          %4773 = vst [vmem:[#allocation6 + $0x128] sm:$0xff] %v4709
          %4774 = vst [vmem:[#allocation6 + $0x130] sm:$0xff] %v4710
          %4775 = vst [vmem:[#allocation6 + $0x138] sm:$0xff] %v4711
          %4776 = vst [vmem:[#allocation6 + $0x140] sm:$0xff] %v4712
          %4777 = vst [vmem:[#allocation6 + $0x148] sm:$0xff] %v4713
          %4778 = vst [vmem:[#allocation6 + $0x150] sm:$0xff] %v4714
          %4779 = vst [vmem:[#allocation6 + $0x158] sm:$0xff] %v4715
          %4780 = vst [vmem:[#allocation6 + $0x160] sm:$0xff] %v4716
          %4781 = vst [vmem:[#allocation6 + $0x168] sm:$0xff] %v4717
          %4782 = vst [vmem:[#allocation6 + $0x170] sm:$0xff] %v4718
          %4783 = vst [vmem:[#allocation6 + $0x178] sm:$0xff] %v4719
          %4784 = vst [vmem:[#allocation6 + $0x180] sm:$0xff] %v4720
          %4785 = vst [vmem:[#allocation6 + $0x188] sm:$0xff] %v4721
          %4786 = vst [vmem:[#allocation6 + $0x190] sm:$0xff] %v4722
          %4787 = vst [vmem:[#allocation6 + $0x198] sm:$0xff] %v4723
          %4788 = vst [vmem:[#allocation6 + $0x1a0] sm:$0xff] %v4724
          %4789 = vst [vmem:[#allocation6 + $0x1a8] sm:$0xff] %v4725
          %4790 = vst [vmem:[#allocation6 + $0x1b0] sm:$0xff] %v4726
          %4791 = vst [vmem:[#allocation6 + $0x1b8] sm:$0xff] %v4727
          %4792 = vst [vmem:[#allocation6 + $0x1c0] sm:$0xff] %v4728
          %4793 = vst [vmem:[#allocation6 + $0x1c8] sm:$0xff] %v4729
          %4794 = vst [vmem:[#allocation6 + $0x1d0] sm:$0xff] %v4730
          %4795 = vst [vmem:[#allocation6 + $0x1d8] sm:$0xff] %v4731
          %4796 = vst [vmem:[#allocation6 + $0x1e0] sm:$0xff] %v4732
          %4797 = vst [vmem:[#allocation6 + $0x1e8] sm:$0xff] %v4733
          %4798 = vst [vmem:[#allocation6 + $0x1f0] sm:$0xff] %v4734
          %4799 = vst [vmem:[#allocation6 + $0x1f8] sm:$0xff] %v4735
          %v4800 = vld [vmem:[#allocation2] sm:$0xff]
          %v4801 = vld [vmem:[#allocation2 + $0x8] sm:$0xff]
          %v4802 = vld [vmem:[#allocation2 + $0x10] sm:$0xff]
          %v4803 = vld [vmem:[#allocation2 + $0x18] sm:$0xff]
          %v4804 = vld [vmem:[#allocation2 + $0x20] sm:$0xff]
          %v4805 = vld [vmem:[#allocation2 + $0x28] sm:$0xff]
          %v4806 = vld [vmem:[#allocation2 + $0x30] sm:$0xff]
          %v4807 = vld [vmem:[#allocation2 + $0x38] sm:$0xff]
          %v4808 = vld [vmem:[#allocation2 + $0x40] sm:$0xff]
          %v4809 = vld [vmem:[#allocation2 + $0x48] sm:$0xff]
          %v4810 = vld [vmem:[#allocation2 + $0x50] sm:$0xff]
          %v4811 = vld [vmem:[#allocation2 + $0x58] sm:$0xff]
          %v4812 = vld [vmem:[#allocation2 + $0x60] sm:$0xff]
          %v4813 = vld [vmem:[#allocation2 + $0x68] sm:$0xff]
          %v4814 = vld [vmem:[#allocation2 + $0x70] sm:$0xff]
          %v4815 = vld [vmem:[#allocation2 + $0x78] sm:$0xff]
          %v4816 = vld [vmem:[#allocation2 + $0x80] sm:$0xff]
          %v4817 = vld [vmem:[#allocation2 + $0x88] sm:$0xff]
          %v4818 = vld [vmem:[#allocation2 + $0x90] sm:$0xff]
          %v4819 = vld [vmem:[#allocation2 + $0x98] sm:$0xff]
          %v4820 = vld [vmem:[#allocation2 + $0xa0] sm:$0xff]
          %v4821 = vld [vmem:[#allocation2 + $0xa8] sm:$0xff]
          %v4822 = vld [vmem:[#allocation2 + $0xb0] sm:$0xff]
          %v4823 = vld [vmem:[#allocation2 + $0xb8] sm:$0xff]
          %v4824 = vld [vmem:[#allocation2 + $0xc0] sm:$0xff]
          %v4825 = vld [vmem:[#allocation2 + $0xc8] sm:$0xff]
          %v4826 = vld [vmem:[#allocation2 + $0xd0] sm:$0xff]
          %v4827 = vld [vmem:[#allocation2 + $0xd8] sm:$0xff]
          %v4828 = vld [vmem:[#allocation2 + $0xe0] sm:$0xff]
          %v4829 = vld [vmem:[#allocation2 + $0xe8] sm:$0xff]
          %v4830 = vld [vmem:[#allocation2 + $0xf0] sm:$0xff]
          %v4831 = vld [vmem:[#allocation2 + $0xf8] sm:$0xff]
          %4832 = vst [vmem:[#allocation3] sm:$0xff] %v4800
          %4833 = vst [vmem:[#allocation3 + $0x8] sm:$0xff] %v4801
          %4834 = vst [vmem:[#allocation3 + $0x10] sm:$0xff] %v4802
          %4835 = vst [vmem:[#allocation3 + $0x18] sm:$0xff] %v4803
          %4836 = vst [vmem:[#allocation3 + $0x20] sm:$0xff] %v4804
          %4837 = vst [vmem:[#allocation3 + $0x28] sm:$0xff] %v4805
          %4838 = vst [vmem:[#allocation3 + $0x30] sm:$0xff] %v4806
          %4839 = vst [vmem:[#allocation3 + $0x38] sm:$0xff] %v4807
          %4840 = vst [vmem:[#allocation3 + $0x40] sm:$0xff] %v4808
          %4841 = vst [vmem:[#allocation3 + $0x48] sm:$0xff] %v4809
          %4842 = vst [vmem:[#allocation3 + $0x50] sm:$0xff] %v4810
          %4843 = vst [vmem:[#allocation3 + $0x58] sm:$0xff] %v4811
          %4844 = vst [vmem:[#allocation3 + $0x60] sm:$0xff] %v4812
          %4845 = vst [vmem:[#allocation3 + $0x68] sm:$0xff] %v4813
          %4846 = vst [vmem:[#allocation3 + $0x70] sm:$0xff] %v4814
          %4847 = vst [vmem:[#allocation3 + $0x78] sm:$0xff] %v4815
          %4848 = vst [vmem:[#allocation3 + $0x80] sm:$0xff] %v4816
          %4849 = vst [vmem:[#allocation3 + $0x88] sm:$0xff] %v4817
          %4850 = vst [vmem:[#allocation3 + $0x90] sm:$0xff] %v4818
          %4851 = vst [vmem:[#allocation3 + $0x98] sm:$0xff] %v4819
          %4852 = vst [vmem:[#allocation3 + $0xa0] sm:$0xff] %v4820
          %4853 = vst [vmem:[#allocation3 + $0xa8] sm:$0xff] %v4821
          %4854 = vst [vmem:[#allocation3 + $0xb0] sm:$0xff] %v4822
          %4855 = vst [vmem:[#allocation3 + $0xb8] sm:$0xff] %v4823
          %4856 = vst [vmem:[#allocation3 + $0xc0] sm:$0xff] %v4824
          %4857 = vst [vmem:[#allocation3 + $0xc8] sm:$0xff] %v4825
          %4858 = vst [vmem:[#allocation3 + $0xd0] sm:$0xff] %v4826
          %4859 = vst [vmem:[#allocation3 + $0xd8] sm:$0xff] %v4827
          %4860 = vst [vmem:[#allocation3 + $0xe0] sm:$0xff] %v4828
          %4861 = vst [vmem:[#allocation3 + $0xe8] sm:$0xff] %v4829
          %4862 = vst [vmem:[#allocation3 + $0xf0] sm:$0xff] %v4830
          %4863 = vst [vmem:[#allocation3 + $0xf8] sm:$0xff] %v4831
          %4864 = vst [vmem:[#allocation2] sm:$0xff] %v4284
          %4865 = vst [vmem:[#allocation2 + $0x8] sm:$0xff] %v4285
          %4866 = vst [vmem:[#allocation2 + $0x10] sm:$0xff] %v4286
          %4867 = vst [vmem:[#allocation2 + $0x18] sm:$0xff] %v4287
          %4868 = vst [vmem:[#allocation2 + $0x20] sm:$0xff] %v4288
          %4869 = vst [vmem:[#allocation2 + $0x28] sm:$0xff] %v4289
          %4870 = vst [vmem:[#allocation2 + $0x30] sm:$0xff] %v4290
          %4871 = vst [vmem:[#allocation2 + $0x38] sm:$0xff] %v4291
          %4872 = vst [vmem:[#allocation2 + $0x40] sm:$0xff] %v4292
          %4873 = vst [vmem:[#allocation2 + $0x48] sm:$0xff] %v4293
          %4874 = vst [vmem:[#allocation2 + $0x50] sm:$0xff] %v4294
          %4875 = vst [vmem:[#allocation2 + $0x58] sm:$0xff] %v4295
          %4876 = vst [vmem:[#allocation2 + $0x60] sm:$0xff] %v4296
          %4877 = vst [vmem:[#allocation2 + $0x68] sm:$0xff] %v4297
          %4878 = vst [vmem:[#allocation2 + $0x70] sm:$0xff] %v4298
          %4879 = vst [vmem:[#allocation2 + $0x78] sm:$0xff] %v4299
          %4880 = vst [vmem:[#allocation2 + $0x80] sm:$0xff] %v4300
          %4881 = vst [vmem:[#allocation2 + $0x88] sm:$0xff] %v4301
          %4882 = vst [vmem:[#allocation2 + $0x90] sm:$0xff] %v4302
          %4883 = vst [vmem:[#allocation2 + $0x98] sm:$0xff] %v4303
          %4884 = vst [vmem:[#allocation2 + $0xa0] sm:$0xff] %v4304
          %4885 = vst [vmem:[#allocation2 + $0xa8] sm:$0xff] %v4305
          %4886 = vst [vmem:[#allocation2 + $0xb0] sm:$0xff] %v4306
          %4887 = vst [vmem:[#allocation2 + $0xb8] sm:$0xff] %v4307
          %4888 = vst [vmem:[#allocation2 + $0xc0] sm:$0xff] %v4308
          %4889 = vst [vmem:[#allocation2 + $0xc8] sm:$0xff] %v4309
          %4890 = vst [vmem:[#allocation2 + $0xd0] sm:$0xff] %v4310
          %4891 = vst [vmem:[#allocation2 + $0xd8] sm:$0xff] %v4311
          %4892 = vst [vmem:[#allocation2 + $0xe0] sm:$0xff] %v4312
          %4893 = vst [vmem:[#allocation2 + $0xe8] sm:$0xff] %v4313
          %4894 = vst [vmem:[#allocation2 + $0xf0] sm:$0xff] %v4314
          %4895 = vst [vmem:[#allocation2 + $0xf8] sm:$0xff] %v4315
          %4896 = vst [vmem:[#allocation4] sm:$0xff] 0.0
          %4897 = vst [vmem:[#allocation4 + $0x8] sm:$0xff] 0.0
          %4898 = vst [vmem:[#allocation4 + $0x10] sm:$0xff] 0.0
          %4899 = vst [vmem:[#allocation4 + $0x18] sm:$0xff] 0.0
          %4900 = vst [vmem:[#allocation4 + $0x20] sm:$0xff] 0.0
          %4901 = vst [vmem:[#allocation4 + $0x28] sm:$0xff] 0.0
          %4902 = vst [vmem:[#allocation4 + $0x30] sm:$0xff] 0.0
          %4903 = vst [vmem:[#allocation4 + $0x38] sm:$0xff] 0.0
          %4904 = vst [vmem:[#allocation4 + $0x40] sm:$0xff] 0.0
          %4905 = vst [vmem:[#allocation4 + $0x48] sm:$0xff] 0.0
          %4906 = vst [vmem:[#allocation4 + $0x50] sm:$0xff] 0.0
          %4907 = vst [vmem:[#allocation4 + $0x58] sm:$0xff] 0.0
          %4908 = vst [vmem:[#allocation4 + $0x60] sm:$0xff] 0.0
          %4909 = vst [vmem:[#allocation4 + $0x68] sm:$0xff] 0.0
          %4910 = vst [vmem:[#allocation4 + $0x70] sm:$0xff] 0.0
          %4911 = vst [vmem:[#allocation4 + $0x78] sm:$0xff] 0.0
          %4912 = vst [vmem:[#allocation4 + $0x80] sm:$0xff] 0.0
          %4913 = vst [vmem:[#allocation4 + $0x88] sm:$0xff] 0.0
          %4914 = vst [vmem:[#allocation4 + $0x90] sm:$0xff] 0.0
          %4915 = vst [vmem:[#allocation4 + $0x98] sm:$0xff] 0.0
          %4916 = vst [vmem:[#allocation4 + $0xa0] sm:$0xff] 0.0
          %4917 = vst [vmem:[#allocation4 + $0xa8] sm:$0xff] 0.0
          %4918 = vst [vmem:[#allocation4 + $0xb0] sm:$0xff] 0.0
          %4919 = vst [vmem:[#allocation4 + $0xb8] sm:$0xff] 0.0
          %4920 = vst [vmem:[#allocation4 + $0xc0] sm:$0xff] 0.0
          %4921 = vst [vmem:[#allocation4 + $0xc8] sm:$0xff] 0.0
          %4922 = vst [vmem:[#allocation4 + $0xd0] sm:$0xff] 0.0
          %4923 = vst [vmem:[#allocation4 + $0xd8] sm:$0xff] 0.0
          %4924 = vst [vmem:[#allocation4 + $0xe0] sm:$0xff] 0.0
          %4925 = vst [vmem:[#allocation4 + $0xe8] sm:$0xff] 0.0
          %4926 = vst [vmem:[#allocation4 + $0xf0] sm:$0xff] 0.0
          %4927 = vst [vmem:[#allocation4 + $0xf8] sm:$0xff] 0.0
          %4928 = vst [vmem:[#allocation4 + $0x100] sm:$0xff] 0.0
          %4929 = vst [vmem:[#allocation4 + $0x108] sm:$0xff] 0.0
          %4930 = vst [vmem:[#allocation4 + $0x110] sm:$0xff] 0.0
          %4931 = vst [vmem:[#allocation4 + $0x118] sm:$0xff] 0.0
          %4932 = vst [vmem:[#allocation4 + $0x120] sm:$0xff] 0.0
          %4933 = vst [vmem:[#allocation4 + $0x128] sm:$0xff] 0.0
          %4934 = vst [vmem:[#allocation4 + $0x130] sm:$0xff] 0.0
          %4935 = vst [vmem:[#allocation4 + $0x138] sm:$0xff] 0.0
          %4936 = vst [vmem:[#allocation4 + $0x140] sm:$0xff] 0.0
          %4937 = vst [vmem:[#allocation4 + $0x148] sm:$0xff] 0.0
          %4938 = vst [vmem:[#allocation4 + $0x150] sm:$0xff] 0.0
          %4939 = vst [vmem:[#allocation4 + $0x158] sm:$0xff] 0.0
          %4940 = vst [vmem:[#allocation4 + $0x160] sm:$0xff] 0.0
          %4941 = vst [vmem:[#allocation4 + $0x168] sm:$0xff] 0.0
          %4942 = vst [vmem:[#allocation4 + $0x170] sm:$0xff] 0.0
          %4943 = vst [vmem:[#allocation4 + $0x178] sm:$0xff] 0.0
          %4944 = vst [vmem:[#allocation4 + $0x180] sm:$0xff] 0.0
          %4945 = vst [vmem:[#allocation4 + $0x188] sm:$0xff] 0.0
          %4946 = vst [vmem:[#allocation4 + $0x190] sm:$0xff] 0.0
          %4947 = vst [vmem:[#allocation4 + $0x198] sm:$0xff] 0.0
          %4948 = vst [vmem:[#allocation4 + $0x1a0] sm:$0xff] 0.0
          %4949 = vst [vmem:[#allocation4 + $0x1a8] sm:$0xff] 0.0
          %4950 = vst [vmem:[#allocation4 + $0x1b0] sm:$0xff] 0.0
          %4951 = vst [vmem:[#allocation4 + $0x1b8] sm:$0xff] 0.0
          %4952 = vst [vmem:[#allocation4 + $0x1c0] sm:$0xff] 0.0
          %4953 = vst [vmem:[#allocation4 + $0x1c8] sm:$0xff] 0.0
          %4954 = vst [vmem:[#allocation4 + $0x1d0] sm:$0xff] 0.0
          %4955 = vst [vmem:[#allocation4 + $0x1d8] sm:$0xff] 0.0
          %4956 = vst [vmem:[#allocation4 + $0x1e0] sm:$0xff] 0.0
          %4957 = vst [vmem:[#allocation4 + $0x1e8] sm:$0xff] 0.0
          %4958 = vst [vmem:[#allocation4 + $0x1f0] sm:$0xff] 0.0
          %4959 = vst [vmem:[#allocation4 + $0x1f8] sm:$0xff] 0.0
        $region68: #{gconv_gru_cell.1} parent=59 // pred_fallthru
          _
      $region60: #{gconv_gru_cell.1} parent=43 // pred_fallthru
        _
      %p4960 = scmp.eq.s32.totalorder %s21, 1
      %p4961 = pnand %p4960, %p2886
      %p4962 = pneg %p4961
      // Predicated region
      $region69: #{gconv_gru_cell.1} parent=43 // pred_check
        _
      $region70: #{gconv_gru_cell.1} parent=43 // pred_check_branch
        %4964 = sbr.rel (%p4961) target = $region72
      $region71: #{gconv_gru_cell.1} parent=43 // pred_region
        %v4965 = vld [vmem:[#allocation5] sm:$0xff]
        %v4966 = vld [vmem:[#allocation5 + $0x8] sm:$0xff]
        %v4967 = vld [vmem:[#allocation5 + $0x10] sm:$0xff]
        %v4968 = vld [vmem:[#allocation5 + $0x18] sm:$0xff]
        %v4969 = vld [vmem:[#allocation5 + $0x20] sm:$0xff]
        %v4970 = vld [vmem:[#allocation5 + $0x28] sm:$0xff]
        %v4971 = vld [vmem:[#allocation5 + $0x30] sm:$0xff]
        %v4972 = vld [vmem:[#allocation5 + $0x38] sm:$0xff]
        %v4973 = vld [vmem:[#allocation5 + $0x40] sm:$0xff]
        %v4974 = vld [vmem:[#allocation5 + $0x48] sm:$0xff]
        %v4975 = vld [vmem:[#allocation5 + $0x50] sm:$0xff]
        %v4976 = vld [vmem:[#allocation5 + $0x58] sm:$0xff]
        %v4977 = vld [vmem:[#allocation5 + $0x60] sm:$0xff]
        %v4978 = vld [vmem:[#allocation5 + $0x68] sm:$0xff]
        %v4979 = vld [vmem:[#allocation5 + $0x70] sm:$0xff]
        %v4980 = vld [vmem:[#allocation5 + $0x78] sm:$0xff]
        %v4981 = vld [vmem:[#allocation5 + $0x80] sm:$0xff]
        %v4982 = vld [vmem:[#allocation5 + $0x88] sm:$0xff]
        %v4983 = vld [vmem:[#allocation5 + $0x90] sm:$0xff]
        %v4984 = vld [vmem:[#allocation5 + $0x98] sm:$0xff]
        %v4985 = vld [vmem:[#allocation5 + $0xa0] sm:$0xff]
        %v4986 = vld [vmem:[#allocation5 + $0xa8] sm:$0xff]
        %v4987 = vld [vmem:[#allocation5 + $0xb0] sm:$0xff]
        %v4988 = vld [vmem:[#allocation5 + $0xb8] sm:$0xff]
        %v4989 = vld [vmem:[#allocation5 + $0xc0] sm:$0xff]
        %v4990 = vld [vmem:[#allocation5 + $0xc8] sm:$0xff]
        %v4991 = vld [vmem:[#allocation5 + $0xd0] sm:$0xff]
        %v4992 = vld [vmem:[#allocation5 + $0xd8] sm:$0xff]
        %v4993 = vld [vmem:[#allocation5 + $0xe0] sm:$0xff]
        %v4994 = vld [vmem:[#allocation5 + $0xe8] sm:$0xff]
        %v4995 = vld [vmem:[#allocation5 + $0xf0] sm:$0xff]
        %v4996 = vld [vmem:[#allocation5 + $0xf8] sm:$0xff]
        %v4997 = vld [vmem:[#allocation5 + $0x100] sm:$0xff]
        %v4998 = vld [vmem:[#allocation5 + $0x108] sm:$0xff]
        %v4999 = vld [vmem:[#allocation5 + $0x110] sm:$0xff]
        %v5000 = vld [vmem:[#allocation5 + $0x118] sm:$0xff]
        %v5001 = vld [vmem:[#allocation5 + $0x120] sm:$0xff]
        %v5002 = vld [vmem:[#allocation5 + $0x128] sm:$0xff]
        %v5003 = vld [vmem:[#allocation5 + $0x130] sm:$0xff]
        %v5004 = vld [vmem:[#allocation5 + $0x138] sm:$0xff]
        %v5005 = vld [vmem:[#allocation5 + $0x140] sm:$0xff]
        %v5006 = vld [vmem:[#allocation5 + $0x148] sm:$0xff]
        %v5007 = vld [vmem:[#allocation5 + $0x150] sm:$0xff]
        %v5008 = vld [vmem:[#allocation5 + $0x158] sm:$0xff]
        %v5009 = vld [vmem:[#allocation5 + $0x160] sm:$0xff]
        %v5010 = vld [vmem:[#allocation5 + $0x168] sm:$0xff]
        %v5011 = vld [vmem:[#allocation5 + $0x170] sm:$0xff]
        %v5012 = vld [vmem:[#allocation5 + $0x178] sm:$0xff]
        %v5013 = vld [vmem:[#allocation5 + $0x180] sm:$0xff]
        %v5014 = vld [vmem:[#allocation5 + $0x188] sm:$0xff]
        %v5015 = vld [vmem:[#allocation5 + $0x190] sm:$0xff]
        %v5016 = vld [vmem:[#allocation5 + $0x198] sm:$0xff]
        %v5017 = vld [vmem:[#allocation5 + $0x1a0] sm:$0xff]
        %v5018 = vld [vmem:[#allocation5 + $0x1a8] sm:$0xff]
        %v5019 = vld [vmem:[#allocation5 + $0x1b0] sm:$0xff]
        %v5020 = vld [vmem:[#allocation5 + $0x1b8] sm:$0xff]
        %v5021 = vld [vmem:[#allocation5 + $0x1c0] sm:$0xff]
        %v5022 = vld [vmem:[#allocation5 + $0x1c8] sm:$0xff]
        %v5023 = vld [vmem:[#allocation5 + $0x1d0] sm:$0xff]
        %v5024 = vld [vmem:[#allocation5 + $0x1d8] sm:$0xff]
        %v5025 = vld [vmem:[#allocation5 + $0x1e0] sm:$0xff]
        %v5026 = vld [vmem:[#allocation5 + $0x1e8] sm:$0xff]
        %v5027 = vld [vmem:[#allocation5 + $0x1f0] sm:$0xff]
        %v5028 = vld [vmem:[#allocation5 + $0x1f8] sm:$0xff]
        %v5029 = vld [vmem:[%s5] sm:$0x1]
        %v5031 = vlaneseq
        %v5032 = vshrl.u32 %v5031, 7
        %v5033 = vsub.s32 0, %v5032
        %v5034 = vrot.slane %v5029, %v5033
        %v5036 = vadd.f32 %v4965, %v5034
        %v5037 = vadd.f32 %v4966, %v5034
        %v5038 = vadd.f32 %v4967, %v5034
        %v5039 = vadd.f32 %v4968, %v5034
        %v5040 = vadd.f32 %v4969, %v5034
        %v5041 = vadd.f32 %v4970, %v5034
        %v5042 = vadd.f32 %v4971, %v5034
        %v5043 = vadd.f32 %v4972, %v5034
        %v5044 = vadd.f32 %v4973, %v5034
        %v5045 = vadd.f32 %v4974, %v5034
        %v5046 = vadd.f32 %v4975, %v5034
        %v5047 = vadd.f32 %v4976, %v5034
        %v5048 = vadd.f32 %v4977, %v5034
        %v5049 = vadd.f32 %v4978, %v5034
        %v5050 = vadd.f32 %v4979, %v5034
        %v5051 = vadd.f32 %v4980, %v5034
        %v5052 = vadd.f32 %v4981, %v5034
        %v5053 = vadd.f32 %v4982, %v5034
        %v5054 = vadd.f32 %v4983, %v5034
        %v5055 = vadd.f32 %v4984, %v5034
        %v5056 = vadd.f32 %v4985, %v5034
        %v5057 = vadd.f32 %v4986, %v5034
        %v5058 = vadd.f32 %v4987, %v5034
        %v5059 = vadd.f32 %v4988, %v5034
        %v5060 = vadd.f32 %v4989, %v5034
        %v5061 = vadd.f32 %v4990, %v5034
        %v5062 = vadd.f32 %v4991, %v5034
        %v5063 = vadd.f32 %v4992, %v5034
        %v5064 = vadd.f32 %v4993, %v5034
        %v5065 = vadd.f32 %v4994, %v5034
        %v5066 = vadd.f32 %v4995, %v5034
        %v5067 = vadd.f32 %v4996, %v5034
        %v5068 = vadd.f32 %v4997, %v5034
        %v5069 = vadd.f32 %v4998, %v5034
        %v5070 = vadd.f32 %v4999, %v5034
        %v5071 = vadd.f32 %v5000, %v5034
        %v5072 = vadd.f32 %v5001, %v5034
        %v5073 = vadd.f32 %v5002, %v5034
        %v5074 = vadd.f32 %v5003, %v5034
        %v5075 = vadd.f32 %v5004, %v5034
        %v5076 = vadd.f32 %v5005, %v5034
        %v5077 = vadd.f32 %v5006, %v5034
        %v5078 = vadd.f32 %v5007, %v5034
        %v5079 = vadd.f32 %v5008, %v5034
        %v5080 = vadd.f32 %v5009, %v5034
        %v5081 = vadd.f32 %v5010, %v5034
        %v5082 = vadd.f32 %v5011, %v5034
        %v5083 = vadd.f32 %v5012, %v5034
        %v5084 = vadd.f32 %v5013, %v5034
        %v5085 = vadd.f32 %v5014, %v5034
        %v5086 = vadd.f32 %v5015, %v5034
        %v5087 = vadd.f32 %v5016, %v5034
        %v5088 = vadd.f32 %v5017, %v5034
        %v5089 = vadd.f32 %v5018, %v5034
        %v5090 = vadd.f32 %v5019, %v5034
        %v5091 = vadd.f32 %v5020, %v5034
        %v5092 = vadd.f32 %v5021, %v5034
        %v5093 = vadd.f32 %v5022, %v5034
        %v5094 = vadd.f32 %v5023, %v5034
        %v5095 = vadd.f32 %v5024, %v5034
        %v5096 = vadd.f32 %v5025, %v5034
        %v5097 = vadd.f32 %v5026, %v5034
        %v5098 = vadd.f32 %v5027, %v5034
        %v5099 = vadd.f32 %v5028, %v5034
        %v5100 = vxor.u32 %v5036, 2147483648
        %v5101 = vxor.u32 %v5037, 2147483648
        %v5102 = vxor.u32 %v5038, 2147483648
        %v5103 = vxor.u32 %v5039, 2147483648
        %v5104 = vxor.u32 %v5040, 2147483648
        %v5105 = vxor.u32 %v5041, 2147483648
        %v5106 = vxor.u32 %v5042, 2147483648
        %v5107 = vxor.u32 %v5043, 2147483648
        %v5108 = vxor.u32 %v5044, 2147483648
        %v5109 = vxor.u32 %v5045, 2147483648
        %v5110 = vxor.u32 %v5046, 2147483648
        %v5111 = vxor.u32 %v5047, 2147483648
        %v5112 = vxor.u32 %v5048, 2147483648
        %v5113 = vxor.u32 %v5049, 2147483648
        %v5114 = vxor.u32 %v5050, 2147483648
        %v5115 = vxor.u32 %v5051, 2147483648
        %v5116 = vxor.u32 %v5052, 2147483648
        %v5117 = vxor.u32 %v5053, 2147483648
        %v5118 = vxor.u32 %v5054, 2147483648
        %v5119 = vxor.u32 %v5055, 2147483648
        %v5120 = vxor.u32 %v5056, 2147483648
        %v5121 = vxor.u32 %v5057, 2147483648
        %v5122 = vxor.u32 %v5058, 2147483648
        %v5123 = vxor.u32 %v5059, 2147483648
        %v5124 = vxor.u32 %v5060, 2147483648
        %v5125 = vxor.u32 %v5061, 2147483648
        %v5126 = vxor.u32 %v5062, 2147483648
        %v5127 = vxor.u32 %v5063, 2147483648
        %v5128 = vxor.u32 %v5064, 2147483648
        %v5129 = vxor.u32 %v5065, 2147483648
        %v5130 = vxor.u32 %v5066, 2147483648
        %v5131 = vxor.u32 %v5067, 2147483648
        %v5132 = vxor.u32 %v5068, 2147483648
        %v5133 = vxor.u32 %v5069, 2147483648
        %v5134 = vxor.u32 %v5070, 2147483648
        %v5135 = vxor.u32 %v5071, 2147483648
        %v5136 = vxor.u32 %v5072, 2147483648
        %v5137 = vxor.u32 %v5073, 2147483648
        %v5138 = vxor.u32 %v5074, 2147483648
        %v5139 = vxor.u32 %v5075, 2147483648
        %v5140 = vxor.u32 %v5076, 2147483648
        %v5141 = vxor.u32 %v5077, 2147483648
        %v5142 = vxor.u32 %v5078, 2147483648
        %v5143 = vxor.u32 %v5079, 2147483648
        %v5144 = vxor.u32 %v5080, 2147483648
        %v5145 = vxor.u32 %v5081, 2147483648
        %v5146 = vxor.u32 %v5082, 2147483648
        %v5147 = vxor.u32 %v5083, 2147483648
        %v5148 = vxor.u32 %v5084, 2147483648
        %v5149 = vxor.u32 %v5085, 2147483648
        %v5150 = vxor.u32 %v5086, 2147483648
        %v5151 = vxor.u32 %v5087, 2147483648
        %v5152 = vxor.u32 %v5088, 2147483648
        %v5153 = vxor.u32 %v5089, 2147483648
        %v5154 = vxor.u32 %v5090, 2147483648
        %v5155 = vxor.u32 %v5091, 2147483648
        %v5156 = vxor.u32 %v5092, 2147483648
        %v5157 = vxor.u32 %v5093, 2147483648
        %v5158 = vxor.u32 %v5094, 2147483648
        %v5159 = vxor.u32 %v5095, 2147483648
        %v5160 = vxor.u32 %v5096, 2147483648
        %v5161 = vxor.u32 %v5097, 2147483648
        %v5162 = vxor.u32 %v5098, 2147483648
        %v5163 = vxor.u32 %v5099, 2147483648
        %v5164 = vmul.f32 %v5100, 1.442695
        %v5165 = vpow.pop %v5164
        %v5166 = vmul.f32 %v5101, 1.442695
        %v5167 = vpow.pop %v5166
        %v5168 = vmul.f32 %v5102, 1.442695
        %v5169 = vpow.pop %v5168
        %v5170 = vmul.f32 %v5103, 1.442695
        %v5171 = vpow.pop %v5170
        %v5172 = vmul.f32 %v5104, 1.442695
        %v5173 = vpow.pop %v5172
        %v5174 = vmul.f32 %v5105, 1.442695
        %v5175 = vpow.pop %v5174
        %v5176 = vmul.f32 %v5106, 1.442695
        %v5177 = vpow.pop %v5176
        %v5178 = vmul.f32 %v5107, 1.442695
        %v5179 = vpow.pop %v5178
        %v5180 = vmul.f32 %v5108, 1.442695
        %v5181 = vpow.pop %v5180
        %v5182 = vmul.f32 %v5109, 1.442695
        %v5183 = vpow.pop %v5182
        %v5184 = vmul.f32 %v5110, 1.442695
        %v5185 = vpow.pop %v5184
        %v5186 = vmul.f32 %v5111, 1.442695
        %v5187 = vpow.pop %v5186
        %v5188 = vmul.f32 %v5112, 1.442695
        %v5189 = vpow.pop %v5188
        %v5190 = vmul.f32 %v5113, 1.442695
        %v5191 = vpow.pop %v5190
        %v5192 = vmul.f32 %v5114, 1.442695
        %v5193 = vpow.pop %v5192
        %v5194 = vmul.f32 %v5115, 1.442695
        %v5195 = vpow.pop %v5194
        %v5196 = vmul.f32 %v5116, 1.442695
        %v5197 = vpow.pop %v5196
        %v5198 = vmul.f32 %v5117, 1.442695
        %v5199 = vpow.pop %v5198
        %v5200 = vmul.f32 %v5118, 1.442695
        %v5201 = vpow.pop %v5200
        %v5202 = vmul.f32 %v5119, 1.442695
        %v5203 = vpow.pop %v5202
        %v5204 = vmul.f32 %v5120, 1.442695
        %v5205 = vpow.pop %v5204
        %v5206 = vmul.f32 %v5121, 1.442695
        %v5207 = vpow.pop %v5206
        %v5208 = vmul.f32 %v5122, 1.442695
        %v5209 = vpow.pop %v5208
        %v5210 = vmul.f32 %v5123, 1.442695
        %v5211 = vpow.pop %v5210
        %v5212 = vmul.f32 %v5124, 1.442695
        %v5213 = vpow.pop %v5212
        %v5214 = vmul.f32 %v5125, 1.442695
        %v5215 = vpow.pop %v5214
        %v5216 = vmul.f32 %v5126, 1.442695
        %v5217 = vpow.pop %v5216
        %v5218 = vmul.f32 %v5127, 1.442695
        %v5219 = vpow.pop %v5218
        %v5220 = vmul.f32 %v5128, 1.442695
        %v5221 = vpow.pop %v5220
        %v5222 = vmul.f32 %v5129, 1.442695
        %v5223 = vpow.pop %v5222
        %v5224 = vmul.f32 %v5130, 1.442695
        %v5225 = vpow.pop %v5224
        %v5226 = vmul.f32 %v5131, 1.442695
        %v5227 = vpow.pop %v5226
        %v5228 = vmul.f32 %v5132, 1.442695
        %v5229 = vpow.pop %v5228
        %v5230 = vmul.f32 %v5133, 1.442695
        %v5231 = vpow.pop %v5230
        %v5232 = vmul.f32 %v5134, 1.442695
        %v5233 = vpow.pop %v5232
        %v5234 = vmul.f32 %v5135, 1.442695
        %v5235 = vpow.pop %v5234
        %v5236 = vmul.f32 %v5136, 1.442695
        %v5237 = vpow.pop %v5236
        %v5238 = vmul.f32 %v5137, 1.442695
        %v5239 = vpow.pop %v5238
        %v5240 = vmul.f32 %v5138, 1.442695
        %v5241 = vpow.pop %v5240
        %v5242 = vmul.f32 %v5139, 1.442695
        %v5243 = vpow.pop %v5242
        %v5244 = vmul.f32 %v5140, 1.442695
        %v5245 = vpow.pop %v5244
        %v5246 = vmul.f32 %v5141, 1.442695
        %v5247 = vpow.pop %v5246
        %v5248 = vmul.f32 %v5142, 1.442695
        %v5249 = vpow.pop %v5248
        %v5250 = vmul.f32 %v5143, 1.442695
        %v5251 = vpow.pop %v5250
        %v5252 = vmul.f32 %v5144, 1.442695
        %v5253 = vpow.pop %v5252
        %v5254 = vmul.f32 %v5145, 1.442695
        %v5255 = vpow.pop %v5254
        %v5256 = vmul.f32 %v5146, 1.442695
        %v5257 = vpow.pop %v5256
        %v5258 = vmul.f32 %v5147, 1.442695
        %v5259 = vpow.pop %v5258
        %v5260 = vmul.f32 %v5148, 1.442695
        %v5261 = vpow.pop %v5260
        %v5262 = vmul.f32 %v5149, 1.442695
        %v5263 = vpow.pop %v5262
        %v5264 = vmul.f32 %v5150, 1.442695
        %v5265 = vpow.pop %v5264
        %v5266 = vmul.f32 %v5151, 1.442695
        %v5267 = vpow.pop %v5266
        %v5268 = vmul.f32 %v5152, 1.442695
        %v5269 = vpow.pop %v5268
        %v5270 = vmul.f32 %v5153, 1.442695
        %v5271 = vpow.pop %v5270
        %v5272 = vmul.f32 %v5154, 1.442695
        %v5273 = vpow.pop %v5272
        %v5274 = vmul.f32 %v5155, 1.442695
        %v5275 = vpow.pop %v5274
        %v5276 = vmul.f32 %v5156, 1.442695
        %v5277 = vpow.pop %v5276
        %v5278 = vmul.f32 %v5157, 1.442695
        %v5279 = vpow.pop %v5278
        %v5280 = vmul.f32 %v5158, 1.442695
        %v5281 = vpow.pop %v5280
        %v5282 = vmul.f32 %v5159, 1.442695
        %v5283 = vpow.pop %v5282
        %v5284 = vmul.f32 %v5160, 1.442695
        %v5285 = vpow.pop %v5284
        %v5286 = vmul.f32 %v5161, 1.442695
        %v5287 = vpow.pop %v5286
        %v5288 = vmul.f32 %v5162, 1.442695
        %v5289 = vpow.pop %v5288
        %v5290 = vmul.f32 %v5163, 1.442695
        %v5291 = vpow.pop %v5290
        %v5292 = vadd.f32 %v5165, 1.0
        %v5293 = vadd.f32 %v5167, 1.0
        %v5294 = vadd.f32 %v5169, 1.0
        %v5295 = vadd.f32 %v5171, 1.0
        %v5296 = vadd.f32 %v5173, 1.0
        %v5297 = vadd.f32 %v5175, 1.0
        %v5298 = vadd.f32 %v5177, 1.0
        %v5299 = vadd.f32 %v5179, 1.0
        %v5300 = vadd.f32 %v5181, 1.0
        %v5301 = vadd.f32 %v5183, 1.0
        %v5302 = vadd.f32 %v5185, 1.0
        %v5303 = vadd.f32 %v5187, 1.0
        %v5304 = vadd.f32 %v5189, 1.0
        %v5305 = vadd.f32 %v5191, 1.0
        %v5306 = vadd.f32 %v5193, 1.0
        %v5307 = vadd.f32 %v5195, 1.0
        %v5308 = vadd.f32 %v5197, 1.0
        %v5309 = vadd.f32 %v5199, 1.0
        %v5310 = vadd.f32 %v5201, 1.0
        %v5311 = vadd.f32 %v5203, 1.0
        %v5312 = vadd.f32 %v5205, 1.0
        %v5313 = vadd.f32 %v5207, 1.0
        %v5314 = vadd.f32 %v5209, 1.0
        %v5315 = vadd.f32 %v5211, 1.0
        %v5316 = vadd.f32 %v5213, 1.0
        %v5317 = vadd.f32 %v5215, 1.0
        %v5318 = vadd.f32 %v5217, 1.0
        %v5319 = vadd.f32 %v5219, 1.0
        %v5320 = vadd.f32 %v5221, 1.0
        %v5321 = vadd.f32 %v5223, 1.0
        %v5322 = vadd.f32 %v5225, 1.0
        %v5323 = vadd.f32 %v5227, 1.0
        %v5324 = vadd.f32 %v5229, 1.0
        %v5325 = vadd.f32 %v5231, 1.0
        %v5326 = vadd.f32 %v5233, 1.0
        %v5327 = vadd.f32 %v5235, 1.0
        %v5328 = vadd.f32 %v5237, 1.0
        %v5329 = vadd.f32 %v5239, 1.0
        %v5330 = vadd.f32 %v5241, 1.0
        %v5331 = vadd.f32 %v5243, 1.0
        %v5332 = vadd.f32 %v5245, 1.0
        %v5333 = vadd.f32 %v5247, 1.0
        %v5334 = vadd.f32 %v5249, 1.0
        %v5335 = vadd.f32 %v5251, 1.0
        %v5336 = vadd.f32 %v5253, 1.0
        %v5337 = vadd.f32 %v5255, 1.0
        %v5338 = vadd.f32 %v5257, 1.0
        %v5339 = vadd.f32 %v5259, 1.0
        %v5340 = vadd.f32 %v5261, 1.0
        %v5341 = vadd.f32 %v5263, 1.0
        %v5342 = vadd.f32 %v5265, 1.0
        %v5343 = vadd.f32 %v5267, 1.0
        %v5344 = vadd.f32 %v5269, 1.0
        %v5345 = vadd.f32 %v5271, 1.0
        %v5346 = vadd.f32 %v5273, 1.0
        %v5347 = vadd.f32 %v5275, 1.0
        %v5348 = vadd.f32 %v5277, 1.0
        %v5349 = vadd.f32 %v5279, 1.0
        %v5350 = vadd.f32 %v5281, 1.0
        %v5351 = vadd.f32 %v5283, 1.0
        %v5352 = vadd.f32 %v5285, 1.0
        %v5353 = vadd.f32 %v5287, 1.0
        %v5354 = vadd.f32 %v5289, 1.0
        %v5355 = vadd.f32 %v5291, 1.0
        %v5356 = vrcp.pop %v5292
        %v5357 = vmul.f32 1.0, %v5356
        %v5358 = vrcp.pop %v5293
        %v5359 = vmul.f32 1.0, %v5358
        %v5360 = vrcp.pop %v5294
        %v5361 = vmul.f32 1.0, %v5360
        %v5362 = vrcp.pop %v5295
        %v5363 = vmul.f32 1.0, %v5362
        %v5364 = vrcp.pop %v5296
        %v5365 = vmul.f32 1.0, %v5364
        %v5366 = vrcp.pop %v5297
        %v5367 = vmul.f32 1.0, %v5366
        %v5368 = vrcp.pop %v5298
        %v5369 = vmul.f32 1.0, %v5368
        %v5370 = vrcp.pop %v5299
        %v5371 = vmul.f32 1.0, %v5370
        %v5372 = vrcp.pop %v5300
        %v5373 = vmul.f32 1.0, %v5372
        %v5374 = vrcp.pop %v5301
        %v5375 = vmul.f32 1.0, %v5374
        %v5376 = vrcp.pop %v5302
        %v5377 = vmul.f32 1.0, %v5376
        %v5378 = vrcp.pop %v5303
        %v5379 = vmul.f32 1.0, %v5378
        %v5380 = vrcp.pop %v5304
        %v5381 = vmul.f32 1.0, %v5380
        %v5382 = vrcp.pop %v5305
        %v5383 = vmul.f32 1.0, %v5382
        %v5384 = vrcp.pop %v5306
        %v5385 = vmul.f32 1.0, %v5384
        %v5386 = vrcp.pop %v5307
        %v5387 = vmul.f32 1.0, %v5386
        %v5388 = vrcp.pop %v5308
        %v5389 = vmul.f32 1.0, %v5388
        %v5390 = vrcp.pop %v5309
        %v5391 = vmul.f32 1.0, %v5390
        %v5392 = vrcp.pop %v5310
        %v5393 = vmul.f32 1.0, %v5392
        %v5394 = vrcp.pop %v5311
        %v5395 = vmul.f32 1.0, %v5394
        %v5396 = vrcp.pop %v5312
        %v5397 = vmul.f32 1.0, %v5396
        %v5398 = vrcp.pop %v5313
        %v5399 = vmul.f32 1.0, %v5398
        %v5400 = vrcp.pop %v5314
        %v5401 = vmul.f32 1.0, %v5400
        %v5402 = vrcp.pop %v5315
        %v5403 = vmul.f32 1.0, %v5402
        %v5404 = vrcp.pop %v5316
        %v5405 = vmul.f32 1.0, %v5404
        %v5406 = vrcp.pop %v5317
        %v5407 = vmul.f32 1.0, %v5406
        %v5408 = vrcp.pop %v5318
        %v5409 = vmul.f32 1.0, %v5408
        %v5410 = vrcp.pop %v5319
        %v5411 = vmul.f32 1.0, %v5410
        %v5412 = vrcp.pop %v5320
        %v5413 = vmul.f32 1.0, %v5412
        %v5414 = vrcp.pop %v5321
        %v5415 = vmul.f32 1.0, %v5414
        %v5416 = vrcp.pop %v5322
        %v5417 = vmul.f32 1.0, %v5416
        %v5418 = vrcp.pop %v5323
        %v5419 = vmul.f32 1.0, %v5418
        %v5420 = vrcp.pop %v5324
        %v5421 = vmul.f32 1.0, %v5420
        %v5422 = vrcp.pop %v5325
        %v5423 = vmul.f32 1.0, %v5422
        %v5424 = vrcp.pop %v5326
        %v5425 = vmul.f32 1.0, %v5424
        %v5426 = vrcp.pop %v5327
        %v5427 = vmul.f32 1.0, %v5426
        %v5428 = vrcp.pop %v5328
        %v5429 = vmul.f32 1.0, %v5428
        %v5430 = vrcp.pop %v5329
        %v5431 = vmul.f32 1.0, %v5430
        %v5432 = vrcp.pop %v5330
        %v5433 = vmul.f32 1.0, %v5432
        %v5434 = vrcp.pop %v5331
        %v5435 = vmul.f32 1.0, %v5434
        %v5436 = vrcp.pop %v5332
        %v5437 = vmul.f32 1.0, %v5436
        %v5438 = vrcp.pop %v5333
        %v5439 = vmul.f32 1.0, %v5438
        %v5440 = vrcp.pop %v5334
        %v5441 = vmul.f32 1.0, %v5440
        %v5442 = vrcp.pop %v5335
        %v5443 = vmul.f32 1.0, %v5442
        %v5444 = vrcp.pop %v5336
        %v5445 = vmul.f32 1.0, %v5444
        %v5446 = vrcp.pop %v5337
        %v5447 = vmul.f32 1.0, %v5446
        %v5448 = vrcp.pop %v5338
        %v5449 = vmul.f32 1.0, %v5448
        %v5450 = vrcp.pop %v5339
        %v5451 = vmul.f32 1.0, %v5450
        %v5452 = vrcp.pop %v5340
        %v5453 = vmul.f32 1.0, %v5452
        %v5454 = vrcp.pop %v5341
        %v5455 = vmul.f32 1.0, %v5454
        %v5456 = vrcp.pop %v5342
        %v5457 = vmul.f32 1.0, %v5456
        %v5458 = vrcp.pop %v5343
        %v5459 = vmul.f32 1.0, %v5458
        %v5460 = vrcp.pop %v5344
        %v5461 = vmul.f32 1.0, %v5460
        %v5462 = vrcp.pop %v5345
        %v5463 = vmul.f32 1.0, %v5462
        %v5464 = vrcp.pop %v5346
        %v5465 = vmul.f32 1.0, %v5464
        %v5466 = vrcp.pop %v5347
        %v5467 = vmul.f32 1.0, %v5466
        %v5468 = vrcp.pop %v5348
        %v5469 = vmul.f32 1.0, %v5468
        %v5470 = vrcp.pop %v5349
        %v5471 = vmul.f32 1.0, %v5470
        %v5472 = vrcp.pop %v5350
        %v5473 = vmul.f32 1.0, %v5472
        %v5474 = vrcp.pop %v5351
        %v5475 = vmul.f32 1.0, %v5474
        %v5476 = vrcp.pop %v5352
        %v5477 = vmul.f32 1.0, %v5476
        %v5478 = vrcp.pop %v5353
        %v5479 = vmul.f32 1.0, %v5478
        %v5480 = vrcp.pop %v5354
        %v5481 = vmul.f32 1.0, %v5480
        %v5482 = vrcp.pop %v5355
        %v5483 = vmul.f32 1.0, %v5482
        %v5484 = vld [vmem:[%s2] sm:$0xf]
        %v5485 = vld [vmem:[%s2 + $0x4] sm:$0xf]
        %v5486 = vld [vmem:[%s2 + $0x8] sm:$0xf]
        %v5487 = vld [vmem:[%s2 + $0xc] sm:$0xf]
        %v5488 = vld [vmem:[%s2 + $0x10] sm:$0xf]
        %v5489 = vld [vmem:[%s2 + $0x14] sm:$0xf]
        %v5490 = vld [vmem:[%s2 + $0x18] sm:$0xf]
        %v5491 = vld [vmem:[%s2 + $0x1c] sm:$0xf]
        %v5492 = vld [vmem:[%s2 + $0x20] sm:$0xf]
        %v5493 = vld [vmem:[%s2 + $0x24] sm:$0xf]
        %v5494 = vld [vmem:[%s2 + $0x28] sm:$0xf]
        %v5495 = vld [vmem:[%s2 + $0x2c] sm:$0xf]
        %v5496 = vld [vmem:[%s2 + $0x30] sm:$0xf]
        %v5497 = vld [vmem:[%s2 + $0x34] sm:$0xf]
        %v5498 = vld [vmem:[%s2 + $0x38] sm:$0xf]
        %v5499 = vld [vmem:[%s2 + $0x3c] sm:$0xf]
        %v5500 = vld [vmem:[%s2 + $0x40] sm:$0xf]
        %v5501 = vld [vmem:[%s2 + $0x44] sm:$0xf]
        %v5502 = vld [vmem:[%s2 + $0x48] sm:$0xf]
        %v5503 = vld [vmem:[%s2 + $0x4c] sm:$0xf]
        %v5504 = vld [vmem:[%s2 + $0x50] sm:$0xf]
        %v5505 = vld [vmem:[%s2 + $0x54] sm:$0xf]
        %v5506 = vld [vmem:[%s2 + $0x58] sm:$0xf]
        %v5507 = vld [vmem:[%s2 + $0x5c] sm:$0xf]
        %v5508 = vld [vmem:[%s2 + $0x60] sm:$0xf]
        %v5509 = vld [vmem:[%s2 + $0x64] sm:$0xf]
        %v5510 = vld [vmem:[%s2 + $0x68] sm:$0xf]
        %v5511 = vld [vmem:[%s2 + $0x6c] sm:$0xf]
        %v5512 = vld [vmem:[%s2 + $0x70] sm:$0xf]
        %v5513 = vld [vmem:[%s2 + $0x74] sm:$0xf]
        %v5514 = vld [vmem:[%s2 + $0x78] sm:$0xf]
        %v5515 = vld [vmem:[%s2 + $0x7c] sm:$0xf]
        %v5516 = vld [vmem:[%s2 + $0x80] sm:$0xf]
        %v5517 = vld [vmem:[%s2 + $0x84] sm:$0xf]
        %v5518 = vld [vmem:[%s2 + $0x88] sm:$0xf]
        %v5519 = vld [vmem:[%s2 + $0x8c] sm:$0xf]
        %v5520 = vld [vmem:[%s2 + $0x90] sm:$0xf]
        %v5521 = vld [vmem:[%s2 + $0x94] sm:$0xf]
        %v5522 = vld [vmem:[%s2 + $0x98] sm:$0xf]
        %v5523 = vld [vmem:[%s2 + $0x9c] sm:$0xf]
        %v5524 = vld [vmem:[%s2 + $0xa0] sm:$0xf]
        %v5525 = vld [vmem:[%s2 + $0xa4] sm:$0xf]
        %v5526 = vld [vmem:[%s2 + $0xa8] sm:$0xf]
        %v5527 = vld [vmem:[%s2 + $0xac] sm:$0xf]
        %v5528 = vld [vmem:[%s2 + $0xb0] sm:$0xf]
        %v5529 = vld [vmem:[%s2 + $0xb4] sm:$0xf]
        %v5530 = vld [vmem:[%s2 + $0xb8] sm:$0xf]
        %v5531 = vld [vmem:[%s2 + $0xbc] sm:$0xf]
        %v5532 = vld [vmem:[%s2 + $0xc0] sm:$0xf]
        %v5533 = vld [vmem:[%s2 + $0xc4] sm:$0xf]
        %v5534 = vld [vmem:[%s2 + $0xc8] sm:$0xf]
        %v5535 = vld [vmem:[%s2 + $0xcc] sm:$0xf]
        %v5536 = vld [vmem:[%s2 + $0xd0] sm:$0xf]
        %v5537 = vld [vmem:[%s2 + $0xd4] sm:$0xf]
        %v5538 = vld [vmem:[%s2 + $0xd8] sm:$0xf]
        %v5539 = vld [vmem:[%s2 + $0xdc] sm:$0xf]
        %v5540 = vld [vmem:[%s2 + $0xe0] sm:$0xf]
        %v5541 = vld [vmem:[%s2 + $0xe4] sm:$0xf]
        %v5542 = vld [vmem:[%s2 + $0xe8] sm:$0xf]
        %v5543 = vld [vmem:[%s2 + $0xec] sm:$0xf]
        %v5544 = vld [vmem:[%s2 + $0xf0] sm:$0xf]
        %v5545 = vld [vmem:[%s2 + $0xf4] sm:$0xf]
        %v5546 = vld [vmem:[%s2 + $0xf8] sm:$0xf]
        %v5547 = vld [vmem:[%s2 + $0xfc] sm:$0xf]
        %v5548 = vunpack.c.l.bf16 %v5484
        %v5549 = vunpack.c.l.bf16 %v5485
        %v5550 = vunpack.c.l.bf16 %v5486
        %v5551 = vunpack.c.l.bf16 %v5487
        %v5552 = vunpack.c.l.bf16 %v5488
        %v5553 = vunpack.c.l.bf16 %v5489
        %v5554 = vunpack.c.l.bf16 %v5490
        %v5555 = vunpack.c.l.bf16 %v5491
        %v5556 = vunpack.c.l.bf16 %v5492
        %v5557 = vunpack.c.l.bf16 %v5493
        %v5558 = vunpack.c.l.bf16 %v5494
        %v5559 = vunpack.c.l.bf16 %v5495
        %v5560 = vunpack.c.l.bf16 %v5496
        %v5561 = vunpack.c.l.bf16 %v5497
        %v5562 = vunpack.c.l.bf16 %v5498
        %v5563 = vunpack.c.l.bf16 %v5499
        %v5564 = vunpack.c.l.bf16 %v5500
        %v5565 = vunpack.c.l.bf16 %v5501
        %v5566 = vunpack.c.l.bf16 %v5502
        %v5567 = vunpack.c.l.bf16 %v5503
        %v5568 = vunpack.c.l.bf16 %v5504
        %v5569 = vunpack.c.l.bf16 %v5505
        %v5570 = vunpack.c.l.bf16 %v5506
        %v5571 = vunpack.c.l.bf16 %v5507
        %v5572 = vunpack.c.l.bf16 %v5508
        %v5573 = vunpack.c.l.bf16 %v5509
        %v5574 = vunpack.c.l.bf16 %v5510
        %v5575 = vunpack.c.l.bf16 %v5511
        %v5576 = vunpack.c.l.bf16 %v5512
        %v5577 = vunpack.c.l.bf16 %v5513
        %v5578 = vunpack.c.l.bf16 %v5514
        %v5579 = vunpack.c.l.bf16 %v5515
        %v5580 = vunpack.c.l.bf16 %v5516
        %v5581 = vunpack.c.l.bf16 %v5517
        %v5582 = vunpack.c.l.bf16 %v5518
        %v5583 = vunpack.c.l.bf16 %v5519
        %v5584 = vunpack.c.l.bf16 %v5520
        %v5585 = vunpack.c.l.bf16 %v5521
        %v5586 = vunpack.c.l.bf16 %v5522
        %v5587 = vunpack.c.l.bf16 %v5523
        %v5588 = vunpack.c.l.bf16 %v5524
        %v5589 = vunpack.c.l.bf16 %v5525
        %v5590 = vunpack.c.l.bf16 %v5526
        %v5591 = vunpack.c.l.bf16 %v5527
        %v5592 = vunpack.c.l.bf16 %v5528
        %v5593 = vunpack.c.l.bf16 %v5529
        %v5594 = vunpack.c.l.bf16 %v5530
        %v5595 = vunpack.c.l.bf16 %v5531
        %v5596 = vunpack.c.l.bf16 %v5532
        %v5597 = vunpack.c.l.bf16 %v5533
        %v5598 = vunpack.c.l.bf16 %v5534
        %v5599 = vunpack.c.l.bf16 %v5535
        %v5600 = vunpack.c.l.bf16 %v5536
        %v5601 = vunpack.c.l.bf16 %v5537
        %v5602 = vunpack.c.l.bf16 %v5538
        %v5603 = vunpack.c.l.bf16 %v5539
        %v5604 = vunpack.c.l.bf16 %v5540
        %v5605 = vunpack.c.l.bf16 %v5541
        %v5606 = vunpack.c.l.bf16 %v5542
        %v5607 = vunpack.c.l.bf16 %v5543
        %v5608 = vunpack.c.l.bf16 %v5544
        %v5609 = vunpack.c.l.bf16 %v5545
        %v5610 = vunpack.c.l.bf16 %v5546
        %v5611 = vunpack.c.l.bf16 %v5547
        %5676 = vrot.lane.b32.xlu0 %v5357, 96
        %v5677 = vpop.permute.xlu0 %5676
        %5678 = vrot.lane.b32.xlu0 %v5359, 96
        %v5679 = vpop.permute.xlu0 %5678
        %5680 = vrot.lane.b32.xlu0 %v5361, 96
        %v5681 = vpop.permute.xlu0 %5680
        %5682 = vrot.lane.b32.xlu0 %v5363, 96
        %v5683 = vpop.permute.xlu0 %5682
        %5684 = vrot.lane.b32.xlu0 %v5365, 96
        %v5685 = vpop.permute.xlu0 %5684
        %5686 = vrot.lane.b32.xlu0 %v5367, 96
        %v5687 = vpop.permute.xlu0 %5686
        %5688 = vrot.lane.b32.xlu0 %v5369, 96
        %v5689 = vpop.permute.xlu0 %5688
        %5690 = vrot.lane.b32.xlu0 %v5371, 96
        %v5691 = vpop.permute.xlu0 %5690
        %5692 = vrot.lane.b32.xlu0 %v5373, 96
        %v5693 = vpop.permute.xlu0 %5692
        %5694 = vrot.lane.b32.xlu0 %v5375, 96
        %v5695 = vpop.permute.xlu0 %5694
        %5696 = vrot.lane.b32.xlu0 %v5377, 96
        %v5697 = vpop.permute.xlu0 %5696
        %5698 = vrot.lane.b32.xlu0 %v5379, 96
        %v5699 = vpop.permute.xlu0 %5698
        %5700 = vrot.lane.b32.xlu0 %v5381, 96
        %v5701 = vpop.permute.xlu0 %5700
        %5702 = vrot.lane.b32.xlu0 %v5383, 96
        %v5703 = vpop.permute.xlu0 %5702
        %5704 = vrot.lane.b32.xlu0 %v5385, 96
        %v5705 = vpop.permute.xlu0 %5704
        %5706 = vrot.lane.b32.xlu0 %v5387, 96
        %v5707 = vpop.permute.xlu0 %5706
        %5708 = vrot.lane.b32.xlu0 %v5389, 96
        %v5709 = vpop.permute.xlu0 %5708
        %5710 = vrot.lane.b32.xlu0 %v5391, 96
        %v5711 = vpop.permute.xlu0 %5710
        %5712 = vrot.lane.b32.xlu0 %v5393, 96
        %v5713 = vpop.permute.xlu0 %5712
        %5714 = vrot.lane.b32.xlu0 %v5395, 96
        %v5715 = vpop.permute.xlu0 %5714
        %5716 = vrot.lane.b32.xlu0 %v5397, 96
        %v5717 = vpop.permute.xlu0 %5716
        %5718 = vrot.lane.b32.xlu0 %v5399, 96
        %v5719 = vpop.permute.xlu0 %5718
        %5720 = vrot.lane.b32.xlu0 %v5401, 96
        %v5721 = vpop.permute.xlu0 %5720
        %5722 = vrot.lane.b32.xlu0 %v5403, 96
        %v5723 = vpop.permute.xlu0 %5722
        %5724 = vrot.lane.b32.xlu0 %v5405, 96
        %v5725 = vpop.permute.xlu0 %5724
        %5726 = vrot.lane.b32.xlu0 %v5407, 96
        %v5727 = vpop.permute.xlu0 %5726
        %5728 = vrot.lane.b32.xlu0 %v5409, 96
        %v5729 = vpop.permute.xlu0 %5728
        %5730 = vrot.lane.b32.xlu0 %v5411, 96
        %v5731 = vpop.permute.xlu0 %5730
        %5732 = vrot.lane.b32.xlu0 %v5413, 96
        %v5733 = vpop.permute.xlu0 %5732
        %5734 = vrot.lane.b32.xlu0 %v5415, 96
        %v5735 = vpop.permute.xlu0 %5734
        %5736 = vrot.lane.b32.xlu0 %v5417, 96
        %v5737 = vpop.permute.xlu0 %5736
        %5738 = vrot.lane.b32.xlu0 %v5419, 96
        %v5739 = vpop.permute.xlu0 %5738
        %5740 = vrot.lane.b32.xlu0 %v5421, 96
        %v5741 = vpop.permute.xlu0 %5740
        %5742 = vrot.lane.b32.xlu0 %v5423, 96
        %v5743 = vpop.permute.xlu0 %5742
        %5744 = vrot.lane.b32.xlu0 %v5425, 96
        %v5745 = vpop.permute.xlu0 %5744
        %5746 = vrot.lane.b32.xlu0 %v5427, 96
        %v5747 = vpop.permute.xlu0 %5746
        %5748 = vrot.lane.b32.xlu0 %v5429, 96
        %v5749 = vpop.permute.xlu0 %5748
        %5750 = vrot.lane.b32.xlu0 %v5431, 96
        %v5751 = vpop.permute.xlu0 %5750
        %5752 = vrot.lane.b32.xlu0 %v5433, 96
        %v5753 = vpop.permute.xlu0 %5752
        %5754 = vrot.lane.b32.xlu0 %v5435, 96
        %v5755 = vpop.permute.xlu0 %5754
        %5756 = vrot.lane.b32.xlu0 %v5437, 96
        %v5757 = vpop.permute.xlu0 %5756
        %5758 = vrot.lane.b32.xlu0 %v5439, 96
        %v5759 = vpop.permute.xlu0 %5758
        %5760 = vrot.lane.b32.xlu0 %v5441, 96
        %v5761 = vpop.permute.xlu0 %5760
        %5762 = vrot.lane.b32.xlu0 %v5443, 96
        %v5763 = vpop.permute.xlu0 %5762
        %5764 = vrot.lane.b32.xlu0 %v5445, 96
        %v5765 = vpop.permute.xlu0 %5764
        %5766 = vrot.lane.b32.xlu0 %v5447, 96
        %v5767 = vpop.permute.xlu0 %5766
        %5768 = vrot.lane.b32.xlu0 %v5449, 96
        %v5769 = vpop.permute.xlu0 %5768
        %5770 = vrot.lane.b32.xlu0 %v5451, 96
        %v5771 = vpop.permute.xlu0 %5770
        %5772 = vrot.lane.b32.xlu0 %v5453, 96
        %v5773 = vpop.permute.xlu0 %5772
        %5774 = vrot.lane.b32.xlu0 %v5455, 96
        %v5775 = vpop.permute.xlu0 %5774
        %5776 = vrot.lane.b32.xlu0 %v5457, 96
        %v5777 = vpop.permute.xlu0 %5776
        %5778 = vrot.lane.b32.xlu0 %v5459, 96
        %v5779 = vpop.permute.xlu0 %5778
        %5780 = vrot.lane.b32.xlu0 %v5461, 96
        %v5781 = vpop.permute.xlu0 %5780
        %5782 = vrot.lane.b32.xlu0 %v5463, 96
        %v5783 = vpop.permute.xlu0 %5782
        %5784 = vrot.lane.b32.xlu0 %v5465, 96
        %v5785 = vpop.permute.xlu0 %5784
        %5786 = vrot.lane.b32.xlu0 %v5467, 96
        %v5787 = vpop.permute.xlu0 %5786
        %5788 = vrot.lane.b32.xlu0 %v5469, 96
        %v5789 = vpop.permute.xlu0 %5788
        %5790 = vrot.lane.b32.xlu0 %v5471, 96
        %v5791 = vpop.permute.xlu0 %5790
        %5792 = vrot.lane.b32.xlu0 %v5473, 96
        %v5793 = vpop.permute.xlu0 %5792
        %5794 = vrot.lane.b32.xlu0 %v5475, 96
        %v5795 = vpop.permute.xlu0 %5794
        %5796 = vrot.lane.b32.xlu0 %v5477, 96
        %v5797 = vpop.permute.xlu0 %5796
        %5798 = vrot.lane.b32.xlu0 %v5479, 96
        %v5799 = vpop.permute.xlu0 %5798
        %5800 = vrot.lane.b32.xlu0 %v5481, 96
        %v5801 = vpop.permute.xlu0 %5800
        %5802 = vrot.lane.b32.xlu0 %v5483, 96
        %v5803 = vpop.permute.xlu0 %5802
        %v5868 = vmul.f32 %v5548, %v5677
        %v5869 = vmul.f32 %v5549, %v5679
        %v5870 = vmul.f32 %v5550, %v5681
        %v5871 = vmul.f32 %v5551, %v5683
        %v5872 = vmul.f32 %v5552, %v5685
        %v5873 = vmul.f32 %v5553, %v5687
        %v5874 = vmul.f32 %v5554, %v5689
        %v5875 = vmul.f32 %v5555, %v5691
        %v5876 = vmul.f32 %v5556, %v5693
        %v5877 = vmul.f32 %v5557, %v5695
        %v5878 = vmul.f32 %v5558, %v5697
        %v5879 = vmul.f32 %v5559, %v5699
        %v5880 = vmul.f32 %v5560, %v5701
        %v5881 = vmul.f32 %v5561, %v5703
        %v5882 = vmul.f32 %v5562, %v5705
        %v5883 = vmul.f32 %v5563, %v5707
        %v5884 = vmul.f32 %v5564, %v5709
        %v5885 = vmul.f32 %v5565, %v5711
        %v5886 = vmul.f32 %v5566, %v5713
        %v5887 = vmul.f32 %v5567, %v5715
        %v5888 = vmul.f32 %v5568, %v5717
        %v5889 = vmul.f32 %v5569, %v5719
        %v5890 = vmul.f32 %v5570, %v5721
        %v5891 = vmul.f32 %v5571, %v5723
        %v5892 = vmul.f32 %v5572, %v5725
        %v5893 = vmul.f32 %v5573, %v5727
        %v5894 = vmul.f32 %v5574, %v5729
        %v5895 = vmul.f32 %v5575, %v5731
        %v5896 = vmul.f32 %v5576, %v5733
        %v5897 = vmul.f32 %v5577, %v5735
        %v5898 = vmul.f32 %v5578, %v5737
        %v5899 = vmul.f32 %v5579, %v5739
        %v5900 = vmul.f32 %v5580, %v5741
        %v5901 = vmul.f32 %v5581, %v5743
        %v5902 = vmul.f32 %v5582, %v5745
        %v5903 = vmul.f32 %v5583, %v5747
        %v5904 = vmul.f32 %v5584, %v5749
        %v5905 = vmul.f32 %v5585, %v5751
        %v5906 = vmul.f32 %v5586, %v5753
        %v5907 = vmul.f32 %v5587, %v5755
        %v5908 = vmul.f32 %v5588, %v5757
        %v5909 = vmul.f32 %v5589, %v5759
        %v5910 = vmul.f32 %v5590, %v5761
        %v5911 = vmul.f32 %v5591, %v5763
        %v5912 = vmul.f32 %v5592, %v5765
        %v5913 = vmul.f32 %v5593, %v5767
        %v5914 = vmul.f32 %v5594, %v5769
        %v5915 = vmul.f32 %v5595, %v5771
        %v5916 = vmul.f32 %v5596, %v5773
        %v5917 = vmul.f32 %v5597, %v5775
        %v5918 = vmul.f32 %v5598, %v5777
        %v5919 = vmul.f32 %v5599, %v5779
        %v5920 = vmul.f32 %v5600, %v5781
        %v5921 = vmul.f32 %v5601, %v5783
        %v5922 = vmul.f32 %v5602, %v5785
        %v5923 = vmul.f32 %v5603, %v5787
        %v5924 = vmul.f32 %v5604, %v5789
        %v5925 = vmul.f32 %v5605, %v5791
        %v5926 = vmul.f32 %v5606, %v5793
        %v5927 = vmul.f32 %v5607, %v5795
        %v5928 = vmul.f32 %v5608, %v5797
        %v5929 = vmul.f32 %v5609, %v5799
        %v5930 = vmul.f32 %v5610, %v5801
        %v5931 = vmul.f32 %v5611, %v5803
        %vm5932 = vcmask 261120
        %v5933 = vsel %vm5932, %v5868, 0.0
        %v5934 = vsel %vm5932, %v5869, 0.0
        %v5935 = vsel %vm5932, %v5870, 0.0
        %v5936 = vsel %vm5932, %v5871, 0.0
        %v5937 = vsel %vm5932, %v5872, 0.0
        %v5938 = vsel %vm5932, %v5873, 0.0
        %v5939 = vsel %vm5932, %v5874, 0.0
        %v5940 = vsel %vm5932, %v5875, 0.0
        %v5941 = vsel %vm5932, %v5876, 0.0
        %v5942 = vsel %vm5932, %v5877, 0.0
        %v5943 = vsel %vm5932, %v5878, 0.0
        %v5944 = vsel %vm5932, %v5879, 0.0
        %v5945 = vsel %vm5932, %v5880, 0.0
        %v5946 = vsel %vm5932, %v5881, 0.0
        %v5947 = vsel %vm5932, %v5882, 0.0
        %v5948 = vsel %vm5932, %v5883, 0.0
        %v5949 = vsel %vm5932, %v5884, 0.0
        %v5950 = vsel %vm5932, %v5885, 0.0
        %v5951 = vsel %vm5932, %v5886, 0.0
        %v5952 = vsel %vm5932, %v5887, 0.0
        %v5953 = vsel %vm5932, %v5888, 0.0
        %v5954 = vsel %vm5932, %v5889, 0.0
        %v5955 = vsel %vm5932, %v5890, 0.0
        %v5956 = vsel %vm5932, %v5891, 0.0
        %v5957 = vsel %vm5932, %v5892, 0.0
        %v5958 = vsel %vm5932, %v5893, 0.0
        %v5959 = vsel %vm5932, %v5894, 0.0
        %v5960 = vsel %vm5932, %v5895, 0.0
        %v5961 = vsel %vm5932, %v5896, 0.0
        %v5962 = vsel %vm5932, %v5897, 0.0
        %v5963 = vsel %vm5932, %v5898, 0.0
        %v5964 = vsel %vm5932, %v5899, 0.0
        %v5965 = vsel %vm5932, %v5900, 0.0
        %v5966 = vsel %vm5932, %v5901, 0.0
        %v5967 = vsel %vm5932, %v5902, 0.0
        %v5968 = vsel %vm5932, %v5903, 0.0
        %v5969 = vsel %vm5932, %v5904, 0.0
        %v5970 = vsel %vm5932, %v5905, 0.0
        %v5971 = vsel %vm5932, %v5906, 0.0
        %v5972 = vsel %vm5932, %v5907, 0.0
        %v5973 = vsel %vm5932, %v5908, 0.0
        %v5974 = vsel %vm5932, %v5909, 0.0
        %v5975 = vsel %vm5932, %v5910, 0.0
        %v5976 = vsel %vm5932, %v5911, 0.0
        %v5977 = vsel %vm5932, %v5912, 0.0
        %v5978 = vsel %vm5932, %v5913, 0.0
        %v5979 = vsel %vm5932, %v5914, 0.0
        %v5980 = vsel %vm5932, %v5915, 0.0
        %v5981 = vsel %vm5932, %v5916, 0.0
        %v5982 = vsel %vm5932, %v5917, 0.0
        %v5983 = vsel %vm5932, %v5918, 0.0
        %v5984 = vsel %vm5932, %v5919, 0.0
        %v5985 = vsel %vm5932, %v5920, 0.0
        %v5986 = vsel %vm5932, %v5921, 0.0
        %v5987 = vsel %vm5932, %v5922, 0.0
        %v5988 = vsel %vm5932, %v5923, 0.0
        %v5989 = vsel %vm5932, %v5924, 0.0
        %v5990 = vsel %vm5932, %v5925, 0.0
        %v5991 = vsel %vm5932, %v5926, 0.0
        %v5992 = vsel %vm5932, %v5927, 0.0
        %v5993 = vsel %vm5932, %v5928, 0.0
        %v5994 = vsel %vm5932, %v5929, 0.0
        %v5995 = vsel %vm5932, %v5930, 0.0
        %v5996 = vsel %vm5932, %v5931, 0.0
        %v5997 = vpack.c.bf16 %v5934, %v5933
        %v5998 = vpack.c.bf16 %v5936, %v5935
        %v5999 = vpack.c.bf16 %v5938, %v5937
        %v6000 = vpack.c.bf16 %v5940, %v5939
        %v6001 = vpack.c.bf16 %v5942, %v5941
        %v6002 = vpack.c.bf16 %v5944, %v5943
        %v6003 = vpack.c.bf16 %v5946, %v5945
        %v6004 = vpack.c.bf16 %v5948, %v5947
        %v6005 = vpack.c.bf16 %v5950, %v5949
        %v6006 = vpack.c.bf16 %v5952, %v5951
        %v6007 = vpack.c.bf16 %v5954, %v5953
        %v6008 = vpack.c.bf16 %v5956, %v5955
        %v6009 = vpack.c.bf16 %v5958, %v5957
        %v6010 = vpack.c.bf16 %v5960, %v5959
        %v6011 = vpack.c.bf16 %v5962, %v5961
        %v6012 = vpack.c.bf16 %v5964, %v5963
        %v6013 = vpack.c.bf16 %v5966, %v5965
        %v6014 = vpack.c.bf16 %v5968, %v5967
        %v6015 = vpack.c.bf16 %v5970, %v5969
        %v6016 = vpack.c.bf16 %v5972, %v5971
        %v6017 = vpack.c.bf16 %v5974, %v5973
        %v6018 = vpack.c.bf16 %v5976, %v5975
        %v6019 = vpack.c.bf16 %v5978, %v5977
        %v6020 = vpack.c.bf16 %v5980, %v5979
        %v6021 = vpack.c.bf16 %v5982, %v5981
        %v6022 = vpack.c.bf16 %v5984, %v5983
        %v6023 = vpack.c.bf16 %v5986, %v5985
        %v6024 = vpack.c.bf16 %v5988, %v5987
        %v6025 = vpack.c.bf16 %v5990, %v5989
        %v6026 = vpack.c.bf16 %v5992, %v5991
        %v6027 = vpack.c.bf16 %v5994, %v5993
        %v6028 = vpack.c.bf16 %v5996, %v5995
        %v6029 = vld [vmem:[%s4] sm:$0xf]
        %v6030 = vld [vmem:[%s4 + $0x4] sm:$0xf]
        %v6031 = vld [vmem:[%s4 + $0x8] sm:$0xf]
        %v6032 = vld [vmem:[%s4 + $0xc] sm:$0xf]
        %v6033 = vld [vmem:[%s4 + $0x10] sm:$0xf]
        %v6034 = vld [vmem:[%s4 + $0x14] sm:$0xf]
        %v6035 = vld [vmem:[%s4 + $0x18] sm:$0xf]
        %v6036 = vld [vmem:[%s4 + $0x1c] sm:$0xf]
        %v6037 = vld [vmem:[%s4 + $0x20] sm:$0xf]
        %v6038 = vld [vmem:[%s4 + $0x24] sm:$0xf]
        %v6039 = vld [vmem:[%s4 + $0x28] sm:$0xf]
        %v6040 = vld [vmem:[%s4 + $0x2c] sm:$0xf]
        %v6041 = vld [vmem:[%s4 + $0x30] sm:$0xf]
        %v6042 = vld [vmem:[%s4 + $0x34] sm:$0xf]
        %v6043 = vld [vmem:[%s4 + $0x38] sm:$0xf]
        %v6044 = vld [vmem:[%s4 + $0x3c] sm:$0xf]
        %v6061 = vunpack.c.l.b16 %v6029
        %v6062 = vunpack.c.l.b16 %v6030
        %v6063 = vunpack.c.l.b16 %v6031
        %v6064 = vunpack.c.l.b16 %v6032
        %v6065 = vunpack.c.l.b16 %v6033
        %v6066 = vunpack.c.l.b16 %v6034
        %v6067 = vunpack.c.l.b16 %v6035
        %v6068 = vunpack.c.l.b16 %v6036
        %v6069 = vunpack.c.l.b16 %v6037
        %v6070 = vunpack.c.l.b16 %v6038
        %v6071 = vunpack.c.l.b16 %v6039
        %v6072 = vunpack.c.l.b16 %v6040
        %v6073 = vunpack.c.l.b16 %v6041
        %v6074 = vunpack.c.l.b16 %v6042
        %v6075 = vunpack.c.l.b16 %v6043
        %v6076 = vunpack.c.l.b16 %v6044
        %v6077 = vpack.c.b16 %v6062, %v6061
        %v6078 = vpack.c.b16 %v6064, %v6063
        %v6079 = vpack.c.b16 %v6066, %v6065
        %v6080 = vpack.c.b16 %v6068, %v6067
        %v6081 = vpack.c.b16 %v6070, %v6069
        %v6082 = vpack.c.b16 %v6072, %v6071
        %v6083 = vpack.c.b16 %v6074, %v6073
        %v6084 = vpack.c.b16 %v6076, %v6075
        %6093 = vmatprep.subr.bf16.mxu0 0
        %6094 = vmatpush1.bf16.msra.mxu0 %v6077
        %6095 = vmatprep.subr.bf16.mxu0 0
        %6096 = vmatpush1.bf16.msra.mxu0 %v6078
        %6097 = vmatprep.subr.bf16.mxu0 0
        %6098 = vmatpush1.bf16.msra.mxu0 %v6079
        %6099 = vmatprep.subr.bf16.mxu0 0
        %6100 = vmatpush1.bf16.msra.mxu0 %v6080
        %6101 = vmatprep.subr.bf16.mxu0 0
        %6102 = vmatpush1.bf16.msra.mxu0 %v6081
        %6103 = vmatprep.subr.bf16.mxu0 0
        %6104 = vmatpush1.bf16.msra.mxu0 %v6082
        %6105 = vmatprep.subr.bf16.mxu0 0
        %6106 = vmatpush1.bf16.msra.mxu0 %v6083
        %6107 = vmatprep.subr.bf16.mxu0 0
        %6108 = vmatpush1.bf16.msra.mxu0 %v6084
        %6109 = vmatprep.subr.bf16.mxu0 0
        %6110 = vmatpush1.bf16.msra.mxu0 0
        %6111 = vmatprep.subr.bf16.mxu0 0
        %6112 = vmatpush1.bf16.msra.mxu0 0
        %6113 = vmatprep.subr.bf16.mxu0 0
        %6114 = vmatpush1.bf16.msra.mxu0 0
        %6115 = vmatprep.subr.bf16.mxu0 0
        %6116 = vmatpush1.bf16.msra.mxu0 0
        %6117 = vmatprep.subr.bf16.mxu0 0
        %6118 = vmatpush1.bf16.msra.mxu0 0
        %6119 = vmatprep.subr.bf16.mxu0 0
        %6120 = vmatpush1.bf16.msra.mxu0 0
        %6121 = vmatprep.subr.bf16.mxu0 0
        %6122 = vmatpush1.bf16.msra.mxu0 0
        %6123 = vmatprep.subr.bf16.mxu0 0
        %6124 = vmatpush1.bf16.msra.mxu0 0
        %6125 = vmatprep.mubr.bf16.mxu0 0
        %6126 = vmatmul.mubr.bf16.gmra.mrb[0].mxu0 %v5997
        %v6127 = vpop.f32.mrb[0].mxu0
        %v6128 = vadd.f32 0.0, %v6127
        %v6129 = vpop.f32.mrb[0].mxu0
        %v6130 = vpop.f32.mrb[0].mxu0
        %v6131 = vadd.f32 0.0, %v6130
        %v6132 = vpop.f32.mrb[0].mxu0
        %6133 = vmatprep.mubr.bf16.mxu0 0
        %6134 = vmatmul.mubr.bf16.gmra.mrb[0].mxu0 %v5998
        %v6135 = vpop.f32.mrb[0].mxu0
        %v6136 = vadd.f32 0.0, %v6135
        %v6137 = vpop.f32.mrb[0].mxu0
        %v6138 = vpop.f32.mrb[0].mxu0
        %v6139 = vadd.f32 0.0, %v6138
        %v6140 = vpop.f32.mrb[0].mxu0
        %6141 = vmatprep.mubr.bf16.mxu0 0
        %6142 = vmatmul.mubr.bf16.gmra.mrb[0].mxu0 %v5999
        %v6143 = vpop.f32.mrb[0].mxu0
        %v6144 = vadd.f32 0.0, %v6143
        %v6145 = vpop.f32.mrb[0].mxu0
        %v6146 = vpop.f32.mrb[0].mxu0
        %v6147 = vadd.f32 0.0, %v6146
        %v6148 = vpop.f32.mrb[0].mxu0
        %6149 = vmatprep.mubr.bf16.mxu0 0
        %6150 = vmatmul.mubr.bf16.gmra.mrb[0].mxu0 %v6000
        %v6151 = vpop.f32.mrb[0].mxu0
        %v6152 = vadd.f32 0.0, %v6151
        %v6153 = vpop.f32.mrb[0].mxu0
        %v6154 = vpop.f32.mrb[0].mxu0
        %v6155 = vadd.f32 0.0, %v6154
        %v6156 = vpop.f32.mrb[0].mxu0
        %6157 = vmatprep.mubr.bf16.mxu0 0
        %6158 = vmatmul.mubr.bf16.gmra.mrb[0].mxu0 %v6001
        %v6159 = vpop.f32.mrb[0].mxu0
        %v6160 = vadd.f32 0.0, %v6159
        %v6161 = vpop.f32.mrb[0].mxu0
        %v6162 = vpop.f32.mrb[0].mxu0
        %v6163 = vadd.f32 0.0, %v6162
        %v6164 = vpop.f32.mrb[0].mxu0
        %6165 = vmatprep.mubr.bf16.mxu0 0
        %6166 = vmatmul.mubr.bf16.gmra.mrb[0].mxu0 %v6002
        %v6167 = vpop.f32.mrb[0].mxu0
        %v6168 = vadd.f32 0.0, %v6167
        %v6169 = vpop.f32.mrb[0].mxu0
        %v6170 = vpop.f32.mrb[0].mxu0
        %v6171 = vadd.f32 0.0, %v6170
        %v6172 = vpop.f32.mrb[0].mxu0
        %6173 = vmatprep.mubr.bf16.mxu0 0
        %6174 = vmatmul.mubr.bf16.gmra.mrb[0].mxu0 %v6003
        %v6175 = vpop.f32.mrb[0].mxu0
        %v6176 = vadd.f32 0.0, %v6175
        %v6177 = vpop.f32.mrb[0].mxu0
        %v6178 = vpop.f32.mrb[0].mxu0
        %v6179 = vadd.f32 0.0, %v6178
        %v6180 = vpop.f32.mrb[0].mxu0
        %6181 = vmatprep.mubr.bf16.mxu0 0
        %6182 = vmatmul.mubr.bf16.gmra.mrb[0].mxu0 %v6004
        %v6183 = vpop.f32.mrb[0].mxu0
        %v6184 = vadd.f32 0.0, %v6183
        %v6185 = vpop.f32.mrb[0].mxu0
        %v6186 = vpop.f32.mrb[0].mxu0
        %v6187 = vadd.f32 0.0, %v6186
        %v6188 = vpop.f32.mrb[0].mxu0
        %6189 = vmatprep.mubr.bf16.mxu0 0
        %6190 = vmatmul.mubr.bf16.gmra.mrb[0].mxu0 %v6005
        %v6191 = vpop.f32.mrb[0].mxu0
        %v6192 = vadd.f32 0.0, %v6191
        %v6193 = vpop.f32.mrb[0].mxu0
        %v6194 = vpop.f32.mrb[0].mxu0
        %v6195 = vadd.f32 0.0, %v6194
        %v6196 = vpop.f32.mrb[0].mxu0
        %6197 = vmatprep.mubr.bf16.mxu0 0
        %6198 = vmatmul.mubr.bf16.gmra.mrb[0].mxu0 %v6006
        %v6199 = vpop.f32.mrb[0].mxu0
        %v6200 = vadd.f32 0.0, %v6199
        %v6201 = vpop.f32.mrb[0].mxu0
        %v6202 = vpop.f32.mrb[0].mxu0
        %v6203 = vadd.f32 0.0, %v6202
        %v6204 = vpop.f32.mrb[0].mxu0
        %6205 = vmatprep.mubr.bf16.mxu0 0
        %6206 = vmatmul.mubr.bf16.gmra.mrb[0].mxu0 %v6007
        %v6207 = vpop.f32.mrb[0].mxu0
        %v6208 = vadd.f32 0.0, %v6207
        %v6209 = vpop.f32.mrb[0].mxu0
        %v6210 = vpop.f32.mrb[0].mxu0
        %v6211 = vadd.f32 0.0, %v6210
        %v6212 = vpop.f32.mrb[0].mxu0
        %6213 = vmatprep.mubr.bf16.mxu0 0
        %6214 = vmatmul.mubr.bf16.gmra.mrb[0].mxu0 %v6008
        %v6215 = vpop.f32.mrb[0].mxu0
        %v6216 = vadd.f32 0.0, %v6215
        %v6217 = vpop.f32.mrb[0].mxu0
        %v6218 = vpop.f32.mrb[0].mxu0
        %v6219 = vadd.f32 0.0, %v6218
        %v6220 = vpop.f32.mrb[0].mxu0
        %6221 = vmatprep.mubr.bf16.mxu0 0
        %6222 = vmatmul.mubr.bf16.gmra.mrb[0].mxu0 %v6009
        %v6223 = vpop.f32.mrb[0].mxu0
        %v6224 = vadd.f32 0.0, %v6223
        %v6225 = vpop.f32.mrb[0].mxu0
        %v6226 = vpop.f32.mrb[0].mxu0
        %v6227 = vadd.f32 0.0, %v6226
        %v6228 = vpop.f32.mrb[0].mxu0
        %6229 = vmatprep.mubr.bf16.mxu0 0
        %6230 = vmatmul.mubr.bf16.gmra.mrb[0].mxu0 %v6010
        %v6231 = vpop.f32.mrb[0].mxu0
        %v6232 = vadd.f32 0.0, %v6231
        %v6233 = vpop.f32.mrb[0].mxu0
        %v6234 = vpop.f32.mrb[0].mxu0
        %v6235 = vadd.f32 0.0, %v6234
        %v6236 = vpop.f32.mrb[0].mxu0
        %6237 = vmatprep.mubr.bf16.mxu0 0
        %6238 = vmatmul.mubr.bf16.gmra.mrb[0].mxu0 %v6011
        %v6239 = vpop.f32.mrb[0].mxu0
        %v6240 = vadd.f32 0.0, %v6239
        %v6241 = vpop.f32.mrb[0].mxu0
        %v6242 = vpop.f32.mrb[0].mxu0
        %v6243 = vadd.f32 0.0, %v6242
        %v6244 = vpop.f32.mrb[0].mxu0
        %6245 = vmatprep.mubr.bf16.mxu0 0
        %6246 = vmatmul.mubr.bf16.gmra.mrb[0].mxu0 %v6012
        %v6247 = vpop.f32.mrb[0].mxu0
        %v6248 = vadd.f32 0.0, %v6247
        %v6249 = vpop.f32.mrb[0].mxu0
        %v6250 = vpop.f32.mrb[0].mxu0
        %v6251 = vadd.f32 0.0, %v6250
        %v6252 = vpop.f32.mrb[0].mxu0
        %6253 = vmatprep.mubr.bf16.mxu0 0
        %6254 = vmatmul.mubr.bf16.gmra.mrb[0].mxu0 %v6013
        %v6255 = vpop.f32.mrb[0].mxu0
        %v6256 = vadd.f32 0.0, %v6255
        %v6257 = vpop.f32.mrb[0].mxu0
        %v6258 = vpop.f32.mrb[0].mxu0
        %v6259 = vadd.f32 0.0, %v6258
        %v6260 = vpop.f32.mrb[0].mxu0
        %6261 = vmatprep.mubr.bf16.mxu0 0
        %6262 = vmatmul.mubr.bf16.gmra.mrb[0].mxu0 %v6014
        %v6263 = vpop.f32.mrb[0].mxu0
        %v6264 = vadd.f32 0.0, %v6263
        %v6265 = vpop.f32.mrb[0].mxu0
        %v6266 = vpop.f32.mrb[0].mxu0
        %v6267 = vadd.f32 0.0, %v6266
        %v6268 = vpop.f32.mrb[0].mxu0
        %6269 = vmatprep.mubr.bf16.mxu0 0
        %6270 = vmatmul.mubr.bf16.gmra.mrb[0].mxu0 %v6015
        %v6271 = vpop.f32.mrb[0].mxu0
        %v6272 = vadd.f32 0.0, %v6271
        %v6273 = vpop.f32.mrb[0].mxu0
        %v6274 = vpop.f32.mrb[0].mxu0
        %v6275 = vadd.f32 0.0, %v6274
        %v6276 = vpop.f32.mrb[0].mxu0
        %6277 = vmatprep.mubr.bf16.mxu0 0
        %6278 = vmatmul.mubr.bf16.gmra.mrb[0].mxu0 %v6016
        %v6279 = vpop.f32.mrb[0].mxu0
        %v6280 = vadd.f32 0.0, %v6279
        %v6281 = vpop.f32.mrb[0].mxu0
        %v6282 = vpop.f32.mrb[0].mxu0
        %v6283 = vadd.f32 0.0, %v6282
        %v6284 = vpop.f32.mrb[0].mxu0
        %6285 = vmatprep.mubr.bf16.mxu0 0
        %6286 = vmatmul.mubr.bf16.gmra.mrb[0].mxu0 %v6017
        %v6287 = vpop.f32.mrb[0].mxu0
        %v6288 = vadd.f32 0.0, %v6287
        %v6289 = vpop.f32.mrb[0].mxu0
        %v6290 = vpop.f32.mrb[0].mxu0
        %v6291 = vadd.f32 0.0, %v6290
        %v6292 = vpop.f32.mrb[0].mxu0
        %6293 = vmatprep.mubr.bf16.mxu0 0
        %6294 = vmatmul.mubr.bf16.gmra.mrb[0].mxu0 %v6018
        %v6295 = vpop.f32.mrb[0].mxu0
        %v6296 = vadd.f32 0.0, %v6295
        %v6297 = vpop.f32.mrb[0].mxu0
        %v6298 = vpop.f32.mrb[0].mxu0
        %v6299 = vadd.f32 0.0, %v6298
        %v6300 = vpop.f32.mrb[0].mxu0
        %6301 = vmatprep.mubr.bf16.mxu0 0
        %6302 = vmatmul.mubr.bf16.gmra.mrb[0].mxu0 %v6019
        %v6303 = vpop.f32.mrb[0].mxu0
        %v6304 = vadd.f32 0.0, %v6303
        %v6305 = vpop.f32.mrb[0].mxu0
        %v6306 = vpop.f32.mrb[0].mxu0
        %v6307 = vadd.f32 0.0, %v6306
        %v6308 = vpop.f32.mrb[0].mxu0
        %6309 = vmatprep.mubr.bf16.mxu0 0
        %6310 = vmatmul.mubr.bf16.gmra.mrb[0].mxu0 %v6020
        %v6311 = vpop.f32.mrb[0].mxu0
        %v6312 = vadd.f32 0.0, %v6311
        %v6313 = vpop.f32.mrb[0].mxu0
        %v6314 = vpop.f32.mrb[0].mxu0
        %v6315 = vadd.f32 0.0, %v6314
        %v6316 = vpop.f32.mrb[0].mxu0
        %6317 = vmatprep.mubr.bf16.mxu0 0
        %6318 = vmatmul.mubr.bf16.gmra.mrb[0].mxu0 %v6021
        %v6319 = vpop.f32.mrb[0].mxu0
        %v6320 = vadd.f32 0.0, %v6319
        %v6321 = vpop.f32.mrb[0].mxu0
        %v6322 = vpop.f32.mrb[0].mxu0
        %v6323 = vadd.f32 0.0, %v6322
        %v6324 = vpop.f32.mrb[0].mxu0
        %6325 = vmatprep.mubr.bf16.mxu0 0
        %6326 = vmatmul.mubr.bf16.gmra.mrb[0].mxu0 %v6022
        %v6327 = vpop.f32.mrb[0].mxu0
        %v6328 = vadd.f32 0.0, %v6327
        %v6329 = vpop.f32.mrb[0].mxu0
        %v6330 = vpop.f32.mrb[0].mxu0
        %v6331 = vadd.f32 0.0, %v6330
        %v6332 = vpop.f32.mrb[0].mxu0
        %6333 = vmatprep.mubr.bf16.mxu0 0
        %6334 = vmatmul.mubr.bf16.gmra.mrb[0].mxu0 %v6023
        %v6335 = vpop.f32.mrb[0].mxu0
        %v6336 = vadd.f32 0.0, %v6335
        %v6337 = vpop.f32.mrb[0].mxu0
        %v6338 = vpop.f32.mrb[0].mxu0
        %v6339 = vadd.f32 0.0, %v6338
        %v6340 = vpop.f32.mrb[0].mxu0
        %6341 = vmatprep.mubr.bf16.mxu0 0
        %6342 = vmatmul.mubr.bf16.gmra.mrb[0].mxu0 %v6024
        %v6343 = vpop.f32.mrb[0].mxu0
        %v6344 = vadd.f32 0.0, %v6343
        %v6345 = vpop.f32.mrb[0].mxu0
        %v6346 = vpop.f32.mrb[0].mxu0
        %v6347 = vadd.f32 0.0, %v6346
        %v6348 = vpop.f32.mrb[0].mxu0
        %6349 = vmatprep.mubr.bf16.mxu0 0
        %6350 = vmatmul.mubr.bf16.gmra.mrb[0].mxu0 %v6025
        %v6351 = vpop.f32.mrb[0].mxu0
        %v6352 = vadd.f32 0.0, %v6351
        %v6353 = vpop.f32.mrb[0].mxu0
        %v6354 = vpop.f32.mrb[0].mxu0
        %v6355 = vadd.f32 0.0, %v6354
        %v6356 = vpop.f32.mrb[0].mxu0
        %6357 = vmatprep.mubr.bf16.mxu0 0
        %6358 = vmatmul.mubr.bf16.gmra.mrb[0].mxu0 %v6026
        %v6359 = vpop.f32.mrb[0].mxu0
        %v6360 = vadd.f32 0.0, %v6359
        %v6361 = vpop.f32.mrb[0].mxu0
        %v6362 = vpop.f32.mrb[0].mxu0
        %v6363 = vadd.f32 0.0, %v6362
        %v6364 = vpop.f32.mrb[0].mxu0
        %6365 = vmatprep.mubr.bf16.mxu0 0
        %6366 = vmatmul.mubr.bf16.gmra.mrb[0].mxu0 %v6027
        %v6367 = vpop.f32.mrb[0].mxu0
        %v6368 = vadd.f32 0.0, %v6367
        %v6369 = vpop.f32.mrb[0].mxu0
        %v6370 = vpop.f32.mrb[0].mxu0
        %v6371 = vadd.f32 0.0, %v6370
        %v6372 = vpop.f32.mrb[0].mxu0
        %6373 = vmatprep.mubr.bf16.mxu0 0
        %6374 = vmatmul.mubr.bf16.gmra.mrb[0].mxu0 %v6028
        %v6375 = vpop.f32.mrb[0].mxu0
        %v6376 = vadd.f32 0.0, %v6375
        %v6377 = vpop.f32.mrb[0].mxu0
        %v6378 = vpop.f32.mrb[0].mxu0
        %v6379 = vadd.f32 0.0, %v6378
        %v6380 = vpop.f32.mrb[0].mxu0
        %6381 = vdwg.mxu0
        %6382 = vst [vmem:[#allocation6] sm:$0xff] %v6128
        %6383 = vst [vmem:[#allocation6 + $0x8] sm:$0xff] %v6131
        %6384 = vst [vmem:[#allocation6 + $0x10] sm:$0xff] %v6136
        %6385 = vst [vmem:[#allocation6 + $0x18] sm:$0xff] %v6139
        %6386 = vst [vmem:[#allocation6 + $0x20] sm:$0xff] %v6144
        %6387 = vst [vmem:[#allocation6 + $0x28] sm:$0xff] %v6147
        %6388 = vst [vmem:[#allocation6 + $0x30] sm:$0xff] %v6152
        %6389 = vst [vmem:[#allocation6 + $0x38] sm:$0xff] %v6155
        %6390 = vst [vmem:[#allocation6 + $0x40] sm:$0xff] %v6160
        %6391 = vst [vmem:[#allocation6 + $0x48] sm:$0xff] %v6163
        %6392 = vst [vmem:[#allocation6 + $0x50] sm:$0xff] %v6168
        %6393 = vst [vmem:[#allocation6 + $0x58] sm:$0xff] %v6171
        %6394 = vst [vmem:[#allocation6 + $0x60] sm:$0xff] %v6176
        %6395 = vst [vmem:[#allocation6 + $0x68] sm:$0xff] %v6179
        %6396 = vst [vmem:[#allocation6 + $0x70] sm:$0xff] %v6184
        %6397 = vst [vmem:[#allocation6 + $0x78] sm:$0xff] %v6187
        %6398 = vst [vmem:[#allocation6 + $0x80] sm:$0xff] %v6192
        %6399 = vst [vmem:[#allocation6 + $0x88] sm:$0xff] %v6195
        %6400 = vst [vmem:[#allocation6 + $0x90] sm:$0xff] %v6200
        %6401 = vst [vmem:[#allocation6 + $0x98] sm:$0xff] %v6203
        %6402 = vst [vmem:[#allocation6 + $0xa0] sm:$0xff] %v6208
        %6403 = vst [vmem:[#allocation6 + $0xa8] sm:$0xff] %v6211
        %6404 = vst [vmem:[#allocation6 + $0xb0] sm:$0xff] %v6216
        %6405 = vst [vmem:[#allocation6 + $0xb8] sm:$0xff] %v6219
        %6406 = vst [vmem:[#allocation6 + $0xc0] sm:$0xff] %v6224
        %6407 = vst [vmem:[#allocation6 + $0xc8] sm:$0xff] %v6227
        %6408 = vst [vmem:[#allocation6 + $0xd0] sm:$0xff] %v6232
        %6409 = vst [vmem:[#allocation6 + $0xd8] sm:$0xff] %v6235
        %6410 = vst [vmem:[#allocation6 + $0xe0] sm:$0xff] %v6240
        %6411 = vst [vmem:[#allocation6 + $0xe8] sm:$0xff] %v6243
        %6412 = vst [vmem:[#allocation6 + $0xf0] sm:$0xff] %v6248
        %6413 = vst [vmem:[#allocation6 + $0xf8] sm:$0xff] %v6251
        %6414 = vst [vmem:[#allocation6 + $0x100] sm:$0xff] %v6256
        %6415 = vst [vmem:[#allocation6 + $0x108] sm:$0xff] %v6259
        %6416 = vst [vmem:[#allocation6 + $0x110] sm:$0xff] %v6264
        %6417 = vst [vmem:[#allocation6 + $0x118] sm:$0xff] %v6267
        %6418 = vst [vmem:[#allocation6 + $0x120] sm:$0xff] %v6272
        %6419 = vst [vmem:[#allocation6 + $0x128] sm:$0xff] %v6275
        %6420 = vst [vmem:[#allocation6 + $0x130] sm:$0xff] %v6280
        %6421 = vst [vmem:[#allocation6 + $0x138] sm:$0xff] %v6283
        %6422 = vst [vmem:[#allocation6 + $0x140] sm:$0xff] %v6288
        %6423 = vst [vmem:[#allocation6 + $0x148] sm:$0xff] %v6291
        %6424 = vst [vmem:[#allocation6 + $0x150] sm:$0xff] %v6296
        %6425 = vst [vmem:[#allocation6 + $0x158] sm:$0xff] %v6299
        %6426 = vst [vmem:[#allocation6 + $0x160] sm:$0xff] %v6304
        %6427 = vst [vmem:[#allocation6 + $0x168] sm:$0xff] %v6307
        %6428 = vst [vmem:[#allocation6 + $0x170] sm:$0xff] %v6312
        %6429 = vst [vmem:[#allocation6 + $0x178] sm:$0xff] %v6315
        %6430 = vst [vmem:[#allocation6 + $0x180] sm:$0xff] %v6320
        %6431 = vst [vmem:[#allocation6 + $0x188] sm:$0xff] %v6323
        %6432 = vst [vmem:[#allocation6 + $0x190] sm:$0xff] %v6328
        %6433 = vst [vmem:[#allocation6 + $0x198] sm:$0xff] %v6331
        %6434 = vst [vmem:[#allocation6 + $0x1a0] sm:$0xff] %v6336
        %6435 = vst [vmem:[#allocation6 + $0x1a8] sm:$0xff] %v6339
        %6436 = vst [vmem:[#allocation6 + $0x1b0] sm:$0xff] %v6344
        %6437 = vst [vmem:[#allocation6 + $0x1b8] sm:$0xff] %v6347
        %6438 = vst [vmem:[#allocation6 + $0x1c0] sm:$0xff] %v6352
        %6439 = vst [vmem:[#allocation6 + $0x1c8] sm:$0xff] %v6355
        %6440 = vst [vmem:[#allocation6 + $0x1d0] sm:$0xff] %v6360
        %6441 = vst [vmem:[#allocation6 + $0x1d8] sm:$0xff] %v6363
        %6442 = vst [vmem:[#allocation6 + $0x1e0] sm:$0xff] %v6368
        %6443 = vst [vmem:[#allocation6 + $0x1e8] sm:$0xff] %v6371
        %6444 = vst [vmem:[#allocation6 + $0x1f0] sm:$0xff] %v6376
        %6445 = vst [vmem:[#allocation6 + $0x1f8] sm:$0xff] %v6379
        %6446 = vst [vmem:[#allocation2] sm:$0xff] %v5997
        %6447 = vst [vmem:[#allocation2 + $0x8] sm:$0xff] %v5998
        %6448 = vst [vmem:[#allocation2 + $0x10] sm:$0xff] %v5999
        %6449 = vst [vmem:[#allocation2 + $0x18] sm:$0xff] %v6000
        %6450 = vst [vmem:[#allocation2 + $0x20] sm:$0xff] %v6001
        %6451 = vst [vmem:[#allocation2 + $0x28] sm:$0xff] %v6002
        %6452 = vst [vmem:[#allocation2 + $0x30] sm:$0xff] %v6003
        %6453 = vst [vmem:[#allocation2 + $0x38] sm:$0xff] %v6004
        %6454 = vst [vmem:[#allocation2 + $0x40] sm:$0xff] %v6005
        %6455 = vst [vmem:[#allocation2 + $0x48] sm:$0xff] %v6006
        %6456 = vst [vmem:[#allocation2 + $0x50] sm:$0xff] %v6007
        %6457 = vst [vmem:[#allocation2 + $0x58] sm:$0xff] %v6008
        %6458 = vst [vmem:[#allocation2 + $0x60] sm:$0xff] %v6009
        %6459 = vst [vmem:[#allocation2 + $0x68] sm:$0xff] %v6010
        %6460 = vst [vmem:[#allocation2 + $0x70] sm:$0xff] %v6011
        %6461 = vst [vmem:[#allocation2 + $0x78] sm:$0xff] %v6012
        %6462 = vst [vmem:[#allocation2 + $0x80] sm:$0xff] %v6013
        %6463 = vst [vmem:[#allocation2 + $0x88] sm:$0xff] %v6014
        %6464 = vst [vmem:[#allocation2 + $0x90] sm:$0xff] %v6015
        %6465 = vst [vmem:[#allocation2 + $0x98] sm:$0xff] %v6016
        %6466 = vst [vmem:[#allocation2 + $0xa0] sm:$0xff] %v6017
        %6467 = vst [vmem:[#allocation2 + $0xa8] sm:$0xff] %v6018
        %6468 = vst [vmem:[#allocation2 + $0xb0] sm:$0xff] %v6019
        %6469 = vst [vmem:[#allocation2 + $0xb8] sm:$0xff] %v6020
        %6470 = vst [vmem:[#allocation2 + $0xc0] sm:$0xff] %v6021
        %6471 = vst [vmem:[#allocation2 + $0xc8] sm:$0xff] %v6022
        %6472 = vst [vmem:[#allocation2 + $0xd0] sm:$0xff] %v6023
        %6473 = vst [vmem:[#allocation2 + $0xd8] sm:$0xff] %v6024
        %6474 = vst [vmem:[#allocation2 + $0xe0] sm:$0xff] %v6025
        %6475 = vst [vmem:[#allocation2 + $0xe8] sm:$0xff] %v6026
        %6476 = vst [vmem:[#allocation2 + $0xf0] sm:$0xff] %v6027
        %6477 = vst [vmem:[#allocation2 + $0xf8] sm:$0xff] %v6028
        %6478 = vst [vmem:[#allocation3] sm:$0xff] 0
        %6479 = vst [vmem:[#allocation3 + $0x8] sm:$0xff] 0
        %6480 = vst [vmem:[#allocation3 + $0x10] sm:$0xff] 0
        %6481 = vst [vmem:[#allocation3 + $0x18] sm:$0xff] 0
        %6482 = vst [vmem:[#allocation3 + $0x20] sm:$0xff] 0
        %6483 = vst [vmem:[#allocation3 + $0x28] sm:$0xff] 0
        %6484 = vst [vmem:[#allocation3 + $0x30] sm:$0xff] 0
        %6485 = vst [vmem:[#allocation3 + $0x38] sm:$0xff] 0
        %6486 = vst [vmem:[#allocation3 + $0x40] sm:$0xff] 0
        %6487 = vst [vmem:[#allocation3 + $0x48] sm:$0xff] 0
        %6488 = vst [vmem:[#allocation3 + $0x50] sm:$0xff] 0
        %6489 = vst [vmem:[#allocation3 + $0x58] sm:$0xff] 0
        %6490 = vst [vmem:[#allocation3 + $0x60] sm:$0xff] 0
        %6491 = vst [vmem:[#allocation3 + $0x68] sm:$0xff] 0
        %6492 = vst [vmem:[#allocation3 + $0x70] sm:$0xff] 0
        %6493 = vst [vmem:[#allocation3 + $0x78] sm:$0xff] 0
        %6494 = vst [vmem:[#allocation3 + $0x80] sm:$0xff] 0
        %6495 = vst [vmem:[#allocation3 + $0x88] sm:$0xff] 0
        %6496 = vst [vmem:[#allocation3 + $0x90] sm:$0xff] 0
        %6497 = vst [vmem:[#allocation3 + $0x98] sm:$0xff] 0
        %6498 = vst [vmem:[#allocation3 + $0xa0] sm:$0xff] 0
        %6499 = vst [vmem:[#allocation3 + $0xa8] sm:$0xff] 0
        %6500 = vst [vmem:[#allocation3 + $0xb0] sm:$0xff] 0
        %6501 = vst [vmem:[#allocation3 + $0xb8] sm:$0xff] 0
        %6502 = vst [vmem:[#allocation3 + $0xc0] sm:$0xff] 0
        %6503 = vst [vmem:[#allocation3 + $0xc8] sm:$0xff] 0
        %6504 = vst [vmem:[#allocation3 + $0xd0] sm:$0xff] 0
        %6505 = vst [vmem:[#allocation3 + $0xd8] sm:$0xff] 0
        %6506 = vst [vmem:[#allocation3 + $0xe0] sm:$0xff] 0
        %6507 = vst [vmem:[#allocation3 + $0xe8] sm:$0xff] 0
        %6508 = vst [vmem:[#allocation3 + $0xf0] sm:$0xff] 0
        %6509 = vst [vmem:[#allocation3 + $0xf8] sm:$0xff] 0
      $region72: #{gconv_gru_cell.1} parent=43 // pred_fallthru
        _
      %p6510 = scmp.eq.s32.totalorder %s21, 3
      %p6511 = pnand %p6510, %p2886
      %p6512 = pneg %p6511
      // Predicated region
      $region73: #{gconv_gru_cell.1} parent=43 // pred_check
        _
      $region74: #{gconv_gru_cell.1} parent=43 // pred_check_branch
        %6514 = sbr.rel (%p6511) target = $region76
      $region75: #{gconv_gru_cell.1} parent=43 // pred_region
        %v6515 = vld [vmem:[#allocation5] sm:$0xff]
        %v6516 = vld [vmem:[#allocation5 + $0x8] sm:$0xff]
        %v6517 = vld [vmem:[#allocation5 + $0x10] sm:$0xff]
        %v6518 = vld [vmem:[#allocation5 + $0x18] sm:$0xff]
        %v6519 = vld [vmem:[#allocation5 + $0x20] sm:$0xff]
        %v6520 = vld [vmem:[#allocation5 + $0x28] sm:$0xff]
        %v6521 = vld [vmem:[#allocation5 + $0x30] sm:$0xff]
        %v6522 = vld [vmem:[#allocation5 + $0x38] sm:$0xff]
        %v6523 = vld [vmem:[#allocation5 + $0x40] sm:$0xff]
        %v6524 = vld [vmem:[#allocation5 + $0x48] sm:$0xff]
        %v6525 = vld [vmem:[#allocation5 + $0x50] sm:$0xff]
        %v6526 = vld [vmem:[#allocation5 + $0x58] sm:$0xff]
        %v6527 = vld [vmem:[#allocation5 + $0x60] sm:$0xff]
        %v6528 = vld [vmem:[#allocation5 + $0x68] sm:$0xff]
        %v6529 = vld [vmem:[#allocation5 + $0x70] sm:$0xff]
        %v6530 = vld [vmem:[#allocation5 + $0x78] sm:$0xff]
        %v6531 = vld [vmem:[#allocation5 + $0x80] sm:$0xff]
        %v6532 = vld [vmem:[#allocation5 + $0x88] sm:$0xff]
        %v6533 = vld [vmem:[#allocation5 + $0x90] sm:$0xff]
        %v6534 = vld [vmem:[#allocation5 + $0x98] sm:$0xff]
        %v6535 = vld [vmem:[#allocation5 + $0xa0] sm:$0xff]
        %v6536 = vld [vmem:[#allocation5 + $0xa8] sm:$0xff]
        %v6537 = vld [vmem:[#allocation5 + $0xb0] sm:$0xff]
        %v6538 = vld [vmem:[#allocation5 + $0xb8] sm:$0xff]
        %v6539 = vld [vmem:[#allocation5 + $0xc0] sm:$0xff]
        %v6540 = vld [vmem:[#allocation5 + $0xc8] sm:$0xff]
        %v6541 = vld [vmem:[#allocation5 + $0xd0] sm:$0xff]
        %v6542 = vld [vmem:[#allocation5 + $0xd8] sm:$0xff]
        %v6543 = vld [vmem:[#allocation5 + $0xe0] sm:$0xff]
        %v6544 = vld [vmem:[#allocation5 + $0xe8] sm:$0xff]
        %v6545 = vld [vmem:[#allocation5 + $0xf0] sm:$0xff]
        %v6546 = vld [vmem:[#allocation5 + $0xf8] sm:$0xff]
        %v6547 = vld [vmem:[#allocation5 + $0x100] sm:$0xff]
        %v6548 = vld [vmem:[#allocation5 + $0x108] sm:$0xff]
        %v6549 = vld [vmem:[#allocation5 + $0x110] sm:$0xff]
        %v6550 = vld [vmem:[#allocation5 + $0x118] sm:$0xff]
        %v6551 = vld [vmem:[#allocation5 + $0x120] sm:$0xff]
        %v6552 = vld [vmem:[#allocation5 + $0x128] sm:$0xff]
        %v6553 = vld [vmem:[#allocation5 + $0x130] sm:$0xff]
        %v6554 = vld [vmem:[#allocation5 + $0x138] sm:$0xff]
        %v6555 = vld [vmem:[#allocation5 + $0x140] sm:$0xff]
        %v6556 = vld [vmem:[#allocation5 + $0x148] sm:$0xff]
        %v6557 = vld [vmem:[#allocation5 + $0x150] sm:$0xff]
        %v6558 = vld [vmem:[#allocation5 + $0x158] sm:$0xff]
        %v6559 = vld [vmem:[#allocation5 + $0x160] sm:$0xff]
        %v6560 = vld [vmem:[#allocation5 + $0x168] sm:$0xff]
        %v6561 = vld [vmem:[#allocation5 + $0x170] sm:$0xff]
        %v6562 = vld [vmem:[#allocation5 + $0x178] sm:$0xff]
        %v6563 = vld [vmem:[#allocation5 + $0x180] sm:$0xff]
        %v6564 = vld [vmem:[#allocation5 + $0x188] sm:$0xff]
        %v6565 = vld [vmem:[#allocation5 + $0x190] sm:$0xff]
        %v6566 = vld [vmem:[#allocation5 + $0x198] sm:$0xff]
        %v6567 = vld [vmem:[#allocation5 + $0x1a0] sm:$0xff]
        %v6568 = vld [vmem:[#allocation5 + $0x1a8] sm:$0xff]
        %v6569 = vld [vmem:[#allocation5 + $0x1b0] sm:$0xff]
        %v6570 = vld [vmem:[#allocation5 + $0x1b8] sm:$0xff]
        %v6571 = vld [vmem:[#allocation5 + $0x1c0] sm:$0xff]
        %v6572 = vld [vmem:[#allocation5 + $0x1c8] sm:$0xff]
        %v6573 = vld [vmem:[#allocation5 + $0x1d0] sm:$0xff]
        %v6574 = vld [vmem:[#allocation5 + $0x1d8] sm:$0xff]
        %v6575 = vld [vmem:[#allocation5 + $0x1e0] sm:$0xff]
        %v6576 = vld [vmem:[#allocation5 + $0x1e8] sm:$0xff]
        %v6577 = vld [vmem:[#allocation5 + $0x1f0] sm:$0xff]
        %v6578 = vld [vmem:[#allocation5 + $0x1f8] sm:$0xff]
        %v6579 = vld [vmem:[%s5] sm:$0x1]
        %v6581 = vlaneseq
        %v6582 = vshrl.u32 %v6581, 7
        %v6583 = vsub.s32 0, %v6582
        %v6584 = vrot.slane %v6579, %v6583
        %v6586 = vadd.f32 %v6515, %v6584
        %v6587 = vadd.f32 %v6516, %v6584
        %v6588 = vadd.f32 %v6517, %v6584
        %v6589 = vadd.f32 %v6518, %v6584
        %v6590 = vadd.f32 %v6519, %v6584
        %v6591 = vadd.f32 %v6520, %v6584
        %v6592 = vadd.f32 %v6521, %v6584
        %v6593 = vadd.f32 %v6522, %v6584
        %v6594 = vadd.f32 %v6523, %v6584
        %v6595 = vadd.f32 %v6524, %v6584
        %v6596 = vadd.f32 %v6525, %v6584
        %v6597 = vadd.f32 %v6526, %v6584
        %v6598 = vadd.f32 %v6527, %v6584
        %v6599 = vadd.f32 %v6528, %v6584
        %v6600 = vadd.f32 %v6529, %v6584
        %v6601 = vadd.f32 %v6530, %v6584
        %v6602 = vadd.f32 %v6531, %v6584
        %v6603 = vadd.f32 %v6532, %v6584
        %v6604 = vadd.f32 %v6533, %v6584
        %v6605 = vadd.f32 %v6534, %v6584
        %v6606 = vadd.f32 %v6535, %v6584
        %v6607 = vadd.f32 %v6536, %v6584
        %v6608 = vadd.f32 %v6537, %v6584
        %v6609 = vadd.f32 %v6538, %v6584
        %v6610 = vadd.f32 %v6539, %v6584
        %v6611 = vadd.f32 %v6540, %v6584
        %v6612 = vadd.f32 %v6541, %v6584
        %v6613 = vadd.f32 %v6542, %v6584
        %v6614 = vadd.f32 %v6543, %v6584
        %v6615 = vadd.f32 %v6544, %v6584
        %v6616 = vadd.f32 %v6545, %v6584
        %v6617 = vadd.f32 %v6546, %v6584
        %v6618 = vadd.f32 %v6547, %v6584
        %v6619 = vadd.f32 %v6548, %v6584
        %v6620 = vadd.f32 %v6549, %v6584
        %v6621 = vadd.f32 %v6550, %v6584
        %v6622 = vadd.f32 %v6551, %v6584
        %v6623 = vadd.f32 %v6552, %v6584
        %v6624 = vadd.f32 %v6553, %v6584
        %v6625 = vadd.f32 %v6554, %v6584
        %v6626 = vadd.f32 %v6555, %v6584
        %v6627 = vadd.f32 %v6556, %v6584
        %v6628 = vadd.f32 %v6557, %v6584
        %v6629 = vadd.f32 %v6558, %v6584
        %v6630 = vadd.f32 %v6559, %v6584
        %v6631 = vadd.f32 %v6560, %v6584
        %v6632 = vadd.f32 %v6561, %v6584
        %v6633 = vadd.f32 %v6562, %v6584
        %v6634 = vadd.f32 %v6563, %v6584
        %v6635 = vadd.f32 %v6564, %v6584
        %v6636 = vadd.f32 %v6565, %v6584
        %v6637 = vadd.f32 %v6566, %v6584
        %v6638 = vadd.f32 %v6567, %v6584
        %v6639 = vadd.f32 %v6568, %v6584
        %v6640 = vadd.f32 %v6569, %v6584
        %v6641 = vadd.f32 %v6570, %v6584
        %v6642 = vadd.f32 %v6571, %v6584
        %v6643 = vadd.f32 %v6572, %v6584
        %v6644 = vadd.f32 %v6573, %v6584
        %v6645 = vadd.f32 %v6574, %v6584
        %v6646 = vadd.f32 %v6575, %v6584
        %v6647 = vadd.f32 %v6576, %v6584
        %v6648 = vadd.f32 %v6577, %v6584
        %v6649 = vadd.f32 %v6578, %v6584
        %v6650 = vxor.u32 %v6586, 2147483648
        %v6651 = vxor.u32 %v6587, 2147483648
        %v6652 = vxor.u32 %v6588, 2147483648
        %v6653 = vxor.u32 %v6589, 2147483648
        %v6654 = vxor.u32 %v6590, 2147483648
        %v6655 = vxor.u32 %v6591, 2147483648
        %v6656 = vxor.u32 %v6592, 2147483648
        %v6657 = vxor.u32 %v6593, 2147483648
        %v6658 = vxor.u32 %v6594, 2147483648
        %v6659 = vxor.u32 %v6595, 2147483648
        %v6660 = vxor.u32 %v6596, 2147483648
        %v6661 = vxor.u32 %v6597, 2147483648
        %v6662 = vxor.u32 %v6598, 2147483648
        %v6663 = vxor.u32 %v6599, 2147483648
        %v6664 = vxor.u32 %v6600, 2147483648
        %v6665 = vxor.u32 %v6601, 2147483648
        %v6666 = vxor.u32 %v6602, 2147483648
        %v6667 = vxor.u32 %v6603, 2147483648
        %v6668 = vxor.u32 %v6604, 2147483648
        %v6669 = vxor.u32 %v6605, 2147483648
        %v6670 = vxor.u32 %v6606, 2147483648
        %v6671 = vxor.u32 %v6607, 2147483648
        %v6672 = vxor.u32 %v6608, 2147483648
        %v6673 = vxor.u32 %v6609, 2147483648
        %v6674 = vxor.u32 %v6610, 2147483648
        %v6675 = vxor.u32 %v6611, 2147483648
        %v6676 = vxor.u32 %v6612, 2147483648
        %v6677 = vxor.u32 %v6613, 2147483648
        %v6678 = vxor.u32 %v6614, 2147483648
        %v6679 = vxor.u32 %v6615, 2147483648
        %v6680 = vxor.u32 %v6616, 2147483648
        %v6681 = vxor.u32 %v6617, 2147483648
        %v6682 = vxor.u32 %v6618, 2147483648
        %v6683 = vxor.u32 %v6619, 2147483648
        %v6684 = vxor.u32 %v6620, 2147483648
        %v6685 = vxor.u32 %v6621, 2147483648
        %v6686 = vxor.u32 %v6622, 2147483648
        %v6687 = vxor.u32 %v6623, 2147483648
        %v6688 = vxor.u32 %v6624, 2147483648
        %v6689 = vxor.u32 %v6625, 2147483648
        %v6690 = vxor.u32 %v6626, 2147483648
        %v6691 = vxor.u32 %v6627, 2147483648
        %v6692 = vxor.u32 %v6628, 2147483648
        %v6693 = vxor.u32 %v6629, 2147483648
        %v6694 = vxor.u32 %v6630, 2147483648
        %v6695 = vxor.u32 %v6631, 2147483648
        %v6696 = vxor.u32 %v6632, 2147483648
        %v6697 = vxor.u32 %v6633, 2147483648
        %v6698 = vxor.u32 %v6634, 2147483648
        %v6699 = vxor.u32 %v6635, 2147483648
        %v6700 = vxor.u32 %v6636, 2147483648
        %v6701 = vxor.u32 %v6637, 2147483648
        %v6702 = vxor.u32 %v6638, 2147483648
        %v6703 = vxor.u32 %v6639, 2147483648
        %v6704 = vxor.u32 %v6640, 2147483648
        %v6705 = vxor.u32 %v6641, 2147483648
        %v6706 = vxor.u32 %v6642, 2147483648
        %v6707 = vxor.u32 %v6643, 2147483648
        %v6708 = vxor.u32 %v6644, 2147483648
        %v6709 = vxor.u32 %v6645, 2147483648
        %v6710 = vxor.u32 %v6646, 2147483648
        %v6711 = vxor.u32 %v6647, 2147483648
        %v6712 = vxor.u32 %v6648, 2147483648
        %v6713 = vxor.u32 %v6649, 2147483648
        %v6714 = vmul.f32 %v6650, 1.442695
        %v6715 = vpow.pop %v6714
        %v6716 = vmul.f32 %v6651, 1.442695
        %v6717 = vpow.pop %v6716
        %v6718 = vmul.f32 %v6652, 1.442695
        %v6719 = vpow.pop %v6718
        %v6720 = vmul.f32 %v6653, 1.442695
        %v6721 = vpow.pop %v6720
        %v6722 = vmul.f32 %v6654, 1.442695
        %v6723 = vpow.pop %v6722
        %v6724 = vmul.f32 %v6655, 1.442695
        %v6725 = vpow.pop %v6724
        %v6726 = vmul.f32 %v6656, 1.442695
        %v6727 = vpow.pop %v6726
        %v6728 = vmul.f32 %v6657, 1.442695
        %v6729 = vpow.pop %v6728
        %v6730 = vmul.f32 %v6658, 1.442695
        %v6731 = vpow.pop %v6730
        %v6732 = vmul.f32 %v6659, 1.442695
        %v6733 = vpow.pop %v6732
        %v6734 = vmul.f32 %v6660, 1.442695
        %v6735 = vpow.pop %v6734
        %v6736 = vmul.f32 %v6661, 1.442695
        %v6737 = vpow.pop %v6736
        %v6738 = vmul.f32 %v6662, 1.442695
        %v6739 = vpow.pop %v6738
        %v6740 = vmul.f32 %v6663, 1.442695
        %v6741 = vpow.pop %v6740
        %v6742 = vmul.f32 %v6664, 1.442695
        %v6743 = vpow.pop %v6742
        %v6744 = vmul.f32 %v6665, 1.442695
        %v6745 = vpow.pop %v6744
        %v6746 = vmul.f32 %v6666, 1.442695
        %v6747 = vpow.pop %v6746
        %v6748 = vmul.f32 %v6667, 1.442695
        %v6749 = vpow.pop %v6748
        %v6750 = vmul.f32 %v6668, 1.442695
        %v6751 = vpow.pop %v6750
        %v6752 = vmul.f32 %v6669, 1.442695
        %v6753 = vpow.pop %v6752
        %v6754 = vmul.f32 %v6670, 1.442695
        %v6755 = vpow.pop %v6754
        %v6756 = vmul.f32 %v6671, 1.442695
        %v6757 = vpow.pop %v6756
        %v6758 = vmul.f32 %v6672, 1.442695
        %v6759 = vpow.pop %v6758
        %v6760 = vmul.f32 %v6673, 1.442695
        %v6761 = vpow.pop %v6760
        %v6762 = vmul.f32 %v6674, 1.442695
        %v6763 = vpow.pop %v6762
        %v6764 = vmul.f32 %v6675, 1.442695
        %v6765 = vpow.pop %v6764
        %v6766 = vmul.f32 %v6676, 1.442695
        %v6767 = vpow.pop %v6766
        %v6768 = vmul.f32 %v6677, 1.442695
        %v6769 = vpow.pop %v6768
        %v6770 = vmul.f32 %v6678, 1.442695
        %v6771 = vpow.pop %v6770
        %v6772 = vmul.f32 %v6679, 1.442695
        %v6773 = vpow.pop %v6772
        %v6774 = vmul.f32 %v6680, 1.442695
        %v6775 = vpow.pop %v6774
        %v6776 = vmul.f32 %v6681, 1.442695
        %v6777 = vpow.pop %v6776
        %v6778 = vmul.f32 %v6682, 1.442695
        %v6779 = vpow.pop %v6778
        %v6780 = vmul.f32 %v6683, 1.442695
        %v6781 = vpow.pop %v6780
        %v6782 = vmul.f32 %v6684, 1.442695
        %v6783 = vpow.pop %v6782
        %v6784 = vmul.f32 %v6685, 1.442695
        %v6785 = vpow.pop %v6784
        %v6786 = vmul.f32 %v6686, 1.442695
        %v6787 = vpow.pop %v6786
        %v6788 = vmul.f32 %v6687, 1.442695
        %v6789 = vpow.pop %v6788
        %v6790 = vmul.f32 %v6688, 1.442695
        %v6791 = vpow.pop %v6790
        %v6792 = vmul.f32 %v6689, 1.442695
        %v6793 = vpow.pop %v6792
        %v6794 = vmul.f32 %v6690, 1.442695
        %v6795 = vpow.pop %v6794
        %v6796 = vmul.f32 %v6691, 1.442695
        %v6797 = vpow.pop %v6796
        %v6798 = vmul.f32 %v6692, 1.442695
        %v6799 = vpow.pop %v6798
        %v6800 = vmul.f32 %v6693, 1.442695
        %v6801 = vpow.pop %v6800
        %v6802 = vmul.f32 %v6694, 1.442695
        %v6803 = vpow.pop %v6802
        %v6804 = vmul.f32 %v6695, 1.442695
        %v6805 = vpow.pop %v6804
        %v6806 = vmul.f32 %v6696, 1.442695
        %v6807 = vpow.pop %v6806
        %v6808 = vmul.f32 %v6697, 1.442695
        %v6809 = vpow.pop %v6808
        %v6810 = vmul.f32 %v6698, 1.442695
        %v6811 = vpow.pop %v6810
        %v6812 = vmul.f32 %v6699, 1.442695
        %v6813 = vpow.pop %v6812
        %v6814 = vmul.f32 %v6700, 1.442695
        %v6815 = vpow.pop %v6814
        %v6816 = vmul.f32 %v6701, 1.442695
        %v6817 = vpow.pop %v6816
        %v6818 = vmul.f32 %v6702, 1.442695
        %v6819 = vpow.pop %v6818
        %v6820 = vmul.f32 %v6703, 1.442695
        %v6821 = vpow.pop %v6820
        %v6822 = vmul.f32 %v6704, 1.442695
        %v6823 = vpow.pop %v6822
        %v6824 = vmul.f32 %v6705, 1.442695
        %v6825 = vpow.pop %v6824
        %v6826 = vmul.f32 %v6706, 1.442695
        %v6827 = vpow.pop %v6826
        %v6828 = vmul.f32 %v6707, 1.442695
        %v6829 = vpow.pop %v6828
        %v6830 = vmul.f32 %v6708, 1.442695
        %v6831 = vpow.pop %v6830
        %v6832 = vmul.f32 %v6709, 1.442695
        %v6833 = vpow.pop %v6832
        %v6834 = vmul.f32 %v6710, 1.442695
        %v6835 = vpow.pop %v6834
        %v6836 = vmul.f32 %v6711, 1.442695
        %v6837 = vpow.pop %v6836
        %v6838 = vmul.f32 %v6712, 1.442695
        %v6839 = vpow.pop %v6838
        %v6840 = vmul.f32 %v6713, 1.442695
        %v6841 = vpow.pop %v6840
        %v6842 = vadd.f32 %v6715, 1.0
        %v6843 = vadd.f32 %v6717, 1.0
        %v6844 = vadd.f32 %v6719, 1.0
        %v6845 = vadd.f32 %v6721, 1.0
        %v6846 = vadd.f32 %v6723, 1.0
        %v6847 = vadd.f32 %v6725, 1.0
        %v6848 = vadd.f32 %v6727, 1.0
        %v6849 = vadd.f32 %v6729, 1.0
        %v6850 = vadd.f32 %v6731, 1.0
        %v6851 = vadd.f32 %v6733, 1.0
        %v6852 = vadd.f32 %v6735, 1.0
        %v6853 = vadd.f32 %v6737, 1.0
        %v6854 = vadd.f32 %v6739, 1.0
        %v6855 = vadd.f32 %v6741, 1.0
        %v6856 = vadd.f32 %v6743, 1.0
        %v6857 = vadd.f32 %v6745, 1.0
        %v6858 = vadd.f32 %v6747, 1.0
        %v6859 = vadd.f32 %v6749, 1.0
        %v6860 = vadd.f32 %v6751, 1.0
        %v6861 = vadd.f32 %v6753, 1.0
        %v6862 = vadd.f32 %v6755, 1.0
        %v6863 = vadd.f32 %v6757, 1.0
        %v6864 = vadd.f32 %v6759, 1.0
        %v6865 = vadd.f32 %v6761, 1.0
        %v6866 = vadd.f32 %v6763, 1.0
        %v6867 = vadd.f32 %v6765, 1.0
        %v6868 = vadd.f32 %v6767, 1.0
        %v6869 = vadd.f32 %v6769, 1.0
        %v6870 = vadd.f32 %v6771, 1.0
        %v6871 = vadd.f32 %v6773, 1.0
        %v6872 = vadd.f32 %v6775, 1.0
        %v6873 = vadd.f32 %v6777, 1.0
        %v6874 = vadd.f32 %v6779, 1.0
        %v6875 = vadd.f32 %v6781, 1.0
        %v6876 = vadd.f32 %v6783, 1.0
        %v6877 = vadd.f32 %v6785, 1.0
        %v6878 = vadd.f32 %v6787, 1.0
        %v6879 = vadd.f32 %v6789, 1.0
        %v6880 = vadd.f32 %v6791, 1.0
        %v6881 = vadd.f32 %v6793, 1.0
        %v6882 = vadd.f32 %v6795, 1.0
        %v6883 = vadd.f32 %v6797, 1.0
        %v6884 = vadd.f32 %v6799, 1.0
        %v6885 = vadd.f32 %v6801, 1.0
        %v6886 = vadd.f32 %v6803, 1.0
        %v6887 = vadd.f32 %v6805, 1.0
        %v6888 = vadd.f32 %v6807, 1.0
        %v6889 = vadd.f32 %v6809, 1.0
        %v6890 = vadd.f32 %v6811, 1.0
        %v6891 = vadd.f32 %v6813, 1.0
        %v6892 = vadd.f32 %v6815, 1.0
        %v6893 = vadd.f32 %v6817, 1.0
        %v6894 = vadd.f32 %v6819, 1.0
        %v6895 = vadd.f32 %v6821, 1.0
        %v6896 = vadd.f32 %v6823, 1.0
        %v6897 = vadd.f32 %v6825, 1.0
        %v6898 = vadd.f32 %v6827, 1.0
        %v6899 = vadd.f32 %v6829, 1.0
        %v6900 = vadd.f32 %v6831, 1.0
        %v6901 = vadd.f32 %v6833, 1.0
        %v6902 = vadd.f32 %v6835, 1.0
        %v6903 = vadd.f32 %v6837, 1.0
        %v6904 = vadd.f32 %v6839, 1.0
        %v6905 = vadd.f32 %v6841, 1.0
        %v6906 = vrcp.pop %v6842
        %v6907 = vmul.f32 1.0, %v6906
        %v6908 = vrcp.pop %v6843
        %v6909 = vmul.f32 1.0, %v6908
        %v6910 = vrcp.pop %v6844
        %v6911 = vmul.f32 1.0, %v6910
        %v6912 = vrcp.pop %v6845
        %v6913 = vmul.f32 1.0, %v6912
        %v6914 = vrcp.pop %v6846
        %v6915 = vmul.f32 1.0, %v6914
        %v6916 = vrcp.pop %v6847
        %v6917 = vmul.f32 1.0, %v6916
        %v6918 = vrcp.pop %v6848
        %v6919 = vmul.f32 1.0, %v6918
        %v6920 = vrcp.pop %v6849
        %v6921 = vmul.f32 1.0, %v6920
        %v6922 = vrcp.pop %v6850
        %v6923 = vmul.f32 1.0, %v6922
        %v6924 = vrcp.pop %v6851
        %v6925 = vmul.f32 1.0, %v6924
        %v6926 = vrcp.pop %v6852
        %v6927 = vmul.f32 1.0, %v6926
        %v6928 = vrcp.pop %v6853
        %v6929 = vmul.f32 1.0, %v6928
        %v6930 = vrcp.pop %v6854
        %v6931 = vmul.f32 1.0, %v6930
        %v6932 = vrcp.pop %v6855
        %v6933 = vmul.f32 1.0, %v6932
        %v6934 = vrcp.pop %v6856
        %v6935 = vmul.f32 1.0, %v6934
        %v6936 = vrcp.pop %v6857
        %v6937 = vmul.f32 1.0, %v6936
        %v6938 = vrcp.pop %v6858
        %v6939 = vmul.f32 1.0, %v6938
        %v6940 = vrcp.pop %v6859
        %v6941 = vmul.f32 1.0, %v6940
        %v6942 = vrcp.pop %v6860
        %v6943 = vmul.f32 1.0, %v6942
        %v6944 = vrcp.pop %v6861
        %v6945 = vmul.f32 1.0, %v6944
        %v6946 = vrcp.pop %v6862
        %v6947 = vmul.f32 1.0, %v6946
        %v6948 = vrcp.pop %v6863
        %v6949 = vmul.f32 1.0, %v6948
        %v6950 = vrcp.pop %v6864
        %v6951 = vmul.f32 1.0, %v6950
        %v6952 = vrcp.pop %v6865
        %v6953 = vmul.f32 1.0, %v6952
        %v6954 = vrcp.pop %v6866
        %v6955 = vmul.f32 1.0, %v6954
        %v6956 = vrcp.pop %v6867
        %v6957 = vmul.f32 1.0, %v6956
        %v6958 = vrcp.pop %v6868
        %v6959 = vmul.f32 1.0, %v6958
        %v6960 = vrcp.pop %v6869
        %v6961 = vmul.f32 1.0, %v6960
        %v6962 = vrcp.pop %v6870
        %v6963 = vmul.f32 1.0, %v6962
        %v6964 = vrcp.pop %v6871
        %v6965 = vmul.f32 1.0, %v6964
        %v6966 = vrcp.pop %v6872
        %v6967 = vmul.f32 1.0, %v6966
        %v6968 = vrcp.pop %v6873
        %v6969 = vmul.f32 1.0, %v6968
        %v6970 = vrcp.pop %v6874
        %v6971 = vmul.f32 1.0, %v6970
        %v6972 = vrcp.pop %v6875
        %v6973 = vmul.f32 1.0, %v6972
        %v6974 = vrcp.pop %v6876
        %v6975 = vmul.f32 1.0, %v6974
        %v6976 = vrcp.pop %v6877
        %v6977 = vmul.f32 1.0, %v6976
        %v6978 = vrcp.pop %v6878
        %v6979 = vmul.f32 1.0, %v6978
        %v6980 = vrcp.pop %v6879
        %v6981 = vmul.f32 1.0, %v6980
        %v6982 = vrcp.pop %v6880
        %v6983 = vmul.f32 1.0, %v6982
        %v6984 = vrcp.pop %v6881
        %v6985 = vmul.f32 1.0, %v6984
        %v6986 = vrcp.pop %v6882
        %v6987 = vmul.f32 1.0, %v6986
        %v6988 = vrcp.pop %v6883
        %v6989 = vmul.f32 1.0, %v6988
        %v6990 = vrcp.pop %v6884
        %v6991 = vmul.f32 1.0, %v6990
        %v6992 = vrcp.pop %v6885
        %v6993 = vmul.f32 1.0, %v6992
        %v6994 = vrcp.pop %v6886
        %v6995 = vmul.f32 1.0, %v6994
        %v6996 = vrcp.pop %v6887
        %v6997 = vmul.f32 1.0, %v6996
        %v6998 = vrcp.pop %v6888
        %v6999 = vmul.f32 1.0, %v6998
        %v7000 = vrcp.pop %v6889
        %v7001 = vmul.f32 1.0, %v7000
        %v7002 = vrcp.pop %v6890
        %v7003 = vmul.f32 1.0, %v7002
        %v7004 = vrcp.pop %v6891
        %v7005 = vmul.f32 1.0, %v7004
        %v7006 = vrcp.pop %v6892
        %v7007 = vmul.f32 1.0, %v7006
        %v7008 = vrcp.pop %v6893
        %v7009 = vmul.f32 1.0, %v7008
        %v7010 = vrcp.pop %v6894
        %v7011 = vmul.f32 1.0, %v7010
        %v7012 = vrcp.pop %v6895
        %v7013 = vmul.f32 1.0, %v7012
        %v7014 = vrcp.pop %v6896
        %v7015 = vmul.f32 1.0, %v7014
        %v7016 = vrcp.pop %v6897
        %v7017 = vmul.f32 1.0, %v7016
        %v7018 = vrcp.pop %v6898
        %v7019 = vmul.f32 1.0, %v7018
        %v7020 = vrcp.pop %v6899
        %v7021 = vmul.f32 1.0, %v7020
        %v7022 = vrcp.pop %v6900
        %v7023 = vmul.f32 1.0, %v7022
        %v7024 = vrcp.pop %v6901
        %v7025 = vmul.f32 1.0, %v7024
        %v7026 = vrcp.pop %v6902
        %v7027 = vmul.f32 1.0, %v7026
        %v7028 = vrcp.pop %v6903
        %v7029 = vmul.f32 1.0, %v7028
        %v7030 = vrcp.pop %v6904
        %v7031 = vmul.f32 1.0, %v7030
        %v7032 = vrcp.pop %v6905
        %v7033 = vmul.f32 1.0, %v7032
        %v7034 = vld [vmem:[#allocation6] sm:$0xff]
        %v7035 = vld [vmem:[#allocation6 + $0x8] sm:$0xff]
        %v7036 = vld [vmem:[#allocation6 + $0x10] sm:$0xff]
        %v7037 = vld [vmem:[#allocation6 + $0x18] sm:$0xff]
        %v7038 = vld [vmem:[#allocation6 + $0x20] sm:$0xff]
        %v7039 = vld [vmem:[#allocation6 + $0x28] sm:$0xff]
        %v7040 = vld [vmem:[#allocation6 + $0x30] sm:$0xff]
        %v7041 = vld [vmem:[#allocation6 + $0x38] sm:$0xff]
        %v7042 = vld [vmem:[#allocation6 + $0x40] sm:$0xff]
        %v7043 = vld [vmem:[#allocation6 + $0x48] sm:$0xff]
        %v7044 = vld [vmem:[#allocation6 + $0x50] sm:$0xff]
        %v7045 = vld [vmem:[#allocation6 + $0x58] sm:$0xff]
        %v7046 = vld [vmem:[#allocation6 + $0x60] sm:$0xff]
        %v7047 = vld [vmem:[#allocation6 + $0x68] sm:$0xff]
        %v7048 = vld [vmem:[#allocation6 + $0x70] sm:$0xff]
        %v7049 = vld [vmem:[#allocation6 + $0x78] sm:$0xff]
        %v7050 = vld [vmem:[#allocation6 + $0x80] sm:$0xff]
        %v7051 = vld [vmem:[#allocation6 + $0x88] sm:$0xff]
        %v7052 = vld [vmem:[#allocation6 + $0x90] sm:$0xff]
        %v7053 = vld [vmem:[#allocation6 + $0x98] sm:$0xff]
        %v7054 = vld [vmem:[#allocation6 + $0xa0] sm:$0xff]
        %v7055 = vld [vmem:[#allocation6 + $0xa8] sm:$0xff]
        %v7056 = vld [vmem:[#allocation6 + $0xb0] sm:$0xff]
        %v7057 = vld [vmem:[#allocation6 + $0xb8] sm:$0xff]
        %v7058 = vld [vmem:[#allocation6 + $0xc0] sm:$0xff]
        %v7059 = vld [vmem:[#allocation6 + $0xc8] sm:$0xff]
        %v7060 = vld [vmem:[#allocation6 + $0xd0] sm:$0xff]
        %v7061 = vld [vmem:[#allocation6 + $0xd8] sm:$0xff]
        %v7062 = vld [vmem:[#allocation6 + $0xe0] sm:$0xff]
        %v7063 = vld [vmem:[#allocation6 + $0xe8] sm:$0xff]
        %v7064 = vld [vmem:[#allocation6 + $0xf0] sm:$0xff]
        %v7065 = vld [vmem:[#allocation6 + $0xf8] sm:$0xff]
        %v7066 = vld [vmem:[#allocation6 + $0x100] sm:$0xff]
        %v7067 = vld [vmem:[#allocation6 + $0x108] sm:$0xff]
        %v7068 = vld [vmem:[#allocation6 + $0x110] sm:$0xff]
        %v7069 = vld [vmem:[#allocation6 + $0x118] sm:$0xff]
        %v7070 = vld [vmem:[#allocation6 + $0x120] sm:$0xff]
        %v7071 = vld [vmem:[#allocation6 + $0x128] sm:$0xff]
        %v7072 = vld [vmem:[#allocation6 + $0x130] sm:$0xff]
        %v7073 = vld [vmem:[#allocation6 + $0x138] sm:$0xff]
        %v7074 = vld [vmem:[#allocation6 + $0x140] sm:$0xff]
        %v7075 = vld [vmem:[#allocation6 + $0x148] sm:$0xff]
        %v7076 = vld [vmem:[#allocation6 + $0x150] sm:$0xff]
        %v7077 = vld [vmem:[#allocation6 + $0x158] sm:$0xff]
        %v7078 = vld [vmem:[#allocation6 + $0x160] sm:$0xff]
        %v7079 = vld [vmem:[#allocation6 + $0x168] sm:$0xff]
        %v7080 = vld [vmem:[#allocation6 + $0x170] sm:$0xff]
        %v7081 = vld [vmem:[#allocation6 + $0x178] sm:$0xff]
        %v7082 = vld [vmem:[#allocation6 + $0x180] sm:$0xff]
        %v7083 = vld [vmem:[#allocation6 + $0x188] sm:$0xff]
        %v7084 = vld [vmem:[#allocation6 + $0x190] sm:$0xff]
        %v7085 = vld [vmem:[#allocation6 + $0x198] sm:$0xff]
        %v7086 = vld [vmem:[#allocation6 + $0x1a0] sm:$0xff]
        %v7087 = vld [vmem:[#allocation6 + $0x1a8] sm:$0xff]
        %v7088 = vld [vmem:[#allocation6 + $0x1b0] sm:$0xff]
        %v7089 = vld [vmem:[#allocation6 + $0x1b8] sm:$0xff]
        %v7090 = vld [vmem:[#allocation6 + $0x1c0] sm:$0xff]
        %v7091 = vld [vmem:[#allocation6 + $0x1c8] sm:$0xff]
        %v7092 = vld [vmem:[#allocation6 + $0x1d0] sm:$0xff]
        %v7093 = vld [vmem:[#allocation6 + $0x1d8] sm:$0xff]
        %v7094 = vld [vmem:[#allocation6 + $0x1e0] sm:$0xff]
        %v7095 = vld [vmem:[#allocation6 + $0x1e8] sm:$0xff]
        %v7096 = vld [vmem:[#allocation6 + $0x1f0] sm:$0xff]
        %v7097 = vld [vmem:[#allocation6 + $0x1f8] sm:$0xff]
        %7162 = vrot.lane.b32.xlu0 %v7034, 64
        %v7163 = vpop.permute.xlu0 %7162
        %7164 = vrot.lane.b32.xlu0 %v7035, 64
        %v7165 = vpop.permute.xlu0 %7164
        %7166 = vrot.lane.b32.xlu0 %v7036, 64
        %v7167 = vpop.permute.xlu0 %7166
        %7168 = vrot.lane.b32.xlu0 %v7037, 64
        %v7169 = vpop.permute.xlu0 %7168
        %7170 = vrot.lane.b32.xlu0 %v7038, 64
        %v7171 = vpop.permute.xlu0 %7170
        %7172 = vrot.lane.b32.xlu0 %v7039, 64
        %v7173 = vpop.permute.xlu0 %7172
        %7174 = vrot.lane.b32.xlu0 %v7040, 64
        %v7175 = vpop.permute.xlu0 %7174
        %7176 = vrot.lane.b32.xlu0 %v7041, 64
        %v7177 = vpop.permute.xlu0 %7176
        %7178 = vrot.lane.b32.xlu0 %v7042, 64
        %v7179 = vpop.permute.xlu0 %7178
        %7180 = vrot.lane.b32.xlu0 %v7043, 64
        %v7181 = vpop.permute.xlu0 %7180
        %7182 = vrot.lane.b32.xlu0 %v7044, 64
        %v7183 = vpop.permute.xlu0 %7182
        %7184 = vrot.lane.b32.xlu0 %v7045, 64
        %v7185 = vpop.permute.xlu0 %7184
        %7186 = vrot.lane.b32.xlu0 %v7046, 64
        %v7187 = vpop.permute.xlu0 %7186
        %7188 = vrot.lane.b32.xlu0 %v7047, 64
        %v7189 = vpop.permute.xlu0 %7188
        %7190 = vrot.lane.b32.xlu0 %v7048, 64
        %v7191 = vpop.permute.xlu0 %7190
        %7192 = vrot.lane.b32.xlu0 %v7049, 64
        %v7193 = vpop.permute.xlu0 %7192
        %7194 = vrot.lane.b32.xlu0 %v7050, 64
        %v7195 = vpop.permute.xlu0 %7194
        %7196 = vrot.lane.b32.xlu0 %v7051, 64
        %v7197 = vpop.permute.xlu0 %7196
        %7198 = vrot.lane.b32.xlu0 %v7052, 64
        %v7199 = vpop.permute.xlu0 %7198
        %7200 = vrot.lane.b32.xlu0 %v7053, 64
        %v7201 = vpop.permute.xlu0 %7200
        %7202 = vrot.lane.b32.xlu0 %v7054, 64
        %v7203 = vpop.permute.xlu0 %7202
        %7204 = vrot.lane.b32.xlu0 %v7055, 64
        %v7205 = vpop.permute.xlu0 %7204
        %7206 = vrot.lane.b32.xlu0 %v7056, 64
        %v7207 = vpop.permute.xlu0 %7206
        %7208 = vrot.lane.b32.xlu0 %v7057, 64
        %v7209 = vpop.permute.xlu0 %7208
        %7210 = vrot.lane.b32.xlu0 %v7058, 64
        %v7211 = vpop.permute.xlu0 %7210
        %7212 = vrot.lane.b32.xlu0 %v7059, 64
        %v7213 = vpop.permute.xlu0 %7212
        %7214 = vrot.lane.b32.xlu0 %v7060, 64
        %v7215 = vpop.permute.xlu0 %7214
        %7216 = vrot.lane.b32.xlu0 %v7061, 64
        %v7217 = vpop.permute.xlu0 %7216
        %7218 = vrot.lane.b32.xlu0 %v7062, 64
        %v7219 = vpop.permute.xlu0 %7218
        %7220 = vrot.lane.b32.xlu0 %v7063, 64
        %v7221 = vpop.permute.xlu0 %7220
        %7222 = vrot.lane.b32.xlu0 %v7064, 64
        %v7223 = vpop.permute.xlu0 %7222
        %7224 = vrot.lane.b32.xlu0 %v7065, 64
        %v7225 = vpop.permute.xlu0 %7224
        %7226 = vrot.lane.b32.xlu0 %v7066, 64
        %v7227 = vpop.permute.xlu0 %7226
        %7228 = vrot.lane.b32.xlu0 %v7067, 64
        %v7229 = vpop.permute.xlu0 %7228
        %7230 = vrot.lane.b32.xlu0 %v7068, 64
        %v7231 = vpop.permute.xlu0 %7230
        %7232 = vrot.lane.b32.xlu0 %v7069, 64
        %v7233 = vpop.permute.xlu0 %7232
        %7234 = vrot.lane.b32.xlu0 %v7070, 64
        %v7235 = vpop.permute.xlu0 %7234
        %7236 = vrot.lane.b32.xlu0 %v7071, 64
        %v7237 = vpop.permute.xlu0 %7236
        %7238 = vrot.lane.b32.xlu0 %v7072, 64
        %v7239 = vpop.permute.xlu0 %7238
        %7240 = vrot.lane.b32.xlu0 %v7073, 64
        %v7241 = vpop.permute.xlu0 %7240
        %7242 = vrot.lane.b32.xlu0 %v7074, 64
        %v7243 = vpop.permute.xlu0 %7242
        %7244 = vrot.lane.b32.xlu0 %v7075, 64
        %v7245 = vpop.permute.xlu0 %7244
        %7246 = vrot.lane.b32.xlu0 %v7076, 64
        %v7247 = vpop.permute.xlu0 %7246
        %7248 = vrot.lane.b32.xlu0 %v7077, 64
        %v7249 = vpop.permute.xlu0 %7248
        %7250 = vrot.lane.b32.xlu0 %v7078, 64
        %v7251 = vpop.permute.xlu0 %7250
        %7252 = vrot.lane.b32.xlu0 %v7079, 64
        %v7253 = vpop.permute.xlu0 %7252
        %7254 = vrot.lane.b32.xlu0 %v7080, 64
        %v7255 = vpop.permute.xlu0 %7254
        %7256 = vrot.lane.b32.xlu0 %v7081, 64
        %v7257 = vpop.permute.xlu0 %7256
        %7258 = vrot.lane.b32.xlu0 %v7082, 64
        %v7259 = vpop.permute.xlu0 %7258
        %7260 = vrot.lane.b32.xlu0 %v7083, 64
        %v7261 = vpop.permute.xlu0 %7260
        %7262 = vrot.lane.b32.xlu0 %v7084, 64
        %v7263 = vpop.permute.xlu0 %7262
        %7264 = vrot.lane.b32.xlu0 %v7085, 64
        %v7265 = vpop.permute.xlu0 %7264
        %7266 = vrot.lane.b32.xlu0 %v7086, 64
        %v7267 = vpop.permute.xlu0 %7266
        %7268 = vrot.lane.b32.xlu0 %v7087, 64
        %v7269 = vpop.permute.xlu0 %7268
        %7270 = vrot.lane.b32.xlu0 %v7088, 64
        %v7271 = vpop.permute.xlu0 %7270
        %7272 = vrot.lane.b32.xlu0 %v7089, 64
        %v7273 = vpop.permute.xlu0 %7272
        %7274 = vrot.lane.b32.xlu0 %v7090, 64
        %v7275 = vpop.permute.xlu0 %7274
        %7276 = vrot.lane.b32.xlu0 %v7091, 64
        %v7277 = vpop.permute.xlu0 %7276
        %7278 = vrot.lane.b32.xlu0 %v7092, 64
        %v7279 = vpop.permute.xlu0 %7278
        %7280 = vrot.lane.b32.xlu0 %v7093, 64
        %v7281 = vpop.permute.xlu0 %7280
        %7282 = vrot.lane.b32.xlu0 %v7094, 64
        %v7283 = vpop.permute.xlu0 %7282
        %7284 = vrot.lane.b32.xlu0 %v7095, 64
        %v7285 = vpop.permute.xlu0 %7284
        %7286 = vrot.lane.b32.xlu0 %v7096, 64
        %v7287 = vpop.permute.xlu0 %7286
        %7288 = vrot.lane.b32.xlu0 %v7097, 64
        %v7289 = vpop.permute.xlu0 %7288
        %v7354 = vadd.f32 %v6586, %v7163
        %v7355 = vadd.f32 %v6587, %v7165
        %v7356 = vadd.f32 %v6588, %v7167
        %v7357 = vadd.f32 %v6589, %v7169
        %v7358 = vadd.f32 %v6590, %v7171
        %v7359 = vadd.f32 %v6591, %v7173
        %v7360 = vadd.f32 %v6592, %v7175
        %v7361 = vadd.f32 %v6593, %v7177
        %v7362 = vadd.f32 %v6594, %v7179
        %v7363 = vadd.f32 %v6595, %v7181
        %v7364 = vadd.f32 %v6596, %v7183
        %v7365 = vadd.f32 %v6597, %v7185
        %v7366 = vadd.f32 %v6598, %v7187
        %v7367 = vadd.f32 %v6599, %v7189
        %v7368 = vadd.f32 %v6600, %v7191
        %v7369 = vadd.f32 %v6601, %v7193
        %v7370 = vadd.f32 %v6602, %v7195
        %v7371 = vadd.f32 %v6603, %v7197
        %v7372 = vadd.f32 %v6604, %v7199
        %v7373 = vadd.f32 %v6605, %v7201
        %v7374 = vadd.f32 %v6606, %v7203
        %v7375 = vadd.f32 %v6607, %v7205
        %v7376 = vadd.f32 %v6608, %v7207
        %v7377 = vadd.f32 %v6609, %v7209
        %v7378 = vadd.f32 %v6610, %v7211
        %v7379 = vadd.f32 %v6611, %v7213
        %v7380 = vadd.f32 %v6612, %v7215
        %v7381 = vadd.f32 %v6613, %v7217
        %v7382 = vadd.f32 %v6614, %v7219
        %v7383 = vadd.f32 %v6615, %v7221
        %v7384 = vadd.f32 %v6616, %v7223
        %v7385 = vadd.f32 %v6617, %v7225
        %v7386 = vadd.f32 %v6618, %v7227
        %v7387 = vadd.f32 %v6619, %v7229
        %v7388 = vadd.f32 %v6620, %v7231
        %v7389 = vadd.f32 %v6621, %v7233
        %v7390 = vadd.f32 %v6622, %v7235
        %v7391 = vadd.f32 %v6623, %v7237
        %v7392 = vadd.f32 %v6624, %v7239
        %v7393 = vadd.f32 %v6625, %v7241
        %v7394 = vadd.f32 %v6626, %v7243
        %v7395 = vadd.f32 %v6627, %v7245
        %v7396 = vadd.f32 %v6628, %v7247
        %v7397 = vadd.f32 %v6629, %v7249
        %v7398 = vadd.f32 %v6630, %v7251
        %v7399 = vadd.f32 %v6631, %v7253
        %v7400 = vadd.f32 %v6632, %v7255
        %v7401 = vadd.f32 %v6633, %v7257
        %v7402 = vadd.f32 %v6634, %v7259
        %v7403 = vadd.f32 %v6635, %v7261
        %v7404 = vadd.f32 %v6636, %v7263
        %v7405 = vadd.f32 %v6637, %v7265
        %v7406 = vadd.f32 %v6638, %v7267
        %v7407 = vadd.f32 %v6639, %v7269
        %v7408 = vadd.f32 %v6640, %v7271
        %v7409 = vadd.f32 %v6641, %v7273
        %v7410 = vadd.f32 %v6642, %v7275
        %v7411 = vadd.f32 %v6643, %v7277
        %v7412 = vadd.f32 %v6644, %v7279
        %v7413 = vadd.f32 %v6645, %v7281
        %v7414 = vadd.f32 %v6646, %v7283
        %v7415 = vadd.f32 %v6647, %v7285
        %v7416 = vadd.f32 %v6648, %v7287
        %v7417 = vadd.f32 %v6649, %v7289
        %v7418 = vtanh.pop %v7354
        %v7419 = vtanh.pop %v7355
        %v7420 = vtanh.pop %v7356
        %v7421 = vtanh.pop %v7357
        %v7422 = vtanh.pop %v7358
        %v7423 = vtanh.pop %v7359
        %v7424 = vtanh.pop %v7360
        %v7425 = vtanh.pop %v7361
        %v7426 = vtanh.pop %v7362
        %v7427 = vtanh.pop %v7363
        %v7428 = vtanh.pop %v7364
        %v7429 = vtanh.pop %v7365
        %v7430 = vtanh.pop %v7366
        %v7431 = vtanh.pop %v7367
        %v7432 = vtanh.pop %v7368
        %v7433 = vtanh.pop %v7369
        %v7434 = vtanh.pop %v7370
        %v7435 = vtanh.pop %v7371
        %v7436 = vtanh.pop %v7372
        %v7437 = vtanh.pop %v7373
        %v7438 = vtanh.pop %v7374
        %v7439 = vtanh.pop %v7375
        %v7440 = vtanh.pop %v7376
        %v7441 = vtanh.pop %v7377
        %v7442 = vtanh.pop %v7378
        %v7443 = vtanh.pop %v7379
        %v7444 = vtanh.pop %v7380
        %v7445 = vtanh.pop %v7381
        %v7446 = vtanh.pop %v7382
        %v7447 = vtanh.pop %v7383
        %v7448 = vtanh.pop %v7384
        %v7449 = vtanh.pop %v7385
        %v7450 = vtanh.pop %v7386
        %v7451 = vtanh.pop %v7387
        %v7452 = vtanh.pop %v7388
        %v7453 = vtanh.pop %v7389
        %v7454 = vtanh.pop %v7390
        %v7455 = vtanh.pop %v7391
        %v7456 = vtanh.pop %v7392
        %v7457 = vtanh.pop %v7393
        %v7458 = vtanh.pop %v7394
        %v7459 = vtanh.pop %v7395
        %v7460 = vtanh.pop %v7396
        %v7461 = vtanh.pop %v7397
        %v7462 = vtanh.pop %v7398
        %v7463 = vtanh.pop %v7399
        %v7464 = vtanh.pop %v7400
        %v7465 = vtanh.pop %v7401
        %v7466 = vtanh.pop %v7402
        %v7467 = vtanh.pop %v7403
        %v7468 = vtanh.pop %v7404
        %v7469 = vtanh.pop %v7405
        %v7470 = vtanh.pop %v7406
        %v7471 = vtanh.pop %v7407
        %v7472 = vtanh.pop %v7408
        %v7473 = vtanh.pop %v7409
        %v7474 = vtanh.pop %v7410
        %v7475 = vtanh.pop %v7411
        %v7476 = vtanh.pop %v7412
        %v7477 = vtanh.pop %v7413
        %v7478 = vtanh.pop %v7414
        %v7479 = vtanh.pop %v7415
        %v7480 = vtanh.pop %v7416
        %v7481 = vtanh.pop %v7417
        %v7482 = vld [vmem:[%s2] sm:$0xf]
        %v7483 = vld [vmem:[%s2 + $0x4] sm:$0xf]
        %v7484 = vld [vmem:[%s2 + $0x8] sm:$0xf]
        %v7485 = vld [vmem:[%s2 + $0xc] sm:$0xf]
        %v7486 = vld [vmem:[%s2 + $0x10] sm:$0xf]
        %v7487 = vld [vmem:[%s2 + $0x14] sm:$0xf]
        %v7488 = vld [vmem:[%s2 + $0x18] sm:$0xf]
        %v7489 = vld [vmem:[%s2 + $0x1c] sm:$0xf]
        %v7490 = vld [vmem:[%s2 + $0x20] sm:$0xf]
        %v7491 = vld [vmem:[%s2 + $0x24] sm:$0xf]
        %v7492 = vld [vmem:[%s2 + $0x28] sm:$0xf]
        %v7493 = vld [vmem:[%s2 + $0x2c] sm:$0xf]
        %v7494 = vld [vmem:[%s2 + $0x30] sm:$0xf]
        %v7495 = vld [vmem:[%s2 + $0x34] sm:$0xf]
        %v7496 = vld [vmem:[%s2 + $0x38] sm:$0xf]
        %v7497 = vld [vmem:[%s2 + $0x3c] sm:$0xf]
        %v7498 = vld [vmem:[%s2 + $0x40] sm:$0xf]
        %v7499 = vld [vmem:[%s2 + $0x44] sm:$0xf]
        %v7500 = vld [vmem:[%s2 + $0x48] sm:$0xf]
        %v7501 = vld [vmem:[%s2 + $0x4c] sm:$0xf]
        %v7502 = vld [vmem:[%s2 + $0x50] sm:$0xf]
        %v7503 = vld [vmem:[%s2 + $0x54] sm:$0xf]
        %v7504 = vld [vmem:[%s2 + $0x58] sm:$0xf]
        %v7505 = vld [vmem:[%s2 + $0x5c] sm:$0xf]
        %v7506 = vld [vmem:[%s2 + $0x60] sm:$0xf]
        %v7507 = vld [vmem:[%s2 + $0x64] sm:$0xf]
        %v7508 = vld [vmem:[%s2 + $0x68] sm:$0xf]
        %v7509 = vld [vmem:[%s2 + $0x6c] sm:$0xf]
        %v7510 = vld [vmem:[%s2 + $0x70] sm:$0xf]
        %v7511 = vld [vmem:[%s2 + $0x74] sm:$0xf]
        %v7512 = vld [vmem:[%s2 + $0x78] sm:$0xf]
        %v7513 = vld [vmem:[%s2 + $0x7c] sm:$0xf]
        %v7514 = vld [vmem:[%s2 + $0x80] sm:$0xf]
        %v7515 = vld [vmem:[%s2 + $0x84] sm:$0xf]
        %v7516 = vld [vmem:[%s2 + $0x88] sm:$0xf]
        %v7517 = vld [vmem:[%s2 + $0x8c] sm:$0xf]
        %v7518 = vld [vmem:[%s2 + $0x90] sm:$0xf]
        %v7519 = vld [vmem:[%s2 + $0x94] sm:$0xf]
        %v7520 = vld [vmem:[%s2 + $0x98] sm:$0xf]
        %v7521 = vld [vmem:[%s2 + $0x9c] sm:$0xf]
        %v7522 = vld [vmem:[%s2 + $0xa0] sm:$0xf]
        %v7523 = vld [vmem:[%s2 + $0xa4] sm:$0xf]
        %v7524 = vld [vmem:[%s2 + $0xa8] sm:$0xf]
        %v7525 = vld [vmem:[%s2 + $0xac] sm:$0xf]
        %v7526 = vld [vmem:[%s2 + $0xb0] sm:$0xf]
        %v7527 = vld [vmem:[%s2 + $0xb4] sm:$0xf]
        %v7528 = vld [vmem:[%s2 + $0xb8] sm:$0xf]
        %v7529 = vld [vmem:[%s2 + $0xbc] sm:$0xf]
        %v7530 = vld [vmem:[%s2 + $0xc0] sm:$0xf]
        %v7531 = vld [vmem:[%s2 + $0xc4] sm:$0xf]
        %v7532 = vld [vmem:[%s2 + $0xc8] sm:$0xf]
        %v7533 = vld [vmem:[%s2 + $0xcc] sm:$0xf]
        %v7534 = vld [vmem:[%s2 + $0xd0] sm:$0xf]
        %v7535 = vld [vmem:[%s2 + $0xd4] sm:$0xf]
        %v7536 = vld [vmem:[%s2 + $0xd8] sm:$0xf]
        %v7537 = vld [vmem:[%s2 + $0xdc] sm:$0xf]
        %v7538 = vld [vmem:[%s2 + $0xe0] sm:$0xf]
        %v7539 = vld [vmem:[%s2 + $0xe4] sm:$0xf]
        %v7540 = vld [vmem:[%s2 + $0xe8] sm:$0xf]
        %v7541 = vld [vmem:[%s2 + $0xec] sm:$0xf]
        %v7542 = vld [vmem:[%s2 + $0xf0] sm:$0xf]
        %v7543 = vld [vmem:[%s2 + $0xf4] sm:$0xf]
        %v7544 = vld [vmem:[%s2 + $0xf8] sm:$0xf]
        %v7545 = vld [vmem:[%s2 + $0xfc] sm:$0xf]
        %v7546 = vunpack.c.l.bf16 %v7482
        %v7547 = vunpack.c.l.bf16 %v7483
        %v7548 = vunpack.c.l.bf16 %v7484
        %v7549 = vunpack.c.l.bf16 %v7485
        %v7550 = vunpack.c.l.bf16 %v7486
        %v7551 = vunpack.c.l.bf16 %v7487
        %v7552 = vunpack.c.l.bf16 %v7488
        %v7553 = vunpack.c.l.bf16 %v7489
        %v7554 = vunpack.c.l.bf16 %v7490
        %v7555 = vunpack.c.l.bf16 %v7491
        %v7556 = vunpack.c.l.bf16 %v7492
        %v7557 = vunpack.c.l.bf16 %v7493
        %v7558 = vunpack.c.l.bf16 %v7494
        %v7559 = vunpack.c.l.bf16 %v7495
        %v7560 = vunpack.c.l.bf16 %v7496
        %v7561 = vunpack.c.l.bf16 %v7497
        %v7562 = vunpack.c.l.bf16 %v7498
        %v7563 = vunpack.c.l.bf16 %v7499
        %v7564 = vunpack.c.l.bf16 %v7500
        %v7565 = vunpack.c.l.bf16 %v7501
        %v7566 = vunpack.c.l.bf16 %v7502
        %v7567 = vunpack.c.l.bf16 %v7503
        %v7568 = vunpack.c.l.bf16 %v7504
        %v7569 = vunpack.c.l.bf16 %v7505
        %v7570 = vunpack.c.l.bf16 %v7506
        %v7571 = vunpack.c.l.bf16 %v7507
        %v7572 = vunpack.c.l.bf16 %v7508
        %v7573 = vunpack.c.l.bf16 %v7509
        %v7574 = vunpack.c.l.bf16 %v7510
        %v7575 = vunpack.c.l.bf16 %v7511
        %v7576 = vunpack.c.l.bf16 %v7512
        %v7577 = vunpack.c.l.bf16 %v7513
        %v7578 = vunpack.c.l.bf16 %v7514
        %v7579 = vunpack.c.l.bf16 %v7515
        %v7580 = vunpack.c.l.bf16 %v7516
        %v7581 = vunpack.c.l.bf16 %v7517
        %v7582 = vunpack.c.l.bf16 %v7518
        %v7583 = vunpack.c.l.bf16 %v7519
        %v7584 = vunpack.c.l.bf16 %v7520
        %v7585 = vunpack.c.l.bf16 %v7521
        %v7586 = vunpack.c.l.bf16 %v7522
        %v7587 = vunpack.c.l.bf16 %v7523
        %v7588 = vunpack.c.l.bf16 %v7524
        %v7589 = vunpack.c.l.bf16 %v7525
        %v7590 = vunpack.c.l.bf16 %v7526
        %v7591 = vunpack.c.l.bf16 %v7527
        %v7592 = vunpack.c.l.bf16 %v7528
        %v7593 = vunpack.c.l.bf16 %v7529
        %v7594 = vunpack.c.l.bf16 %v7530
        %v7595 = vunpack.c.l.bf16 %v7531
        %v7596 = vunpack.c.l.bf16 %v7532
        %v7597 = vunpack.c.l.bf16 %v7533
        %v7598 = vunpack.c.l.bf16 %v7534
        %v7599 = vunpack.c.l.bf16 %v7535
        %v7600 = vunpack.c.l.bf16 %v7536
        %v7601 = vunpack.c.l.bf16 %v7537
        %v7602 = vunpack.c.l.bf16 %v7538
        %v7603 = vunpack.c.l.bf16 %v7539
        %v7604 = vunpack.c.l.bf16 %v7540
        %v7605 = vunpack.c.l.bf16 %v7541
        %v7606 = vunpack.c.l.bf16 %v7542
        %v7607 = vunpack.c.l.bf16 %v7543
        %v7608 = vunpack.c.l.bf16 %v7544
        %v7609 = vunpack.c.l.bf16 %v7545
        %v7610 = vmul.f32 %v6907, %v7546
        %v7611 = vmul.f32 %v6909, %v7547
        %v7612 = vmul.f32 %v6911, %v7548
        %v7613 = vmul.f32 %v6913, %v7549
        %v7614 = vmul.f32 %v6915, %v7550
        %v7615 = vmul.f32 %v6917, %v7551
        %v7616 = vmul.f32 %v6919, %v7552
        %v7617 = vmul.f32 %v6921, %v7553
        %v7618 = vmul.f32 %v6923, %v7554
        %v7619 = vmul.f32 %v6925, %v7555
        %v7620 = vmul.f32 %v6927, %v7556
        %v7621 = vmul.f32 %v6929, %v7557
        %v7622 = vmul.f32 %v6931, %v7558
        %v7623 = vmul.f32 %v6933, %v7559
        %v7624 = vmul.f32 %v6935, %v7560
        %v7625 = vmul.f32 %v6937, %v7561
        %v7626 = vmul.f32 %v6939, %v7562
        %v7627 = vmul.f32 %v6941, %v7563
        %v7628 = vmul.f32 %v6943, %v7564
        %v7629 = vmul.f32 %v6945, %v7565
        %v7630 = vmul.f32 %v6947, %v7566
        %v7631 = vmul.f32 %v6949, %v7567
        %v7632 = vmul.f32 %v6951, %v7568
        %v7633 = vmul.f32 %v6953, %v7569
        %v7634 = vmul.f32 %v6955, %v7570
        %v7635 = vmul.f32 %v6957, %v7571
        %v7636 = vmul.f32 %v6959, %v7572
        %v7637 = vmul.f32 %v6961, %v7573
        %v7638 = vmul.f32 %v6963, %v7574
        %v7639 = vmul.f32 %v6965, %v7575
        %v7640 = vmul.f32 %v6967, %v7576
        %v7641 = vmul.f32 %v6969, %v7577
        %v7642 = vmul.f32 %v6971, %v7578
        %v7643 = vmul.f32 %v6973, %v7579
        %v7644 = vmul.f32 %v6975, %v7580
        %v7645 = vmul.f32 %v6977, %v7581
        %v7646 = vmul.f32 %v6979, %v7582
        %v7647 = vmul.f32 %v6981, %v7583
        %v7648 = vmul.f32 %v6983, %v7584
        %v7649 = vmul.f32 %v6985, %v7585
        %v7650 = vmul.f32 %v6987, %v7586
        %v7651 = vmul.f32 %v6989, %v7587
        %v7652 = vmul.f32 %v6991, %v7588
        %v7653 = vmul.f32 %v6993, %v7589
        %v7654 = vmul.f32 %v6995, %v7590
        %v7655 = vmul.f32 %v6997, %v7591
        %v7656 = vmul.f32 %v6999, %v7592
        %v7657 = vmul.f32 %v7001, %v7593
        %v7658 = vmul.f32 %v7003, %v7594
        %v7659 = vmul.f32 %v7005, %v7595
        %v7660 = vmul.f32 %v7007, %v7596
        %v7661 = vmul.f32 %v7009, %v7597
        %v7662 = vmul.f32 %v7011, %v7598
        %v7663 = vmul.f32 %v7013, %v7599
        %v7664 = vmul.f32 %v7015, %v7600
        %v7665 = vmul.f32 %v7017, %v7601
        %v7666 = vmul.f32 %v7019, %v7602
        %v7667 = vmul.f32 %v7021, %v7603
        %v7668 = vmul.f32 %v7023, %v7604
        %v7669 = vmul.f32 %v7025, %v7605
        %v7670 = vmul.f32 %v7027, %v7606
        %v7671 = vmul.f32 %v7029, %v7607
        %v7672 = vmul.f32 %v7031, %v7608
        %v7673 = vmul.f32 %v7033, %v7609
        %v7674 = vsub.f32 1.0, %v6907
        %v7675 = vsub.f32 1.0, %v6909
        %v7676 = vsub.f32 1.0, %v6911
        %v7677 = vsub.f32 1.0, %v6913
        %v7678 = vsub.f32 1.0, %v6915
        %v7679 = vsub.f32 1.0, %v6917
        %v7680 = vsub.f32 1.0, %v6919
        %v7681 = vsub.f32 1.0, %v6921
        %v7682 = vsub.f32 1.0, %v6923
        %v7683 = vsub.f32 1.0, %v6925
        %v7684 = vsub.f32 1.0, %v6927
        %v7685 = vsub.f32 1.0, %v6929
        %v7686 = vsub.f32 1.0, %v6931
        %v7687 = vsub.f32 1.0, %v6933
        %v7688 = vsub.f32 1.0, %v6935
        %v7689 = vsub.f32 1.0, %v6937
        %v7690 = vsub.f32 1.0, %v6939
        %v7691 = vsub.f32 1.0, %v6941
        %v7692 = vsub.f32 1.0, %v6943
        %v7693 = vsub.f32 1.0, %v6945
        %v7694 = vsub.f32 1.0, %v6947
        %v7695 = vsub.f32 1.0, %v6949
        %v7696 = vsub.f32 1.0, %v6951
        %v7697 = vsub.f32 1.0, %v6953
        %v7698 = vsub.f32 1.0, %v6955
        %v7699 = vsub.f32 1.0, %v6957
        %v7700 = vsub.f32 1.0, %v6959
        %v7701 = vsub.f32 1.0, %v6961
        %v7702 = vsub.f32 1.0, %v6963
        %v7703 = vsub.f32 1.0, %v6965
        %v7704 = vsub.f32 1.0, %v6967
        %v7705 = vsub.f32 1.0, %v6969
        %v7706 = vsub.f32 1.0, %v6971
        %v7707 = vsub.f32 1.0, %v6973
        %v7708 = vsub.f32 1.0, %v6975
        %v7709 = vsub.f32 1.0, %v6977
        %v7710 = vsub.f32 1.0, %v6979
        %v7711 = vsub.f32 1.0, %v6981
        %v7712 = vsub.f32 1.0, %v6983
        %v7713 = vsub.f32 1.0, %v6985
        %v7714 = vsub.f32 1.0, %v6987
        %v7715 = vsub.f32 1.0, %v6989
        %v7716 = vsub.f32 1.0, %v6991
        %v7717 = vsub.f32 1.0, %v6993
        %v7718 = vsub.f32 1.0, %v6995
        %v7719 = vsub.f32 1.0, %v6997
        %v7720 = vsub.f32 1.0, %v6999
        %v7721 = vsub.f32 1.0, %v7001
        %v7722 = vsub.f32 1.0, %v7003
        %v7723 = vsub.f32 1.0, %v7005
        %v7724 = vsub.f32 1.0, %v7007
        %v7725 = vsub.f32 1.0, %v7009
        %v7726 = vsub.f32 1.0, %v7011
        %v7727 = vsub.f32 1.0, %v7013
        %v7728 = vsub.f32 1.0, %v7015
        %v7729 = vsub.f32 1.0, %v7017
        %v7730 = vsub.f32 1.0, %v7019
        %v7731 = vsub.f32 1.0, %v7021
        %v7732 = vsub.f32 1.0, %v7023
        %v7733 = vsub.f32 1.0, %v7025
        %v7734 = vsub.f32 1.0, %v7027
        %v7735 = vsub.f32 1.0, %v7029
        %v7736 = vsub.f32 1.0, %v7031
        %v7737 = vsub.f32 1.0, %v7033
        %7802 = vrot.lane.b32.xlu0 %v7418, 64
        %v7803 = vpop.permute.xlu0 %7802
        %7804 = vrot.lane.b32.xlu0 %v7419, 64
        %v7805 = vpop.permute.xlu0 %7804
        %7806 = vrot.lane.b32.xlu0 %v7420, 64
        %v7807 = vpop.permute.xlu0 %7806
        %7808 = vrot.lane.b32.xlu0 %v7421, 64
        %v7809 = vpop.permute.xlu0 %7808
        %7810 = vrot.lane.b32.xlu0 %v7422, 64
        %v7811 = vpop.permute.xlu0 %7810
        %7812 = vrot.lane.b32.xlu0 %v7423, 64
        %v7813 = vpop.permute.xlu0 %7812
        %7814 = vrot.lane.b32.xlu0 %v7424, 64
        %v7815 = vpop.permute.xlu0 %7814
        %7816 = vrot.lane.b32.xlu0 %v7425, 64
        %v7817 = vpop.permute.xlu0 %7816
        %7818 = vrot.lane.b32.xlu0 %v7426, 64
        %v7819 = vpop.permute.xlu0 %7818
        %7820 = vrot.lane.b32.xlu0 %v7427, 64
        %v7821 = vpop.permute.xlu0 %7820
        %7822 = vrot.lane.b32.xlu0 %v7428, 64
        %v7823 = vpop.permute.xlu0 %7822
        %7824 = vrot.lane.b32.xlu0 %v7429, 64
        %v7825 = vpop.permute.xlu0 %7824
        %7826 = vrot.lane.b32.xlu0 %v7430, 64
        %v7827 = vpop.permute.xlu0 %7826
        %7828 = vrot.lane.b32.xlu0 %v7431, 64
        %v7829 = vpop.permute.xlu0 %7828
        %7830 = vrot.lane.b32.xlu0 %v7432, 64
        %v7831 = vpop.permute.xlu0 %7830
        %7832 = vrot.lane.b32.xlu0 %v7433, 64
        %v7833 = vpop.permute.xlu0 %7832
        %7834 = vrot.lane.b32.xlu0 %v7434, 64
        %v7835 = vpop.permute.xlu0 %7834
        %7836 = vrot.lane.b32.xlu0 %v7435, 64
        %v7837 = vpop.permute.xlu0 %7836
        %7838 = vrot.lane.b32.xlu0 %v7436, 64
        %v7839 = vpop.permute.xlu0 %7838
        %7840 = vrot.lane.b32.xlu0 %v7437, 64
        %v7841 = vpop.permute.xlu0 %7840
        %7842 = vrot.lane.b32.xlu0 %v7438, 64
        %v7843 = vpop.permute.xlu0 %7842
        %7844 = vrot.lane.b32.xlu0 %v7439, 64
        %v7845 = vpop.permute.xlu0 %7844
        %7846 = vrot.lane.b32.xlu0 %v7440, 64
        %v7847 = vpop.permute.xlu0 %7846
        %7848 = vrot.lane.b32.xlu0 %v7441, 64
        %v7849 = vpop.permute.xlu0 %7848
        %7850 = vrot.lane.b32.xlu0 %v7442, 64
        %v7851 = vpop.permute.xlu0 %7850
        %7852 = vrot.lane.b32.xlu0 %v7443, 64
        %v7853 = vpop.permute.xlu0 %7852
        %7854 = vrot.lane.b32.xlu0 %v7444, 64
        %v7855 = vpop.permute.xlu0 %7854
        %7856 = vrot.lane.b32.xlu0 %v7445, 64
        %v7857 = vpop.permute.xlu0 %7856
        %7858 = vrot.lane.b32.xlu0 %v7446, 64
        %v7859 = vpop.permute.xlu0 %7858
        %7860 = vrot.lane.b32.xlu0 %v7447, 64
        %v7861 = vpop.permute.xlu0 %7860
        %7862 = vrot.lane.b32.xlu0 %v7448, 64
        %v7863 = vpop.permute.xlu0 %7862
        %7864 = vrot.lane.b32.xlu0 %v7449, 64
        %v7865 = vpop.permute.xlu0 %7864
        %7866 = vrot.lane.b32.xlu0 %v7450, 64
        %v7867 = vpop.permute.xlu0 %7866
        %7868 = vrot.lane.b32.xlu0 %v7451, 64
        %v7869 = vpop.permute.xlu0 %7868
        %7870 = vrot.lane.b32.xlu0 %v7452, 64
        %v7871 = vpop.permute.xlu0 %7870
        %7872 = vrot.lane.b32.xlu0 %v7453, 64
        %v7873 = vpop.permute.xlu0 %7872
        %7874 = vrot.lane.b32.xlu0 %v7454, 64
        %v7875 = vpop.permute.xlu0 %7874
        %7876 = vrot.lane.b32.xlu0 %v7455, 64
        %v7877 = vpop.permute.xlu0 %7876
        %7878 = vrot.lane.b32.xlu0 %v7456, 64
        %v7879 = vpop.permute.xlu0 %7878
        %7880 = vrot.lane.b32.xlu0 %v7457, 64
        %v7881 = vpop.permute.xlu0 %7880
        %7882 = vrot.lane.b32.xlu0 %v7458, 64
        %v7883 = vpop.permute.xlu0 %7882
        %7884 = vrot.lane.b32.xlu0 %v7459, 64
        %v7885 = vpop.permute.xlu0 %7884
        %7886 = vrot.lane.b32.xlu0 %v7460, 64
        %v7887 = vpop.permute.xlu0 %7886
        %7888 = vrot.lane.b32.xlu0 %v7461, 64
        %v7889 = vpop.permute.xlu0 %7888
        %7890 = vrot.lane.b32.xlu0 %v7462, 64
        %v7891 = vpop.permute.xlu0 %7890
        %7892 = vrot.lane.b32.xlu0 %v7463, 64
        %v7893 = vpop.permute.xlu0 %7892
        %7894 = vrot.lane.b32.xlu0 %v7464, 64
        %v7895 = vpop.permute.xlu0 %7894
        %7896 = vrot.lane.b32.xlu0 %v7465, 64
        %v7897 = vpop.permute.xlu0 %7896
        %7898 = vrot.lane.b32.xlu0 %v7466, 64
        %v7899 = vpop.permute.xlu0 %7898
        %7900 = vrot.lane.b32.xlu0 %v7467, 64
        %v7901 = vpop.permute.xlu0 %7900
        %7902 = vrot.lane.b32.xlu0 %v7468, 64
        %v7903 = vpop.permute.xlu0 %7902
        %7904 = vrot.lane.b32.xlu0 %v7469, 64
        %v7905 = vpop.permute.xlu0 %7904
        %7906 = vrot.lane.b32.xlu0 %v7470, 64
        %v7907 = vpop.permute.xlu0 %7906
        %7908 = vrot.lane.b32.xlu0 %v7471, 64
        %v7909 = vpop.permute.xlu0 %7908
        %7910 = vrot.lane.b32.xlu0 %v7472, 64
        %v7911 = vpop.permute.xlu0 %7910
        %7912 = vrot.lane.b32.xlu0 %v7473, 64
        %v7913 = vpop.permute.xlu0 %7912
        %7914 = vrot.lane.b32.xlu0 %v7474, 64
        %v7915 = vpop.permute.xlu0 %7914
        %7916 = vrot.lane.b32.xlu0 %v7475, 64
        %v7917 = vpop.permute.xlu0 %7916
        %7918 = vrot.lane.b32.xlu0 %v7476, 64
        %v7919 = vpop.permute.xlu0 %7918
        %7920 = vrot.lane.b32.xlu0 %v7477, 64
        %v7921 = vpop.permute.xlu0 %7920
        %7922 = vrot.lane.b32.xlu0 %v7478, 64
        %v7923 = vpop.permute.xlu0 %7922
        %7924 = vrot.lane.b32.xlu0 %v7479, 64
        %v7925 = vpop.permute.xlu0 %7924
        %7926 = vrot.lane.b32.xlu0 %v7480, 64
        %v7927 = vpop.permute.xlu0 %7926
        %7928 = vrot.lane.b32.xlu0 %v7481, 64
        %v7929 = vpop.permute.xlu0 %7928
        %v7994 = vmul.f32 %v7674, %v7803
        %v7995 = vmul.f32 %v7675, %v7805
        %v7996 = vmul.f32 %v7676, %v7807
        %v7997 = vmul.f32 %v7677, %v7809
        %v7998 = vmul.f32 %v7678, %v7811
        %v7999 = vmul.f32 %v7679, %v7813
        %v8000 = vmul.f32 %v7680, %v7815
        %v8001 = vmul.f32 %v7681, %v7817
        %v8002 = vmul.f32 %v7682, %v7819
        %v8003 = vmul.f32 %v7683, %v7821
        %v8004 = vmul.f32 %v7684, %v7823
        %v8005 = vmul.f32 %v7685, %v7825
        %v8006 = vmul.f32 %v7686, %v7827
        %v8007 = vmul.f32 %v7687, %v7829
        %v8008 = vmul.f32 %v7688, %v7831
        %v8009 = vmul.f32 %v7689, %v7833
        %v8010 = vmul.f32 %v7690, %v7835
        %v8011 = vmul.f32 %v7691, %v7837
        %v8012 = vmul.f32 %v7692, %v7839
        %v8013 = vmul.f32 %v7693, %v7841
        %v8014 = vmul.f32 %v7694, %v7843
        %v8015 = vmul.f32 %v7695, %v7845
        %v8016 = vmul.f32 %v7696, %v7847
        %v8017 = vmul.f32 %v7697, %v7849
        %v8018 = vmul.f32 %v7698, %v7851
        %v8019 = vmul.f32 %v7699, %v7853
        %v8020 = vmul.f32 %v7700, %v7855
        %v8021 = vmul.f32 %v7701, %v7857
        %v8022 = vmul.f32 %v7702, %v7859
        %v8023 = vmul.f32 %v7703, %v7861
        %v8024 = vmul.f32 %v7704, %v7863
        %v8025 = vmul.f32 %v7705, %v7865
        %v8026 = vmul.f32 %v7706, %v7867
        %v8027 = vmul.f32 %v7707, %v7869
        %v8028 = vmul.f32 %v7708, %v7871
        %v8029 = vmul.f32 %v7709, %v7873
        %v8030 = vmul.f32 %v7710, %v7875
        %v8031 = vmul.f32 %v7711, %v7877
        %v8032 = vmul.f32 %v7712, %v7879
        %v8033 = vmul.f32 %v7713, %v7881
        %v8034 = vmul.f32 %v7714, %v7883
        %v8035 = vmul.f32 %v7715, %v7885
        %v8036 = vmul.f32 %v7716, %v7887
        %v8037 = vmul.f32 %v7717, %v7889
        %v8038 = vmul.f32 %v7718, %v7891
        %v8039 = vmul.f32 %v7719, %v7893
        %v8040 = vmul.f32 %v7720, %v7895
        %v8041 = vmul.f32 %v7721, %v7897
        %v8042 = vmul.f32 %v7722, %v7899
        %v8043 = vmul.f32 %v7723, %v7901
        %v8044 = vmul.f32 %v7724, %v7903
        %v8045 = vmul.f32 %v7725, %v7905
        %v8046 = vmul.f32 %v7726, %v7907
        %v8047 = vmul.f32 %v7727, %v7909
        %v8048 = vmul.f32 %v7728, %v7911
        %v8049 = vmul.f32 %v7729, %v7913
        %v8050 = vmul.f32 %v7730, %v7915
        %v8051 = vmul.f32 %v7731, %v7917
        %v8052 = vmul.f32 %v7732, %v7919
        %v8053 = vmul.f32 %v7733, %v7921
        %v8054 = vmul.f32 %v7734, %v7923
        %v8055 = vmul.f32 %v7735, %v7925
        %v8056 = vmul.f32 %v7736, %v7927
        %v8057 = vmul.f32 %v7737, %v7929
        %v8058 = vadd.f32 %v7610, %v7994
        %v8059 = vadd.f32 %v7611, %v7995
        %v8060 = vadd.f32 %v7612, %v7996
        %v8061 = vadd.f32 %v7613, %v7997
        %v8062 = vadd.f32 %v7614, %v7998
        %v8063 = vadd.f32 %v7615, %v7999
        %v8064 = vadd.f32 %v7616, %v8000
        %v8065 = vadd.f32 %v7617, %v8001
        %v8066 = vadd.f32 %v7618, %v8002
        %v8067 = vadd.f32 %v7619, %v8003
        %v8068 = vadd.f32 %v7620, %v8004
        %v8069 = vadd.f32 %v7621, %v8005
        %v8070 = vadd.f32 %v7622, %v8006
        %v8071 = vadd.f32 %v7623, %v8007
        %v8072 = vadd.f32 %v7624, %v8008
        %v8073 = vadd.f32 %v7625, %v8009
        %v8074 = vadd.f32 %v7626, %v8010
        %v8075 = vadd.f32 %v7627, %v8011
        %v8076 = vadd.f32 %v7628, %v8012
        %v8077 = vadd.f32 %v7629, %v8013
        %v8078 = vadd.f32 %v7630, %v8014
        %v8079 = vadd.f32 %v7631, %v8015
        %v8080 = vadd.f32 %v7632, %v8016
        %v8081 = vadd.f32 %v7633, %v8017
        %v8082 = vadd.f32 %v7634, %v8018
        %v8083 = vadd.f32 %v7635, %v8019
        %v8084 = vadd.f32 %v7636, %v8020
        %v8085 = vadd.f32 %v7637, %v8021
        %v8086 = vadd.f32 %v7638, %v8022
        %v8087 = vadd.f32 %v7639, %v8023
        %v8088 = vadd.f32 %v7640, %v8024
        %v8089 = vadd.f32 %v7641, %v8025
        %v8090 = vadd.f32 %v7642, %v8026
        %v8091 = vadd.f32 %v7643, %v8027
        %v8092 = vadd.f32 %v7644, %v8028
        %v8093 = vadd.f32 %v7645, %v8029
        %v8094 = vadd.f32 %v7646, %v8030
        %v8095 = vadd.f32 %v7647, %v8031
        %v8096 = vadd.f32 %v7648, %v8032
        %v8097 = vadd.f32 %v7649, %v8033
        %v8098 = vadd.f32 %v7650, %v8034
        %v8099 = vadd.f32 %v7651, %v8035
        %v8100 = vadd.f32 %v7652, %v8036
        %v8101 = vadd.f32 %v7653, %v8037
        %v8102 = vadd.f32 %v7654, %v8038
        %v8103 = vadd.f32 %v7655, %v8039
        %v8104 = vadd.f32 %v7656, %v8040
        %v8105 = vadd.f32 %v7657, %v8041
        %v8106 = vadd.f32 %v7658, %v8042
        %v8107 = vadd.f32 %v7659, %v8043
        %v8108 = vadd.f32 %v7660, %v8044
        %v8109 = vadd.f32 %v7661, %v8045
        %v8110 = vadd.f32 %v7662, %v8046
        %v8111 = vadd.f32 %v7663, %v8047
        %v8112 = vadd.f32 %v7664, %v8048
        %v8113 = vadd.f32 %v7665, %v8049
        %v8114 = vadd.f32 %v7666, %v8050
        %v8115 = vadd.f32 %v7667, %v8051
        %v8116 = vadd.f32 %v7668, %v8052
        %v8117 = vadd.f32 %v7669, %v8053
        %v8118 = vadd.f32 %v7670, %v8054
        %v8119 = vadd.f32 %v7671, %v8055
        %v8120 = vadd.f32 %v7672, %v8056
        %v8121 = vadd.f32 %v7673, %v8057
        %vm8122 = vcmask 261120
        %8123 = vst.msk [vmem:[%s6] sm:$0xff] %vm8122, %v8058
        %8124 = vst.msk [vmem:[%s6 + $0x8] sm:$0xff] %vm8122, %v8059
        %8125 = vst.msk [vmem:[%s6 + $0x10] sm:$0xff] %vm8122, %v8060
        %8126 = vst.msk [vmem:[%s6 + $0x18] sm:$0xff] %vm8122, %v8061
        %8127 = vst.msk [vmem:[%s6 + $0x20] sm:$0xff] %vm8122, %v8062
        %8128 = vst.msk [vmem:[%s6 + $0x28] sm:$0xff] %vm8122, %v8063
        %8129 = vst.msk [vmem:[%s6 + $0x30] sm:$0xff] %vm8122, %v8064
        %8130 = vst.msk [vmem:[%s6 + $0x38] sm:$0xff] %vm8122, %v8065
        %8131 = vst.msk [vmem:[%s6 + $0x40] sm:$0xff] %vm8122, %v8066
        %8132 = vst.msk [vmem:[%s6 + $0x48] sm:$0xff] %vm8122, %v8067
        %8133 = vst.msk [vmem:[%s6 + $0x50] sm:$0xff] %vm8122, %v8068
        %8134 = vst.msk [vmem:[%s6 + $0x58] sm:$0xff] %vm8122, %v8069
        %8135 = vst.msk [vmem:[%s6 + $0x60] sm:$0xff] %vm8122, %v8070
        %8136 = vst.msk [vmem:[%s6 + $0x68] sm:$0xff] %vm8122, %v8071
        %8137 = vst.msk [vmem:[%s6 + $0x70] sm:$0xff] %vm8122, %v8072
        %8138 = vst.msk [vmem:[%s6 + $0x78] sm:$0xff] %vm8122, %v8073
        %8139 = vst.msk [vmem:[%s6 + $0x80] sm:$0xff] %vm8122, %v8074
        %8140 = vst.msk [vmem:[%s6 + $0x88] sm:$0xff] %vm8122, %v8075
        %8141 = vst.msk [vmem:[%s6 + $0x90] sm:$0xff] %vm8122, %v8076
        %8142 = vst.msk [vmem:[%s6 + $0x98] sm:$0xff] %vm8122, %v8077
        %8143 = vst.msk [vmem:[%s6 + $0xa0] sm:$0xff] %vm8122, %v8078
        %8144 = vst.msk [vmem:[%s6 + $0xa8] sm:$0xff] %vm8122, %v8079
        %8145 = vst.msk [vmem:[%s6 + $0xb0] sm:$0xff] %vm8122, %v8080
        %8146 = vst.msk [vmem:[%s6 + $0xb8] sm:$0xff] %vm8122, %v8081
        %8147 = vst.msk [vmem:[%s6 + $0xc0] sm:$0xff] %vm8122, %v8082
        %8148 = vst.msk [vmem:[%s6 + $0xc8] sm:$0xff] %vm8122, %v8083
        %8149 = vst.msk [vmem:[%s6 + $0xd0] sm:$0xff] %vm8122, %v8084
        %8150 = vst.msk [vmem:[%s6 + $0xd8] sm:$0xff] %vm8122, %v8085
        %8151 = vst.msk [vmem:[%s6 + $0xe0] sm:$0xff] %vm8122, %v8086
        %8152 = vst.msk [vmem:[%s6 + $0xe8] sm:$0xff] %vm8122, %v8087
        %8153 = vst.msk [vmem:[%s6 + $0xf0] sm:$0xff] %vm8122, %v8088
        %8154 = vst.msk [vmem:[%s6 + $0xf8] sm:$0xff] %vm8122, %v8089
        %8155 = vst.msk [vmem:[%s6 + $0x100] sm:$0xff] %vm8122, %v8090
        %8156 = vst.msk [vmem:[%s6 + $0x108] sm:$0xff] %vm8122, %v8091
        %8157 = vst.msk [vmem:[%s6 + $0x110] sm:$0xff] %vm8122, %v8092
        %8158 = vst.msk [vmem:[%s6 + $0x118] sm:$0xff] %vm8122, %v8093
        %8159 = vst.msk [vmem:[%s6 + $0x120] sm:$0xff] %vm8122, %v8094
        %8160 = vst.msk [vmem:[%s6 + $0x128] sm:$0xff] %vm8122, %v8095
        %8161 = vst.msk [vmem:[%s6 + $0x130] sm:$0xff] %vm8122, %v8096
        %8162 = vst.msk [vmem:[%s6 + $0x138] sm:$0xff] %vm8122, %v8097
        %8163 = vst.msk [vmem:[%s6 + $0x140] sm:$0xff] %vm8122, %v8098
        %8164 = vst.msk [vmem:[%s6 + $0x148] sm:$0xff] %vm8122, %v8099
        %8165 = vst.msk [vmem:[%s6 + $0x150] sm:$0xff] %vm8122, %v8100
        %8166 = vst.msk [vmem:[%s6 + $0x158] sm:$0xff] %vm8122, %v8101
        %8167 = vst.msk [vmem:[%s6 + $0x160] sm:$0xff] %vm8122, %v8102
        %8168 = vst.msk [vmem:[%s6 + $0x168] sm:$0xff] %vm8122, %v8103
        %8169 = vst.msk [vmem:[%s6 + $0x170] sm:$0xff] %vm8122, %v8104
        %8170 = vst.msk [vmem:[%s6 + $0x178] sm:$0xff] %vm8122, %v8105
        %8171 = vst.msk [vmem:[%s6 + $0x180] sm:$0xff] %vm8122, %v8106
        %8172 = vst.msk [vmem:[%s6 + $0x188] sm:$0xff] %vm8122, %v8107
        %8173 = vst.msk [vmem:[%s6 + $0x190] sm:$0xff] %vm8122, %v8108
        %8174 = vst.msk [vmem:[%s6 + $0x198] sm:$0xff] %vm8122, %v8109
        %8175 = vst.msk [vmem:[%s6 + $0x1a0] sm:$0xff] %vm8122, %v8110
        %8176 = vst.msk [vmem:[%s6 + $0x1a8] sm:$0xff] %vm8122, %v8111
        %8177 = vst.msk [vmem:[%s6 + $0x1b0] sm:$0xff] %vm8122, %v8112
        %8178 = vst.msk [vmem:[%s6 + $0x1b8] sm:$0xff] %vm8122, %v8113
        %8179 = vst.msk [vmem:[%s6 + $0x1c0] sm:$0xff] %vm8122, %v8114
        %8180 = vst.msk [vmem:[%s6 + $0x1c8] sm:$0xff] %vm8122, %v8115
        %8181 = vst.msk [vmem:[%s6 + $0x1d0] sm:$0xff] %vm8122, %v8116
        %8182 = vst.msk [vmem:[%s6 + $0x1d8] sm:$0xff] %vm8122, %v8117
        %8183 = vst.msk [vmem:[%s6 + $0x1e0] sm:$0xff] %vm8122, %v8118
        %8184 = vst.msk [vmem:[%s6 + $0x1e8] sm:$0xff] %vm8122, %v8119
        %8185 = vst.msk [vmem:[%s6 + $0x1f0] sm:$0xff] %vm8122, %v8120
        %8186 = vst.msk [vmem:[%s6 + $0x1f8] sm:$0xff] %vm8122, %v8121
      $region76: #{gconv_gru_cell.1} parent=43 // pred_fallthru
        _
      // Predicated region
      $region77: #{gconv_gru_cell.1} parent=43 // pred_check
        %p8187 = pneg %p168
      $region78: #{gconv_gru_cell.1} parent=43 // pred_check_branch
        %8189 = sbr.rel (%p8187) target = $region80
      $region79: #{gconv_gru_cell.1} parent=43 // pred_region
        _
      $region80: #{gconv_gru_cell.1} parent=43 // pred_fallthru
        _
      // Predicated region
      $region81: #{gconv_gru_cell.1} parent=43 // pred_check
        %p8190 = pneg %p168
      $region82: #{gconv_gru_cell.1} parent=43 // pred_check_branch
        %8192 = sbr.rel (%p8190) target = $region84
      $region83: #{gconv_gru_cell.1} parent=43 // pred_region
        _
      $region84: #{gconv_gru_cell.1} parent=43 // pred_fallthru
        _
    $region44: #{gconv_gru_cell.1} parent=5 // pred_fallthru
      _
    %p8193 = scmp.le.s32.totalorder 2, %s12
    // Predicated region
    $region85: #{gconv_gru_cell.1} parent=5 // pred_check
      %p8194 = pneg %p8193
    $region86: #{gconv_gru_cell.1} parent=5 // pred_check_branch
      %8196 = sbr.rel (%p8194) target = $region88
    $region87: #{gconv_gru_cell.1} parent=5 // pred_region
      %s8197 = ssub.s32 %s12, 2
    $region88: #{gconv_gru_cell.1} parent=5 // pred_fallthru
      _
  $region6: #{gconv_gru_cell.1} parent=0 // loop_footer
    %s16 = sadd.s32 1, %s12
  $region7: #{gconv_gru_cell.1} parent=0 // loop_footer_branch
    %11 = sbr.rel target = $region3
  $region8: #{gconv_gru_cell.1} parent=0 // loop_exit
    _

</llo_original>
